<compile_context>
chip_gen: v7x
topology: tpu7x:2x2x1
jax: 0.10.0
libtpu: 0.0.40
codegen_flags: <defaults>
</compile_context>

<pallas_src>
import functools

import jax
import jax.numpy as jnp
from jax.experimental import pallas as pl
from jax.experimental.pallas import tpu as pltpu

BOTTLENECK = 32            # fixed in the PyTorch module
KERNEL_SIZES = (9, 19, 39)
BN_EPS = 1e-5
TAPS = 40                  # 39 real taps (offsets -19..+19) + 1 zero tap -> divisible by 4
TAP_GROUP = 4              # 4 taps side by side on lanes -> K = 4 * 32 = 128 per matmul
PAD = 24                   # zero rows each side of the bottleneck activations (8-aligned)


# ----------------------------------------------------------------------------
# Fused forward kernel factory: whole autoencoder, one batch element per grid step.
# ----------------------------------------------------------------------------
def _make_fused_kernel(depth, enc_L, num_filters, out_pads, dec_cout, row_of_pos):
    B = BOTTLENECK
    F = num_filters
    F4 = 4 * F
    base = PAD - TAPS // 2           # first tap offset inside the padded buffer
    n_groups = TAPS // TAP_GROUP
    n_in = 1 + 8 * depth + 2 * depth
    out_len = len(row_of_pos)

    def kernel(*refs):
        x_ref = refs[0]
        enc_refs = refs[1:1 + 8 * depth]
        dec_refs = refs[1 + 8 * depth:n_in]
        o_ref = refs[n_in]
        p_scr, s_scr, y_scr = refs[n_in + 1:n_in + 4]

        x = x_ref[0]                                        # (L0, Cin) for this batch elem

        # -------- encoder: depth x (InceptionModule + MaxPool1d(2)), all in VMEM --------
        for s in range(depth):
            bw, bb, wg, wb, mpw, mpb, scale, shift = enc_refs[8 * s:8 * s + 8]
            L = enc_L[s]
            SR = L + base + TAPS - TAP_GROUP                # rows of the 4-tap slab

            # bottleneck 1x1 conv
            xb = jnp.dot(x, bw[...], preferred_element_type=jnp.float32) + bb[...]

            # zero-padded bottleneck activations (only borders + interior are written)
            p_scr[0:PAD, :] = jnp.zeros((PAD, B), jnp.float32)
            p_scr[PAD:PAD + L, :] = xb
            p_scr[PAD + L:PAD + L + PAD, :] = jnp.zeros((PAD, B), jnp.float32)

            # im2col slab: 4 consecutive taps side by side on the lane axis (K = 128)
            for j in range(TAP_GROUP):
                s_scr[0:SR, j * B:(j + 1) * B] = p_scr[j:j + SR, :]

            # grouped wide convs (k=9/19/39 fused along output channels, N = 96)
            acc = jnp.zeros((L, 3 * F), jnp.float32)
            for q in range(n_groups):
                r0 = base + TAP_GROUP * q
                acc = acc + jnp.dot(s_scr[r0:r0 + L, :], wg[q],
                                    preferred_element_type=jnp.float32)
            acc = acc + wb[...]

            # MaxPool1d(k=3, s=1, p=1) + 1x1 conv branch on the raw stage input.
            # Edge replication == -inf padding since the centre element is in the max.
            ridx = jax.lax.broadcasted_iota(jnp.int32, (L, x.shape[1]), 0)
            xu = jnp.where(ridx == 0, x, pltpu.roll(x, shift=1, axis=0))
            xd = jnp.where(ridx == L - 1, x, pltpu.roll(x, shift=L - 1, axis=0))
            m3 = jnp.maximum(x, jnp.maximum(xu, xd))
            ymp = jnp.dot(m3, mpw[...], preferred_element_type=jnp.float32) + mpb[...]

            # channel concat [k9|k19|k39|maxpool] + folded eval-mode BN + ReLU,
            # written lane-dense (96 + 32 lanes) into VMEM scratch.
            sc = scale[...]
            sh = shift[...]
            y_scr[0:L, 0:3 * F] = jnp.maximum(acc * sc[:, 0:3 * F] + sh[:, 0:3 * F], 0.0)
            y_scr[0:L, 3 * F:F4] = jnp.maximum(ymp * sc[:, 3 * F:F4] + sh[:, 3 * F:F4], 0.0)

            # fused MaxPool1d(kernel=2, stride=2): stride-2 sublane loads + max
            Lh = L // 2
            x = jnp.maximum(y_scr[pl.ds(0, Lh, stride=2), 0:F4],
                            y_scr[pl.ds(1, Lh, stride=2), 0:F4])

        # -------- decoder: depth x (ConvTranspose1d(k=2, s=2) + ReLU) -------------------
        d_act = x                                           # encoded, (L_enc, 4F)
        n_rows = d_act.shape[0]
        for d in range(depth):
            wcat = dec_refs[2 * d]
            bias = dec_refs[2 * d + 1]
            cout = dec_cout[d]
            z = jnp.dot(d_act, wcat[...], preferred_element_type=jnp.float32)
            b = bias[...]
            y_scr[0:n_rows, 0:cout] = jnp.maximum(z[:, 0:cout] + b, 0.0)
            y_scr[n_rows:2 * n_rows, 0:cout] = jnp.maximum(z[:, cout:2 * cout] + b, 0.0)
            new_rows = 2 * n_rows
            if out_pads[d]:
                # output_padding tail: kernel==stride => no input taps reach it
                y_scr[new_rows:new_rows + 1, 0:cout] = jnp.maximum(b, 0.0)
                new_rows += 1
            d_act = y_scr[0:new_rows, 0:cout]
            n_rows = new_rows

        # phase-blocked rows -> true positional order; write the output block
        for m in range(out_len):
            r = row_of_pos[m]
            o_ref[0, m:m + 1, :] = d_act[r:r + 1, :]

    return kernel, n_in


# ----------------------------------------------------------------------------
# Parameter init (deterministic, synthetic; mirrors the PyTorch module's shapes) with
# MXU-friendly preprocessing: taps packed/grouped, conv-transpose taps concatenated.
# ----------------------------------------------------------------------------
def init_params(key, in_channels, num_filters=32, depth=3):
    F = num_filters
    B = BOTTLENECK
    enc_channels = [in_channels] + [4 * F] * depth

    def winit(k, shape, fan_in):
        return jax.random.normal(k, shape, jnp.float32) / (float(fan_in) ** 0.5)

    params = {'encoder': [], 'decoder': []}
    for d in range(depth):
        cin = enc_channels[d]
        key, *ks = jax.random.split(key, 11)
        ws = [winit(ks[2 * i], (k, B, F), k * B) for i, k in enumerate(KERNEL_SIZES)]
        bs = [winit(ks[2 * i + 1], (1, F), k * B) for i, k in enumerate(KERNEL_SIZES)]

        # pack the three "same padding" convs into one grouped tap slab:
        #   wc[t] = tap at offset (t - TAPS//2), columns [k9 | k19 | k39]
        wc = jnp.zeros((TAPS, B, 3 * F), jnp.float32)
        for i, k in enumerate(KERNEL_SIZES):
            c = TAPS // 2 - k // 2
            wc = wc.at[c:c + k, :, i * F:(i + 1) * F].set(ws[i])
        wg = wc.reshape(TAPS // TAP_GROUP, TAP_GROUP * B, 3 * F)       # (10, 128, 96)
        wb = jnp.concatenate(bs, axis=1)                               # (1, 96)

        mod = {
            'bw': winit(ks[6], (cin, B), cin),
            'bb': winit(ks[7], (1, B), cin),
            'wg': wg,
            'wb': wb,
            'mpw': winit(ks[8], (cin, F), cin),
            'mpb': winit(ks[9], (1, F), cin),
        }
        # BatchNorm1d(4F) eval-mode fold with default init (gamma=1, beta=0, mean=0, var=1)
        gamma = jnp.ones((1, 4 * F), jnp.float32)
        beta = jnp.zeros((1, 4 * F), jnp.float32)
        r_mean = jnp.zeros((1, 4 * F), jnp.float32)
        r_var = jnp.ones((1, 4 * F), jnp.float32)
        scale = gamma / jnp.sqrt(r_var + BN_EPS)
        mod['scale'] = scale
        mod['shift'] = beta - r_mean * scale
        params['encoder'].append(mod)

    dec_channels = enc_channels[::-1]
    for d in range(depth):
        cin, cout = dec_channels[d], dec_channels[d + 1]
        key, k1, k2 = jax.random.split(key, 3)
        wfull = jax.random.normal(k1, (cin, cout, 2), jnp.float32) / (float(cin * 2) ** 0.5)
        params['decoder'].append({
            # [W(:,:,tap0) | W(:,:,tap1)] -> a single (Cin, 2*Cout) matmul per layer
            'wcat': jnp.concatenate([wfull[:, :, 0], wfull[:, :, 1]], axis=1),
            'b': jax.random.normal(k2, (1, cout), jnp.float32) / (float(cin * 2) ** 0.5),
        })
    return params


# ----------------------------------------------------------------------------
# Full forward pass (matches InceptionAutoencoder.forward in eval mode).
# ----------------------------------------------------------------------------
def inception_autoencoder_forward(x_ncl, params, input_length, depth=3):
    x = jnp.transpose(x_ncl, (0, 2, 1)).astype(jnp.float32)       # NCL -> NLC
    N, L0, cin0 = x.shape
    F = params['encoder'][0]['mpb'].shape[1]
    F4 = 4 * F
    B = BOTTLENECK

    # static per-stage lengths (MaxPool1d(2) floor-divides)
    enc_L = [L0]
    for _ in range(depth):
        enc_L.append(enc_L[-1] // 2)

    # decoder output_padding computed exactly like the PyTorch constructor
    out_pads = []
    cur = 1
    for d in range(depth):
        desired = input_length // 2 ** (depth - d - 1)
        o_len = (cur - 1) * 2 + 2
        op = desired - o_len
        if op < 0 or op >= 2:
            op = 0
        out_pads.append(op)
        cur = desired

    dec_channels = ([cin0] + [F4] * depth)[::-1]
    dec_cout = [dec_channels[d + 1] for d in range(depth)]
    c_last = dec_cout[-1]

    # trace-time simulation of phase-blocked row order -> final positional order
    pos = list(range(enc_L[depth]))
    for d in range(depth):
        p_cnt = len(pos)
        pos = [2 * p for p in pos] + [2 * p + 1 for p in pos]
        if out_pads[d]:
            pos.append(2 * p_cnt)
    out_len = len(pos)
    row_of_pos = [pos.index(m) for m in range(out_len)]

    kernel, n_in = _make_fused_kernel(depth, enc_L[:depth], F, out_pads, dec_cout,
                                      row_of_pos)

    flat_in = [x]
    for mod in params['encoder']:
        flat_in += [mod['bw'], mod['bb'], mod['wg'], mod['wb'],
                    mod['mpw'], mod['mpb'], mod['scale'], mod['shift']]
    for dec in params['decoder']:
        flat_in += [dec['wcat'], dec['b']]
    assert len(flat_in) == n_in

    def _rep(a):
        nd = a.ndim
        return pl.BlockSpec(a.shape, lambda n, _nd=nd: (0,) * _nd)

    in_specs = [pl.BlockSpec((1, L0, cin0), lambda n: (n, 0, 0))]
    in_specs += [_rep(a) for a in flat_in[1:]]

    y_rows = max(L0, out_len)
    y_lanes = max([F4] + dec_cout)
    s_rows = L0 + (PAD - TAPS // 2) + TAPS - TAP_GROUP

    out_nlc = pl.pallas_call(
        kernel,
        grid=(N,),
        in_specs=in_specs,
        out_specs=pl.BlockSpec((1, out_len, c_last), lambda n: (n, 0, 0)),
        out_shape=jax.ShapeDtypeStruct((N, out_len, c_last), jnp.float32),
        scratch_shapes=[
            pltpu.VMEM((L0 + 2 * PAD, B), jnp.float32),            # padded bottleneck
            pltpu.VMEM((s_rows, TAP_GROUP * B), jnp.float32),      # 4-tap im2col slab
            pltpu.VMEM((y_rows, y_lanes), jnp.float32),            # stage output / decoder
        ],
        compiler_params=pltpu.CompilerParams(dimension_semantics=("parallel",)),
    )(*flat_in)

    return jnp.transpose(out_nlc, (0, 2, 1))                       # NLC -> NCL


if __name__ == "__main__":
    in_channels, input_length, num_filters, depth = 4, 32, 32, 3
    key = jax.random.PRNGKey(0)
    kx, kp = jax.random.split(key)
    x = jax.random.normal(kx, (2, in_channels, input_length), jnp.float32)
    params = init_params(kp, in_channels, num_filters, depth)

    fwd = jax.jit(functools.partial(inception_autoencoder_forward,
                                    params=params, input_length=input_length, depth=depth))
    out = fwd(x)
    jax.block_until_ready(out)
    assert out.shape == (2, in_channels, input_length), out.shape
    assert bool(jnp.all(jnp.isfinite(out)))
    print("KERNEL_OK")
</pallas_src>

<mosaic_0001>
module attributes {stable_mosaic.version = 11 : i64} {
  func.func @kernel(%arg0: i32, %arg1: memref<1x32x4xf32, #tpu.memory_space<vmem>>, %arg2: memref<4x32xf32, #tpu.memory_space<vmem>>, %arg3: memref<1x32xf32, #tpu.memory_space<vmem>>, %arg4: memref<10x128x96xf32, #tpu.memory_space<vmem>>, %arg5: memref<1x96xf32, #tpu.memory_space<vmem>>, %arg6: memref<4x32xf32, #tpu.memory_space<vmem>>, %arg7: memref<1x32xf32, #tpu.memory_space<vmem>>, %arg8: memref<1x128xf32, #tpu.memory_space<vmem>>, %arg9: memref<1x128xf32, #tpu.memory_space<vmem>>, %arg10: memref<128x32xf32, #tpu.memory_space<vmem>>, %arg11: memref<1x32xf32, #tpu.memory_space<vmem>>, %arg12: memref<10x128x96xf32, #tpu.memory_space<vmem>>, %arg13: memref<1x96xf32, #tpu.memory_space<vmem>>, %arg14: memref<128x32xf32, #tpu.memory_space<vmem>>, %arg15: memref<1x32xf32, #tpu.memory_space<vmem>>, %arg16: memref<1x128xf32, #tpu.memory_space<vmem>>, %arg17: memref<1x128xf32, #tpu.memory_space<vmem>>, %arg18: memref<128x32xf32, #tpu.memory_space<vmem>>, %arg19: memref<1x32xf32, #tpu.memory_space<vmem>>, %arg20: memref<10x128x96xf32, #tpu.memory_space<vmem>>, %arg21: memref<1x96xf32, #tpu.memory_space<vmem>>, %arg22: memref<128x32xf32, #tpu.memory_space<vmem>>, %arg23: memref<1x32xf32, #tpu.memory_space<vmem>>, %arg24: memref<1x128xf32, #tpu.memory_space<vmem>>, %arg25: memref<1x128xf32, #tpu.memory_space<vmem>>, %arg26: memref<128x256xf32, #tpu.memory_space<vmem>>, %arg27: memref<1x128xf32, #tpu.memory_space<vmem>>, %arg28: memref<128x256xf32, #tpu.memory_space<vmem>>, %arg29: memref<1x128xf32, #tpu.memory_space<vmem>>, %arg30: memref<128x8xf32, #tpu.memory_space<vmem>>, %arg31: memref<1x4xf32, #tpu.memory_space<vmem>>, %arg32: memref<1x32x4xf32, #tpu.memory_space<vmem>>, %arg33: memref<80x32xf32, #tpu.memory_space<vmem>>, %arg34: memref<72x128xf32, #tpu.memory_space<vmem>>, %arg35: memref<32x128xf32, #tpu.memory_space<vmem>>) attributes {dimension_semantics = [#tpu.dimension_semantics<parallel>], iteration_bounds = array<i64: 2>, scalar_prefetch = 0 : i64, scratch_operands = 3 : i64, tpu.core_type = #tpu.core_type<tc>, window_params = [{transform_indices = @transform_0, window_bounds = array<i64: 1, 32, 4>}, {pipeline_mode = #tpu.pipeline_mode<synchronous>, transform_indices = @transform_1, window_bounds = array<i64: 4, 32>}, {pipeline_mode = #tpu.pipeline_mode<synchronous>, transform_indices = @transform_2, window_bounds = array<i64: 1, 32>}, {pipeline_mode = #tpu.pipeline_mode<synchronous>, transform_indices = @transform_3, window_bounds = array<i64: 10, 128, 96>}, {pipeline_mode = #tpu.pipeline_mode<synchronous>, transform_indices = @transform_4, window_bounds = array<i64: 1, 96>}, {pipeline_mode = #tpu.pipeline_mode<synchronous>, transform_indices = @transform_5, window_bounds = array<i64: 4, 32>}, {pipeline_mode = #tpu.pipeline_mode<synchronous>, transform_indices = @transform_6, window_bounds = array<i64: 1, 32>}, {pipeline_mode = #tpu.pipeline_mode<synchronous>, transform_indices = @transform_7, window_bounds = array<i64: 1, 128>}, {pipeline_mode = #tpu.pipeline_mode<synchronous>, transform_indices = @transform_8, window_bounds = array<i64: 1, 128>}, {pipeline_mode = #tpu.pipeline_mode<synchronous>, transform_indices = @transform_9, window_bounds = array<i64: 128, 32>}, {pipeline_mode = #tpu.pipeline_mode<synchronous>, transform_indices = @transform_10, window_bounds = array<i64: 1, 32>}, {pipeline_mode = #tpu.pipeline_mode<synchronous>, transform_indices = @transform_11, window_bounds = array<i64: 10, 128, 96>}, {pipeline_mode = #tpu.pipeline_mode<synchronous>, transform_indices = @transform_12, window_bounds = array<i64: 1, 96>}, {pipeline_mode = #tpu.pipeline_mode<synchronous>, transform_indices = @transform_13, window_bounds = array<i64: 128, 32>}, {pipeline_mode = #tpu.pipeline_mode<synchronous>, transform_indices = @transform_14, window_bounds = array<i64: 1, 32>}, {pipeline_mode = #tpu.pipeline_mode<synchronous>, transform_indices = @transform_15, window_bounds = array<i64: 1, 128>}, {pipeline_mode = #tpu.pipeline_mode<synchronous>, transform_indices = @transform_16, window_bounds = array<i64: 1, 128>}, {pipeline_mode = #tpu.pipeline_mode<synchronous>, transform_indices = @transform_17, window_bounds = array<i64: 128, 32>}, {pipeline_mode = #tpu.pipeline_mode<synchronous>, transform_indices = @transform_18, window_bounds = array<i64: 1, 32>}, {pipeline_mode = #tpu.pipeline_mode<synchronous>, transform_indices = @transform_19, window_bounds = array<i64: 10, 128, 96>}, {pipeline_mode = #tpu.pipeline_mode<synchronous>, transform_indices = @transform_20, window_bounds = array<i64: 1, 96>}, {pipeline_mode = #tpu.pipeline_mode<synchronous>, transform_indices = @transform_21, window_bounds = array<i64: 128, 32>}, {pipeline_mode = #tpu.pipeline_mode<synchronous>, transform_indices = @transform_22, window_bounds = array<i64: 1, 32>}, {pipeline_mode = #tpu.pipeline_mode<synchronous>, transform_indices = @transform_23, window_bounds = array<i64: 1, 128>}, {pipeline_mode = #tpu.pipeline_mode<synchronous>, transform_indices = @transform_24, window_bounds = array<i64: 1, 128>}, {pipeline_mode = #tpu.pipeline_mode<synchronous>, transform_indices = @transform_25, window_bounds = array<i64: 128, 256>}, {pipeline_mode = #tpu.pipeline_mode<synchronous>, transform_indices = @transform_26, window_bounds = array<i64: 1, 128>}, {pipeline_mode = #tpu.pipeline_mode<synchronous>, transform_indices = @transform_27, window_bounds = array<i64: 128, 256>}, {pipeline_mode = #tpu.pipeline_mode<synchronous>, transform_indices = @transform_28, window_bounds = array<i64: 1, 128>}, {pipeline_mode = #tpu.pipeline_mode<synchronous>, transform_indices = @transform_29, window_bounds = array<i64: 128, 8>}, {pipeline_mode = #tpu.pipeline_mode<synchronous>, transform_indices = @transform_30, window_bounds = array<i64: 1, 4>}, {transform_indices = @transform_31, window_bounds = array<i64: 1, 32, 4>}]} {
    %c0 = arith.constant 0 : index
    %c0_0 = arith.constant 0 : index
    %c0_1 = arith.constant 0 : index
    %0 = vector.load %arg1[%c0, %c0_0, %c0_1] : memref<1x32x4xf32, #tpu.memory_space<vmem>>, vector<1x32x4xf32>
    %1 = vector.shape_cast %0 : vector<1x32x4xf32> to vector<32x4xf32>
    %c0_2 = arith.constant 0 : index
    %c0_3 = arith.constant 0 : index
    %2 = vector.load %arg2[%c0_2, %c0_3] : memref<4x32xf32, #tpu.memory_space<vmem>>, vector<4x32xf32>
    %cst = arith.constant dense<0.000000e+00> : vector<32x32xf32>
    %3 = tpu.matmul %1, %2, %cst {dimension_numbers = #tpu.dot_dimension_numbers<[1], [0], [0], [1], [0, 0, 1, 1], [], []>} : vector<32x4xf32>, vector<4x32xf32>, vector<32x32xf32> -> vector<32x32xf32>
    %c0_4 = arith.constant 0 : index
    %c0_5 = arith.constant 0 : index
    %4 = vector.load %arg3[%c0_4, %c0_5] : memref<1x32xf32, #tpu.memory_space<vmem>>, vector<1x32xf32>
    %5 = vector.broadcast %4 : vector<1x32xf32> to vector<32x32xf32>
    %6 = arith.addf %3, %5 : vector<32x32xf32>
    %cst_6 = arith.constant 0.000000e+00 : f32
    %7 = vector.broadcast %cst_6 : f32 to vector<24x32xf32>
    %c0_7 = arith.constant 0 : index
    %c0_8 = arith.constant 0 : index
    %8 = vector.load %arg33[%c0_7, %c0_8] : memref<80x32xf32, #tpu.memory_space<vmem>>, vector<24x32xf32>
    tpu.vector_store %arg33[%c0_7, %c0_8], %7 {strides = array<i32>} : memref<80x32xf32, #tpu.memory_space<vmem>>, vector<24x32xf32>,
    %c24 = arith.constant 24 : index
    %c0_9 = arith.constant 0 : index
    %9 = vector.load %arg33[%c24, %c0_9] : memref<80x32xf32, #tpu.memory_space<vmem>>, vector<32x32xf32>
    tpu.vector_store %arg33[%c24, %c0_9], %6 {strides = array<i32>} : memref<80x32xf32, #tpu.memory_space<vmem>>, vector<32x32xf32>,
    %cst_10 = arith.constant 0.000000e+00 : f32
    %10 = vector.broadcast %cst_10 : f32 to vector<24x32xf32>
    %c56 = arith.constant 56 : index
    %c0_11 = arith.constant 0 : index
    %11 = vector.load %arg33[%c56, %c0_11] : memref<80x32xf32, #tpu.memory_space<vmem>>, vector<24x32xf32>
    tpu.vector_store %arg33[%c56, %c0_11], %10 {strides = array<i32>} : memref<80x32xf32, #tpu.memory_space<vmem>>, vector<24x32xf32>,
    %c0_12 = arith.constant 0 : index
    %c0_13 = arith.constant 0 : index
    %12 = vector.load %arg33[%c0_12, %c0_13] : memref<80x32xf32, #tpu.memory_space<vmem>>, vector<72x32xf32>
    %c0_14 = arith.constant 0 : index
    %c0_15 = arith.constant 0 : index
    %13 = vector.load %arg34[%c0_14, %c0_15] : memref<72x128xf32, #tpu.memory_space<vmem>>, vector<72x32xf32>
    tpu.vector_store %arg34[%c0_14, %c0_15], %12 {strides = array<i32>} : memref<72x128xf32, #tpu.memory_space<vmem>>, vector<72x32xf32>,
    %c1 = arith.constant 1 : index
    %c0_16 = arith.constant 0 : index
    %14 = vector.load %arg33[%c1, %c0_16] : memref<80x32xf32, #tpu.memory_space<vmem>>, vector<72x32xf32>
    %c0_17 = arith.constant 0 : index
    %c32 = arith.constant 32 : index
    %15 = vector.load %arg34[%c0_17, %c32] : memref<72x128xf32, #tpu.memory_space<vmem>>, vector<72x32xf32>
    tpu.vector_store %arg34[%c0_17, %c32], %14 {strides = array<i32>} : memref<72x128xf32, #tpu.memory_space<vmem>>, vector<72x32xf32>,
    %c2 = arith.constant 2 : index
    %c0_18 = arith.constant 0 : index
    %16 = vector.load %arg33[%c2, %c0_18] : memref<80x32xf32, #tpu.memory_space<vmem>>, vector<72x32xf32>
    %c0_19 = arith.constant 0 : index
    %c64 = arith.constant 64 : index
    %17 = vector.load %arg34[%c0_19, %c64] : memref<72x128xf32, #tpu.memory_space<vmem>>, vector<72x32xf32>
    tpu.vector_store %arg34[%c0_19, %c64], %16 {strides = array<i32>} : memref<72x128xf32, #tpu.memory_space<vmem>>, vector<72x32xf32>,
    %c3 = arith.constant 3 : index
    %c0_20 = arith.constant 0 : index
    %18 = vector.load %arg33[%c3, %c0_20] : memref<80x32xf32, #tpu.memory_space<vmem>>, vector<72x32xf32>
    %c0_21 = arith.constant 0 : index
    %c96 = arith.constant 96 : index
    %19 = vector.load %arg34[%c0_21, %c96] : memref<72x128xf32, #tpu.memory_space<vmem>>, vector<72x32xf32>
    tpu.vector_store %arg34[%c0_21, %c96], %18 {strides = array<i32>} : memref<72x128xf32, #tpu.memory_space<vmem>>, vector<72x32xf32>,
    %cst_22 = arith.constant 0.000000e+00 : f32
    %20 = vector.broadcast %cst_22 : f32 to vector<32x96xf32>
    %c4 = arith.constant 4 : index
    %c0_23 = arith.constant 0 : index
    %21 = vector.load %arg34[%c4, %c0_23] : memref<72x128xf32, #tpu.memory_space<vmem>>, vector<32x128xf32>
    %c0_24 = arith.constant 0 : index
    %c0_25 = arith.constant 0 : index
    %c0_26 = arith.constant 0 : index
    %22 = vector.load %arg4[%c0_24, %c0_25, %c0_26] : memref<10x128x96xf32, #tpu.memory_space<vmem>>, vector<1x128x96xf32>
    %23 = vector.shape_cast %22 : vector<1x128x96xf32> to vector<128x96xf32>
    %cst_27 = arith.constant dense<0.000000e+00> : vector<32x96xf32>
    %24 = tpu.matmul %21, %23, %cst_27 {dimension_numbers = #tpu.dot_dimension_numbers<[1], [0], [0], [1], [0, 0, 1, 1], [], []>} : vector<32x128xf32>, vector<128x96xf32>, vector<32x96xf32> -> vector<32x96xf32>
    %25 = arith.addf %20, %24 : vector<32x96xf32>
    %c8 = arith.constant 8 : index
    %c0_28 = arith.constant 0 : index
    %26 = vector.load %arg34[%c8, %c0_28] : memref<72x128xf32, #tpu.memory_space<vmem>>, vector<32x128xf32>
    %c1_29 = arith.constant 1 : index
    %c0_30 = arith.constant 0 : index
    %c0_31 = arith.constant 0 : index
    %27 = vector.load %arg4[%c1_29, %c0_30, %c0_31] : memref<10x128x96xf32, #tpu.memory_space<vmem>>, vector<1x128x96xf32>
    %28 = vector.shape_cast %27 : vector<1x128x96xf32> to vector<128x96xf32>
    %cst_32 = arith.constant dense<0.000000e+00> : vector<32x96xf32>
    %29 = tpu.matmul %26, %28, %cst_32 {dimension_numbers = #tpu.dot_dimension_numbers<[1], [0], [0], [1], [0, 0, 1, 1], [], []>} : vector<32x128xf32>, vector<128x96xf32>, vector<32x96xf32> -> vector<32x96xf32>
    %30 = arith.addf %25, %29 : vector<32x96xf32>
    %c12 = arith.constant 12 : index
    %c0_33 = arith.constant 0 : index
    %31 = vector.load %arg34[%c12, %c0_33] : memref<72x128xf32, #tpu.memory_space<vmem>>, vector<32x128xf32>
    %c2_34 = arith.constant 2 : index
    %c0_35 = arith.constant 0 : index
    %c0_36 = arith.constant 0 : index
    %32 = vector.load %arg4[%c2_34, %c0_35, %c0_36] : memref<10x128x96xf32, #tpu.memory_space<vmem>>, vector<1x128x96xf32>
    %33 = vector.shape_cast %32 : vector<1x128x96xf32> to vector<128x96xf32>
    %cst_37 = arith.constant dense<0.000000e+00> : vector<32x96xf32>
    %34 = tpu.matmul %31, %33, %cst_37 {dimension_numbers = #tpu.dot_dimension_numbers<[1], [0], [0], [1], [0, 0, 1, 1], [], []>} : vector<32x128xf32>, vector<128x96xf32>, vector<32x96xf32> -> vector<32x96xf32>
    %35 = arith.addf %30, %34 : vector<32x96xf32>
    %c16 = arith.constant 16 : index
    %c0_38 = arith.constant 0 : index
    %36 = vector.load %arg34[%c16, %c0_38] : memref<72x128xf32, #tpu.memory_space<vmem>>, vector<32x128xf32>
    %c3_39 = arith.constant 3 : index
    %c0_40 = arith.constant 0 : index
    %c0_41 = arith.constant 0 : index
    %37 = vector.load %arg4[%c3_39, %c0_40, %c0_41] : memref<10x128x96xf32, #tpu.memory_space<vmem>>, vector<1x128x96xf32>
    %38 = vector.shape_cast %37 : vector<1x128x96xf32> to vector<128x96xf32>
    %cst_42 = arith.constant dense<0.000000e+00> : vector<32x96xf32>
    %39 = tpu.matmul %36, %38, %cst_42 {dimension_numbers = #tpu.dot_dimension_numbers<[1], [0], [0], [1], [0, 0, 1, 1], [], []>} : vector<32x128xf32>, vector<128x96xf32>, vector<32x96xf32> -> vector<32x96xf32>
    %40 = arith.addf %35, %39 : vector<32x96xf32>
    %c20 = arith.constant 20 : index
    %c0_43 = arith.constant 0 : index
    %41 = vector.load %arg34[%c20, %c0_43] : memref<72x128xf32, #tpu.memory_space<vmem>>, vector<32x128xf32>
    %c4_44 = arith.constant 4 : index
    %c0_45 = arith.constant 0 : index
    %c0_46 = arith.constant 0 : index
    %42 = vector.load %arg4[%c4_44, %c0_45, %c0_46] : memref<10x128x96xf32, #tpu.memory_space<vmem>>, vector<1x128x96xf32>
    %43 = vector.shape_cast %42 : vector<1x128x96xf32> to vector<128x96xf32>
    %cst_47 = arith.constant dense<0.000000e+00> : vector<32x96xf32>
    %44 = tpu.matmul %41, %43, %cst_47 {dimension_numbers = #tpu.dot_dimension_numbers<[1], [0], [0], [1], [0, 0, 1, 1], [], []>} : vector<32x128xf32>, vector<128x96xf32>, vector<32x96xf32> -> vector<32x96xf32>
    %45 = arith.addf %40, %44 : vector<32x96xf32>
    %c24_48 = arith.constant 24 : index
    %c0_49 = arith.constant 0 : index
    %46 = vector.load %arg34[%c24_48, %c0_49] : memref<72x128xf32, #tpu.memory_space<vmem>>, vector<32x128xf32>
    %c5 = arith.constant 5 : index
    %c0_50 = arith.constant 0 : index
    %c0_51 = arith.constant 0 : index
    %47 = vector.load %arg4[%c5, %c0_50, %c0_51] : memref<10x128x96xf32, #tpu.memory_space<vmem>>, vector<1x128x96xf32>
    %48 = vector.shape_cast %47 : vector<1x128x96xf32> to vector<128x96xf32>
    %cst_52 = arith.constant dense<0.000000e+00> : vector<32x96xf32>
    %49 = tpu.matmul %46, %48, %cst_52 {dimension_numbers = #tpu.dot_dimension_numbers<[1], [0], [0], [1], [0, 0, 1, 1], [], []>} : vector<32x128xf32>, vector<128x96xf32>, vector<32x96xf32> -> vector<32x96xf32>
    %50 = arith.addf %45, %49 : vector<32x96xf32>
    %c28 = arith.constant 28 : index
    %c0_53 = arith.constant 0 : index
    %51 = vector.load %arg34[%c28, %c0_53] : memref<72x128xf32, #tpu.memory_space<vmem>>, vector<32x128xf32>
    %c6 = arith.constant 6 : index
    %c0_54 = arith.constant 0 : index
    %c0_55 = arith.constant 0 : index
    %52 = vector.load %arg4[%c6, %c0_54, %c0_55] : memref<10x128x96xf32, #tpu.memory_space<vmem>>, vector<1x128x96xf32>
    %53 = vector.shape_cast %52 : vector<1x128x96xf32> to vector<128x96xf32>
    %cst_56 = arith.constant dense<0.000000e+00> : vector<32x96xf32>
    %54 = tpu.matmul %51, %53, %cst_56 {dimension_numbers = #tpu.dot_dimension_numbers<[1], [0], [0], [1], [0, 0, 1, 1], [], []>} : vector<32x128xf32>, vector<128x96xf32>, vector<32x96xf32> -> vector<32x96xf32>
    %55 = arith.addf %50, %54 : vector<32x96xf32>
    %c32_57 = arith.constant 32 : index
    %c0_58 = arith.constant 0 : index
    %56 = vector.load %arg34[%c32_57, %c0_58] : memref<72x128xf32, #tpu.memory_space<vmem>>, vector<32x128xf32>
    %c7 = arith.constant 7 : index
    %c0_59 = arith.constant 0 : index
    %c0_60 = arith.constant 0 : index
    %57 = vector.load %arg4[%c7, %c0_59, %c0_60] : memref<10x128x96xf32, #tpu.memory_space<vmem>>, vector<1x128x96xf32>
    %58 = vector.shape_cast %57 : vector<1x128x96xf32> to vector<128x96xf32>
    %cst_61 = arith.constant dense<0.000000e+00> : vector<32x96xf32>
    %59 = tpu.matmul %56, %58, %cst_61 {dimension_numbers = #tpu.dot_dimension_numbers<[1], [0], [0], [1], [0, 0, 1, 1], [], []>} : vector<32x128xf32>, vector<128x96xf32>, vector<32x96xf32> -> vector<32x96xf32>
    %60 = arith.addf %55, %59 : vector<32x96xf32>
    %c36 = arith.constant 36 : index
    %c0_62 = arith.constant 0 : index
    %61 = vector.load %arg34[%c36, %c0_62] : memref<72x128xf32, #tpu.memory_space<vmem>>, vector<32x128xf32>
    %c8_63 = arith.constant 8 : index
    %c0_64 = arith.constant 0 : index
    %c0_65 = arith.constant 0 : index
    %62 = vector.load %arg4[%c8_63, %c0_64, %c0_65] : memref<10x128x96xf32, #tpu.memory_space<vmem>>, vector<1x128x96xf32>
    %63 = vector.shape_cast %62 : vector<1x128x96xf32> to vector<128x96xf32>
    %cst_66 = arith.constant dense<0.000000e+00> : vector<32x96xf32>
    %64 = tpu.matmul %61, %63, %cst_66 {dimension_numbers = #tpu.dot_dimension_numbers<[1], [0], [0], [1], [0, 0, 1, 1], [], []>} : vector<32x128xf32>, vector<128x96xf32>, vector<32x96xf32> -> vector<32x96xf32>
    %65 = arith.addf %60, %64 : vector<32x96xf32>
    %c40 = arith.constant 40 : index
    %c0_67 = arith.constant 0 : index
    %66 = vector.load %arg34[%c40, %c0_67] : memref<72x128xf32, #tpu.memory_space<vmem>>, vector<32x128xf32>
    %c9 = arith.constant 9 : index
    %c0_68 = arith.constant 0 : index
    %c0_69 = arith.constant 0 : index
    %67 = vector.load %arg4[%c9, %c0_68, %c0_69] : memref<10x128x96xf32, #tpu.memory_space<vmem>>, vector<1x128x96xf32>
    %68 = vector.shape_cast %67 : vector<1x128x96xf32> to vector<128x96xf32>
    %cst_70 = arith.constant dense<0.000000e+00> : vector<32x96xf32>
    %69 = tpu.matmul %66, %68, %cst_70 {dimension_numbers = #tpu.dot_dimension_numbers<[1], [0], [0], [1], [0, 0, 1, 1], [], []>} : vector<32x128xf32>, vector<128x96xf32>, vector<32x96xf32> -> vector<32x96xf32>
    %70 = arith.addf %65, %69 : vector<32x96xf32>
    %c0_71 = arith.constant 0 : index
    %c0_72 = arith.constant 0 : index
    %71 = vector.load %arg5[%c0_71, %c0_72] : memref<1x96xf32, #tpu.memory_space<vmem>>, vector<1x96xf32>
    %72 = vector.broadcast %71 : vector<1x96xf32> to vector<32x96xf32>
    %73 = arith.addf %70, %72 : vector<32x96xf32>
    %74 = tpu.iota {dimensions = array<i32: 0>} : vector<32x4xi32>
    %c0_i32 = arith.constant 0 : i32
    %75 = vector.broadcast %c0_i32 : i32 to vector<32x4xi32>
    %76 = arith.cmpi eq, %74, %75 : vector<32x4xi32>
    %c1_i32 = arith.constant 1 : i32
    %77 = tpu.dynamic_rotate %1 by %c1_i32 dim 0 : vector<32x4xf32>, i32 -> vector<32x4xf32>
    %78 = arith.select %76, %1, %77 : vector<32x4xi1>, vector<32x4xf32>
    %c31_i32 = arith.constant 31 : i32
    %79 = vector.broadcast %c31_i32 : i32 to vector<32x4xi32>
    %80 = arith.cmpi eq, %74, %79 : vector<32x4xi32>
    %c31_i32_73 = arith.constant 31 : i32
    %81 = tpu.dynamic_rotate %1 by %c31_i32_73 dim 0 : vector<32x4xf32>, i32 -> vector<32x4xf32>
    %82 = arith.select %80, %1, %81 : vector<32x4xi1>, vector<32x4xf32>
    %83 = arith.maximumf %78, %82 : vector<32x4xf32>
    %84 = arith.maximumf %1, %83 : vector<32x4xf32>
    %c0_74 = arith.constant 0 : index
    %c0_75 = arith.constant 0 : index
    %85 = vector.load %arg6[%c0_74, %c0_75] : memref<4x32xf32, #tpu.memory_space<vmem>>, vector<4x32xf32>
    %cst_76 = arith.constant dense<0.000000e+00> : vector<32x32xf32>
    %86 = tpu.matmul %84, %85, %cst_76 {dimension_numbers = #tpu.dot_dimension_numbers<[1], [0], [0], [1], [0, 0, 1, 1], [], []>} : vector<32x4xf32>, vector<4x32xf32>, vector<32x32xf32> -> vector<32x32xf32>
    %c0_77 = arith.constant 0 : index
    %c0_78 = arith.constant 0 : index
    %87 = vector.load %arg7[%c0_77, %c0_78] : memref<1x32xf32, #tpu.memory_space<vmem>>, vector<1x32xf32>
    %88 = vector.broadcast %87 : vector<1x32xf32> to vector<32x32xf32>
    %89 = arith.addf %86, %88 : vector<32x32xf32>
    %c0_79 = arith.constant 0 : index
    %c0_80 = arith.constant 0 : index
    %90 = vector.load %arg8[%c0_79, %c0_80] : memref<1x128xf32, #tpu.memory_space<vmem>>, vector<1x128xf32>
    %c0_81 = arith.constant 0 : index
    %c0_82 = arith.constant 0 : index
    %91 = vector.load %arg9[%c0_81, %c0_82] : memref<1x128xf32, #tpu.memory_space<vmem>>, vector<1x128xf32>
    %92 = vector.extract_strided_slice %90 {offsets = [0, 0], sizes = [1, 96], strides = [1, 1]} : vector<1x128xf32> to vector<1x96xf32>
    %93 = vector.broadcast %92 : vector<1x96xf32> to vector<32x96xf32>
    %94 = arith.mulf %73, %93 : vector<32x96xf32>
    %95 = vector.extract_strided_slice %91 {offsets = [0, 0], sizes = [1, 96], strides = [1, 1]} : vector<1x128xf32> to vector<1x96xf32>
    %96 = vector.broadcast %95 : vector<1x96xf32> to vector<32x96xf32>
    %97 = arith.addf %94, %96 : vector<32x96xf32>
    %cst_83 = arith.constant 0.000000e+00 : f32
    %98 = vector.broadcast %cst_83 : f32 to vector<32x96xf32>
    %99 = arith.maximumf %97, %98 : vector<32x96xf32>
    %c0_84 = arith.constant 0 : index
    %c0_85 = arith.constant 0 : index
    %100 = vector.load %arg35[%c0_84, %c0_85] : memref<32x128xf32, #tpu.memory_space<vmem>>, vector<32x96xf32>
    tpu.vector_store %arg35[%c0_84, %c0_85], %99 {strides = array<i32>} : memref<32x128xf32, #tpu.memory_space<vmem>>, vector<32x96xf32>,
    %101 = vector.extract_strided_slice %90 {offsets = [0, 96], sizes = [1, 32], strides = [1, 1]} : vector<1x128xf32> to vector<1x32xf32>
    %102 = vector.broadcast %101 : vector<1x32xf32> to vector<32x32xf32>
    %103 = arith.mulf %89, %102 : vector<32x32xf32>
    %104 = vector.extract_strided_slice %91 {offsets = [0, 96], sizes = [1, 32], strides = [1, 1]} : vector<1x128xf32> to vector<1x32xf32>
    %105 = vector.broadcast %104 : vector<1x32xf32> to vector<32x32xf32>
    %106 = arith.addf %103, %105 : vector<32x32xf32>
    %cst_86 = arith.constant 0.000000e+00 : f32
    %107 = vector.broadcast %cst_86 : f32 to vector<32x32xf32>
    %108 = arith.maximumf %106, %107 : vector<32x32xf32>
    %c0_87 = arith.constant 0 : index
    %c96_88 = arith.constant 96 : index
    %109 = vector.load %arg35[%c0_87, %c96_88] : memref<32x128xf32, #tpu.memory_space<vmem>>, vector<32x32xf32>
    tpu.vector_store %arg35[%c0_87, %c96_88], %108 {strides = array<i32>} : memref<32x128xf32, #tpu.memory_space<vmem>>, vector<32x32xf32>,
    %c0_89 = arith.constant 0 : index
    %c0_90 = arith.constant 0 : index
    %110 = tpu.strided_load %arg35[%c0_89, %c0_90] {strides = array<i32: 2, 1>} : memref<32x128xf32, #tpu.memory_space<vmem>>, vector<16x128xf32>
    %c1_91 = arith.constant 1 : index
    %c0_92 = arith.constant 0 : index
    %111 = tpu.strided_load %arg35[%c1_91, %c0_92] {strides = array<i32: 2, 1>} : memref<32x128xf32, #tpu.memory_space<vmem>>, vector<16x128xf32>
    %112 = arith.maximumf %110, %111 : vector<16x128xf32>
    %c0_93 = arith.constant 0 : index
    %c0_94 = arith.constant 0 : index
    %113 = vector.load %arg10[%c0_93, %c0_94] : memref<128x32xf32, #tpu.memory_space<vmem>>, vector<128x32xf32>
    %cst_95 = arith.constant dense<0.000000e+00> : vector<16x32xf32>
    %114 = tpu.matmul %112, %113, %cst_95 {dimension_numbers = #tpu.dot_dimension_numbers<[1], [0], [0], [1], [0, 0, 1, 1], [], []>} : vector<16x128xf32>, vector<128x32xf32>, vector<16x32xf32> -> vector<16x32xf32>
    %c0_96 = arith.constant 0 : index
    %c0_97 = arith.constant 0 : index
    %115 = vector.load %arg11[%c0_96, %c0_97] : memref<1x32xf32, #tpu.memory_space<vmem>>, vector<1x32xf32>
    %116 = vector.broadcast %115 : vector<1x32xf32> to vector<16x32xf32>
    %117 = arith.addf %114, %116 : vector<16x32xf32>
    %cst_98 = arith.constant 0.000000e+00 : f32
    %118 = vector.broadcast %cst_98 : f32 to vector<24x32xf32>
    %c0_99 = arith.constant 0 : index
    %c0_100 = arith.constant 0 : index
    %119 = vector.load %arg33[%c0_99, %c0_100] : memref<80x32xf32, #tpu.memory_space<vmem>>, vector<24x32xf32>
    tpu.vector_store %arg33[%c0_99, %c0_100], %118 {strides = array<i32>} : memref<80x32xf32, #tpu.memory_space<vmem>>, vector<24x32xf32>,
    %c24_101 = arith.constant 24 : index
    %c0_102 = arith.constant 0 : index
    %120 = vector.load %arg33[%c24_101, %c0_102] : memref<80x32xf32, #tpu.memory_space<vmem>>, vector<16x32xf32>
    tpu.vector_store %arg33[%c24_101, %c0_102], %117 {strides = array<i32>} : memref<80x32xf32, #tpu.memory_space<vmem>>, vector<16x32xf32>,
    %cst_103 = arith.constant 0.000000e+00 : f32
    %121 = vector.broadcast %cst_103 : f32 to vector<24x32xf32>
    %c40_104 = arith.constant 40 : index
    %c0_105 = arith.constant 0 : index
    %122 = vector.load %arg33[%c40_104, %c0_105] : memref<80x32xf32, #tpu.memory_space<vmem>>, vector<24x32xf32>
    tpu.vector_store %arg33[%c40_104, %c0_105], %121 {strides = array<i32>} : memref<80x32xf32, #tpu.memory_space<vmem>>, vector<24x32xf32>,
    %c0_106 = arith.constant 0 : index
    %c0_107 = arith.constant 0 : index
    %123 = vector.load %arg33[%c0_106, %c0_107] : memref<80x32xf32, #tpu.memory_space<vmem>>, vector<56x32xf32>
    %c0_108 = arith.constant 0 : index
    %c0_109 = arith.constant 0 : index
    %124 = vector.load %arg34[%c0_108, %c0_109] : memref<72x128xf32, #tpu.memory_space<vmem>>, vector<56x32xf32>
    tpu.vector_store %arg34[%c0_108, %c0_109], %123 {strides = array<i32>} : memref<72x128xf32, #tpu.memory_space<vmem>>, vector<56x32xf32>,
    %c1_110 = arith.constant 1 : index
    %c0_111 = arith.constant 0 : index
    %125 = vector.load %arg33[%c1_110, %c0_111] : memref<80x32xf32, #tpu.memory_space<vmem>>, vector<56x32xf32>
    %c0_112 = arith.constant 0 : index
    %c32_113 = arith.constant 32 : index
    %126 = vector.load %arg34[%c0_112, %c32_113] : memref<72x128xf32, #tpu.memory_space<vmem>>, vector<56x32xf32>
    tpu.vector_store %arg34[%c0_112, %c32_113], %125 {strides = array<i32>} : memref<72x128xf32, #tpu.memory_space<vmem>>, vector<56x32xf32>,
    %c2_114 = arith.constant 2 : index
    %c0_115 = arith.constant 0 : index
    %127 = vector.load %arg33[%c2_114, %c0_115] : memref<80x32xf32, #tpu.memory_space<vmem>>, vector<56x32xf32>
    %c0_116 = arith.constant 0 : index
    %c64_117 = arith.constant 64 : index
    %128 = vector.load %arg34[%c0_116, %c64_117] : memref<72x128xf32, #tpu.memory_space<vmem>>, vector<56x32xf32>
    tpu.vector_store %arg34[%c0_116, %c64_117], %127 {strides = array<i32>} : memref<72x128xf32, #tpu.memory_space<vmem>>, vector<56x32xf32>,
    %c3_118 = arith.constant 3 : index
    %c0_119 = arith.constant 0 : index
    %129 = vector.load %arg33[%c3_118, %c0_119] : memref<80x32xf32, #tpu.memory_space<vmem>>, vector<56x32xf32>
    %c0_120 = arith.constant 0 : index
    %c96_121 = arith.constant 96 : index
    %130 = vector.load %arg34[%c0_120, %c96_121] : memref<72x128xf32, #tpu.memory_space<vmem>>, vector<56x32xf32>
    tpu.vector_store %arg34[%c0_120, %c96_121], %129 {strides = array<i32>} : memref<72x128xf32, #tpu.memory_space<vmem>>, vector<56x32xf32>,
    %cst_122 = arith.constant 0.000000e+00 : f32
    %131 = vector.broadcast %cst_122 : f32 to vector<16x96xf32>
    %c4_123 = arith.constant 4 : index
    %c0_124 = arith.constant 0 : index
    %132 = vector.load %arg34[%c4_123, %c0_124] : memref<72x128xf32, #tpu.memory_space<vmem>>, vector<16x128xf32>
    %c0_125 = arith.constant 0 : index
    %c0_126 = arith.constant 0 : index
    %c0_127 = arith.constant 0 : index
    %133 = vector.load %arg12[%c0_125, %c0_126, %c0_127] : memref<10x128x96xf32, #tpu.memory_space<vmem>>, vector<1x128x96xf32>
    %134 = vector.shape_cast %133 : vector<1x128x96xf32> to vector<128x96xf32>
    %cst_128 = arith.constant dense<0.000000e+00> : vector<16x96xf32>
    %135 = tpu.matmul %132, %134, %cst_128 {dimension_numbers = #tpu.dot_dimension_numbers<[1], [0], [0], [1], [0, 0, 1, 1], [], []>} : vector<16x128xf32>, vector<128x96xf32>, vector<16x96xf32> -> vector<16x96xf32>
    %136 = arith.addf %131, %135 : vector<16x96xf32>
    %c8_129 = arith.constant 8 : index
    %c0_130 = arith.constant 0 : index
    %137 = vector.load %arg34[%c8_129, %c0_130] : memref<72x128xf32, #tpu.memory_space<vmem>>, vector<16x128xf32>
    %c1_131 = arith.constant 1 : index
    %c0_132 = arith.constant 0 : index
    %c0_133 = arith.constant 0 : index
    %138 = vector.load %arg12[%c1_131, %c0_132, %c0_133] : memref<10x128x96xf32, #tpu.memory_space<vmem>>, vector<1x128x96xf32>
    %139 = vector.shape_cast %138 : vector<1x128x96xf32> to vector<128x96xf32>
    %cst_134 = arith.constant dense<0.000000e+00> : vector<16x96xf32>
    %140 = tpu.matmul %137, %139, %cst_134 {dimension_numbers = #tpu.dot_dimension_numbers<[1], [0], [0], [1], [0, 0, 1, 1], [], []>} : vector<16x128xf32>, vector<128x96xf32>, vector<16x96xf32> -> vector<16x96xf32>
    %141 = arith.addf %136, %140 : vector<16x96xf32>
    %c12_135 = arith.constant 12 : index
    %c0_136 = arith.constant 0 : index
    %142 = vector.load %arg34[%c12_135, %c0_136] : memref<72x128xf32, #tpu.memory_space<vmem>>, vector<16x128xf32>
    %c2_137 = arith.constant 2 : index
    %c0_138 = arith.constant 0 : index
    %c0_139 = arith.constant 0 : index
    %143 = vector.load %arg12[%c2_137, %c0_138, %c0_139] : memref<10x128x96xf32, #tpu.memory_space<vmem>>, vector<1x128x96xf32>
    %144 = vector.shape_cast %143 : vector<1x128x96xf32> to vector<128x96xf32>
    %cst_140 = arith.constant dense<0.000000e+00> : vector<16x96xf32>
    %145 = tpu.matmul %142, %144, %cst_140 {dimension_numbers = #tpu.dot_dimension_numbers<[1], [0], [0], [1], [0, 0, 1, 1], [], []>} : vector<16x128xf32>, vector<128x96xf32>, vector<16x96xf32> -> vector<16x96xf32>
    %146 = arith.addf %141, %145 : vector<16x96xf32>
    %c16_141 = arith.constant 16 : index
    %c0_142 = arith.constant 0 : index
    %147 = vector.load %arg34[%c16_141, %c0_142] : memref<72x128xf32, #tpu.memory_space<vmem>>, vector<16x128xf32>
    %c3_143 = arith.constant 3 : index
    %c0_144 = arith.constant 0 : index
    %c0_145 = arith.constant 0 : index
    %148 = vector.load %arg12[%c3_143, %c0_144, %c0_145] : memref<10x128x96xf32, #tpu.memory_space<vmem>>, vector<1x128x96xf32>
    %149 = vector.shape_cast %148 : vector<1x128x96xf32> to vector<128x96xf32>
    %cst_146 = arith.constant dense<0.000000e+00> : vector<16x96xf32>
    %150 = tpu.matmul %147, %149, %cst_146 {dimension_numbers = #tpu.dot_dimension_numbers<[1], [0], [0], [1], [0, 0, 1, 1], [], []>} : vector<16x128xf32>, vector<128x96xf32>, vector<16x96xf32> -> vector<16x96xf32>
    %151 = arith.addf %146, %150 : vector<16x96xf32>
    %c20_147 = arith.constant 20 : index
    %c0_148 = arith.constant 0 : index
    %152 = vector.load %arg34[%c20_147, %c0_148] : memref<72x128xf32, #tpu.memory_space<vmem>>, vector<16x128xf32>
    %c4_149 = arith.constant 4 : index
    %c0_150 = arith.constant 0 : index
    %c0_151 = arith.constant 0 : index
    %153 = vector.load %arg12[%c4_149, %c0_150, %c0_151] : memref<10x128x96xf32, #tpu.memory_space<vmem>>, vector<1x128x96xf32>
    %154 = vector.shape_cast %153 : vector<1x128x96xf32> to vector<128x96xf32>
    %cst_152 = arith.constant dense<0.000000e+00> : vector<16x96xf32>
    %155 = tpu.matmul %152, %154, %cst_152 {dimension_numbers = #tpu.dot_dimension_numbers<[1], [0], [0], [1], [0, 0, 1, 1], [], []>} : vector<16x128xf32>, vector<128x96xf32>, vector<16x96xf32> -> vector<16x96xf32>
    %156 = arith.addf %151, %155 : vector<16x96xf32>
    %c24_153 = arith.constant 24 : index
    %c0_154 = arith.constant 0 : index
    %157 = vector.load %arg34[%c24_153, %c0_154] : memref<72x128xf32, #tpu.memory_space<vmem>>, vector<16x128xf32>
    %c5_155 = arith.constant 5 : index
    %c0_156 = arith.constant 0 : index
    %c0_157 = arith.constant 0 : index
    %158 = vector.load %arg12[%c5_155, %c0_156, %c0_157] : memref<10x128x96xf32, #tpu.memory_space<vmem>>, vector<1x128x96xf32>
    %159 = vector.shape_cast %158 : vector<1x128x96xf32> to vector<128x96xf32>
    %cst_158 = arith.constant dense<0.000000e+00> : vector<16x96xf32>
    %160 = tpu.matmul %157, %159, %cst_158 {dimension_numbers = #tpu.dot_dimension_numbers<[1], [0], [0], [1], [0, 0, 1, 1], [], []>} : vector<16x128xf32>, vector<128x96xf32>, vector<16x96xf32> -> vector<16x96xf32>
    %161 = arith.addf %156, %160 : vector<16x96xf32>
    %c28_159 = arith.constant 28 : index
    %c0_160 = arith.constant 0 : index
    %162 = vector.load %arg34[%c28_159, %c0_160] : memref<72x128xf32, #tpu.memory_space<vmem>>, vector<16x128xf32>
    %c6_161 = arith.constant 6 : index
    %c0_162 = arith.constant 0 : index
    %c0_163 = arith.constant 0 : index
    %163 = vector.load %arg12[%c6_161, %c0_162, %c0_163] : memref<10x128x96xf32, #tpu.memory_space<vmem>>, vector<1x128x96xf32>
    %164 = vector.shape_cast %163 : vector<1x128x96xf32> to vector<128x96xf32>
    %cst_164 = arith.constant dense<0.000000e+00> : vector<16x96xf32>
    %165 = tpu.matmul %162, %164, %cst_164 {dimension_numbers = #tpu.dot_dimension_numbers<[1], [0], [0], [1], [0, 0, 1, 1], [], []>} : vector<16x128xf32>, vector<128x96xf32>, vector<16x96xf32> -> vector<16x96xf32>
    %166 = arith.addf %161, %165 : vector<16x96xf32>
    %c32_165 = arith.constant 32 : index
    %c0_166 = arith.constant 0 : index
    %167 = vector.load %arg34[%c32_165, %c0_166] : memref<72x128xf32, #tpu.memory_space<vmem>>, vector<16x128xf32>
    %c7_167 = arith.constant 7 : index
    %c0_168 = arith.constant 0 : index
    %c0_169 = arith.constant 0 : index
    %168 = vector.load %arg12[%c7_167, %c0_168, %c0_169] : memref<10x128x96xf32, #tpu.memory_space<vmem>>, vector<1x128x96xf32>
    %169 = vector.shape_cast %168 : vector<1x128x96xf32> to vector<128x96xf32>
    %cst_170 = arith.constant dense<0.000000e+00> : vector<16x96xf32>
    %170 = tpu.matmul %167, %169, %cst_170 {dimension_numbers = #tpu.dot_dimension_numbers<[1], [0], [0], [1], [0, 0, 1, 1], [], []>} : vector<16x128xf32>, vector<128x96xf32>, vector<16x96xf32> -> vector<16x96xf32>
    %171 = arith.addf %166, %170 : vector<16x96xf32>
    %c36_171 = arith.constant 36 : index
    %c0_172 = arith.constant 0 : index
    %172 = vector.load %arg34[%c36_171, %c0_172] : memref<72x128xf32, #tpu.memory_space<vmem>>, vector<16x128xf32>
    %c8_173 = arith.constant 8 : index
    %c0_174 = arith.constant 0 : index
    %c0_175 = arith.constant 0 : index
    %173 = vector.load %arg12[%c8_173, %c0_174, %c0_175] : memref<10x128x96xf32, #tpu.memory_space<vmem>>, vector<1x128x96xf32>
    %174 = vector.shape_cast %173 : vector<1x128x96xf32> to vector<128x96xf32>
    %cst_176 = arith.constant dense<0.000000e+00> : vector<16x96xf32>
    %175 = tpu.matmul %172, %174, %cst_176 {dimension_numbers = #tpu.dot_dimension_numbers<[1], [0], [0], [1], [0, 0, 1, 1], [], []>} : vector<16x128xf32>, vector<128x96xf32>, vector<16x96xf32> -> vector<16x96xf32>
    %176 = arith.addf %171, %175 : vector<16x96xf32>
    %c40_177 = arith.constant 40 : index
    %c0_178 = arith.constant 0 : index
    %177 = vector.load %arg34[%c40_177, %c0_178] : memref<72x128xf32, #tpu.memory_space<vmem>>, vector<16x128xf32>
    %c9_179 = arith.constant 9 : index
    %c0_180 = arith.constant 0 : index
    %c0_181 = arith.constant 0 : index
    %178 = vector.load %arg12[%c9_179, %c0_180, %c0_181] : memref<10x128x96xf32, #tpu.memory_space<vmem>>, vector<1x128x96xf32>
    %179 = vector.shape_cast %178 : vector<1x128x96xf32> to vector<128x96xf32>
    %cst_182 = arith.constant dense<0.000000e+00> : vector<16x96xf32>
    %180 = tpu.matmul %177, %179, %cst_182 {dimension_numbers = #tpu.dot_dimension_numbers<[1], [0], [0], [1], [0, 0, 1, 1], [], []>} : vector<16x128xf32>, vector<128x96xf32>, vector<16x96xf32> -> vector<16x96xf32>
    %181 = arith.addf %176, %180 : vector<16x96xf32>
    %c0_183 = arith.constant 0 : index
    %c0_184 = arith.constant 0 : index
    %182 = vector.load %arg13[%c0_183, %c0_184] : memref<1x96xf32, #tpu.memory_space<vmem>>, vector<1x96xf32>
    %183 = vector.broadcast %182 : vector<1x96xf32> to vector<16x96xf32>
    %184 = arith.addf %181, %183 : vector<16x96xf32>
    %185 = tpu.iota {dimensions = array<i32: 0>} : vector<16x128xi32>
    %c0_i32_185 = arith.constant 0 : i32
    %186 = vector.broadcast %c0_i32_185 : i32 to vector<16x128xi32>
    %187 = arith.cmpi eq, %185, %186 : vector<16x128xi32>
    %c1_i32_186 = arith.constant 1 : i32
    %188 = tpu.dynamic_rotate %112 by %c1_i32_186 dim 0 : vector<16x128xf32>, i32 -> vector<16x128xf32>
    %189 = arith.select %187, %112, %188 : vector<16x128xi1>, vector<16x128xf32>
    %c15_i32 = arith.constant 15 : i32
    %190 = vector.broadcast %c15_i32 : i32 to vector<16x128xi32>
    %191 = arith.cmpi eq, %185, %190 : vector<16x128xi32>
    %c15_i32_187 = arith.constant 15 : i32
    %192 = tpu.dynamic_rotate %112 by %c15_i32_187 dim 0 : vector<16x128xf32>, i32 -> vector<16x128xf32>
    %193 = arith.select %191, %112, %192 : vector<16x128xi1>, vector<16x128xf32>
    %194 = arith.maximumf %189, %193 : vector<16x128xf32>
    %195 = arith.maximumf %112, %194 : vector<16x128xf32>
    %c0_188 = arith.constant 0 : index
    %c0_189 = arith.constant 0 : index
    %196 = vector.load %arg14[%c0_188, %c0_189] : memref<128x32xf32, #tpu.memory_space<vmem>>, vector<128x32xf32>
    %cst_190 = arith.constant dense<0.000000e+00> : vector<16x32xf32>
    %197 = tpu.matmul %195, %196, %cst_190 {dimension_numbers = #tpu.dot_dimension_numbers<[1], [0], [0], [1], [0, 0, 1, 1], [], []>} : vector<16x128xf32>, vector<128x32xf32>, vector<16x32xf32> -> vector<16x32xf32>
    %c0_191 = arith.constant 0 : index
    %c0_192 = arith.constant 0 : index
    %198 = vector.load %arg15[%c0_191, %c0_192] : memref<1x32xf32, #tpu.memory_space<vmem>>, vector<1x32xf32>
    %199 = vector.broadcast %198 : vector<1x32xf32> to vector<16x32xf32>
    %200 = arith.addf %197, %199 : vector<16x32xf32>
    %c0_193 = arith.constant 0 : index
    %c0_194 = arith.constant 0 : index
    %201 = vector.load %arg16[%c0_193, %c0_194] : memref<1x128xf32, #tpu.memory_space<vmem>>, vector<1x128xf32>
    %c0_195 = arith.constant 0 : index
    %c0_196 = arith.constant 0 : index
    %202 = vector.load %arg17[%c0_195, %c0_196] : memref<1x128xf32, #tpu.memory_space<vmem>>, vector<1x128xf32>
    %203 = vector.extract_strided_slice %201 {offsets = [0, 0], sizes = [1, 96], strides = [1, 1]} : vector<1x128xf32> to vector<1x96xf32>
    %204 = vector.broadcast %203 : vector<1x96xf32> to vector<16x96xf32>
    %205 = arith.mulf %184, %204 : vector<16x96xf32>
    %206 = vector.extract_strided_slice %202 {offsets = [0, 0], sizes = [1, 96], strides = [1, 1]} : vector<1x128xf32> to vector<1x96xf32>
    %207 = vector.broadcast %206 : vector<1x96xf32> to vector<16x96xf32>
    %208 = arith.addf %205, %207 : vector<16x96xf32>
    %cst_197 = arith.constant 0.000000e+00 : f32
    %209 = vector.broadcast %cst_197 : f32 to vector<16x96xf32>
    %210 = arith.maximumf %208, %209 : vector<16x96xf32>
    %c0_198 = arith.constant 0 : index
    %c0_199 = arith.constant 0 : index
    %211 = vector.load %arg35[%c0_198, %c0_199] : memref<32x128xf32, #tpu.memory_space<vmem>>, vector<16x96xf32>
    tpu.vector_store %arg35[%c0_198, %c0_199], %210 {strides = array<i32>} : memref<32x128xf32, #tpu.memory_space<vmem>>, vector<16x96xf32>,
    %212 = vector.extract_strided_slice %201 {offsets = [0, 96], sizes = [1, 32], strides = [1, 1]} : vector<1x128xf32> to vector<1x32xf32>
    %213 = vector.broadcast %212 : vector<1x32xf32> to vector<16x32xf32>
    %214 = arith.mulf %200, %213 : vector<16x32xf32>
    %215 = vector.extract_strided_slice %202 {offsets = [0, 96], sizes = [1, 32], strides = [1, 1]} : vector<1x128xf32> to vector<1x32xf32>
    %216 = vector.broadcast %215 : vector<1x32xf32> to vector<16x32xf32>
    %217 = arith.addf %214, %216 : vector<16x32xf32>
    %cst_200 = arith.constant 0.000000e+00 : f32
    %218 = vector.broadcast %cst_200 : f32 to vector<16x32xf32>
    %219 = arith.maximumf %217, %218 : vector<16x32xf32>
    %c0_201 = arith.constant 0 : index
    %c96_202 = arith.constant 96 : index
    %220 = vector.load %arg35[%c0_201, %c96_202] : memref<32x128xf32, #tpu.memory_space<vmem>>, vector<16x32xf32>
    tpu.vector_store %arg35[%c0_201, %c96_202], %219 {strides = array<i32>} : memref<32x128xf32, #tpu.memory_space<vmem>>, vector<16x32xf32>,
    %c0_203 = arith.constant 0 : index
    %c0_204 = arith.constant 0 : index
    %221 = tpu.strided_load %arg35[%c0_203, %c0_204] {strides = array<i32: 2, 1>} : memref<32x128xf32, #tpu.memory_space<vmem>>, vector<8x128xf32>
    %c1_205 = arith.constant 1 : index
    %c0_206 = arith.constant 0 : index
    %222 = tpu.strided_load %arg35[%c1_205, %c0_206] {strides = array<i32: 2, 1>} : memref<32x128xf32, #tpu.memory_space<vmem>>, vector<8x128xf32>
    %223 = arith.maximumf %221, %222 : vector<8x128xf32>
    %c0_207 = arith.constant 0 : index
    %c0_208 = arith.constant 0 : index
    %224 = vector.load %arg18[%c0_207, %c0_208] : memref<128x32xf32, #tpu.memory_space<vmem>>, vector<128x32xf32>
    %cst_209 = arith.constant dense<0.000000e+00> : vector<8x32xf32>
    %225 = tpu.matmul %223, %224, %cst_209 {dimension_numbers = #tpu.dot_dimension_numbers<[1], [0], [0], [1], [0, 0, 1, 1], [], []>} : vector<8x128xf32>, vector<128x32xf32>, vector<8x32xf32> -> vector<8x32xf32>
    %c0_210 = arith.constant 0 : index
    %c0_211 = arith.constant 0 : index
    %226 = vector.load %arg19[%c0_210, %c0_211] : memref<1x32xf32, #tpu.memory_space<vmem>>, vector<1x32xf32>
    %227 = vector.broadcast %226 : vector<1x32xf32> to vector<8x32xf32>
    %228 = arith.addf %225, %227 : vector<8x32xf32>
    %cst_212 = arith.constant 0.000000e+00 : f32
    %229 = vector.broadcast %cst_212 : f32 to vector<24x32xf32>
    %c0_213 = arith.constant 0 : index
    %c0_214 = arith.constant 0 : index
    %230 = vector.load %arg33[%c0_213, %c0_214] : memref<80x32xf32, #tpu.memory_space<vmem>>, vector<24x32xf32>
    tpu.vector_store %arg33[%c0_213, %c0_214], %229 {strides = array<i32>} : memref<80x32xf32, #tpu.memory_space<vmem>>, vector<24x32xf32>,
    %c24_215 = arith.constant 24 : index
    %c0_216 = arith.constant 0 : index
    %231 = vector.load %arg33[%c24_215, %c0_216] : memref<80x32xf32, #tpu.memory_space<vmem>>, vector<8x32xf32>
    tpu.vector_store %arg33[%c24_215, %c0_216], %228 {strides = array<i32>} : memref<80x32xf32, #tpu.memory_space<vmem>>, vector<8x32xf32>,
    %cst_217 = arith.constant 0.000000e+00 : f32
    %232 = vector.broadcast %cst_217 : f32 to vector<24x32xf32>
    %c32_218 = arith.constant 32 : index
    %c0_219 = arith.constant 0 : index
    %233 = vector.load %arg33[%c32_218, %c0_219] : memref<80x32xf32, #tpu.memory_space<vmem>>, vector<24x32xf32>
    tpu.vector_store %arg33[%c32_218, %c0_219], %232 {strides = array<i32>} : memref<80x32xf32, #tpu.memory_space<vmem>>, vector<24x32xf32>,
    %c0_220 = arith.constant 0 : index
    %c0_221 = arith.constant 0 : index
    %234 = vector.load %arg33[%c0_220, %c0_221] : memref<80x32xf32, #tpu.memory_space<vmem>>, vector<48x32xf32>
    %c0_222 = arith.constant 0 : index
    %c0_223 = arith.constant 0 : index
    %235 = vector.load %arg34[%c0_222, %c0_223] : memref<72x128xf32, #tpu.memory_space<vmem>>, vector<48x32xf32>
    tpu.vector_store %arg34[%c0_222, %c0_223], %234 {strides = array<i32>} : memref<72x128xf32, #tpu.memory_space<vmem>>, vector<48x32xf32>,
    %c1_224 = arith.constant 1 : index
    %c0_225 = arith.constant 0 : index
    %236 = vector.load %arg33[%c1_224, %c0_225] : memref<80x32xf32, #tpu.memory_space<vmem>>, vector<48x32xf32>
    %c0_226 = arith.constant 0 : index
    %c32_227 = arith.constant 32 : index
    %237 = vector.load %arg34[%c0_226, %c32_227] : memref<72x128xf32, #tpu.memory_space<vmem>>, vector<48x32xf32>
    tpu.vector_store %arg34[%c0_226, %c32_227], %236 {strides = array<i32>} : memref<72x128xf32, #tpu.memory_space<vmem>>, vector<48x32xf32>,
    %c2_228 = arith.constant 2 : index
    %c0_229 = arith.constant 0 : index
    %238 = vector.load %arg33[%c2_228, %c0_229] : memref<80x32xf32, #tpu.memory_space<vmem>>, vector<48x32xf32>
    %c0_230 = arith.constant 0 : index
    %c64_231 = arith.constant 64 : index
    %239 = vector.load %arg34[%c0_230, %c64_231] : memref<72x128xf32, #tpu.memory_space<vmem>>, vector<48x32xf32>
    tpu.vector_store %arg34[%c0_230, %c64_231], %238 {strides = array<i32>} : memref<72x128xf32, #tpu.memory_space<vmem>>, vector<48x32xf32>,
    %c3_232 = arith.constant 3 : index
    %c0_233 = arith.constant 0 : index
    %240 = vector.load %arg33[%c3_232, %c0_233] : memref<80x32xf32, #tpu.memory_space<vmem>>, vector<48x32xf32>
    %c0_234 = arith.constant 0 : index
    %c96_235 = arith.constant 96 : index
    %241 = vector.load %arg34[%c0_234, %c96_235] : memref<72x128xf32, #tpu.memory_space<vmem>>, vector<48x32xf32>
    tpu.vector_store %arg34[%c0_234, %c96_235], %240 {strides = array<i32>} : memref<72x128xf32, #tpu.memory_space<vmem>>, vector<48x32xf32>,
    %cst_236 = arith.constant 0.000000e+00 : f32
    %242 = vector.broadcast %cst_236 : f32 to vector<8x96xf32>
    %c4_237 = arith.constant 4 : index
    %c0_238 = arith.constant 0 : index
    %243 = vector.load %arg34[%c4_237, %c0_238] : memref<72x128xf32, #tpu.memory_space<vmem>>, vector<8x128xf32>
    %c0_239 = arith.constant 0 : index
    %c0_240 = arith.constant 0 : index
    %c0_241 = arith.constant 0 : index
    %244 = vector.load %arg20[%c0_239, %c0_240, %c0_241] : memref<10x128x96xf32, #tpu.memory_space<vmem>>, vector<1x128x96xf32>
    %245 = vector.shape_cast %244 : vector<1x128x96xf32> to vector<128x96xf32>
    %cst_242 = arith.constant dense<0.000000e+00> : vector<8x96xf32>
    %246 = tpu.matmul %243, %245, %cst_242 {dimension_numbers = #tpu.dot_dimension_numbers<[1], [0], [0], [1], [0, 0, 1, 1], [], []>} : vector<8x128xf32>, vector<128x96xf32>, vector<8x96xf32> -> vector<8x96xf32>
    %247 = arith.addf %242, %246 : vector<8x96xf32>
    %c8_243 = arith.constant 8 : index
    %c0_244 = arith.constant 0 : index
    %248 = vector.load %arg34[%c8_243, %c0_244] : memref<72x128xf32, #tpu.memory_space<vmem>>, vector<8x128xf32>
    %c1_245 = arith.constant 1 : index
    %c0_246 = arith.constant 0 : index
    %c0_247 = arith.constant 0 : index
    %249 = vector.load %arg20[%c1_245, %c0_246, %c0_247] : memref<10x128x96xf32, #tpu.memory_space<vmem>>, vector<1x128x96xf32>
    %250 = vector.shape_cast %249 : vector<1x128x96xf32> to vector<128x96xf32>
    %cst_248 = arith.constant dense<0.000000e+00> : vector<8x96xf32>
    %251 = tpu.matmul %248, %250, %cst_248 {dimension_numbers = #tpu.dot_dimension_numbers<[1], [0], [0], [1], [0, 0, 1, 1], [], []>} : vector<8x128xf32>, vector<128x96xf32>, vector<8x96xf32> -> vector<8x96xf32>
    %252 = arith.addf %247, %251 : vector<8x96xf32>
    %c12_249 = arith.constant 12 : index
    %c0_250 = arith.constant 0 : index
    %253 = vector.load %arg34[%c12_249, %c0_250] : memref<72x128xf32, #tpu.memory_space<vmem>>, vector<8x128xf32>
    %c2_251 = arith.constant 2 : index
    %c0_252 = arith.constant 0 : index
    %c0_253 = arith.constant 0 : index
    %254 = vector.load %arg20[%c2_251, %c0_252, %c0_253] : memref<10x128x96xf32, #tpu.memory_space<vmem>>, vector<1x128x96xf32>
    %255 = vector.shape_cast %254 : vector<1x128x96xf32> to vector<128x96xf32>
    %cst_254 = arith.constant dense<0.000000e+00> : vector<8x96xf32>
    %256 = tpu.matmul %253, %255, %cst_254 {dimension_numbers = #tpu.dot_dimension_numbers<[1], [0], [0], [1], [0, 0, 1, 1], [], []>} : vector<8x128xf32>, vector<128x96xf32>, vector<8x96xf32> -> vector<8x96xf32>
    %257 = arith.addf %252, %256 : vector<8x96xf32>
    %c16_255 = arith.constant 16 : index
    %c0_256 = arith.constant 0 : index
    %258 = vector.load %arg34[%c16_255, %c0_256] : memref<72x128xf32, #tpu.memory_space<vmem>>, vector<8x128xf32>
    %c3_257 = arith.constant 3 : index
    %c0_258 = arith.constant 0 : index
    %c0_259 = arith.constant 0 : index
    %259 = vector.load %arg20[%c3_257, %c0_258, %c0_259] : memref<10x128x96xf32, #tpu.memory_space<vmem>>, vector<1x128x96xf32>
    %260 = vector.shape_cast %259 : vector<1x128x96xf32> to vector<128x96xf32>
    %cst_260 = arith.constant dense<0.000000e+00> : vector<8x96xf32>
    %261 = tpu.matmul %258, %260, %cst_260 {dimension_numbers = #tpu.dot_dimension_numbers<[1], [0], [0], [1], [0, 0, 1, 1], [], []>} : vector<8x128xf32>, vector<128x96xf32>, vector<8x96xf32> -> vector<8x96xf32>
    %262 = arith.addf %257, %261 : vector<8x96xf32>
    %c20_261 = arith.constant 20 : index
    %c0_262 = arith.constant 0 : index
    %263 = vector.load %arg34[%c20_261, %c0_262] : memref<72x128xf32, #tpu.memory_space<vmem>>, vector<8x128xf32>
    %c4_263 = arith.constant 4 : index
    %c0_264 = arith.constant 0 : index
    %c0_265 = arith.constant 0 : index
    %264 = vector.load %arg20[%c4_263, %c0_264, %c0_265] : memref<10x128x96xf32, #tpu.memory_space<vmem>>, vector<1x128x96xf32>
    %265 = vector.shape_cast %264 : vector<1x128x96xf32> to vector<128x96xf32>
    %cst_266 = arith.constant dense<0.000000e+00> : vector<8x96xf32>
    %266 = tpu.matmul %263, %265, %cst_266 {dimension_numbers = #tpu.dot_dimension_numbers<[1], [0], [0], [1], [0, 0, 1, 1], [], []>} : vector<8x128xf32>, vector<128x96xf32>, vector<8x96xf32> -> vector<8x96xf32>
    %267 = arith.addf %262, %266 : vector<8x96xf32>
    %c24_267 = arith.constant 24 : index
    %c0_268 = arith.constant 0 : index
    %268 = vector.load %arg34[%c24_267, %c0_268] : memref<72x128xf32, #tpu.memory_space<vmem>>, vector<8x128xf32>
    %c5_269 = arith.constant 5 : index
    %c0_270 = arith.constant 0 : index
    %c0_271 = arith.constant 0 : index
    %269 = vector.load %arg20[%c5_269, %c0_270, %c0_271] : memref<10x128x96xf32, #tpu.memory_space<vmem>>, vector<1x128x96xf32>
    %270 = vector.shape_cast %269 : vector<1x128x96xf32> to vector<128x96xf32>
    %cst_272 = arith.constant dense<0.000000e+00> : vector<8x96xf32>
    %271 = tpu.matmul %268, %270, %cst_272 {dimension_numbers = #tpu.dot_dimension_numbers<[1], [0], [0], [1], [0, 0, 1, 1], [], []>} : vector<8x128xf32>, vector<128x96xf32>, vector<8x96xf32> -> vector<8x96xf32>
    %272 = arith.addf %267, %271 : vector<8x96xf32>
    %c28_273 = arith.constant 28 : index
    %c0_274 = arith.constant 0 : index
    %273 = vector.load %arg34[%c28_273, %c0_274] : memref<72x128xf32, #tpu.memory_space<vmem>>, vector<8x128xf32>
    %c6_275 = arith.constant 6 : index
    %c0_276 = arith.constant 0 : index
    %c0_277 = arith.constant 0 : index
    %274 = vector.load %arg20[%c6_275, %c0_276, %c0_277] : memref<10x128x96xf32, #tpu.memory_space<vmem>>, vector<1x128x96xf32>
    %275 = vector.shape_cast %274 : vector<1x128x96xf32> to vector<128x96xf32>
    %cst_278 = arith.constant dense<0.000000e+00> : vector<8x96xf32>
    %276 = tpu.matmul %273, %275, %cst_278 {dimension_numbers = #tpu.dot_dimension_numbers<[1], [0], [0], [1], [0, 0, 1, 1], [], []>} : vector<8x128xf32>, vector<128x96xf32>, vector<8x96xf32> -> vector<8x96xf32>
    %277 = arith.addf %272, %276 : vector<8x96xf32>
    %c32_279 = arith.constant 32 : index
    %c0_280 = arith.constant 0 : index
    %278 = vector.load %arg34[%c32_279, %c0_280] : memref<72x128xf32, #tpu.memory_space<vmem>>, vector<8x128xf32>
    %c7_281 = arith.constant 7 : index
    %c0_282 = arith.constant 0 : index
    %c0_283 = arith.constant 0 : index
    %279 = vector.load %arg20[%c7_281, %c0_282, %c0_283] : memref<10x128x96xf32, #tpu.memory_space<vmem>>, vector<1x128x96xf32>
    %280 = vector.shape_cast %279 : vector<1x128x96xf32> to vector<128x96xf32>
    %cst_284 = arith.constant dense<0.000000e+00> : vector<8x96xf32>
    %281 = tpu.matmul %278, %280, %cst_284 {dimension_numbers = #tpu.dot_dimension_numbers<[1], [0], [0], [1], [0, 0, 1, 1], [], []>} : vector<8x128xf32>, vector<128x96xf32>, vector<8x96xf32> -> vector<8x96xf32>
    %282 = arith.addf %277, %281 : vector<8x96xf32>
    %c36_285 = arith.constant 36 : index
    %c0_286 = arith.constant 0 : index
    %283 = vector.load %arg34[%c36_285, %c0_286] : memref<72x128xf32, #tpu.memory_space<vmem>>, vector<8x128xf32>
    %c8_287 = arith.constant 8 : index
    %c0_288 = arith.constant 0 : index
    %c0_289 = arith.constant 0 : index
    %284 = vector.load %arg20[%c8_287, %c0_288, %c0_289] : memref<10x128x96xf32, #tpu.memory_space<vmem>>, vector<1x128x96xf32>
    %285 = vector.shape_cast %284 : vector<1x128x96xf32> to vector<128x96xf32>
    %cst_290 = arith.constant dense<0.000000e+00> : vector<8x96xf32>
    %286 = tpu.matmul %283, %285, %cst_290 {dimension_numbers = #tpu.dot_dimension_numbers<[1], [0], [0], [1], [0, 0, 1, 1], [], []>} : vector<8x128xf32>, vector<128x96xf32>, vector<8x96xf32> -> vector<8x96xf32>
    %287 = arith.addf %282, %286 : vector<8x96xf32>
    %c40_291 = arith.constant 40 : index
    %c0_292 = arith.constant 0 : index
    %288 = vector.load %arg34[%c40_291, %c0_292] : memref<72x128xf32, #tpu.memory_space<vmem>>, vector<8x128xf32>
    %c9_293 = arith.constant 9 : index
    %c0_294 = arith.constant 0 : index
    %c0_295 = arith.constant 0 : index
    %289 = vector.load %arg20[%c9_293, %c0_294, %c0_295] : memref<10x128x96xf32, #tpu.memory_space<vmem>>, vector<1x128x96xf32>
    %290 = vector.shape_cast %289 : vector<1x128x96xf32> to vector<128x96xf32>
    %cst_296 = arith.constant dense<0.000000e+00> : vector<8x96xf32>
    %291 = tpu.matmul %288, %290, %cst_296 {dimension_numbers = #tpu.dot_dimension_numbers<[1], [0], [0], [1], [0, 0, 1, 1], [], []>} : vector<8x128xf32>, vector<128x96xf32>, vector<8x96xf32> -> vector<8x96xf32>
    %292 = arith.addf %287, %291 : vector<8x96xf32>
    %c0_297 = arith.constant 0 : index
    %c0_298 = arith.constant 0 : index
    %293 = vector.load %arg21[%c0_297, %c0_298] : memref<1x96xf32, #tpu.memory_space<vmem>>, vector<1x96xf32>
    %294 = vector.broadcast %293 : vector<1x96xf32> to vector<8x96xf32>
    %295 = arith.addf %292, %294 : vector<8x96xf32>
    %296 = tpu.iota {dimensions = array<i32: 0>} : vector<8x128xi32>
    %c0_i32_299 = arith.constant 0 : i32
    %297 = vector.broadcast %c0_i32_299 : i32 to vector<8x128xi32>
    %298 = arith.cmpi eq, %296, %297 : vector<8x128xi32>
    %c1_i32_300 = arith.constant 1 : i32
    %299 = tpu.dynamic_rotate %223 by %c1_i32_300 dim 0 : vector<8x128xf32>, i32 -> vector<8x128xf32>
    %300 = arith.select %298, %223, %299 : vector<8x128xi1>, vector<8x128xf32>
    %c7_i32 = arith.constant 7 : i32
    %301 = vector.broadcast %c7_i32 : i32 to vector<8x128xi32>
    %302 = arith.cmpi eq, %296, %301 : vector<8x128xi32>
    %c7_i32_301 = arith.constant 7 : i32
    %303 = tpu.dynamic_rotate %223 by %c7_i32_301 dim 0 : vector<8x128xf32>, i32 -> vector<8x128xf32>
    %304 = arith.select %302, %223, %303 : vector<8x128xi1>, vector<8x128xf32>
    %305 = arith.maximumf %300, %304 : vector<8x128xf32>
    %306 = arith.maximumf %223, %305 : vector<8x128xf32>
    %c0_302 = arith.constant 0 : index
    %c0_303 = arith.constant 0 : index
    %307 = vector.load %arg22[%c0_302, %c0_303] : memref<128x32xf32, #tpu.memory_space<vmem>>, vector<128x32xf32>
    %cst_304 = arith.constant dense<0.000000e+00> : vector<8x32xf32>
    %308 = tpu.matmul %306, %307, %cst_304 {dimension_numbers = #tpu.dot_dimension_numbers<[1], [0], [0], [1], [0, 0, 1, 1], [], []>} : vector<8x128xf32>, vector<128x32xf32>, vector<8x32xf32> -> vector<8x32xf32>
    %c0_305 = arith.constant 0 : index
    %c0_306 = arith.constant 0 : index
    %309 = vector.load %arg23[%c0_305, %c0_306] : memref<1x32xf32, #tpu.memory_space<vmem>>, vector<1x32xf32>
    %310 = vector.broadcast %309 : vector<1x32xf32> to vector<8x32xf32>
    %311 = arith.addf %308, %310 : vector<8x32xf32>
    %c0_307 = arith.constant 0 : index
    %c0_308 = arith.constant 0 : index
    %312 = vector.load %arg24[%c0_307, %c0_308] : memref<1x128xf32, #tpu.memory_space<vmem>>, vector<1x128xf32>
    %c0_309 = arith.constant 0 : index
    %c0_310 = arith.constant 0 : index
    %313 = vector.load %arg25[%c0_309, %c0_310] : memref<1x128xf32, #tpu.memory_space<vmem>>, vector<1x128xf32>
    %314 = vector.extract_strided_slice %312 {offsets = [0, 0], sizes = [1, 96], strides = [1, 1]} : vector<1x128xf32> to vector<1x96xf32>
    %315 = vector.broadcast %314 : vector<1x96xf32> to vector<8x96xf32>
    %316 = arith.mulf %295, %315 : vector<8x96xf32>
    %317 = vector.extract_strided_slice %313 {offsets = [0, 0], sizes = [1, 96], strides = [1, 1]} : vector<1x128xf32> to vector<1x96xf32>
    %318 = vector.broadcast %317 : vector<1x96xf32> to vector<8x96xf32>
    %319 = arith.addf %316, %318 : vector<8x96xf32>
    %cst_311 = arith.constant 0.000000e+00 : f32
    %320 = vector.broadcast %cst_311 : f32 to vector<8x96xf32>
    %321 = arith.maximumf %319, %320 : vector<8x96xf32>
    %c0_312 = arith.constant 0 : index
    %c0_313 = arith.constant 0 : index
    %322 = vector.load %arg35[%c0_312, %c0_313] : memref<32x128xf32, #tpu.memory_space<vmem>>, vector<8x96xf32>
    tpu.vector_store %arg35[%c0_312, %c0_313], %321 {strides = array<i32>} : memref<32x128xf32, #tpu.memory_space<vmem>>, vector<8x96xf32>,
    %323 = vector.extract_strided_slice %312 {offsets = [0, 96], sizes = [1, 32], strides = [1, 1]} : vector<1x128xf32> to vector<1x32xf32>
    %324 = vector.broadcast %323 : vector<1x32xf32> to vector<8x32xf32>
    %325 = arith.mulf %311, %324 : vector<8x32xf32>
    %326 = vector.extract_strided_slice %313 {offsets = [0, 96], sizes = [1, 32], strides = [1, 1]} : vector<1x128xf32> to vector<1x32xf32>
    %327 = vector.broadcast %326 : vector<1x32xf32> to vector<8x32xf32>
    %328 = arith.addf %325, %327 : vector<8x32xf32>
    %cst_314 = arith.constant 0.000000e+00 : f32
    %329 = vector.broadcast %cst_314 : f32 to vector<8x32xf32>
    %330 = arith.maximumf %328, %329 : vector<8x32xf32>
    %c0_315 = arith.constant 0 : index
    %c96_316 = arith.constant 96 : index
    %331 = vector.load %arg35[%c0_315, %c96_316] : memref<32x128xf32, #tpu.memory_space<vmem>>, vector<8x32xf32>
    tpu.vector_store %arg35[%c0_315, %c96_316], %330 {strides = array<i32>} : memref<32x128xf32, #tpu.memory_space<vmem>>, vector<8x32xf32>,
    %c0_317 = arith.constant 0 : index
    %c0_318 = arith.constant 0 : index
    %332 = tpu.strided_load %arg35[%c0_317, %c0_318] {strides = array<i32: 2, 1>} : memref<32x128xf32, #tpu.memory_space<vmem>>, vector<4x128xf32>
    %c1_319 = arith.constant 1 : index
    %c0_320 = arith.constant 0 : index
    %333 = tpu.strided_load %arg35[%c1_319, %c0_320] {strides = array<i32: 2, 1>} : memref<32x128xf32, #tpu.memory_space<vmem>>, vector<4x128xf32>
    %334 = arith.maximumf %332, %333 : vector<4x128xf32>
    %c0_321 = arith.constant 0 : index
    %c0_322 = arith.constant 0 : index
    %335 = vector.load %arg26[%c0_321, %c0_322] : memref<128x256xf32, #tpu.memory_space<vmem>>, vector<128x256xf32>
    %cst_323 = arith.constant dense<0.000000e+00> : vector<4x256xf32>
    %336 = tpu.matmul %334, %335, %cst_323 {dimension_numbers = #tpu.dot_dimension_numbers<[1], [0], [0], [1], [0, 0, 1, 1], [], []>} : vector<4x128xf32>, vector<128x256xf32>, vector<4x256xf32> -> vector<4x256xf32>
    %c0_324 = arith.constant 0 : index
    %c0_325 = arith.constant 0 : index
    %337 = vector.load %arg27[%c0_324, %c0_325] : memref<1x128xf32, #tpu.memory_space<vmem>>, vector<1x128xf32>
    %338 = vector.extract_strided_slice %336 {offsets = [0, 0], sizes = [4, 128], strides = [1, 1]} : vector<4x256xf32> to vector<4x128xf32>
    %339 = vector.broadcast %337 : vector<1x128xf32> to vector<4x128xf32>
    %340 = arith.addf %338, %339 : vector<4x128xf32>
    %cst_326 = arith.constant 0.000000e+00 : f32
    %341 = vector.broadcast %cst_326 : f32 to vector<4x128xf32>
    %342 = arith.maximumf %340, %341 : vector<4x128xf32>
    %c0_327 = arith.constant 0 : index
    %c0_328 = arith.constant 0 : index
    %343 = vector.load %arg35[%c0_327, %c0_328] : memref<32x128xf32, #tpu.memory_space<vmem>>, vector<4x128xf32>
    tpu.vector_store %arg35[%c0_327, %c0_328], %342 {strides = array<i32>} : memref<32x128xf32, #tpu.memory_space<vmem>>, vector<4x128xf32>,
    %344 = vector.extract_strided_slice %336 {offsets = [0, 128], sizes = [4, 128], strides = [1, 1]} : vector<4x256xf32> to vector<4x128xf32>
    %345 = vector.broadcast %337 : vector<1x128xf32> to vector<4x128xf32>
    %346 = arith.addf %344, %345 : vector<4x128xf32>
    %cst_329 = arith.constant 0.000000e+00 : f32
    %347 = vector.broadcast %cst_329 : f32 to vector<4x128xf32>
    %348 = arith.maximumf %346, %347 : vector<4x128xf32>
    %c4_330 = arith.constant 4 : index
    %c0_331 = arith.constant 0 : index
    %349 = vector.load %arg35[%c4_330, %c0_331] : memref<32x128xf32, #tpu.memory_space<vmem>>, vector<4x128xf32>
    tpu.vector_store %arg35[%c4_330, %c0_331], %348 {strides = array<i32>} : memref<32x128xf32, #tpu.memory_space<vmem>>, vector<4x128xf32>,
    %c0_332 = arith.constant 0 : index
    %c0_333 = arith.constant 0 : index
    %350 = vector.load %arg35[%c0_332, %c0_333] : memref<32x128xf32, #tpu.memory_space<vmem>>, vector<8x128xf32>
    %c0_334 = arith.constant 0 : index
    %c0_335 = arith.constant 0 : index
    %351 = vector.load %arg28[%c0_334, %c0_335] : memref<128x256xf32, #tpu.memory_space<vmem>>, vector<128x256xf32>
    %cst_336 = arith.constant dense<0.000000e+00> : vector<8x256xf32>
    %352 = tpu.matmul %350, %351, %cst_336 {dimension_numbers = #tpu.dot_dimension_numbers<[1], [0], [0], [1], [0, 0, 1, 1], [], []>} : vector<8x128xf32>, vector<128x256xf32>, vector<8x256xf32> -> vector<8x256xf32>
    %c0_337 = arith.constant 0 : index
    %c0_338 = arith.constant 0 : index
    %353 = vector.load %arg29[%c0_337, %c0_338] : memref<1x128xf32, #tpu.memory_space<vmem>>, vector<1x128xf32>
    %354 = vector.extract_strided_slice %352 {offsets = [0, 0], sizes = [8, 128], strides = [1, 1]} : vector<8x256xf32> to vector<8x128xf32>
    %355 = vector.broadcast %353 : vector<1x128xf32> to vector<8x128xf32>
    %356 = arith.addf %354, %355 : vector<8x128xf32>
    %cst_339 = arith.constant 0.000000e+00 : f32
    %357 = vector.broadcast %cst_339 : f32 to vector<8x128xf32>
    %358 = arith.maximumf %356, %357 : vector<8x128xf32>
    %c0_340 = arith.constant 0 : index
    %c0_341 = arith.constant 0 : index
    %359 = vector.load %arg35[%c0_340, %c0_341] : memref<32x128xf32, #tpu.memory_space<vmem>>, vector<8x128xf32>
    tpu.vector_store %arg35[%c0_340, %c0_341], %358 {strides = array<i32>} : memref<32x128xf32, #tpu.memory_space<vmem>>, vector<8x128xf32>,
    %360 = vector.extract_strided_slice %352 {offsets = [0, 128], sizes = [8, 128], strides = [1, 1]} : vector<8x256xf32> to vector<8x128xf32>
    %361 = vector.broadcast %353 : vector<1x128xf32> to vector<8x128xf32>
    %362 = arith.addf %360, %361 : vector<8x128xf32>
    %cst_342 = arith.constant 0.000000e+00 : f32
    %363 = vector.broadcast %cst_342 : f32 to vector<8x128xf32>
    %364 = arith.maximumf %362, %363 : vector<8x128xf32>
    %c8_343 = arith.constant 8 : index
    %c0_344 = arith.constant 0 : index
    %365 = vector.load %arg35[%c8_343, %c0_344] : memref<32x128xf32, #tpu.memory_space<vmem>>, vector<8x128xf32>
    tpu.vector_store %arg35[%c8_343, %c0_344], %364 {strides = array<i32>} : memref<32x128xf32, #tpu.memory_space<vmem>>, vector<8x128xf32>,
    %c0_345 = arith.constant 0 : index
    %c0_346 = arith.constant 0 : index
    %366 = vector.load %arg35[%c0_345, %c0_346] : memref<32x128xf32, #tpu.memory_space<vmem>>, vector<16x128xf32>
    %c0_347 = arith.constant 0 : index
    %c0_348 = arith.constant 0 : index
    %367 = vector.load %arg30[%c0_347, %c0_348] : memref<128x8xf32, #tpu.memory_space<vmem>>, vector<128x8xf32>
    %cst_349 = arith.constant dense<0.000000e+00> : vector<16x8xf32>
    %368 = tpu.matmul %366, %367, %cst_349 {dimension_numbers = #tpu.dot_dimension_numbers<[1], [0], [0], [1], [0, 0, 1, 1], [], []>} : vector<16x128xf32>, vector<128x8xf32>, vector<16x8xf32> -> vector<16x8xf32>
    %c0_350 = arith.constant 0 : index
    %c0_351 = arith.constant 0 : index
    %369 = vector.load %arg31[%c0_350, %c0_351] : memref<1x4xf32, #tpu.memory_space<vmem>>, vector<1x4xf32>
    %370 = vector.extract_strided_slice %368 {offsets = [0, 0], sizes = [16, 4], strides = [1, 1]} : vector<16x8xf32> to vector<16x4xf32>
    %371 = vector.broadcast %369 : vector<1x4xf32> to vector<16x4xf32>
    %372 = arith.addf %370, %371 : vector<16x4xf32>
    %cst_352 = arith.constant 0.000000e+00 : f32
    %373 = vector.broadcast %cst_352 : f32 to vector<16x4xf32>
    %374 = arith.maximumf %372, %373 : vector<16x4xf32>
    %c0_353 = arith.constant 0 : index
    %c0_354 = arith.constant 0 : index
    %375 = vector.load %arg35[%c0_353, %c0_354] : memref<32x128xf32, #tpu.memory_space<vmem>>, vector<16x4xf32>
    tpu.vector_store %arg35[%c0_353, %c0_354], %374 {strides = array<i32>} : memref<32x128xf32, #tpu.memory_space<vmem>>, vector<16x4xf32>,
    %376 = vector.extract_strided_slice %368 {offsets = [0, 4], sizes = [16, 4], strides = [1, 1]} : vector<16x8xf32> to vector<16x4xf32>
    %377 = vector.broadcast %369 : vector<1x4xf32> to vector<16x4xf32>
    %378 = arith.addf %376, %377 : vector<16x4xf32>
    %cst_355 = arith.constant 0.000000e+00 : f32
    %379 = vector.broadcast %cst_355 : f32 to vector<16x4xf32>
    %380 = arith.maximumf %378, %379 : vector<16x4xf32>
    %c16_356 = arith.constant 16 : index
    %c0_357 = arith.constant 0 : index
    %381 = vector.load %arg35[%c16_356, %c0_357] : memref<32x128xf32, #tpu.memory_space<vmem>>, vector<16x4xf32>
    tpu.vector_store %arg35[%c16_356, %c0_357], %380 {strides = array<i32>} : memref<32x128xf32, #tpu.memory_space<vmem>>, vector<16x4xf32>,
    %c0_358 = arith.constant 0 : index
    %c0_359 = arith.constant 0 : index
    %382 = vector.load %arg35[%c0_358, %c0_359] : memref<32x128xf32, #tpu.memory_space<vmem>>, vector<32x4xf32>
    %383 = vector.extract_strided_slice %382 {offsets = [0, 0], sizes = [1, 4], strides = [1, 1]} : vector<32x4xf32> to vector<1x4xf32>
    %c0_360 = arith.constant 0 : index
    %c0_361 = arith.constant 0 : index
    %c0_362 = arith.constant 0 : index
    %384 = vector.load %arg32[%c0_360, %c0_361, %c0_362] : memref<1x32x4xf32, #tpu.memory_space<vmem>>, vector<1x1x4xf32>
    %385 = vector.shape_cast %384 : vector<1x1x4xf32> to vector<1x4xf32>
    %386 = vector.shape_cast %383 : vector<1x4xf32> to vector<1x1x4xf32>
    tpu.vector_store %arg32[%c0_360, %c0_361, %c0_362], %386 {strides = array<i32>} : memref<1x32x4xf32, #tpu.memory_space<vmem>>, vector<1x1x4xf32>,
    %387 = vector.extract_strided_slice %382 {offsets = [16, 0], sizes = [1, 4], strides = [1, 1]} : vector<32x4xf32> to vector<1x4xf32>
    %c0_363 = arith.constant 0 : index
    %c1_364 = arith.constant 1 : index
    %c0_365 = arith.constant 0 : index
    %388 = vector.load %arg32[%c0_363, %c1_364, %c0_365] : memref<1x32x4xf32, #tpu.memory_space<vmem>>, vector<1x1x4xf32>
    %389 = vector.shape_cast %388 : vector<1x1x4xf32> to vector<1x4xf32>
    %390 = vector.shape_cast %387 : vector<1x4xf32> to vector<1x1x4xf32>
    tpu.vector_store %arg32[%c0_363, %c1_364, %c0_365], %390 {strides = array<i32>} : memref<1x32x4xf32, #tpu.memory_space<vmem>>, vector<1x1x4xf32>,
    %391 = vector.extract_strided_slice %382 {offsets = [8, 0], sizes = [1, 4], strides = [1, 1]} : vector<32x4xf32> to vector<1x4xf32>
    %c0_366 = arith.constant 0 : index
    %c2_367 = arith.constant 2 : index
    %c0_368 = arith.constant 0 : index
    %392 = vector.load %arg32[%c0_366, %c2_367, %c0_368] : memref<1x32x4xf32, #tpu.memory_space<vmem>>, vector<1x1x4xf32>
    %393 = vector.shape_cast %392 : vector<1x1x4xf32> to vector<1x4xf32>
    %394 = vector.shape_cast %391 : vector<1x4xf32> to vector<1x1x4xf32>
    tpu.vector_store %arg32[%c0_366, %c2_367, %c0_368], %394 {strides = array<i32>} : memref<1x32x4xf32, #tpu.memory_space<vmem>>, vector<1x1x4xf32>,
    %395 = vector.extract_strided_slice %382 {offsets = [24, 0], sizes = [1, 4], strides = [1, 1]} : vector<32x4xf32> to vector<1x4xf32>
    %c0_369 = arith.constant 0 : index
    %c3_370 = arith.constant 3 : index
    %c0_371 = arith.constant 0 : index
    %396 = vector.load %arg32[%c0_369, %c3_370, %c0_371] : memref<1x32x4xf32, #tpu.memory_space<vmem>>, vector<1x1x4xf32>
    %397 = vector.shape_cast %396 : vector<1x1x4xf32> to vector<1x4xf32>
    %398 = vector.shape_cast %395 : vector<1x4xf32> to vector<1x1x4xf32>
    tpu.vector_store %arg32[%c0_369, %c3_370, %c0_371], %398 {strides = array<i32>} : memref<1x32x4xf32, #tpu.memory_space<vmem>>, vector<1x1x4xf32>,
    %399 = vector.extract_strided_slice %382 {offsets = [4, 0], sizes = [1, 4], strides = [1, 1]} : vector<32x4xf32> to vector<1x4xf32>
    %c0_372 = arith.constant 0 : index
    %c4_373 = arith.constant 4 : index
    %c0_374 = arith.constant 0 : index
    %400 = vector.load %arg32[%c0_372, %c4_373, %c0_374] : memref<1x32x4xf32, #tpu.memory_space<vmem>>, vector<1x1x4xf32>
    %401 = vector.shape_cast %400 : vector<1x1x4xf32> to vector<1x4xf32>
    %402 = vector.shape_cast %399 : vector<1x4xf32> to vector<1x1x4xf32>
    tpu.vector_store %arg32[%c0_372, %c4_373, %c0_374], %402 {strides = array<i32>} : memref<1x32x4xf32, #tpu.memory_space<vmem>>, vector<1x1x4xf32>,
    %403 = vector.extract_strided_slice %382 {offsets = [20, 0], sizes = [1, 4], strides = [1, 1]} : vector<32x4xf32> to vector<1x4xf32>
    %c0_375 = arith.constant 0 : index
    %c5_376 = arith.constant 5 : index
    %c0_377 = arith.constant 0 : index
    %404 = vector.load %arg32[%c0_375, %c5_376, %c0_377] : memref<1x32x4xf32, #tpu.memory_space<vmem>>, vector<1x1x4xf32>
    %405 = vector.shape_cast %404 : vector<1x1x4xf32> to vector<1x4xf32>
    %406 = vector.shape_cast %403 : vector<1x4xf32> to vector<1x1x4xf32>
    tpu.vector_store %arg32[%c0_375, %c5_376, %c0_377], %406 {strides = array<i32>} : memref<1x32x4xf32, #tpu.memory_space<vmem>>, vector<1x1x4xf32>,
    %407 = vector.extract_strided_slice %382 {offsets = [12, 0], sizes = [1, 4], strides = [1, 1]} : vector<32x4xf32> to vector<1x4xf32>
    %c0_378 = arith.constant 0 : index
    %c6_379 = arith.constant 6 : index
    %c0_380 = arith.constant 0 : index
    %408 = vector.load %arg32[%c0_378, %c6_379, %c0_380] : memref<1x32x4xf32, #tpu.memory_space<vmem>>, vector<1x1x4xf32>
    %409 = vector.shape_cast %408 : vector<1x1x4xf32> to vector<1x4xf32>
    %410 = vector.shape_cast %407 : vector<1x4xf32> to vector<1x1x4xf32>
    tpu.vector_store %arg32[%c0_378, %c6_379, %c0_380], %410 {strides = array<i32>} : memref<1x32x4xf32, #tpu.memory_space<vmem>>, vector<1x1x4xf32>,
    %411 = vector.extract_strided_slice %382 {offsets = [28, 0], sizes = [1, 4], strides = [1, 1]} : vector<32x4xf32> to vector<1x4xf32>
    %c0_381 = arith.constant 0 : index
    %c7_382 = arith.constant 7 : index
    %c0_383 = arith.constant 0 : index
    %412 = vector.load %arg32[%c0_381, %c7_382, %c0_383] : memref<1x32x4xf32, #tpu.memory_space<vmem>>, vector<1x1x4xf32>
    %413 = vector.shape_cast %412 : vector<1x1x4xf32> to vector<1x4xf32>
    %414 = vector.shape_cast %411 : vector<1x4xf32> to vector<1x1x4xf32>
    tpu.vector_store %arg32[%c0_381, %c7_382, %c0_383], %414 {strides = array<i32>} : memref<1x32x4xf32, #tpu.memory_space<vmem>>, vector<1x1x4xf32>,
    %415 = vector.extract_strided_slice %382 {offsets = [1, 0], sizes = [1, 4], strides = [1, 1]} : vector<32x4xf32> to vector<1x4xf32>
    %c0_384 = arith.constant 0 : index
    %c8_385 = arith.constant 8 : index
    %c0_386 = arith.constant 0 : index
    %416 = vector.load %arg32[%c0_384, %c8_385, %c0_386] : memref<1x32x4xf32, #tpu.memory_space<vmem>>, vector<1x1x4xf32>
    %417 = vector.shape_cast %416 : vector<1x1x4xf32> to vector<1x4xf32>
    %418 = vector.shape_cast %415 : vector<1x4xf32> to vector<1x1x4xf32>
    tpu.vector_store %arg32[%c0_384, %c8_385, %c0_386], %418 {strides = array<i32>} : memref<1x32x4xf32, #tpu.memory_space<vmem>>, vector<1x1x4xf32>,
    %419 = vector.extract_strided_slice %382 {offsets = [17, 0], sizes = [1, 4], strides = [1, 1]} : vector<32x4xf32> to vector<1x4xf32>
    %c0_387 = arith.constant 0 : index
    %c9_388 = arith.constant 9 : index
    %c0_389 = arith.constant 0 : index
    %420 = vector.load %arg32[%c0_387, %c9_388, %c0_389] : memref<1x32x4xf32, #tpu.memory_space<vmem>>, vector<1x1x4xf32>
    %421 = vector.shape_cast %420 : vector<1x1x4xf32> to vector<1x4xf32>
    %422 = vector.shape_cast %419 : vector<1x4xf32> to vector<1x1x4xf32>
    tpu.vector_store %arg32[%c0_387, %c9_388, %c0_389], %422 {strides = array<i32>} : memref<1x32x4xf32, #tpu.memory_space<vmem>>, vector<1x1x4xf32>,
    %423 = vector.extract_strided_slice %382 {offsets = [9, 0], sizes = [1, 4], strides = [1, 1]} : vector<32x4xf32> to vector<1x4xf32>
    %c0_390 = arith.constant 0 : index
    %c10 = arith.constant 10 : index
    %c0_391 = arith.constant 0 : index
    %424 = vector.load %arg32[%c0_390, %c10, %c0_391] : memref<1x32x4xf32, #tpu.memory_space<vmem>>, vector<1x1x4xf32>
    %425 = vector.shape_cast %424 : vector<1x1x4xf32> to vector<1x4xf32>
    %426 = vector.shape_cast %423 : vector<1x4xf32> to vector<1x1x4xf32>
    tpu.vector_store %arg32[%c0_390, %c10, %c0_391], %426 {strides = array<i32>} : memref<1x32x4xf32, #tpu.memory_space<vmem>>, vector<1x1x4xf32>,
    %427 = vector.extract_strided_slice %382 {offsets = [25, 0], sizes = [1, 4], strides = [1, 1]} : vector<32x4xf32> to vector<1x4xf32>
    %c0_392 = arith.constant 0 : index
    %c11 = arith.constant 11 : index
    %c0_393 = arith.constant 0 : index
    %428 = vector.load %arg32[%c0_392, %c11, %c0_393] : memref<1x32x4xf32, #tpu.memory_space<vmem>>, vector<1x1x4xf32>
    %429 = vector.shape_cast %428 : vector<1x1x4xf32> to vector<1x4xf32>
    %430 = vector.shape_cast %427 : vector<1x4xf32> to vector<1x1x4xf32>
    tpu.vector_store %arg32[%c0_392, %c11, %c0_393], %430 {strides = array<i32>} : memref<1x32x4xf32, #tpu.memory_space<vmem>>, vector<1x1x4xf32>,
    %431 = vector.extract_strided_slice %382 {offsets = [5, 0], sizes = [1, 4], strides = [1, 1]} : vector<32x4xf32> to vector<1x4xf32>
    %c0_394 = arith.constant 0 : index
    %c12_395 = arith.constant 12 : index
    %c0_396 = arith.constant 0 : index
    %432 = vector.load %arg32[%c0_394, %c12_395, %c0_396] : memref<1x32x4xf32, #tpu.memory_space<vmem>>, vector<1x1x4xf32>
    %433 = vector.shape_cast %432 : vector<1x1x4xf32> to vector<1x4xf32>
    %434 = vector.shape_cast %431 : vector<1x4xf32> to vector<1x1x4xf32>
    tpu.vector_store %arg32[%c0_394, %c12_395, %c0_396], %434 {strides = array<i32>} : memref<1x32x4xf32, #tpu.memory_space<vmem>>, vector<1x1x4xf32>,
    %435 = vector.extract_strided_slice %382 {offsets = [21, 0], sizes = [1, 4], strides = [1, 1]} : vector<32x4xf32> to vector<1x4xf32>
    %c0_397 = arith.constant 0 : index
    %c13 = arith.constant 13 : index
    %c0_398 = arith.constant 0 : index
    %436 = vector.load %arg32[%c0_397, %c13, %c0_398] : memref<1x32x4xf32, #tpu.memory_space<vmem>>, vector<1x1x4xf32>
    %437 = vector.shape_cast %436 : vector<1x1x4xf32> to vector<1x4xf32>
    %438 = vector.shape_cast %435 : vector<1x4xf32> to vector<1x1x4xf32>
    tpu.vector_store %arg32[%c0_397, %c13, %c0_398], %438 {strides = array<i32>} : memref<1x32x4xf32, #tpu.memory_space<vmem>>, vector<1x1x4xf32>,
    %439 = vector.extract_strided_slice %382 {offsets = [13, 0], sizes = [1, 4], strides = [1, 1]} : vector<32x4xf32> to vector<1x4xf32>
    %c0_399 = arith.constant 0 : index
    %c14 = arith.constant 14 : index
    %c0_400 = arith.constant 0 : index
    %440 = vector.load %arg32[%c0_399, %c14, %c0_400] : memref<1x32x4xf32, #tpu.memory_space<vmem>>, vector<1x1x4xf32>
    %441 = vector.shape_cast %440 : vector<1x1x4xf32> to vector<1x4xf32>
    %442 = vector.shape_cast %439 : vector<1x4xf32> to vector<1x1x4xf32>
    tpu.vector_store %arg32[%c0_399, %c14, %c0_400], %442 {strides = array<i32>} : memref<1x32x4xf32, #tpu.memory_space<vmem>>, vector<1x1x4xf32>,
    %443 = vector.extract_strided_slice %382 {offsets = [29, 0], sizes = [1, 4], strides = [1, 1]} : vector<32x4xf32> to vector<1x4xf32>
    %c0_401 = arith.constant 0 : index
    %c15 = arith.constant 15 : index
    %c0_402 = arith.constant 0 : index
    %444 = vector.load %arg32[%c0_401, %c15, %c0_402] : memref<1x32x4xf32, #tpu.memory_space<vmem>>, vector<1x1x4xf32>
    %445 = vector.shape_cast %444 : vector<1x1x4xf32> to vector<1x4xf32>
    %446 = vector.shape_cast %443 : vector<1x4xf32> to vector<1x1x4xf32>
    tpu.vector_store %arg32[%c0_401, %c15, %c0_402], %446 {strides = array<i32>} : memref<1x32x4xf32, #tpu.memory_space<vmem>>, vector<1x1x4xf32>,
    %447 = vector.extract_strided_slice %382 {offsets = [2, 0], sizes = [1, 4], strides = [1, 1]} : vector<32x4xf32> to vector<1x4xf32>
    %c0_403 = arith.constant 0 : index
    %c16_404 = arith.constant 16 : index
    %c0_405 = arith.constant 0 : index
    %448 = vector.load %arg32[%c0_403, %c16_404, %c0_405] : memref<1x32x4xf32, #tpu.memory_space<vmem>>, vector<1x1x4xf32>
    %449 = vector.shape_cast %448 : vector<1x1x4xf32> to vector<1x4xf32>
    %450 = vector.shape_cast %447 : vector<1x4xf32> to vector<1x1x4xf32>
    tpu.vector_store %arg32[%c0_403, %c16_404, %c0_405], %450 {strides = array<i32>} : memref<1x32x4xf32, #tpu.memory_space<vmem>>, vector<1x1x4xf32>,
    %451 = vector.extract_strided_slice %382 {offsets = [18, 0], sizes = [1, 4], strides = [1, 1]} : vector<32x4xf32> to vector<1x4xf32>
    %c0_406 = arith.constant 0 : index
    %c17 = arith.constant 17 : index
    %c0_407 = arith.constant 0 : index
    %452 = vector.load %arg32[%c0_406, %c17, %c0_407] : memref<1x32x4xf32, #tpu.memory_space<vmem>>, vector<1x1x4xf32>
    %453 = vector.shape_cast %452 : vector<1x1x4xf32> to vector<1x4xf32>
    %454 = vector.shape_cast %451 : vector<1x4xf32> to vector<1x1x4xf32>
    tpu.vector_store %arg32[%c0_406, %c17, %c0_407], %454 {strides = array<i32>} : memref<1x32x4xf32, #tpu.memory_space<vmem>>, vector<1x1x4xf32>,
    %455 = vector.extract_strided_slice %382 {offsets = [10, 0], sizes = [1, 4], strides = [1, 1]} : vector<32x4xf32> to vector<1x4xf32>
    %c0_408 = arith.constant 0 : index
    %c18 = arith.constant 18 : index
    %c0_409 = arith.constant 0 : index
    %456 = vector.load %arg32[%c0_408, %c18, %c0_409] : memref<1x32x4xf32, #tpu.memory_space<vmem>>, vector<1x1x4xf32>
    %457 = vector.shape_cast %456 : vector<1x1x4xf32> to vector<1x4xf32>
    %458 = vector.shape_cast %455 : vector<1x4xf32> to vector<1x1x4xf32>
    tpu.vector_store %arg32[%c0_408, %c18, %c0_409], %458 {strides = array<i32>} : memref<1x32x4xf32, #tpu.memory_space<vmem>>, vector<1x1x4xf32>,
    %459 = vector.extract_strided_slice %382 {offsets = [26, 0], sizes = [1, 4], strides = [1, 1]} : vector<32x4xf32> to vector<1x4xf32>
    %c0_410 = arith.constant 0 : index
    %c19 = arith.constant 19 : index
    %c0_411 = arith.constant 0 : index
    %460 = vector.load %arg32[%c0_410, %c19, %c0_411] : memref<1x32x4xf32, #tpu.memory_space<vmem>>, vector<1x1x4xf32>
    %461 = vector.shape_cast %460 : vector<1x1x4xf32> to vector<1x4xf32>
    %462 = vector.shape_cast %459 : vector<1x4xf32> to vector<1x1x4xf32>
    tpu.vector_store %arg32[%c0_410, %c19, %c0_411], %462 {strides = array<i32>} : memref<1x32x4xf32, #tpu.memory_space<vmem>>, vector<1x1x4xf32>,
    %463 = vector.extract_strided_slice %382 {offsets = [6, 0], sizes = [1, 4], strides = [1, 1]} : vector<32x4xf32> to vector<1x4xf32>
    %c0_412 = arith.constant 0 : index
    %c20_413 = arith.constant 20 : index
    %c0_414 = arith.constant 0 : index
    %464 = vector.load %arg32[%c0_412, %c20_413, %c0_414] : memref<1x32x4xf32, #tpu.memory_space<vmem>>, vector<1x1x4xf32>
    %465 = vector.shape_cast %464 : vector<1x1x4xf32> to vector<1x4xf32>
    %466 = vector.shape_cast %463 : vector<1x4xf32> to vector<1x1x4xf32>
    tpu.vector_store %arg32[%c0_412, %c20_413, %c0_414], %466 {strides = array<i32>} : memref<1x32x4xf32, #tpu.memory_space<vmem>>, vector<1x1x4xf32>,
    %467 = vector.extract_strided_slice %382 {offsets = [22, 0], sizes = [1, 4], strides = [1, 1]} : vector<32x4xf32> to vector<1x4xf32>
    %c0_415 = arith.constant 0 : index
    %c21 = arith.constant 21 : index
    %c0_416 = arith.constant 0 : index
    %468 = vector.load %arg32[%c0_415, %c21, %c0_416] : memref<1x32x4xf32, #tpu.memory_space<vmem>>, vector<1x1x4xf32>
    %469 = vector.shape_cast %468 : vector<1x1x4xf32> to vector<1x4xf32>
    %470 = vector.shape_cast %467 : vector<1x4xf32> to vector<1x1x4xf32>
    tpu.vector_store %arg32[%c0_415, %c21, %c0_416], %470 {strides = array<i32>} : memref<1x32x4xf32, #tpu.memory_space<vmem>>, vector<1x1x4xf32>,
    %471 = vector.extract_strided_slice %382 {offsets = [14, 0], sizes = [1, 4], strides = [1, 1]} : vector<32x4xf32> to vector<1x4xf32>
    %c0_417 = arith.constant 0 : index
    %c22 = arith.constant 22 : index
    %c0_418 = arith.constant 0 : index
    %472 = vector.load %arg32[%c0_417, %c22, %c0_418] : memref<1x32x4xf32, #tpu.memory_space<vmem>>, vector<1x1x4xf32>
    %473 = vector.shape_cast %472 : vector<1x1x4xf32> to vector<1x4xf32>
    %474 = vector.shape_cast %471 : vector<1x4xf32> to vector<1x1x4xf32>
    tpu.vector_store %arg32[%c0_417, %c22, %c0_418], %474 {strides = array<i32>} : memref<1x32x4xf32, #tpu.memory_space<vmem>>, vector<1x1x4xf32>,
    %475 = vector.extract_strided_slice %382 {offsets = [30, 0], sizes = [1, 4], strides = [1, 1]} : vector<32x4xf32> to vector<1x4xf32>
    %c0_419 = arith.constant 0 : index
    %c23 = arith.constant 23 : index
    %c0_420 = arith.constant 0 : index
    %476 = vector.load %arg32[%c0_419, %c23, %c0_420] : memref<1x32x4xf32, #tpu.memory_space<vmem>>, vector<1x1x4xf32>
    %477 = vector.shape_cast %476 : vector<1x1x4xf32> to vector<1x4xf32>
    %478 = vector.shape_cast %475 : vector<1x4xf32> to vector<1x1x4xf32>
    tpu.vector_store %arg32[%c0_419, %c23, %c0_420], %478 {strides = array<i32>} : memref<1x32x4xf32, #tpu.memory_space<vmem>>, vector<1x1x4xf32>,
    %479 = vector.extract_strided_slice %382 {offsets = [3, 0], sizes = [1, 4], strides = [1, 1]} : vector<32x4xf32> to vector<1x4xf32>
    %c0_421 = arith.constant 0 : index
    %c24_422 = arith.constant 24 : index
    %c0_423 = arith.constant 0 : index
    %480 = vector.load %arg32[%c0_421, %c24_422, %c0_423] : memref<1x32x4xf32, #tpu.memory_space<vmem>>, vector<1x1x4xf32>
    %481 = vector.shape_cast %480 : vector<1x1x4xf32> to vector<1x4xf32>
    %482 = vector.shape_cast %479 : vector<1x4xf32> to vector<1x1x4xf32>
    tpu.vector_store %arg32[%c0_421, %c24_422, %c0_423], %482 {strides = array<i32>} : memref<1x32x4xf32, #tpu.memory_space<vmem>>, vector<1x1x4xf32>,
    %483 = vector.extract_strided_slice %382 {offsets = [19, 0], sizes = [1, 4], strides = [1, 1]} : vector<32x4xf32> to vector<1x4xf32>
    %c0_424 = arith.constant 0 : index
    %c25 = arith.constant 25 : index
    %c0_425 = arith.constant 0 : index
    %484 = vector.load %arg32[%c0_424, %c25, %c0_425] : memref<1x32x4xf32, #tpu.memory_space<vmem>>, vector<1x1x4xf32>
    %485 = vector.shape_cast %484 : vector<1x1x4xf32> to vector<1x4xf32>
    %486 = vector.shape_cast %483 : vector<1x4xf32> to vector<1x1x4xf32>
    tpu.vector_store %arg32[%c0_424, %c25, %c0_425], %486 {strides = array<i32>} : memref<1x32x4xf32, #tpu.memory_space<vmem>>, vector<1x1x4xf32>,
    %487 = vector.extract_strided_slice %382 {offsets = [11, 0], sizes = [1, 4], strides = [1, 1]} : vector<32x4xf32> to vector<1x4xf32>
    %c0_426 = arith.constant 0 : index
    %c26 = arith.constant 26 : index
    %c0_427 = arith.constant 0 : index
    %488 = vector.load %arg32[%c0_426, %c26, %c0_427] : memref<1x32x4xf32, #tpu.memory_space<vmem>>, vector<1x1x4xf32>
    %489 = vector.shape_cast %488 : vector<1x1x4xf32> to vector<1x4xf32>
    %490 = vector.shape_cast %487 : vector<1x4xf32> to vector<1x1x4xf32>
    tpu.vector_store %arg32[%c0_426, %c26, %c0_427], %490 {strides = array<i32>} : memref<1x32x4xf32, #tpu.memory_space<vmem>>, vector<1x1x4xf32>,
    %491 = vector.extract_strided_slice %382 {offsets = [27, 0], sizes = [1, 4], strides = [1, 1]} : vector<32x4xf32> to vector<1x4xf32>
    %c0_428 = arith.constant 0 : index
    %c27 = arith.constant 27 : index
    %c0_429 = arith.constant 0 : index
    %492 = vector.load %arg32[%c0_428, %c27, %c0_429] : memref<1x32x4xf32, #tpu.memory_space<vmem>>, vector<1x1x4xf32>
    %493 = vector.shape_cast %492 : vector<1x1x4xf32> to vector<1x4xf32>
    %494 = vector.shape_cast %491 : vector<1x4xf32> to vector<1x1x4xf32>
    tpu.vector_store %arg32[%c0_428, %c27, %c0_429], %494 {strides = array<i32>} : memref<1x32x4xf32, #tpu.memory_space<vmem>>, vector<1x1x4xf32>,
    %495 = vector.extract_strided_slice %382 {offsets = [7, 0], sizes = [1, 4], strides = [1, 1]} : vector<32x4xf32> to vector<1x4xf32>
    %c0_430 = arith.constant 0 : index
    %c28_431 = arith.constant 28 : index
    %c0_432 = arith.constant 0 : index
    %496 = vector.load %arg32[%c0_430, %c28_431, %c0_432] : memref<1x32x4xf32, #tpu.memory_space<vmem>>, vector<1x1x4xf32>
    %497 = vector.shape_cast %496 : vector<1x1x4xf32> to vector<1x4xf32>
    %498 = vector.shape_cast %495 : vector<1x4xf32> to vector<1x1x4xf32>
    tpu.vector_store %arg32[%c0_430, %c28_431, %c0_432], %498 {strides = array<i32>} : memref<1x32x4xf32, #tpu.memory_space<vmem>>, vector<1x1x4xf32>,
    %499 = vector.extract_strided_slice %382 {offsets = [23, 0], sizes = [1, 4], strides = [1, 1]} : vector<32x4xf32> to vector<1x4xf32>
    %c0_433 = arith.constant 0 : index
    %c29 = arith.constant 29 : index
    %c0_434 = arith.constant 0 : index
    %500 = vector.load %arg32[%c0_433, %c29, %c0_434] : memref<1x32x4xf32, #tpu.memory_space<vmem>>, vector<1x1x4xf32>
    %501 = vector.shape_cast %500 : vector<1x1x4xf32> to vector<1x4xf32>
    %502 = vector.shape_cast %499 : vector<1x4xf32> to vector<1x1x4xf32>
    tpu.vector_store %arg32[%c0_433, %c29, %c0_434], %502 {strides = array<i32>} : memref<1x32x4xf32, #tpu.memory_space<vmem>>, vector<1x1x4xf32>,
    %503 = vector.extract_strided_slice %382 {offsets = [15, 0], sizes = [1, 4], strides = [1, 1]} : vector<32x4xf32> to vector<1x4xf32>
    %c0_435 = arith.constant 0 : index
    %c30 = arith.constant 30 : index
    %c0_436 = arith.constant 0 : index
    %504 = vector.load %arg32[%c0_435, %c30, %c0_436] : memref<1x32x4xf32, #tpu.memory_space<vmem>>, vector<1x1x4xf32>
    %505 = vector.shape_cast %504 : vector<1x1x4xf32> to vector<1x4xf32>
    %506 = vector.shape_cast %503 : vector<1x4xf32> to vector<1x1x4xf32>
    tpu.vector_store %arg32[%c0_435, %c30, %c0_436], %506 {strides = array<i32>} : memref<1x32x4xf32, #tpu.memory_space<vmem>>, vector<1x1x4xf32>,
    %507 = vector.extract_strided_slice %382 {offsets = [31, 0], sizes = [1, 4], strides = [1, 1]} : vector<32x4xf32> to vector<1x4xf32>
    %c0_437 = arith.constant 0 : index
    %c31 = arith.constant 31 : index
    %c0_438 = arith.constant 0 : index
    %508 = vector.load %arg32[%c0_437, %c31, %c0_438] : memref<1x32x4xf32, #tpu.memory_space<vmem>>, vector<1x1x4xf32>
    %509 = vector.shape_cast %508 : vector<1x1x4xf32> to vector<1x4xf32>
    %510 = vector.shape_cast %507 : vector<1x4xf32> to vector<1x1x4xf32>
    tpu.vector_store %arg32[%c0_437, %c31, %c0_438], %510 {strides = array<i32>} : memref<1x32x4xf32, #tpu.memory_space<vmem>>, vector<1x1x4xf32>,
    return
  }
  func.func @transform_0(%arg0: i32) -> (i32, i32, i32) {
    %c0_i32 = arith.constant 0 : i32
    %c0_i32_0 = arith.constant 0 : i32
    %c0_i32_1 = arith.constant 0 : i32
    return %arg0, %c0_i32, %c0_i32_0 : i32, i32, i32
  }
  func.func @transform_1(%arg0: i32) -> (i32, i32) {
    %c0_i32 = arith.constant 0 : i32
    %c0_i32_0 = arith.constant 0 : i32
    %c0_i32_1 = arith.constant 0 : i32
    return %c0_i32, %c0_i32_0 : i32, i32
  }
  func.func @transform_2(%arg0: i32) -> (i32, i32) {
    %c0_i32 = arith.constant 0 : i32
    %c0_i32_0 = arith.constant 0 : i32
    %c0_i32_1 = arith.constant 0 : i32
    return %c0_i32, %c0_i32_0 : i32, i32
  }
  func.func @transform_3(%arg0: i32) -> (i32, i32, i32) {
    %c0_i32 = arith.constant 0 : i32
    %c0_i32_0 = arith.constant 0 : i32
    %c0_i32_1 = arith.constant 0 : i32
    %c0_i32_2 = arith.constant 0 : i32
    return %c0_i32, %c0_i32_0, %c0_i32_1 : i32, i32, i32
  }
  func.func @transform_4(%arg0: i32) -> (i32, i32) {
    %c0_i32 = arith.constant 0 : i32
    %c0_i32_0 = arith.constant 0 : i32
    %c0_i32_1 = arith.constant 0 : i32
    return %c0_i32, %c0_i32_0 : i32, i32
  }
  func.func @transform_5(%arg0: i32) -> (i32, i32) {
    %c0_i32 = arith.constant 0 : i32
    %c0_i32_0 = arith.constant 0 : i32
    %c0_i32_1 = arith.constant 0 : i32
    return %c0_i32, %c0_i32_0 : i32, i32
  }
  func.func @transform_6(%arg0: i32) -> (i32, i32) {
    %c0_i32 = arith.constant 0 : i32
    %c0_i32_0 = arith.constant 0 : i32
    %c0_i32_1 = arith.constant 0 : i32
    return %c0_i32, %c0_i32_0 : i32, i32
  }
  func.func @transform_7(%arg0: i32) -> (i32, i32) {
    %c0_i32 = arith.constant 0 : i32
    %c0_i32_0 = arith.constant 0 : i32
    %c0_i32_1 = arith.constant 0 : i32
    return %c0_i32, %c0_i32_0 : i32, i32
  }
  func.func @transform_8(%arg0: i32) -> (i32, i32) {
    %c0_i32 = arith.constant 0 : i32
    %c0_i32_0 = arith.constant 0 : i32
    %c0_i32_1 = arith.constant 0 : i32
    return %c0_i32, %c0_i32_0 : i32, i32
  }
  func.func @transform_9(%arg0: i32) -> (i32, i32) {
    %c0_i32 = arith.constant 0 : i32
    %c0_i32_0 = arith.constant 0 : i32
    %c0_i32_1 = arith.constant 0 : i32
    return %c0_i32, %c0_i32_0 : i32, i32
  }
  func.func @transform_10(%arg0: i32) -> (i32, i32) {
    %c0_i32 = arith.constant 0 : i32
    %c0_i32_0 = arith.constant 0 : i32
    %c0_i32_1 = arith.constant 0 : i32
    return %c0_i32, %c0_i32_0 : i32, i32
  }
  func.func @transform_11(%arg0: i32) -> (i32, i32, i32) {
    %c0_i32 = arith.constant 0 : i32
    %c0_i32_0 = arith.constant 0 : i32
    %c0_i32_1 = arith.constant 0 : i32
    %c0_i32_2 = arith.constant 0 : i32
    return %c0_i32, %c0_i32_0, %c0_i32_1 : i32, i32, i32
  }
  func.func @transform_12(%arg0: i32) -> (i32, i32) {
    %c0_i32 = arith.constant 0 : i32
    %c0_i32_0 = arith.constant 0 : i32
    %c0_i32_1 = arith.constant 0 : i32
    return %c0_i32, %c0_i32_0 : i32, i32
  }
  func.func @transform_13(%arg0: i32) -> (i32, i32) {
    %c0_i32 = arith.constant 0 : i32
    %c0_i32_0 = arith.constant 0 : i32
    %c0_i32_1 = arith.constant 0 : i32
    return %c0_i32, %c0_i32_0 : i32, i32
  }
  func.func @transform_14(%arg0: i32) -> (i32, i32) {
    %c0_i32 = arith.constant 0 : i32
    %c0_i32_0 = arith.constant 0 : i32
    %c0_i32_1 = arith.constant 0 : i32
    return %c0_i32, %c0_i32_0 : i32, i32
  }
  func.func @transform_15(%arg0: i32) -> (i32, i32) {
    %c0_i32 = arith.constant 0 : i32
    %c0_i32_0 = arith.constant 0 : i32
    %c0_i32_1 = arith.constant 0 : i32
    return %c0_i32, %c0_i32_0 : i32, i32
  }
  func.func @transform_16(%arg0: i32) -> (i32, i32) {
    %c0_i32 = arith.constant 0 : i32
    %c0_i32_0 = arith.constant 0 : i32
    %c0_i32_1 = arith.constant 0 : i32
    return %c0_i32, %c0_i32_0 : i32, i32
  }
  func.func @transform_17(%arg0: i32) -> (i32, i32) {
    %c0_i32 = arith.constant 0 : i32
    %c0_i32_0 = arith.constant 0 : i32
    %c0_i32_1 = arith.constant 0 : i32
    return %c0_i32, %c0_i32_0 : i32, i32
  }
  func.func @transform_18(%arg0: i32) -> (i32, i32) {
    %c0_i32 = arith.constant 0 : i32
    %c0_i32_0 = arith.constant 0 : i32
    %c0_i32_1 = arith.constant 0 : i32
    return %c0_i32, %c0_i32_0 : i32, i32
  }
  func.func @transform_19(%arg0: i32) -> (i32, i32, i32) {
    %c0_i32 = arith.constant 0 : i32
    %c0_i32_0 = arith.constant 0 : i32
    %c0_i32_1 = arith.constant 0 : i32
    %c0_i32_2 = arith.constant 0 : i32
    return %c0_i32, %c0_i32_0, %c0_i32_1 : i32, i32, i32
  }
  func.func @transform_20(%arg0: i32) -> (i32, i32) {
    %c0_i32 = arith.constant 0 : i32
    %c0_i32_0 = arith.constant 0 : i32
    %c0_i32_1 = arith.constant 0 : i32
    return %c0_i32, %c0_i32_0 : i32, i32
  }
  func.func @transform_21(%arg0: i32) -> (i32, i32) {
    %c0_i32 = arith.constant 0 : i32
    %c0_i32_0 = arith.constant 0 : i32
    %c0_i32_1 = arith.constant 0 : i32
    return %c0_i32, %c0_i32_0 : i32, i32
  }
  func.func @transform_22(%arg0: i32) -> (i32, i32) {
    %c0_i32 = arith.constant 0 : i32
    %c0_i32_0 = arith.constant 0 : i32
    %c0_i32_1 = arith.constant 0 : i32
    return %c0_i32, %c0_i32_0 : i32, i32
  }
  func.func @transform_23(%arg0: i32) -> (i32, i32) {
    %c0_i32 = arith.constant 0 : i32
    %c0_i32_0 = arith.constant 0 : i32
    %c0_i32_1 = arith.constant 0 : i32
    return %c0_i32, %c0_i32_0 : i32, i32
  }
  func.func @transform_24(%arg0: i32) -> (i32, i32) {
    %c0_i32 = arith.constant 0 : i32
    %c0_i32_0 = arith.constant 0 : i32
    %c0_i32_1 = arith.constant 0 : i32
    return %c0_i32, %c0_i32_0 : i32, i32
  }
  func.func @transform_25(%arg0: i32) -> (i32, i32) {
    %c0_i32 = arith.constant 0 : i32
    %c0_i32_0 = arith.constant 0 : i32
    %c0_i32_1 = arith.constant 0 : i32
    return %c0_i32, %c0_i32_0 : i32, i32
  }
  func.func @transform_26(%arg0: i32) -> (i32, i32) {
    %c0_i32 = arith.constant 0 : i32
    %c0_i32_0 = arith.constant 0 : i32
    %c0_i32_1 = arith.constant 0 : i32
    return %c0_i32, %c0_i32_0 : i32, i32
  }
  func.func @transform_27(%arg0: i32) -> (i32, i32) {
    %c0_i32 = arith.constant 0 : i32
    %c0_i32_0 = arith.constant 0 : i32
    %c0_i32_1 = arith.constant 0 : i32
    return %c0_i32, %c0_i32_0 : i32, i32
  }
  func.func @transform_28(%arg0: i32) -> (i32, i32) {
    %c0_i32 = arith.constant 0 : i32
    %c0_i32_0 = arith.constant 0 : i32
    %c0_i32_1 = arith.constant 0 : i32
    return %c0_i32, %c0_i32_0 : i32, i32
  }
  func.func @transform_29(%arg0: i32) -> (i32, i32) {
    %c0_i32 = arith.constant 0 : i32
    %c0_i32_0 = arith.constant 0 : i32
    %c0_i32_1 = arith.constant 0 : i32
    return %c0_i32, %c0_i32_0 : i32, i32
  }
  func.func @transform_30(%arg0: i32) -> (i32, i32) {
    %c0_i32 = arith.constant 0 : i32
    %c0_i32_0 = arith.constant 0 : i32
    %c0_i32_1 = arith.constant 0 : i32
    return %c0_i32, %c0_i32_0 : i32, i32
  }
  func.func @transform_31(%arg0: i32) -> (i32, i32, i32) {
    %c0_i32 = arith.constant 0 : i32
    %c0_i32_0 = arith.constant 0 : i32
    %c0_i32_1 = arith.constant 0 : i32
    return %arg0, %c0_i32, %c0_i32_0 : i32, i32, i32
  }
}

</mosaic_0001>

<llo_original>
// kernel: inception_autoencoder_forward.1
$region0: #{inception_autoencoder_forward.1}
  #allocation0 [shape = 'u32[]', space=smem, size = 0x4, offset = 0x4, fixed_abs, tag = 'smem constant byte address 0x4 - core index']
  #allocation1 [shape = 'u32[144,128]{1,0:T(1,128)}', space=vmem, size = 0x12000, scoped, tag = 'internal scratch']
  #allocation2 [shape = 'f32[80,32]{1,0:T(8,128)}', space=vmem, size = 0xa000, scoped, tag = 'scratch operand']
  #allocation3 [shape = 'f32[72,128]{1,0:T(8,128)}', space=vmem, size = 0x9000, scoped, tag = 'scratch operand']
  #allocation4 [shape = 'f32[32,128]{1,0:T(8,128)}', space=vmem, size = 0x4000, scoped, tag = 'scratch operand']
  %s0 = inlined_call_operand.smem [shape: u32[32], index: -1, kind: input, shape index: {}]
  %s1 = sld [smem:[%s0]]
  %s2 = scalar_lea.smem %s0, 1
  %s3 = sld [smem:[%s2]]
  %s4 = scalar_lea.smem %s0, 2
  %s5 = sld [smem:[%s4]]
  %s6 = scalar_lea.smem %s0, 3
  %s7 = sld [smem:[%s6]]
  %s8 = scalar_lea.smem %s0, 4
  %s9 = sld [smem:[%s8]]
  %s10 = scalar_lea.smem %s0, 5
  %s11 = sld [smem:[%s10]]
  %s12 = scalar_lea.smem %s0, 6
  %s13 = sld [smem:[%s12]]
  %s14 = scalar_lea.smem %s0, 7
  %s15 = sld [smem:[%s14]]
  %s16 = scalar_lea.smem %s0, 8
  %s17 = sld [smem:[%s16]]
  %s18 = scalar_lea.smem %s0, 9
  %s19 = sld [smem:[%s18]]
  %s20 = scalar_lea.smem %s0, 10
  %s21 = sld [smem:[%s20]]
  %s22 = scalar_lea.smem %s0, 11
  %s23 = sld [smem:[%s22]]
  %s24 = scalar_lea.smem %s0, 12
  %s25 = sld [smem:[%s24]]
  %s26 = scalar_lea.smem %s0, 13
  %s27 = sld [smem:[%s26]]
  %s28 = scalar_lea.smem %s0, 14
  %s29 = sld [smem:[%s28]]
  %s30 = scalar_lea.smem %s0, 15
  %s31 = sld [smem:[%s30]]
  %s32 = scalar_lea.smem %s0, 16
  %s33 = sld [smem:[%s32]]
  %s34 = scalar_lea.smem %s0, 17
  %s35 = sld [smem:[%s34]]
  %s36 = scalar_lea.smem %s0, 18
  %s37 = sld [smem:[%s36]]
  %s38 = scalar_lea.smem %s0, 19
  %s39 = sld [smem:[%s38]]
  %s40 = scalar_lea.smem %s0, 20
  %s41 = sld [smem:[%s40]]
  %s42 = scalar_lea.smem %s0, 21
  %s43 = sld [smem:[%s42]]
  %s44 = scalar_lea.smem %s0, 22
  %s45 = sld [smem:[%s44]]
  %s46 = scalar_lea.smem %s0, 23
  %s47 = sld [smem:[%s46]]
  %s48 = scalar_lea.smem %s0, 24
  %s49 = sld [smem:[%s48]]
  %s50 = scalar_lea.smem %s0, 25
  %s51 = sld [smem:[%s50]]
  %s52 = scalar_lea.smem %s0, 26
  %s53 = sld [smem:[%s52]]
  %s54 = scalar_lea.smem %s0, 27
  %s55 = sld [smem:[%s54]]
  %s56 = scalar_lea.smem %s0, 28
  %s57 = sld [smem:[%s56]]
  %s58 = scalar_lea.smem %s0, 29
  %s59 = sld [smem:[%s58]]
  %s60 = scalar_lea.smem %s0, 30
  %s61 = sld [smem:[%s60]]
  %s62 = scalar_lea.smem %s0, 31
  %s63 = sld [smem:[%s62]]
  %s64 = sld [smem:[#allocation0]]
  $region193: #{inception_autoencoder_forward.1} parent=0
    _
  %s66 = ssub.s32 1, %s64
  %s67 = scalar_select 0, %s66, %s64
  $region1: #{inception_autoencoder_forward.1} parent=0
    #allocation5 [shape = 'u8[655360]{0}', space=vmem, size = 0xa0000, scoped, tag = 'input window, operand 3, single buffered']
    #allocation6 [shape = 's32[2]{0}', space=sflag, size = 0x8, scoped, tag = 'scoped memory for inception_autoencoder_forward.1']
    #allocation7 [shape = 'u8[65536]{0}', space=vmem, size = 0x10000, scoped, tag = 'input window, operand 9, single buffered']
    #allocation8 [shape = 's32[1]{0}', space=sflag, size = 0x4, scoped, tag = 'scoped memory for inception_autoencoder_forward.1']
    #allocation9 [shape = 'u8[655360]{0}', space=vmem, size = 0xa0000, scoped, tag = 'input window, operand 11, single buffered']
    #allocation10 [shape = 'u8[65536]{0}', space=vmem, size = 0x10000, scoped, tag = 'input window, operand 13, single buffered']
    #allocation11 [shape = 's32[1]{0}', space=sflag, size = 0x4, scoped, tag = 'scoped memory for inception_autoencoder_forward.1']
    #allocation12 [shape = 'u8[65536]{0}', space=vmem, size = 0x10000, scoped, tag = 'input window, operand 17, single buffered']
    #allocation13 [shape = 'u8[655360]{0}', space=vmem, size = 0xa0000, scoped, tag = 'input window, operand 19, single buffered']
    #allocation14 [shape = 's32[1]{0}', space=sflag, size = 0x4, scoped, tag = 'scoped memory for inception_autoencoder_forward.1']
    #allocation15 [shape = 'u8[65536]{0}', space=vmem, size = 0x10000, scoped, tag = 'input window, operand 21, single buffered']
    #allocation16 [shape = 'u8[131072]{0}', space=vmem, size = 0x20000, scoped, tag = 'input window, operand 25, single buffered']
    #allocation17 [shape = 's32[1]{0}', space=sflag, size = 0x4, scoped, tag = 'scoped memory for inception_autoencoder_forward.1']
    #allocation18 [shape = 'u8[131072]{0}', space=vmem, size = 0x20000, scoped, tag = 'input window, operand 27, single buffered']
    %68 = vsyncpa [#allocation6], 0
    %69 = vsyncpa [#allocation8], 0
    %70 = vsyncpa [#allocation11], 0
    %71 = vsyncpa [#allocation14], 0
    %72 = vsyncpa [#allocation17], 0
    loop: start=0, step=1, limit=4
    $region2: #{inception_autoencoder_forward.1} parent=1 // loop_pre_header
      _
    $region3: #{inception_autoencoder_forward.1} parent=1 // loop_header
      %s74 = sphi 0, %s78
      %p75 = scmp.ge.s32.totalorder %s74, 4
      %s84 = sphi 0, %s86
      %s87 = sphi 0, %s84
      %s88 = sphi 0, %s87
      %s104 = sphi 0, %s88
      %s108 = sphi 0, %s108
      %s110 = sphi 0, %s108
      %s111 = sphi 0, %s110
      %s125 = sphi 0, %s111
      %s129 = sphi 0, %s129
      %s131 = sphi 0, %s129
      %s132 = sphi 0, %s131
      %s146 = sphi 0, %s132
      %s150 = sphi 0, %s150
      %s152 = sphi 0, %s150
      %s153 = sphi 0, %s152
      %s167 = sphi 0, %s153
      %s171 = sphi 0, %s171
      %s173 = sphi 0, %s171
      %s174 = sphi 0, %s173
      %s188 = sphi 0, %s174
      %s192 = sphi 0, %s192
      %s194 = sphi 0, %s192
      %s195 = sphi 0, %s194
      %s209 = sphi 0, %s195
      %s213 = sphi 0, %s213
      %s215 = sphi 0, %s213
      %s216 = sphi 0, %s215
      %s230 = sphi 0, %s216
      %s234 = sphi 0, %s234
      %s236 = sphi 0, %s234
      %s237 = sphi 0, %s236
      %s251 = sphi 0, %s237
      %s255 = sphi 0, %s255
      %s257 = sphi 0, %s255
      %s258 = sphi 0, %s257
      %s272 = sphi 0, %s258
      %s276 = sphi 0, %s276
      %s278 = sphi 0, %s276
      %s279 = sphi 0, %s278
      %s293 = sphi 0, %s279
      %s297 = sphi 0, %s297
      %s299 = sphi 0, %s297
      %s300 = sphi 0, %s299
      %s314 = sphi 0, %s300
      %s318 = sphi 0, %s318
      %s320 = sphi 0, %s318
      %s321 = sphi 0, %s320
      %s335 = sphi 0, %s321
      %s339 = sphi 0, %s339
      %s341 = sphi 0, %s339
      %s342 = sphi 0, %s341
      %s356 = sphi 0, %s342
      %s360 = sphi 0, %s360
      %s362 = sphi 0, %s360
      %s363 = sphi 0, %s362
      %s377 = sphi 0, %s363
      %s381 = sphi 0, %s381
      %s383 = sphi 0, %s381
      %s384 = sphi 0, %s383
      %s398 = sphi 0, %s384
      %s402 = sphi 0, %s402
      %s404 = sphi 0, %s402
      %s405 = sphi 0, %s404
      %s419 = sphi 0, %s405
      %s423 = sphi 0, %s423
      %s425 = sphi 0, %s423
      %s426 = sphi 0, %s425
      %s440 = sphi 0, %s426
      %s444 = sphi 0, %s444
      %s446 = sphi 0, %s444
      %s447 = sphi 0, %s446
      %s461 = sphi 0, %s447
      %s465 = sphi 0, %s465
      %s467 = sphi 0, %s465
      %s468 = sphi 0, %s467
      %s482 = sphi 0, %s468
      %s486 = sphi 0, %s486
      %s488 = sphi 0, %s486
      %s489 = sphi 0, %s488
      %s503 = sphi 0, %s489
      %s507 = sphi 0, %s507
      %s509 = sphi 0, %s507
      %s510 = sphi 0, %s509
      %s524 = sphi 0, %s510
      %s528 = sphi 0, %s528
      %s530 = sphi 0, %s528
      %s531 = sphi 0, %s530
      %s545 = sphi 0, %s531
      %s549 = sphi 0, %s549
      %s551 = sphi 0, %s549
      %s552 = sphi 0, %s551
      %s566 = sphi 0, %s552
      %s570 = sphi 0, %s570
      %s572 = sphi 0, %s570
      %s573 = sphi 0, %s572
      %s587 = sphi 0, %s573
      %s591 = sphi 0, %s591
      %s593 = sphi 0, %s591
      %s594 = sphi 0, %s593
      %s608 = sphi 0, %s594
      %s612 = sphi 0, %s612
      %s614 = sphi 0, %s612
      %s615 = sphi 0, %s614
      %s629 = sphi 0, %s615
      %s633 = sphi 0, %s633
      %s635 = sphi 0, %s633
      %s636 = sphi 0, %s635
      %s650 = sphi 0, %s636
      %s654 = sphi 0, %s654
      %s656 = sphi 0, %s654
      %s657 = sphi 0, %s656
      %s671 = sphi 0, %s657
      %s675 = sphi 0, %s675
      %s677 = sphi 0, %s675
      %s678 = sphi 0, %s677
      %s692 = sphi 0, %s678
      %s696 = sphi 0, %s696
      %s698 = sphi 0, %s696
      %s699 = sphi 0, %s698
      %s713 = sphi 0, %s699
      %s717 = sphi 0, %s717
      %s719 = sphi 0, %s717
      %s720 = sphi 0, %s719
      %s734 = sphi 0, %s720
      %s740 = sphi 0, %s742
      %s743 = sphi 0, %s740
      %s744 = sphi 0, %s743
      %s760 = sphi 0, %s744
    $region4: #{inception_autoencoder_forward.1} parent=1 // loop_header_branch
      %77 = sbr.rel (%p75) target = $region8
    $region5: #{inception_autoencoder_forward.1} parent=1 // loop_body
      %s79 = ssub.s32 %s74, 1
      %s80 = ssub.s32 %s74, 2
      %s81 = sadd.s32 %s74, 1
      %s82 = ssub.s32 %s74, %s81
      %p83 = scmp.eq.s32.totalorder %s82, 0
      %s85 = sadd.s32 %s84, 1
      %s86 = scalar_select %p83, %s84, %s85
      %p89 = pneg %p83
      %p90 = scmp.eq.s32.totalorder %s74, 1
      %p91 = por %p89, %p90
      %p92 = scmp.ne.s32.totalorder %s84, %s87
      %p93 = scmp.eq.s32.totalorder %s74, 0
      %p94 = por %p92, %p93
      %p95 = scmp.ne.s32.totalorder %s84, %s87
      %p96 = scmp.eq.s32.totalorder %s79, 1
      %p97 = por %p95, %p96
      %p98 = scmp.ne.s32.totalorder %s87, %s88
      %p99 = scmp.eq.s32.totalorder %s79, 0
      %p100 = por %p98, %p99
      %p101 = scmp.ne.s32.totalorder %s87, %s88
      %p102 = scmp.eq.s32.totalorder %s80, 1
      %p103 = por %p101, %p102
      %p105 = scmp.ne.s32.totalorder %s88, %s104
      %p106 = scmp.eq.s32.totalorder %s80, 0
      %p107 = por %p105, %p106
      %s109 = sadd.s32 %s108, 1
      %p112 = scmp.eq.s32.totalorder %s74, 1
      %p113 = scmp.ne.s32.totalorder %s108, %s110
      %p114 = scmp.eq.s32.totalorder %s74, 0
      %p115 = por %p113, %p114
      %p116 = scmp.ne.s32.totalorder %s108, %s110
      %p117 = scmp.eq.s32.totalorder %s79, 1
      %p118 = por %p116, %p117
      %p119 = scmp.ne.s32.totalorder %s110, %s111
      %p120 = scmp.eq.s32.totalorder %s79, 0
      %p121 = por %p119, %p120
      %p122 = scmp.ne.s32.totalorder %s110, %s111
      %p123 = scmp.eq.s32.totalorder %s80, 1
      %p124 = por %p122, %p123
      %p126 = scmp.ne.s32.totalorder %s111, %s125
      %p127 = scmp.eq.s32.totalorder %s80, 0
      %p128 = por %p126, %p127
      %s130 = sadd.s32 %s129, 1
      %p133 = scmp.eq.s32.totalorder %s74, 1
      %p134 = scmp.ne.s32.totalorder %s129, %s131
      %p135 = scmp.eq.s32.totalorder %s74, 0
      %p136 = por %p134, %p135
      %p137 = scmp.ne.s32.totalorder %s129, %s131
      %p138 = scmp.eq.s32.totalorder %s79, 1
      %p139 = por %p137, %p138
      %p140 = scmp.ne.s32.totalorder %s131, %s132
      %p141 = scmp.eq.s32.totalorder %s79, 0
      %p142 = por %p140, %p141
      %p143 = scmp.ne.s32.totalorder %s131, %s132
      %p144 = scmp.eq.s32.totalorder %s80, 1
      %p145 = por %p143, %p144
      %p147 = scmp.ne.s32.totalorder %s132, %s146
      %p148 = scmp.eq.s32.totalorder %s80, 0
      %p149 = por %p147, %p148
      %s151 = sadd.s32 %s150, 1
      %p154 = scmp.eq.s32.totalorder %s74, 1
      %p155 = scmp.ne.s32.totalorder %s150, %s152
      %p156 = scmp.eq.s32.totalorder %s74, 0
      %p157 = por %p155, %p156
      %p158 = scmp.ne.s32.totalorder %s150, %s152
      %p159 = scmp.eq.s32.totalorder %s79, 1
      %p160 = por %p158, %p159
      %p161 = scmp.ne.s32.totalorder %s152, %s153
      %p162 = scmp.eq.s32.totalorder %s79, 0
      %p163 = por %p161, %p162
      %p164 = scmp.ne.s32.totalorder %s152, %s153
      %p165 = scmp.eq.s32.totalorder %s80, 1
      %p166 = por %p164, %p165
      %p168 = scmp.ne.s32.totalorder %s153, %s167
      %p169 = scmp.eq.s32.totalorder %s80, 0
      %p170 = por %p168, %p169
      %s172 = sadd.s32 %s171, 1
      %p175 = scmp.eq.s32.totalorder %s74, 1
      %p176 = scmp.ne.s32.totalorder %s171, %s173
      %p177 = scmp.eq.s32.totalorder %s74, 0
      %p178 = por %p176, %p177
      %p179 = scmp.ne.s32.totalorder %s171, %s173
      %p180 = scmp.eq.s32.totalorder %s79, 1
      %p181 = por %p179, %p180
      %p182 = scmp.ne.s32.totalorder %s173, %s174
      %p183 = scmp.eq.s32.totalorder %s79, 0
      %p184 = por %p182, %p183
      %p185 = scmp.ne.s32.totalorder %s173, %s174
      %p186 = scmp.eq.s32.totalorder %s80, 1
      %p187 = por %p185, %p186
      %p189 = scmp.ne.s32.totalorder %s174, %s188
      %p190 = scmp.eq.s32.totalorder %s80, 0
      %p191 = por %p189, %p190
      %s193 = sadd.s32 %s192, 1
      %p196 = scmp.eq.s32.totalorder %s74, 1
      %p197 = scmp.ne.s32.totalorder %s192, %s194
      %p198 = scmp.eq.s32.totalorder %s74, 0
      %p199 = por %p197, %p198
      %p200 = scmp.ne.s32.totalorder %s192, %s194
      %p201 = scmp.eq.s32.totalorder %s79, 1
      %p202 = por %p200, %p201
      %p203 = scmp.ne.s32.totalorder %s194, %s195
      %p204 = scmp.eq.s32.totalorder %s79, 0
      %p205 = por %p203, %p204
      %p206 = scmp.ne.s32.totalorder %s194, %s195
      %p207 = scmp.eq.s32.totalorder %s80, 1
      %p208 = por %p206, %p207
      %p210 = scmp.ne.s32.totalorder %s195, %s209
      %p211 = scmp.eq.s32.totalorder %s80, 0
      %p212 = por %p210, %p211
      %s214 = sadd.s32 %s213, 1
      %p217 = scmp.eq.s32.totalorder %s74, 1
      %p218 = scmp.ne.s32.totalorder %s213, %s215
      %p219 = scmp.eq.s32.totalorder %s74, 0
      %p220 = por %p218, %p219
      %p221 = scmp.ne.s32.totalorder %s213, %s215
      %p222 = scmp.eq.s32.totalorder %s79, 1
      %p223 = por %p221, %p222
      %p224 = scmp.ne.s32.totalorder %s215, %s216
      %p225 = scmp.eq.s32.totalorder %s79, 0
      %p226 = por %p224, %p225
      %p227 = scmp.ne.s32.totalorder %s215, %s216
      %p228 = scmp.eq.s32.totalorder %s80, 1
      %p229 = por %p227, %p228
      %p231 = scmp.ne.s32.totalorder %s216, %s230
      %p232 = scmp.eq.s32.totalorder %s80, 0
      %p233 = por %p231, %p232
      %s235 = sadd.s32 %s234, 1
      %p238 = scmp.eq.s32.totalorder %s74, 1
      %p239 = scmp.ne.s32.totalorder %s234, %s236
      %p240 = scmp.eq.s32.totalorder %s74, 0
      %p241 = por %p239, %p240
      %p242 = scmp.ne.s32.totalorder %s234, %s236
      %p243 = scmp.eq.s32.totalorder %s79, 1
      %p244 = por %p242, %p243
      %p245 = scmp.ne.s32.totalorder %s236, %s237
      %p246 = scmp.eq.s32.totalorder %s79, 0
      %p247 = por %p245, %p246
      %p248 = scmp.ne.s32.totalorder %s236, %s237
      %p249 = scmp.eq.s32.totalorder %s80, 1
      %p250 = por %p248, %p249
      %p252 = scmp.ne.s32.totalorder %s237, %s251
      %p253 = scmp.eq.s32.totalorder %s80, 0
      %p254 = por %p252, %p253
      %s256 = sadd.s32 %s255, 1
      %p259 = scmp.eq.s32.totalorder %s74, 1
      %p260 = scmp.ne.s32.totalorder %s255, %s257
      %p261 = scmp.eq.s32.totalorder %s74, 0
      %p262 = por %p260, %p261
      %p263 = scmp.ne.s32.totalorder %s255, %s257
      %p264 = scmp.eq.s32.totalorder %s79, 1
      %p265 = por %p263, %p264
      %p266 = scmp.ne.s32.totalorder %s257, %s258
      %p267 = scmp.eq.s32.totalorder %s79, 0
      %p268 = por %p266, %p267
      %p269 = scmp.ne.s32.totalorder %s257, %s258
      %p270 = scmp.eq.s32.totalorder %s80, 1
      %p271 = por %p269, %p270
      %p273 = scmp.ne.s32.totalorder %s258, %s272
      %p274 = scmp.eq.s32.totalorder %s80, 0
      %p275 = por %p273, %p274
      %s277 = sadd.s32 %s276, 1
      %p280 = scmp.eq.s32.totalorder %s74, 1
      %p281 = scmp.ne.s32.totalorder %s276, %s278
      %p282 = scmp.eq.s32.totalorder %s74, 0
      %p283 = por %p281, %p282
      %p284 = scmp.ne.s32.totalorder %s276, %s278
      %p285 = scmp.eq.s32.totalorder %s79, 1
      %p286 = por %p284, %p285
      %p287 = scmp.ne.s32.totalorder %s278, %s279
      %p288 = scmp.eq.s32.totalorder %s79, 0
      %p289 = por %p287, %p288
      %p290 = scmp.ne.s32.totalorder %s278, %s279
      %p291 = scmp.eq.s32.totalorder %s80, 1
      %p292 = por %p290, %p291
      %p294 = scmp.ne.s32.totalorder %s279, %s293
      %p295 = scmp.eq.s32.totalorder %s80, 0
      %p296 = por %p294, %p295
      %s298 = sadd.s32 %s297, 1
      %p301 = scmp.eq.s32.totalorder %s74, 1
      %p302 = scmp.ne.s32.totalorder %s297, %s299
      %p303 = scmp.eq.s32.totalorder %s74, 0
      %p304 = por %p302, %p303
      %p305 = scmp.ne.s32.totalorder %s297, %s299
      %p306 = scmp.eq.s32.totalorder %s79, 1
      %p307 = por %p305, %p306
      %p308 = scmp.ne.s32.totalorder %s299, %s300
      %p309 = scmp.eq.s32.totalorder %s79, 0
      %p310 = por %p308, %p309
      %p311 = scmp.ne.s32.totalorder %s299, %s300
      %p312 = scmp.eq.s32.totalorder %s80, 1
      %p313 = por %p311, %p312
      %p315 = scmp.ne.s32.totalorder %s300, %s314
      %p316 = scmp.eq.s32.totalorder %s80, 0
      %p317 = por %p315, %p316
      %s319 = sadd.s32 %s318, 1
      %p322 = scmp.eq.s32.totalorder %s74, 1
      %p323 = scmp.ne.s32.totalorder %s318, %s320
      %p324 = scmp.eq.s32.totalorder %s74, 0
      %p325 = por %p323, %p324
      %p326 = scmp.ne.s32.totalorder %s318, %s320
      %p327 = scmp.eq.s32.totalorder %s79, 1
      %p328 = por %p326, %p327
      %p329 = scmp.ne.s32.totalorder %s320, %s321
      %p330 = scmp.eq.s32.totalorder %s79, 0
      %p331 = por %p329, %p330
      %p332 = scmp.ne.s32.totalorder %s320, %s321
      %p333 = scmp.eq.s32.totalorder %s80, 1
      %p334 = por %p332, %p333
      %p336 = scmp.ne.s32.totalorder %s321, %s335
      %p337 = scmp.eq.s32.totalorder %s80, 0
      %p338 = por %p336, %p337
      %s340 = sadd.s32 %s339, 1
      %p343 = scmp.eq.s32.totalorder %s74, 1
      %p344 = scmp.ne.s32.totalorder %s339, %s341
      %p345 = scmp.eq.s32.totalorder %s74, 0
      %p346 = por %p344, %p345
      %p347 = scmp.ne.s32.totalorder %s339, %s341
      %p348 = scmp.eq.s32.totalorder %s79, 1
      %p349 = por %p347, %p348
      %p350 = scmp.ne.s32.totalorder %s341, %s342
      %p351 = scmp.eq.s32.totalorder %s79, 0
      %p352 = por %p350, %p351
      %p353 = scmp.ne.s32.totalorder %s341, %s342
      %p354 = scmp.eq.s32.totalorder %s80, 1
      %p355 = por %p353, %p354
      %p357 = scmp.ne.s32.totalorder %s342, %s356
      %p358 = scmp.eq.s32.totalorder %s80, 0
      %p359 = por %p357, %p358
      %s361 = sadd.s32 %s360, 1
      %p364 = scmp.eq.s32.totalorder %s74, 1
      %p365 = scmp.ne.s32.totalorder %s360, %s362
      %p366 = scmp.eq.s32.totalorder %s74, 0
      %p367 = por %p365, %p366
      %p368 = scmp.ne.s32.totalorder %s360, %s362
      %p369 = scmp.eq.s32.totalorder %s79, 1
      %p370 = por %p368, %p369
      %p371 = scmp.ne.s32.totalorder %s362, %s363
      %p372 = scmp.eq.s32.totalorder %s79, 0
      %p373 = por %p371, %p372
      %p374 = scmp.ne.s32.totalorder %s362, %s363
      %p375 = scmp.eq.s32.totalorder %s80, 1
      %p376 = por %p374, %p375
      %p378 = scmp.ne.s32.totalorder %s363, %s377
      %p379 = scmp.eq.s32.totalorder %s80, 0
      %p380 = por %p378, %p379
      %s382 = sadd.s32 %s381, 1
      %p385 = scmp.eq.s32.totalorder %s74, 1
      %p386 = scmp.ne.s32.totalorder %s381, %s383
      %p387 = scmp.eq.s32.totalorder %s74, 0
      %p388 = por %p386, %p387
      %p389 = scmp.ne.s32.totalorder %s381, %s383
      %p390 = scmp.eq.s32.totalorder %s79, 1
      %p391 = por %p389, %p390
      %p392 = scmp.ne.s32.totalorder %s383, %s384
      %p393 = scmp.eq.s32.totalorder %s79, 0
      %p394 = por %p392, %p393
      %p395 = scmp.ne.s32.totalorder %s383, %s384
      %p396 = scmp.eq.s32.totalorder %s80, 1
      %p397 = por %p395, %p396
      %p399 = scmp.ne.s32.totalorder %s384, %s398
      %p400 = scmp.eq.s32.totalorder %s80, 0
      %p401 = por %p399, %p400
      %s403 = sadd.s32 %s402, 1
      %p406 = scmp.eq.s32.totalorder %s74, 1
      %p407 = scmp.ne.s32.totalorder %s402, %s404
      %p408 = scmp.eq.s32.totalorder %s74, 0
      %p409 = por %p407, %p408
      %p410 = scmp.ne.s32.totalorder %s402, %s404
      %p411 = scmp.eq.s32.totalorder %s79, 1
      %p412 = por %p410, %p411
      %p413 = scmp.ne.s32.totalorder %s404, %s405
      %p414 = scmp.eq.s32.totalorder %s79, 0
      %p415 = por %p413, %p414
      %p416 = scmp.ne.s32.totalorder %s404, %s405
      %p417 = scmp.eq.s32.totalorder %s80, 1
      %p418 = por %p416, %p417
      %p420 = scmp.ne.s32.totalorder %s405, %s419
      %p421 = scmp.eq.s32.totalorder %s80, 0
      %p422 = por %p420, %p421
      %s424 = sadd.s32 %s423, 1
      %p427 = scmp.eq.s32.totalorder %s74, 1
      %p428 = scmp.ne.s32.totalorder %s423, %s425
      %p429 = scmp.eq.s32.totalorder %s74, 0
      %p430 = por %p428, %p429
      %p431 = scmp.ne.s32.totalorder %s423, %s425
      %p432 = scmp.eq.s32.totalorder %s79, 1
      %p433 = por %p431, %p432
      %p434 = scmp.ne.s32.totalorder %s425, %s426
      %p435 = scmp.eq.s32.totalorder %s79, 0
      %p436 = por %p434, %p435
      %p437 = scmp.ne.s32.totalorder %s425, %s426
      %p438 = scmp.eq.s32.totalorder %s80, 1
      %p439 = por %p437, %p438
      %p441 = scmp.ne.s32.totalorder %s426, %s440
      %p442 = scmp.eq.s32.totalorder %s80, 0
      %p443 = por %p441, %p442
      %s445 = sadd.s32 %s444, 1
      %p448 = scmp.eq.s32.totalorder %s74, 1
      %p449 = scmp.ne.s32.totalorder %s444, %s446
      %p450 = scmp.eq.s32.totalorder %s74, 0
      %p451 = por %p449, %p450
      %p452 = scmp.ne.s32.totalorder %s444, %s446
      %p453 = scmp.eq.s32.totalorder %s79, 1
      %p454 = por %p452, %p453
      %p455 = scmp.ne.s32.totalorder %s446, %s447
      %p456 = scmp.eq.s32.totalorder %s79, 0
      %p457 = por %p455, %p456
      %p458 = scmp.ne.s32.totalorder %s446, %s447
      %p459 = scmp.eq.s32.totalorder %s80, 1
      %p460 = por %p458, %p459
      %p462 = scmp.ne.s32.totalorder %s447, %s461
      %p463 = scmp.eq.s32.totalorder %s80, 0
      %p464 = por %p462, %p463
      %s466 = sadd.s32 %s465, 1
      %p469 = scmp.eq.s32.totalorder %s74, 1
      %p470 = scmp.ne.s32.totalorder %s465, %s467
      %p471 = scmp.eq.s32.totalorder %s74, 0
      %p472 = por %p470, %p471
      %p473 = scmp.ne.s32.totalorder %s465, %s467
      %p474 = scmp.eq.s32.totalorder %s79, 1
      %p475 = por %p473, %p474
      %p476 = scmp.ne.s32.totalorder %s467, %s468
      %p477 = scmp.eq.s32.totalorder %s79, 0
      %p478 = por %p476, %p477
      %p479 = scmp.ne.s32.totalorder %s467, %s468
      %p480 = scmp.eq.s32.totalorder %s80, 1
      %p481 = por %p479, %p480
      %p483 = scmp.ne.s32.totalorder %s468, %s482
      %p484 = scmp.eq.s32.totalorder %s80, 0
      %p485 = por %p483, %p484
      %s487 = sadd.s32 %s486, 1
      %p490 = scmp.eq.s32.totalorder %s74, 1
      %p491 = scmp.ne.s32.totalorder %s486, %s488
      %p492 = scmp.eq.s32.totalorder %s74, 0
      %p493 = por %p491, %p492
      %p494 = scmp.ne.s32.totalorder %s486, %s488
      %p495 = scmp.eq.s32.totalorder %s79, 1
      %p496 = por %p494, %p495
      %p497 = scmp.ne.s32.totalorder %s488, %s489
      %p498 = scmp.eq.s32.totalorder %s79, 0
      %p499 = por %p497, %p498
      %p500 = scmp.ne.s32.totalorder %s488, %s489
      %p501 = scmp.eq.s32.totalorder %s80, 1
      %p502 = por %p500, %p501
      %p504 = scmp.ne.s32.totalorder %s489, %s503
      %p505 = scmp.eq.s32.totalorder %s80, 0
      %p506 = por %p504, %p505
      %s508 = sadd.s32 %s507, 1
      %p511 = scmp.eq.s32.totalorder %s74, 1
      %p512 = scmp.ne.s32.totalorder %s507, %s509
      %p513 = scmp.eq.s32.totalorder %s74, 0
      %p514 = por %p512, %p513
      %p515 = scmp.ne.s32.totalorder %s507, %s509
      %p516 = scmp.eq.s32.totalorder %s79, 1
      %p517 = por %p515, %p516
      %p518 = scmp.ne.s32.totalorder %s509, %s510
      %p519 = scmp.eq.s32.totalorder %s79, 0
      %p520 = por %p518, %p519
      %p521 = scmp.ne.s32.totalorder %s509, %s510
      %p522 = scmp.eq.s32.totalorder %s80, 1
      %p523 = por %p521, %p522
      %p525 = scmp.ne.s32.totalorder %s510, %s524
      %p526 = scmp.eq.s32.totalorder %s80, 0
      %p527 = por %p525, %p526
      %s529 = sadd.s32 %s528, 1
      %p532 = scmp.eq.s32.totalorder %s74, 1
      %p533 = scmp.ne.s32.totalorder %s528, %s530
      %p534 = scmp.eq.s32.totalorder %s74, 0
      %p535 = por %p533, %p534
      %p536 = scmp.ne.s32.totalorder %s528, %s530
      %p537 = scmp.eq.s32.totalorder %s79, 1
      %p538 = por %p536, %p537
      %p539 = scmp.ne.s32.totalorder %s530, %s531
      %p540 = scmp.eq.s32.totalorder %s79, 0
      %p541 = por %p539, %p540
      %p542 = scmp.ne.s32.totalorder %s530, %s531
      %p543 = scmp.eq.s32.totalorder %s80, 1
      %p544 = por %p542, %p543
      %p546 = scmp.ne.s32.totalorder %s531, %s545
      %p547 = scmp.eq.s32.totalorder %s80, 0
      %p548 = por %p546, %p547
      %s550 = sadd.s32 %s549, 1
      %p553 = scmp.eq.s32.totalorder %s74, 1
      %p554 = scmp.ne.s32.totalorder %s549, %s551
      %p555 = scmp.eq.s32.totalorder %s74, 0
      %p556 = por %p554, %p555
      %p557 = scmp.ne.s32.totalorder %s549, %s551
      %p558 = scmp.eq.s32.totalorder %s79, 1
      %p559 = por %p557, %p558
      %p560 = scmp.ne.s32.totalorder %s551, %s552
      %p561 = scmp.eq.s32.totalorder %s79, 0
      %p562 = por %p560, %p561
      %p563 = scmp.ne.s32.totalorder %s551, %s552
      %p564 = scmp.eq.s32.totalorder %s80, 1
      %p565 = por %p563, %p564
      %p567 = scmp.ne.s32.totalorder %s552, %s566
      %p568 = scmp.eq.s32.totalorder %s80, 0
      %p569 = por %p567, %p568
      %s571 = sadd.s32 %s570, 1
      %p574 = scmp.eq.s32.totalorder %s74, 1
      %p575 = scmp.ne.s32.totalorder %s570, %s572
      %p576 = scmp.eq.s32.totalorder %s74, 0
      %p577 = por %p575, %p576
      %p578 = scmp.ne.s32.totalorder %s570, %s572
      %p579 = scmp.eq.s32.totalorder %s79, 1
      %p580 = por %p578, %p579
      %p581 = scmp.ne.s32.totalorder %s572, %s573
      %p582 = scmp.eq.s32.totalorder %s79, 0
      %p583 = por %p581, %p582
      %p584 = scmp.ne.s32.totalorder %s572, %s573
      %p585 = scmp.eq.s32.totalorder %s80, 1
      %p586 = por %p584, %p585
      %p588 = scmp.ne.s32.totalorder %s573, %s587
      %p589 = scmp.eq.s32.totalorder %s80, 0
      %p590 = por %p588, %p589
      %s592 = sadd.s32 %s591, 1
      %p595 = scmp.eq.s32.totalorder %s74, 1
      %p596 = scmp.ne.s32.totalorder %s591, %s593
      %p597 = scmp.eq.s32.totalorder %s74, 0
      %p598 = por %p596, %p597
      %p599 = scmp.ne.s32.totalorder %s591, %s593
      %p600 = scmp.eq.s32.totalorder %s79, 1
      %p601 = por %p599, %p600
      %p602 = scmp.ne.s32.totalorder %s593, %s594
      %p603 = scmp.eq.s32.totalorder %s79, 0
      %p604 = por %p602, %p603
      %p605 = scmp.ne.s32.totalorder %s593, %s594
      %p606 = scmp.eq.s32.totalorder %s80, 1
      %p607 = por %p605, %p606
      %p609 = scmp.ne.s32.totalorder %s594, %s608
      %p610 = scmp.eq.s32.totalorder %s80, 0
      %p611 = por %p609, %p610
      %s613 = sadd.s32 %s612, 1
      %p616 = scmp.eq.s32.totalorder %s74, 1
      %p617 = scmp.ne.s32.totalorder %s612, %s614
      %p618 = scmp.eq.s32.totalorder %s74, 0
      %p619 = por %p617, %p618
      %p620 = scmp.ne.s32.totalorder %s612, %s614
      %p621 = scmp.eq.s32.totalorder %s79, 1
      %p622 = por %p620, %p621
      %p623 = scmp.ne.s32.totalorder %s614, %s615
      %p624 = scmp.eq.s32.totalorder %s79, 0
      %p625 = por %p623, %p624
      %p626 = scmp.ne.s32.totalorder %s614, %s615
      %p627 = scmp.eq.s32.totalorder %s80, 1
      %p628 = por %p626, %p627
      %p630 = scmp.ne.s32.totalorder %s615, %s629
      %p631 = scmp.eq.s32.totalorder %s80, 0
      %p632 = por %p630, %p631
      %s634 = sadd.s32 %s633, 1
      %p637 = scmp.eq.s32.totalorder %s74, 1
      %p638 = scmp.ne.s32.totalorder %s633, %s635
      %p639 = scmp.eq.s32.totalorder %s74, 0
      %p640 = por %p638, %p639
      %p641 = scmp.ne.s32.totalorder %s633, %s635
      %p642 = scmp.eq.s32.totalorder %s79, 1
      %p643 = por %p641, %p642
      %p644 = scmp.ne.s32.totalorder %s635, %s636
      %p645 = scmp.eq.s32.totalorder %s79, 0
      %p646 = por %p644, %p645
      %p647 = scmp.ne.s32.totalorder %s635, %s636
      %p648 = scmp.eq.s32.totalorder %s80, 1
      %p649 = por %p647, %p648
      %p651 = scmp.ne.s32.totalorder %s636, %s650
      %p652 = scmp.eq.s32.totalorder %s80, 0
      %p653 = por %p651, %p652
      %s655 = sadd.s32 %s654, 1
      %p658 = scmp.eq.s32.totalorder %s74, 1
      %p659 = scmp.ne.s32.totalorder %s654, %s656
      %p660 = scmp.eq.s32.totalorder %s74, 0
      %p661 = por %p659, %p660
      %p662 = scmp.ne.s32.totalorder %s654, %s656
      %p663 = scmp.eq.s32.totalorder %s79, 1
      %p664 = por %p662, %p663
      %p665 = scmp.ne.s32.totalorder %s656, %s657
      %p666 = scmp.eq.s32.totalorder %s79, 0
      %p667 = por %p665, %p666
      %p668 = scmp.ne.s32.totalorder %s656, %s657
      %p669 = scmp.eq.s32.totalorder %s80, 1
      %p670 = por %p668, %p669
      %p672 = scmp.ne.s32.totalorder %s657, %s671
      %p673 = scmp.eq.s32.totalorder %s80, 0
      %p674 = por %p672, %p673
      %s676 = sadd.s32 %s675, 1
      %p679 = scmp.eq.s32.totalorder %s74, 1
      %p680 = scmp.ne.s32.totalorder %s675, %s677
      %p681 = scmp.eq.s32.totalorder %s74, 0
      %p682 = por %p680, %p681
      %p683 = scmp.ne.s32.totalorder %s675, %s677
      %p684 = scmp.eq.s32.totalorder %s79, 1
      %p685 = por %p683, %p684
      %p686 = scmp.ne.s32.totalorder %s677, %s678
      %p687 = scmp.eq.s32.totalorder %s79, 0
      %p688 = por %p686, %p687
      %p689 = scmp.ne.s32.totalorder %s677, %s678
      %p690 = scmp.eq.s32.totalorder %s80, 1
      %p691 = por %p689, %p690
      %p693 = scmp.ne.s32.totalorder %s678, %s692
      %p694 = scmp.eq.s32.totalorder %s80, 0
      %p695 = por %p693, %p694
      %s697 = sadd.s32 %s696, 1
      %p700 = scmp.eq.s32.totalorder %s74, 1
      %p701 = scmp.ne.s32.totalorder %s696, %s698
      %p702 = scmp.eq.s32.totalorder %s74, 0
      %p703 = por %p701, %p702
      %p704 = scmp.ne.s32.totalorder %s696, %s698
      %p705 = scmp.eq.s32.totalorder %s79, 1
      %p706 = por %p704, %p705
      %p707 = scmp.ne.s32.totalorder %s698, %s699
      %p708 = scmp.eq.s32.totalorder %s79, 0
      %p709 = por %p707, %p708
      %p710 = scmp.ne.s32.totalorder %s698, %s699
      %p711 = scmp.eq.s32.totalorder %s80, 1
      %p712 = por %p710, %p711
      %p714 = scmp.ne.s32.totalorder %s699, %s713
      %p715 = scmp.eq.s32.totalorder %s80, 0
      %p716 = por %p714, %p715
      %s718 = sadd.s32 %s717, 1
      %p721 = scmp.eq.s32.totalorder %s74, 1
      %p722 = scmp.ne.s32.totalorder %s717, %s719
      %p723 = scmp.eq.s32.totalorder %s74, 0
      %p724 = por %p722, %p723
      %p725 = scmp.ne.s32.totalorder %s717, %s719
      %p726 = scmp.eq.s32.totalorder %s79, 1
      %p727 = por %p725, %p726
      %p728 = scmp.ne.s32.totalorder %s719, %s720
      %p729 = scmp.eq.s32.totalorder %s79, 0
      %p730 = por %p728, %p729
      %p731 = scmp.ne.s32.totalorder %s719, %s720
      %p732 = scmp.eq.s32.totalorder %s80, 1
      %p733 = por %p731, %p732
      %p735 = scmp.ne.s32.totalorder %s720, %s734
      %p736 = scmp.eq.s32.totalorder %s80, 0
      %p737 = por %p735, %p736
      %s738 = ssub.s32 %s74, %s81
      %p739 = scmp.eq.s32.totalorder %s738, 0
      %s741 = sadd.s32 %s740, 1
      %s742 = scalar_select %p739, %s740, %s741
      %p745 = pneg %p739
      %p746 = scmp.eq.s32.totalorder %s74, 1
      %p747 = por %p745, %p746
      %p748 = scmp.ne.s32.totalorder %s740, %s743
      %p749 = scmp.eq.s32.totalorder %s74, 0
      %p750 = por %p748, %p749
      %p751 = scmp.ne.s32.totalorder %s740, %s743
      %p752 = scmp.eq.s32.totalorder %s79, 1
      %p753 = por %p751, %p752
      %p754 = scmp.ne.s32.totalorder %s743, %s744
      %p755 = scmp.eq.s32.totalorder %s79, 0
      %p756 = por %p754, %p755
      %p757 = scmp.ne.s32.totalorder %s743, %s744
      %p758 = scmp.eq.s32.totalorder %s80, 1
      %p759 = por %p757, %p758
      %p761 = scmp.ne.s32.totalorder %s744, %s760
      %p762 = scmp.eq.s32.totalorder %s80, 0
      %p763 = por %p761, %p762
      %p764 = scmp.le.s32.totalorder 1, %s74
      %p765 = scmp.lt.s32.totalorder %s74, 3
      %p766 = pnand %p764, %p765
      %p767 = pneg %p766
      // Predicated region
      $region9: #{inception_autoencoder_forward.1} parent=5 // pred_check
        _
      $region10: #{inception_autoencoder_forward.1} parent=5 // pred_check_branch
        %769 = sbr.rel (%p766) target = $region12
      $region11: #{inception_autoencoder_forward.1} parent=5 // pred_region
        %s770 = ssub.s32 %s74, 1
        // Predicated region
        $region13: #{inception_autoencoder_forward.1} parent=11 // pred_check
          %p771 = pneg %p121
        $region14: #{inception_autoencoder_forward.1} parent=11 // pred_check_branch
          %773 = sbr.rel (%p771) target = $region16
        $region15: #{inception_autoencoder_forward.1} parent=11 // pred_region
          _
        $region16: #{inception_autoencoder_forward.1} parent=11 // pred_fallthru
          _
        // Predicated region
        $region17: #{inception_autoencoder_forward.1} parent=11 // pred_check
          %p774 = pneg %p142
        $region18: #{inception_autoencoder_forward.1} parent=11 // pred_check_branch
          %776 = sbr.rel (%p774) target = $region20
        $region19: #{inception_autoencoder_forward.1} parent=11 // pred_region
          _
        $region20: #{inception_autoencoder_forward.1} parent=11 // pred_fallthru
          _
        // Predicated region
        $region21: #{inception_autoencoder_forward.1} parent=11 // pred_check
          %p777 = pneg %p163
        $region22: #{inception_autoencoder_forward.1} parent=11 // pred_check_branch
          %779 = sbr.rel (%p777) target = $region24
        $region23: #{inception_autoencoder_forward.1} parent=11 // pred_region
          %s781 = ssub.s32 20480, 20480
          %782 = vsyncadd [#allocation6], %s781
          %s783 = sshll.u32 [#allocation5], 4
          %s784 = int_to_ptr.vmem [resolvable:$true] %s783
          %789 = dma.hbm_to_vmem [thread:$0]  %s7, 20480, %s784, [#allocation6], 128, 128, 8
        $region24: #{inception_autoencoder_forward.1} parent=11 // pred_fallthru
          _
        // Predicated region
        $region25: #{inception_autoencoder_forward.1} parent=11 // pred_check
          %p790 = pneg %p184
        $region26: #{inception_autoencoder_forward.1} parent=11 // pred_check_branch
          %792 = sbr.rel (%p790) target = $region28
        $region27: #{inception_autoencoder_forward.1} parent=11 // pred_region
          _
        $region28: #{inception_autoencoder_forward.1} parent=11 // pred_fallthru
          _
        // Predicated region
        $region29: #{inception_autoencoder_forward.1} parent=11 // pred_check
          %p793 = pneg %p205
        $region30: #{inception_autoencoder_forward.1} parent=11 // pred_check_branch
          %795 = sbr.rel (%p793) target = $region32
        $region31: #{inception_autoencoder_forward.1} parent=11 // pred_region
          _
        $region32: #{inception_autoencoder_forward.1} parent=11 // pred_fallthru
          _
        // Predicated region
        $region33: #{inception_autoencoder_forward.1} parent=11 // pred_check
          %p796 = pneg %p226
        $region34: #{inception_autoencoder_forward.1} parent=11 // pred_check_branch
          %798 = sbr.rel (%p796) target = $region36
        $region35: #{inception_autoencoder_forward.1} parent=11 // pred_region
          _
        $region36: #{inception_autoencoder_forward.1} parent=11 // pred_fallthru
          _
        // Predicated region
        $region37: #{inception_autoencoder_forward.1} parent=11 // pred_check
          %p799 = pneg %p247
        $region38: #{inception_autoencoder_forward.1} parent=11 // pred_check_branch
          %801 = sbr.rel (%p799) target = $region40
        $region39: #{inception_autoencoder_forward.1} parent=11 // pred_region
          _
        $region40: #{inception_autoencoder_forward.1} parent=11 // pred_fallthru
          _
        // Predicated region
        $region41: #{inception_autoencoder_forward.1} parent=11 // pred_check
          %p802 = pneg %p268
        $region42: #{inception_autoencoder_forward.1} parent=11 // pred_check_branch
          %804 = sbr.rel (%p802) target = $region44
        $region43: #{inception_autoencoder_forward.1} parent=11 // pred_region
          _
        $region44: #{inception_autoencoder_forward.1} parent=11 // pred_fallthru
          _
        // Predicated region
        $region45: #{inception_autoencoder_forward.1} parent=11 // pred_check
          %p805 = pneg %p289
        $region46: #{inception_autoencoder_forward.1} parent=11 // pred_check_branch
          %807 = sbr.rel (%p805) target = $region48
        $region47: #{inception_autoencoder_forward.1} parent=11 // pred_region
          %s809 = ssub.s32 2048, 2048
          %810 = vsyncadd [#allocation8], %s809
          %s811 = sshll.u32 [#allocation7], 4
          %s812 = int_to_ptr.vmem [resolvable:$true] %s811
          %817 = dma.hbm_to_vmem [thread:$0]  %s19, 2048, %s812, [#allocation8], 128, 128, 8
        $region48: #{inception_autoencoder_forward.1} parent=11 // pred_fallthru
          _
        // Predicated region
        $region49: #{inception_autoencoder_forward.1} parent=11 // pred_check
          %p818 = pneg %p310
        $region50: #{inception_autoencoder_forward.1} parent=11 // pred_check_branch
          %820 = sbr.rel (%p818) target = $region52
        $region51: #{inception_autoencoder_forward.1} parent=11 // pred_region
          _
        $region52: #{inception_autoencoder_forward.1} parent=11 // pred_fallthru
          _
        // Predicated region
        $region53: #{inception_autoencoder_forward.1} parent=11 // pred_check
          %p821 = pneg %p331
        $region54: #{inception_autoencoder_forward.1} parent=11 // pred_check_branch
          %823 = sbr.rel (%p821) target = $region56
        $region55: #{inception_autoencoder_forward.1} parent=11 // pred_region
          %s825 = ssub.s32 20480, 20480
          %826 = vsyncadd [#allocation8], %s825
          %s827 = sshll.u32 [#allocation9], 4
          %s828 = int_to_ptr.vmem [resolvable:$true] %s827
          %833 = dma.hbm_to_vmem [thread:$0]  %s23, 20480, %s828, [#allocation8], 128, 128, 8
        $region56: #{inception_autoencoder_forward.1} parent=11 // pred_fallthru
          _
        // Predicated region
        $region57: #{inception_autoencoder_forward.1} parent=11 // pred_check
          %p834 = pneg %p352
        $region58: #{inception_autoencoder_forward.1} parent=11 // pred_check_branch
          %836 = sbr.rel (%p834) target = $region60
        $region59: #{inception_autoencoder_forward.1} parent=11 // pred_region
          _
        $region60: #{inception_autoencoder_forward.1} parent=11 // pred_fallthru
          _
        // Predicated region
        $region61: #{inception_autoencoder_forward.1} parent=11 // pred_check
          %p837 = pneg %p373
        $region62: #{inception_autoencoder_forward.1} parent=11 // pred_check_branch
          %839 = sbr.rel (%p837) target = $region64
        $region63: #{inception_autoencoder_forward.1} parent=11 // pred_region
          %s841 = ssub.s32 2048, 2048
          %842 = vsyncadd [#allocation11], %s841
          %s843 = sshll.u32 [#allocation10], 4
          %s844 = int_to_ptr.vmem [resolvable:$true] %s843
          %849 = dma.hbm_to_vmem [thread:$0]  %s27, 2048, %s844, [#allocation11], 128, 128, 8
        $region64: #{inception_autoencoder_forward.1} parent=11 // pred_fallthru
          _
        // Predicated region
        $region65: #{inception_autoencoder_forward.1} parent=11 // pred_check
          %p850 = pneg %p394
        $region66: #{inception_autoencoder_forward.1} parent=11 // pred_check_branch
          %852 = sbr.rel (%p850) target = $region68
        $region67: #{inception_autoencoder_forward.1} parent=11 // pred_region
          _
        $region68: #{inception_autoencoder_forward.1} parent=11 // pred_fallthru
          _
        // Predicated region
        $region69: #{inception_autoencoder_forward.1} parent=11 // pred_check
          %p853 = pneg %p415
        $region70: #{inception_autoencoder_forward.1} parent=11 // pred_check_branch
          %855 = sbr.rel (%p853) target = $region72
        $region71: #{inception_autoencoder_forward.1} parent=11 // pred_region
          _
        $region72: #{inception_autoencoder_forward.1} parent=11 // pred_fallthru
          _
        // Predicated region
        $region73: #{inception_autoencoder_forward.1} parent=11 // pred_check
          %p856 = pneg %p436
        $region74: #{inception_autoencoder_forward.1} parent=11 // pred_check_branch
          %858 = sbr.rel (%p856) target = $region76
        $region75: #{inception_autoencoder_forward.1} parent=11 // pred_region
          _
        $region76: #{inception_autoencoder_forward.1} parent=11 // pred_fallthru
          _
        // Predicated region
        $region77: #{inception_autoencoder_forward.1} parent=11 // pred_check
          %p859 = pneg %p457
        $region78: #{inception_autoencoder_forward.1} parent=11 // pred_check_branch
          %861 = sbr.rel (%p859) target = $region80
        $region79: #{inception_autoencoder_forward.1} parent=11 // pred_region
          %s863 = ssub.s32 2048, 2048
          %864 = vsyncadd [#allocation11], %s863
          %s865 = sshll.u32 [#allocation12], 4
          %s866 = int_to_ptr.vmem [resolvable:$true] %s865
          %871 = dma.hbm_to_vmem [thread:$0]  %s35, 2048, %s866, [#allocation11], 128, 128, 8
        $region80: #{inception_autoencoder_forward.1} parent=11 // pred_fallthru
          _
        // Predicated region
        $region81: #{inception_autoencoder_forward.1} parent=11 // pred_check
          %p872 = pneg %p478
        $region82: #{inception_autoencoder_forward.1} parent=11 // pred_check_branch
          %874 = sbr.rel (%p872) target = $region84
        $region83: #{inception_autoencoder_forward.1} parent=11 // pred_region
          _
        $region84: #{inception_autoencoder_forward.1} parent=11 // pred_fallthru
          _
        // Predicated region
        $region85: #{inception_autoencoder_forward.1} parent=11 // pred_check
          %p875 = pneg %p499
        $region86: #{inception_autoencoder_forward.1} parent=11 // pred_check_branch
          %877 = sbr.rel (%p875) target = $region88
        $region87: #{inception_autoencoder_forward.1} parent=11 // pred_region
          %s879 = ssub.s32 20480, 20480
          %880 = vsyncadd [#allocation14], %s879
          %s881 = sshll.u32 [#allocation13], 4
          %s882 = int_to_ptr.vmem [resolvable:$true] %s881
          %887 = dma.hbm_to_vmem [thread:$0]  %s39, 20480, %s882, [#allocation14], 128, 128, 8
        $region88: #{inception_autoencoder_forward.1} parent=11 // pred_fallthru
          _
        // Predicated region
        $region89: #{inception_autoencoder_forward.1} parent=11 // pred_check
          %p888 = pneg %p520
        $region90: #{inception_autoencoder_forward.1} parent=11 // pred_check_branch
          %890 = sbr.rel (%p888) target = $region92
        $region91: #{inception_autoencoder_forward.1} parent=11 // pred_region
          _
        $region92: #{inception_autoencoder_forward.1} parent=11 // pred_fallthru
          _
        // Predicated region
        $region93: #{inception_autoencoder_forward.1} parent=11 // pred_check
          %p891 = pneg %p541
        $region94: #{inception_autoencoder_forward.1} parent=11 // pred_check_branch
          %893 = sbr.rel (%p891) target = $region96
        $region95: #{inception_autoencoder_forward.1} parent=11 // pred_region
          %s895 = ssub.s32 2048, 2048
          %896 = vsyncadd [#allocation14], %s895
          %s897 = sshll.u32 [#allocation15], 4
          %s898 = int_to_ptr.vmem [resolvable:$true] %s897
          %903 = dma.hbm_to_vmem [thread:$0]  %s43, 2048, %s898, [#allocation14], 128, 128, 8
        $region96: #{inception_autoencoder_forward.1} parent=11 // pred_fallthru
          _
        // Predicated region
        $region97: #{inception_autoencoder_forward.1} parent=11 // pred_check
          %p904 = pneg %p562
        $region98: #{inception_autoencoder_forward.1} parent=11 // pred_check_branch
          %906 = sbr.rel (%p904) target = $region100
        $region99: #{inception_autoencoder_forward.1} parent=11 // pred_region
          _
        $region100: #{inception_autoencoder_forward.1} parent=11 // pred_fallthru
          _
        // Predicated region
        $region101: #{inception_autoencoder_forward.1} parent=11 // pred_check
          %p907 = pneg %p583
        $region102: #{inception_autoencoder_forward.1} parent=11 // pred_check_branch
          %909 = sbr.rel (%p907) target = $region104
        $region103: #{inception_autoencoder_forward.1} parent=11 // pred_region
          _
        $region104: #{inception_autoencoder_forward.1} parent=11 // pred_fallthru
          _
        // Predicated region
        $region105: #{inception_autoencoder_forward.1} parent=11 // pred_check
          %p910 = pneg %p604
        $region106: #{inception_autoencoder_forward.1} parent=11 // pred_check_branch
          %912 = sbr.rel (%p910) target = $region108
        $region107: #{inception_autoencoder_forward.1} parent=11 // pred_region
          _
        $region108: #{inception_autoencoder_forward.1} parent=11 // pred_fallthru
          _
        // Predicated region
        $region109: #{inception_autoencoder_forward.1} parent=11 // pred_check
          %p913 = pneg %p625
        $region110: #{inception_autoencoder_forward.1} parent=11 // pred_check_branch
          %915 = sbr.rel (%p913) target = $region112
        $region111: #{inception_autoencoder_forward.1} parent=11 // pred_region
          %s917 = ssub.s32 4096, 4096
          %918 = vsyncadd [#allocation17], %s917
          %s919 = sshll.u32 [#allocation16], 4
          %s920 = int_to_ptr.vmem [resolvable:$true] %s919
          %925 = dma.hbm_to_vmem [thread:$0]  %s51, 4096, %s920, [#allocation17], 256, 256, 16
        $region112: #{inception_autoencoder_forward.1} parent=11 // pred_fallthru
          _
        // Predicated region
        $region113: #{inception_autoencoder_forward.1} parent=11 // pred_check
          %p926 = pneg %p646
        $region114: #{inception_autoencoder_forward.1} parent=11 // pred_check_branch
          %928 = sbr.rel (%p926) target = $region116
        $region115: #{inception_autoencoder_forward.1} parent=11 // pred_region
          _
        $region116: #{inception_autoencoder_forward.1} parent=11 // pred_fallthru
          _
        // Predicated region
        $region117: #{inception_autoencoder_forward.1} parent=11 // pred_check
          %p929 = pneg %p667
        $region118: #{inception_autoencoder_forward.1} parent=11 // pred_check_branch
          %931 = sbr.rel (%p929) target = $region120
        $region119: #{inception_autoencoder_forward.1} parent=11 // pred_region
          %s933 = ssub.s32 4096, 4096
          %934 = vsyncadd [#allocation17], %s933
          %s935 = sshll.u32 [#allocation18], 4
          %s936 = int_to_ptr.vmem [resolvable:$true] %s935
          %941 = dma.hbm_to_vmem [thread:$0]  %s55, 4096, %s936, [#allocation17], 256, 256, 16
        $region120: #{inception_autoencoder_forward.1} parent=11 // pred_fallthru
          _
        // Predicated region
        $region121: #{inception_autoencoder_forward.1} parent=11 // pred_check
          %p942 = pneg %p688
        $region122: #{inception_autoencoder_forward.1} parent=11 // pred_check_branch
          %944 = sbr.rel (%p942) target = $region124
        $region123: #{inception_autoencoder_forward.1} parent=11 // pred_region
          _
        $region124: #{inception_autoencoder_forward.1} parent=11 // pred_fallthru
          _
        // Predicated region
        $region125: #{inception_autoencoder_forward.1} parent=11 // pred_check
          %p945 = pneg %p709
        $region126: #{inception_autoencoder_forward.1} parent=11 // pred_check_branch
          %947 = sbr.rel (%p945) target = $region128
        $region127: #{inception_autoencoder_forward.1} parent=11 // pred_region
          _
        $region128: #{inception_autoencoder_forward.1} parent=11 // pred_fallthru
          _
        // Predicated region
        $region129: #{inception_autoencoder_forward.1} parent=11 // pred_check
          %p948 = pneg %p730
        $region130: #{inception_autoencoder_forward.1} parent=11 // pred_check_branch
          %950 = sbr.rel (%p948) target = $region132
        $region131: #{inception_autoencoder_forward.1} parent=11 // pred_region
          _
        $region132: #{inception_autoencoder_forward.1} parent=11 // pred_fallthru
          _
      $region12: #{inception_autoencoder_forward.1} parent=5 // pred_fallthru
        _
      %p951 = scmp.lt.s32.totalorder %s74, 2
      // Predicated region
      $region133: #{inception_autoencoder_forward.1} parent=5 // pred_check
        %p952 = pneg %p951
      $region134: #{inception_autoencoder_forward.1} parent=5 // pred_check_branch
        %954 = sbr.rel (%p952) target = $region136
      $region135: #{inception_autoencoder_forward.1} parent=5 // pred_region
        // Predicated region
        $region137: #{inception_autoencoder_forward.1} parent=135 // pred_check
          %p955 = pneg %p94
        $region138: #{inception_autoencoder_forward.1} parent=135 // pred_check_branch
          %957 = sbr.rel (%p955) target = $region140
        $region139: #{inception_autoencoder_forward.1} parent=135 // pred_region
          %p958 = scmp.lt.s32.totalorder %s74, 1
          %s959 = scalar_select %p958, %s74, 1
          %s960 = smul.addr %s959, 4
          %s961 = smul.addr %s960, 8
          %s962 = scalar_lea.vmem %s1, %s961
        $region140: #{inception_autoencoder_forward.1} parent=135 // pred_fallthru
          _
      $region136: #{inception_autoencoder_forward.1} parent=5 // pred_fallthru
        _
      %p963 = scmp.le.s32.totalorder 1, %s74
      %p964 = scmp.lt.s32.totalorder %s74, 3
      %p965 = pnand %p963, %p964
      %p966 = pneg %p965
      // Predicated region
      $region141: #{inception_autoencoder_forward.1} parent=5 // pred_check
        _
      $region142: #{inception_autoencoder_forward.1} parent=5 // pred_check_branch
        %968 = sbr.rel (%p965) target = $region144
      $region143: #{inception_autoencoder_forward.1} parent=5 // pred_region
        %s969 = ssub.s32 %s74, 1
        // Predicated region
        $region145: #{inception_autoencoder_forward.1} parent=143 // pred_check
          %p970 = pneg %p163
        $region146: #{inception_autoencoder_forward.1} parent=143 // pred_check_branch
          %972 = sbr.rel (%p970) target = $region148
        $region147: #{inception_autoencoder_forward.1} parent=143 // pred_region
          %973 = dma.done [#allocation6], 20480
        $region148: #{inception_autoencoder_forward.1} parent=143 // pred_fallthru
          _
        // Predicated region
        $region149: #{inception_autoencoder_forward.1} parent=143 // pred_check
          %p974 = pneg %p289
        $region150: #{inception_autoencoder_forward.1} parent=143 // pred_check_branch
          %976 = sbr.rel (%p974) target = $region152
        $region151: #{inception_autoencoder_forward.1} parent=143 // pred_region
          %977 = dma.done [#allocation8], 2048
        $region152: #{inception_autoencoder_forward.1} parent=143 // pred_fallthru
          _
        // Predicated region
        $region153: #{inception_autoencoder_forward.1} parent=143 // pred_check
          %p978 = pneg %p331
        $region154: #{inception_autoencoder_forward.1} parent=143 // pred_check_branch
          %980 = sbr.rel (%p978) target = $region156
        $region155: #{inception_autoencoder_forward.1} parent=143 // pred_region
          %981 = dma.done [#allocation8], 20480
        $region156: #{inception_autoencoder_forward.1} parent=143 // pred_fallthru
          _
        // Predicated region
        $region157: #{inception_autoencoder_forward.1} parent=143 // pred_check
          %p982 = pneg %p373
        $region158: #{inception_autoencoder_forward.1} parent=143 // pred_check_branch
          %984 = sbr.rel (%p982) target = $region160
        $region159: #{inception_autoencoder_forward.1} parent=143 // pred_region
          %985 = dma.done [#allocation11], 2048
        $region160: #{inception_autoencoder_forward.1} parent=143 // pred_fallthru
          _
        // Predicated region
        $region161: #{inception_autoencoder_forward.1} parent=143 // pred_check
          %p986 = pneg %p457
        $region162: #{inception_autoencoder_forward.1} parent=143 // pred_check_branch
          %988 = sbr.rel (%p986) target = $region164
        $region163: #{inception_autoencoder_forward.1} parent=143 // pred_region
          %989 = dma.done [#allocation11], 2048
        $region164: #{inception_autoencoder_forward.1} parent=143 // pred_fallthru
          _
        // Predicated region
        $region165: #{inception_autoencoder_forward.1} parent=143 // pred_check
          %p990 = pneg %p499
        $region166: #{inception_autoencoder_forward.1} parent=143 // pred_check_branch
          %992 = sbr.rel (%p990) target = $region168
        $region167: #{inception_autoencoder_forward.1} parent=143 // pred_region
          %993 = dma.done [#allocation14], 20480
        $region168: #{inception_autoencoder_forward.1} parent=143 // pred_fallthru
          _
        // Predicated region
        $region169: #{inception_autoencoder_forward.1} parent=143 // pred_check
          %p994 = pneg %p541
        $region170: #{inception_autoencoder_forward.1} parent=143 // pred_check_branch
          %996 = sbr.rel (%p994) target = $region172
        $region171: #{inception_autoencoder_forward.1} parent=143 // pred_region
          %997 = dma.done [#allocation14], 2048
        $region172: #{inception_autoencoder_forward.1} parent=143 // pred_fallthru
          _
        // Predicated region
        $region173: #{inception_autoencoder_forward.1} parent=143 // pred_check
          %p998 = pneg %p625
        $region174: #{inception_autoencoder_forward.1} parent=143 // pred_check_branch
          %1000 = sbr.rel (%p998) target = $region176
        $region175: #{inception_autoencoder_forward.1} parent=143 // pred_region
          %1001 = dma.done [#allocation17], 4096
        $region176: #{inception_autoencoder_forward.1} parent=143 // pred_fallthru
          _
        // Predicated region
        $region177: #{inception_autoencoder_forward.1} parent=143 // pred_check
          %p1002 = pneg %p667
        $region178: #{inception_autoencoder_forward.1} parent=143 // pred_check_branch
          %1004 = sbr.rel (%p1002) target = $region180
        $region179: #{inception_autoencoder_forward.1} parent=143 // pred_region
          %1005 = dma.done [#allocation17], 4096
        $region180: #{inception_autoencoder_forward.1} parent=143 // pred_fallthru
          _
        %p1006 = scmp.lt.s32.totalorder %s79, 1
        %s1007 = scalar_select %p1006, %s79, 1
        %s1008 = smul.addr %s1007, 4
        %s1009 = smul.addr %s1008, 8
        %s1010 = scalar_lea.vmem %s1, %s1009
        %p1011 = pneg %p100
        %p1012 = pneg %p97
        %p1013 = pneg %p121
        %p1014 = pneg %p118
        %p1015 = pneg %p142
        %p1016 = pneg %p139
        %p1017 = pneg %p163
        %p1018 = pneg %p160
        %p1019 = pneg %p184
        %p1020 = pneg %p181
        %p1021 = pneg %p205
        %p1022 = pneg %p202
        %p1023 = pneg %p226
        %p1024 = pneg %p223
        %p1025 = pneg %p247
        %p1026 = pneg %p244
        %p1027 = pneg %p268
        %p1028 = pneg %p265
        %p1029 = pneg %p289
        %p1030 = pneg %p286
        %p1031 = pneg %p310
        %p1032 = pneg %p307
        %p1033 = pneg %p331
        %p1034 = pneg %p328
        %p1035 = pneg %p352
        %p1036 = pneg %p349
        %p1037 = pneg %p373
        %p1038 = pneg %p370
        %p1039 = pneg %p394
        %p1040 = pneg %p391
        %p1041 = pneg %p415
        %p1042 = pneg %p412
        %p1043 = pneg %p436
        %p1044 = pneg %p433
        %p1045 = pneg %p457
        %p1046 = pneg %p454
        %p1047 = pneg %p478
        %p1048 = pneg %p475
        %p1049 = pneg %p499
        %p1050 = pneg %p496
        %p1051 = pneg %p520
        %p1052 = pneg %p517
        %p1053 = pneg %p541
        %p1054 = pneg %p538
        %p1055 = pneg %p562
        %p1056 = pneg %p559
        %p1057 = pneg %p583
        %p1058 = pneg %p580
        %p1059 = pneg %p604
        %p1060 = pneg %p601
        %p1061 = pneg %p625
        %p1062 = pneg %p622
        %p1063 = pneg %p646
        %p1064 = pneg %p643
        %p1065 = pneg %p667
        %p1066 = pneg %p664
        %p1067 = pneg %p688
        %p1068 = pneg %p685
        %p1069 = pneg %p709
        %p1070 = pneg %p706
        %p1071 = pneg %p730
        %p1072 = pneg %p727
        %p1073 = pneg %p756
        %p1074 = pneg %p753
        %p1075 = scmp.lt.s32.totalorder %s79, 1
        %s1076 = scalar_select %p1075, %s79, 1
        %s1077 = smul.addr %s1076, 4
        %s1078 = smul.addr %s1077, 8
        %s1079 = scalar_lea.vmem %s63, %s1078
        %p1080 = scmp.lt.s32.totalorder %s79, 1
        %s1081 = scalar_select %p1080, %s79, 1
        %s1082 = smul.addr %s1081, 4
        %s1083 = smul.addr %s1082, 8
        %s1084 = scalar_lea.vmem %s1, %s1083
        %p1085 = scmp.lt.s32.totalorder %s79, 1
        %s1086 = scalar_select %p1085, %s79, 1
        %s1087 = smul.addr %s1086, 4
        %s1088 = smul.addr %s1087, 8
        %s1089 = scalar_lea.vmem %s63, %s1088
        %v1090 = vld [vmem:[%s1084] sm:$0xff]
        %v1091 = vld [vmem:[%s1084 + $0x8] sm:$0xff]
        %v1092 = vld [vmem:[%s1084 + $0x10] sm:$0xff]
        %v1093 = vld [vmem:[%s1084 + $0x18] sm:$0xff]
        %v1094 = vld [vmem:[%s3] sm:$0xf]
        %v1095 = vld [vmem:[%s5] sm:$0x1]
        %v1097 = vlaneseq
        %v1098 = vshrl.u32 %v1097, 7
        %v1099 = vsub.s32 0, %v1098
        %v1100 = vrot.slane %v1095, %v1099
        %vm1102 = vcmask 31744
        %v1104 = vsel %vm1102, %v1090, 0
        %v1107 = vsel %vm1102, %v1091, 0
        %v1110 = vsel %vm1102, %v1092, 0
        %v1113 = vsel %vm1102, %v1093, 0
        %vm1115 = vcmask 1043456
        %v1117 = vsel %vm1115, %v1094, 0
        %1119 = vmatprep.subr.mxu0 0.0
        %1120 = vmatpush1.msra.mxu0 %v1117
        %1121 = vmatprep.subr.mxu0 0.0
        %1122 = vmatpush1.msra.mxu0 0.0
        %1123 = vmatprep.subr.mxu0 0.0
        %1124 = vmatpush1.msra.mxu0 0.0
        %1125 = vmatprep.subr.mxu0 0.0
        %1126 = vmatpush1.msra.mxu0 0.0
        %1127 = vmatprep.subr.mxu0 0.0
        %1128 = vmatpush1.msra.mxu0 0.0
        %1129 = vmatprep.subr.mxu0 0.0
        %1130 = vmatpush1.msra.mxu0 0.0
        %1131 = vmatprep.subr.mxu0 0.0
        %1132 = vmatpush1.msra.mxu0 0.0
        %1133 = vmatprep.subr.mxu0 0.0
        %1134 = vmatpush1.msra.mxu0 0.0
        %1135 = vmatprep.subr.mxu0 0.0
        %1136 = vmatpush1.msra.mxu0 0.0
        %1137 = vmatprep.subr.mxu0 0.0
        %1138 = vmatpush1.msra.mxu0 0.0
        %1139 = vmatprep.subr.mxu0 0.0
        %1140 = vmatpush1.msra.mxu0 0.0
        %1141 = vmatprep.subr.mxu0 0.0
        %1142 = vmatpush1.msra.mxu0 0.0
        %1143 = vmatprep.subr.mxu0 0.0
        %1144 = vmatpush1.msra.mxu0 0.0
        %1145 = vmatprep.subr.mxu0 0.0
        %1146 = vmatpush1.msra.mxu0 0.0
        %1147 = vmatprep.subr.mxu0 0.0
        %1148 = vmatpush1.msra.mxu0 0.0
        %1149 = vmatprep.subr.mxu0 0.0
        %1150 = vmatpush1.msra.mxu0 0.0
        %1151 = vmatprep.subr.mxu0 0.0
        %1152 = vmatpush1.msra.mxu0 0.0
        %1153 = vmatprep.subr.mxu0 0.0
        %1154 = vmatpush1.msra.mxu0 0.0
        %1155 = vmatprep.subr.mxu0 0.0
        %1156 = vmatpush1.msra.mxu0 0.0
        %1157 = vmatprep.subr.mxu0 0.0
        %1158 = vmatpush1.msra.mxu0 0.0
        %1159 = vmatprep.subr.mxu0 0.0
        %1160 = vmatpush1.msra.mxu0 0.0
        %1161 = vmatprep.subr.mxu0 0.0
        %1162 = vmatpush1.msra.mxu0 0.0
        %1163 = vmatprep.subr.mxu0 0.0
        %1164 = vmatpush1.msra.mxu0 0.0
        %1165 = vmatprep.subr.mxu0 0.0
        %1166 = vmatpush1.msra.mxu0 0.0
        %1167 = vmatprep.subr.mxu0 0.0
        %1168 = vmatpush1.msra.mxu0 0.0
        %1169 = vmatprep.subr.mxu0 0.0
        %1170 = vmatpush1.msra.mxu0 0.0
        %1171 = vmatprep.subr.mxu0 0.0
        %1172 = vmatpush1.msra.mxu0 0.0
        %1173 = vmatprep.subr.mxu0 0.0
        %1174 = vmatpush1.msra.mxu0 0.0
        %1175 = vmatprep.subr.mxu0 0.0
        %1176 = vmatpush1.msra.mxu0 0.0
        %1177 = vmatprep.subr.mxu0 0.0
        %1178 = vmatpush1.msra.mxu0 0.0
        %1179 = vmatprep.subr.mxu0 0.0
        %1180 = vmatpush1.msra.mxu0 0.0
        %1181 = vmatprep.subr.mxu0 0.0
        %1182 = vmatpush1.msra.mxu0 0.0
        %1183 = vmatprep.mubr.f32.mxu0 0.0
        %1184 = vmatmul.mubr.f32.gmra.mrb[0].mxu0 %v1104
        %v1185 = vpop.f32.mrb[0].mxu0
        %v1186 = vadd.f32 %v1100, %v1185
        %v1187 = vpop.f32.mrb[0].mxu0
        %1188 = vmatprep.mubr.f32.mxu0 0.0
        %1189 = vmatmul.mubr.f32.gmra.mrb[0].mxu0 %v1107
        %v1190 = vpop.f32.mrb[0].mxu0
        %v1191 = vadd.f32 %v1100, %v1190
        %v1192 = vpop.f32.mrb[0].mxu0
        %1193 = vmatprep.mubr.f32.mxu0 0.0
        %1194 = vmatmul.mubr.f32.gmra.mrb[0].mxu0 %v1110
        %v1195 = vpop.f32.mrb[0].mxu0
        %v1196 = vadd.f32 %v1100, %v1195
        %v1197 = vpop.f32.mrb[0].mxu0
        %1198 = vmatprep.mubr.f32.mxu0 0.0
        %1199 = vmatmul.mubr.f32.gmra.mrb[0].mxu0 %v1113
        %v1200 = vpop.f32.mrb[0].mxu0
        %v1201 = vadd.f32 %v1100, %v1200
        %v1202 = vpop.f32.mrb[0].mxu0
        %1203 = vdwg.mxu0
        %vm1204 = vcmask 261120
        %1205 = vst.msk [vmem:[#allocation2] sm:$0xff] %vm1204, 0.0
        %1206 = vst.msk [vmem:[#allocation2 + $0x8] sm:$0xff] %vm1204, 0.0
        %1207 = vst.msk [vmem:[#allocation2 + $0x10] sm:$0xff] %vm1204, 0.0
        %1208 = vst.msk [vmem:[#allocation2 + $0x18] sm:$0xff] %vm1204, %v1186
        %1209 = vst.msk [vmem:[#allocation2 + $0x20] sm:$0xff] %vm1204, %v1191
        %1210 = vst.msk [vmem:[#allocation2 + $0x28] sm:$0xff] %vm1204, %v1196
        %1211 = vst.msk [vmem:[#allocation2 + $0x30] sm:$0xff] %vm1204, %v1201
        %1212 = vst.msk [vmem:[#allocation2 + $0x38] sm:$0xff] %vm1204, 0.0
        %1213 = vst.msk [vmem:[#allocation2 + $0x40] sm:$0xff] %vm1204, 0.0
        %1214 = vst.msk [vmem:[#allocation2 + $0x48] sm:$0xff] %vm1204, 0.0
        %v1215 = vld [vmem:[#allocation2] sm:$0xff]
        %v1216 = vld [vmem:[#allocation2 + $0x8] sm:$0xff]
        %v1217 = vld [vmem:[#allocation2 + $0x10] sm:$0xff]
        %v1218 = vld [vmem:[#allocation2 + $0x18] sm:$0xff]
        %v1219 = vld [vmem:[#allocation2 + $0x20] sm:$0xff]
        %v1220 = vld [vmem:[#allocation2 + $0x28] sm:$0xff]
        %v1221 = vld [vmem:[#allocation2 + $0x30] sm:$0xff]
        %v1222 = vld [vmem:[#allocation2 + $0x38] sm:$0xff]
        %v1223 = vld [vmem:[#allocation2 + $0x40] sm:$0xff]
        %1224 = vst.msk [vmem:[#allocation3] sm:$0xff] %vm1204, %v1215
        %1225 = vst.msk [vmem:[#allocation3 + $0x8] sm:$0xff] %vm1204, %v1216
        %1226 = vst.msk [vmem:[#allocation3 + $0x10] sm:$0xff] %vm1204, %v1217
        %1227 = vst.msk [vmem:[#allocation3 + $0x18] sm:$0xff] %vm1204, %v1218
        %1228 = vst.msk [vmem:[#allocation3 + $0x20] sm:$0xff] %vm1204, %v1219
        %1229 = vst.msk [vmem:[#allocation3 + $0x28] sm:$0xff] %vm1204, %v1220
        %1230 = vst.msk [vmem:[#allocation3 + $0x30] sm:$0xff] %vm1204, %v1221
        %1231 = vst.msk [vmem:[#allocation3 + $0x38] sm:$0xff] %vm1204, %v1222
        %1232 = vst.msk [vmem:[#allocation3 + $0x40] sm:$0xff] %vm1204, %v1223
        %v1233 = vld [vmem:[#allocation2 + $0x1] sm:$0xff]
        %v1234 = vld [vmem:[#allocation2 + $0x9] sm:$0xff]
        %v1235 = vld [vmem:[#allocation2 + $0x11] sm:$0xff]
        %v1236 = vld [vmem:[#allocation2 + $0x19] sm:$0xff]
        %v1237 = vld [vmem:[#allocation2 + $0x21] sm:$0xff]
        %v1238 = vld [vmem:[#allocation2 + $0x29] sm:$0xff]
        %v1239 = vld [vmem:[#allocation2 + $0x31] sm:$0xff]
        %v1240 = vld [vmem:[#allocation2 + $0x39] sm:$0xff]
        %v1241 = vld [vmem:[#allocation2 + $0x41] sm:$0xff]
        %1251 = vrot.lane.b32.xlu0 %v1233, 32
        %v1252 = vpop.permute.xlu0 %1251
        %1253 = vrot.lane.b32.xlu0 %v1234, 32
        %v1254 = vpop.permute.xlu0 %1253
        %1255 = vrot.lane.b32.xlu0 %v1235, 32
        %v1256 = vpop.permute.xlu0 %1255
        %1257 = vrot.lane.b32.xlu0 %v1236, 32
        %v1258 = vpop.permute.xlu0 %1257
        %1259 = vrot.lane.b32.xlu0 %v1237, 32
        %v1260 = vpop.permute.xlu0 %1259
        %1261 = vrot.lane.b32.xlu0 %v1238, 32
        %v1262 = vpop.permute.xlu0 %1261
        %1263 = vrot.lane.b32.xlu0 %v1239, 32
        %v1264 = vpop.permute.xlu0 %1263
        %1265 = vrot.lane.b32.xlu0 %v1240, 32
        %v1266 = vpop.permute.xlu0 %1265
        %1267 = vrot.lane.b32.xlu0 %v1241, 32
        %v1268 = vpop.permute.xlu0 %1267
        %vm1278 = vcmask 523520
        %1279 = vst.msk [vmem:[#allocation3] sm:$0xff] %vm1278, %v1252
        %1280 = vst.msk [vmem:[#allocation3 + $0x8] sm:$0xff] %vm1278, %v1254
        %1281 = vst.msk [vmem:[#allocation3 + $0x10] sm:$0xff] %vm1278, %v1256
        %1282 = vst.msk [vmem:[#allocation3 + $0x18] sm:$0xff] %vm1278, %v1258
        %1283 = vst.msk [vmem:[#allocation3 + $0x20] sm:$0xff] %vm1278, %v1260
        %1284 = vst.msk [vmem:[#allocation3 + $0x28] sm:$0xff] %vm1278, %v1262
        %1285 = vst.msk [vmem:[#allocation3 + $0x30] sm:$0xff] %vm1278, %v1264
        %1286 = vst.msk [vmem:[#allocation3 + $0x38] sm:$0xff] %vm1278, %v1266
        %1287 = vst.msk [vmem:[#allocation3 + $0x40] sm:$0xff] %vm1278, %v1268
        %v1288 = vld [vmem:[#allocation2 + $0x2] sm:$0xff]
        %v1289 = vld [vmem:[#allocation2 + $0xa] sm:$0xff]
        %v1290 = vld [vmem:[#allocation2 + $0x12] sm:$0xff]
        %v1291 = vld [vmem:[#allocation2 + $0x1a] sm:$0xff]
        %v1292 = vld [vmem:[#allocation2 + $0x22] sm:$0xff]
        %v1293 = vld [vmem:[#allocation2 + $0x2a] sm:$0xff]
        %v1294 = vld [vmem:[#allocation2 + $0x32] sm:$0xff]
        %v1295 = vld [vmem:[#allocation2 + $0x3a] sm:$0xff]
        %v1296 = vld [vmem:[#allocation2 + $0x42] sm:$0xff]
        %1306 = vrot.lane.b32.xlu0 %v1288, 64
        %v1307 = vpop.permute.xlu0 %1306
        %1308 = vrot.lane.b32.xlu0 %v1289, 64
        %v1309 = vpop.permute.xlu0 %1308
        %1310 = vrot.lane.b32.xlu0 %v1290, 64
        %v1311 = vpop.permute.xlu0 %1310
        %1312 = vrot.lane.b32.xlu0 %v1291, 64
        %v1313 = vpop.permute.xlu0 %1312
        %1314 = vrot.lane.b32.xlu0 %v1292, 64
        %v1315 = vpop.permute.xlu0 %1314
        %1316 = vrot.lane.b32.xlu0 %v1293, 64
        %v1317 = vpop.permute.xlu0 %1316
        %1318 = vrot.lane.b32.xlu0 %v1294, 64
        %v1319 = vpop.permute.xlu0 %1318
        %1320 = vrot.lane.b32.xlu0 %v1295, 64
        %v1321 = vpop.permute.xlu0 %1320
        %1322 = vrot.lane.b32.xlu0 %v1296, 64
        %v1323 = vpop.permute.xlu0 %1322
        %vm1333 = vcmask 785920
        %1334 = vst.msk [vmem:[#allocation3] sm:$0xff] %vm1333, %v1307
        %1335 = vst.msk [vmem:[#allocation3 + $0x8] sm:$0xff] %vm1333, %v1309
        %1336 = vst.msk [vmem:[#allocation3 + $0x10] sm:$0xff] %vm1333, %v1311
        %1337 = vst.msk [vmem:[#allocation3 + $0x18] sm:$0xff] %vm1333, %v1313
        %1338 = vst.msk [vmem:[#allocation3 + $0x20] sm:$0xff] %vm1333, %v1315
        %1339 = vst.msk [vmem:[#allocation3 + $0x28] sm:$0xff] %vm1333, %v1317
        %1340 = vst.msk [vmem:[#allocation3 + $0x30] sm:$0xff] %vm1333, %v1319
        %1341 = vst.msk [vmem:[#allocation3 + $0x38] sm:$0xff] %vm1333, %v1321
        %1342 = vst.msk [vmem:[#allocation3 + $0x40] sm:$0xff] %vm1333, %v1323
        %v1343 = vld [vmem:[#allocation2 + $0x3] sm:$0xff]
        %v1344 = vld [vmem:[#allocation2 + $0xb] sm:$0xff]
        %v1345 = vld [vmem:[#allocation2 + $0x13] sm:$0xff]
        %v1346 = vld [vmem:[#allocation2 + $0x1b] sm:$0xff]
        %v1347 = vld [vmem:[#allocation2 + $0x23] sm:$0xff]
        %v1348 = vld [vmem:[#allocation2 + $0x2b] sm:$0xff]
        %v1349 = vld [vmem:[#allocation2 + $0x33] sm:$0xff]
        %v1350 = vld [vmem:[#allocation2 + $0x3b] sm:$0xff]
        %v1351 = vld [vmem:[#allocation2 + $0x43] sm:$0xff]
        %1361 = vrot.lane.b32.xlu0 %v1343, 96
        %v1362 = vpop.permute.xlu0 %1361
        %1363 = vrot.lane.b32.xlu0 %v1344, 96
        %v1364 = vpop.permute.xlu0 %1363
        %1365 = vrot.lane.b32.xlu0 %v1345, 96
        %v1366 = vpop.permute.xlu0 %1365
        %1367 = vrot.lane.b32.xlu0 %v1346, 96
        %v1368 = vpop.permute.xlu0 %1367
        %1369 = vrot.lane.b32.xlu0 %v1347, 96
        %v1370 = vpop.permute.xlu0 %1369
        %1371 = vrot.lane.b32.xlu0 %v1348, 96
        %v1372 = vpop.permute.xlu0 %1371
        %1373 = vrot.lane.b32.xlu0 %v1349, 96
        %v1374 = vpop.permute.xlu0 %1373
        %1375 = vrot.lane.b32.xlu0 %v1350, 96
        %v1376 = vpop.permute.xlu0 %1375
        %1377 = vrot.lane.b32.xlu0 %v1351, 96
        %v1378 = vpop.permute.xlu0 %1377
        %vm1388 = vcmask 1048320
        %1389 = vst.msk [vmem:[#allocation3] sm:$0xff] %vm1388, %v1362
        %1390 = vst.msk [vmem:[#allocation3 + $0x8] sm:$0xff] %vm1388, %v1364
        %1391 = vst.msk [vmem:[#allocation3 + $0x10] sm:$0xff] %vm1388, %v1366
        %1392 = vst.msk [vmem:[#allocation3 + $0x18] sm:$0xff] %vm1388, %v1368
        %1393 = vst.msk [vmem:[#allocation3 + $0x20] sm:$0xff] %vm1388, %v1370
        %1394 = vst.msk [vmem:[#allocation3 + $0x28] sm:$0xff] %vm1388, %v1372
        %1395 = vst.msk [vmem:[#allocation3 + $0x30] sm:$0xff] %vm1388, %v1374
        %1396 = vst.msk [vmem:[#allocation3 + $0x38] sm:$0xff] %vm1388, %v1376
        %1397 = vst.msk [vmem:[#allocation3 + $0x40] sm:$0xff] %vm1388, %v1378
        %v1398 = vld [vmem:[#allocation3 + $0x4] sm:$0xff]
        %v1399 = vld [vmem:[#allocation3 + $0xc] sm:$0xff]
        %v1400 = vld [vmem:[#allocation3 + $0x14] sm:$0xff]
        %v1401 = vld [vmem:[#allocation3 + $0x1c] sm:$0xff]
        %v1402 = vld [vmem:[#allocation5] sm:$0xff]
        %v1403 = vld [vmem:[#allocation5 + $0x8] sm:$0xff]
        %v1404 = vld [vmem:[#allocation5 + $0x10] sm:$0xff]
        %v1405 = vld [vmem:[#allocation5 + $0x18] sm:$0xff]
        %v1406 = vld [vmem:[#allocation5 + $0x20] sm:$0xff]
        %v1407 = vld [vmem:[#allocation5 + $0x28] sm:$0xff]
        %v1408 = vld [vmem:[#allocation5 + $0x30] sm:$0xff]
        %v1409 = vld [vmem:[#allocation5 + $0x38] sm:$0xff]
        %v1410 = vld [vmem:[#allocation5 + $0x40] sm:$0xff]
        %v1411 = vld [vmem:[#allocation5 + $0x48] sm:$0xff]
        %v1412 = vld [vmem:[#allocation5 + $0x50] sm:$0xff]
        %v1413 = vld [vmem:[#allocation5 + $0x58] sm:$0xff]
        %v1414 = vld [vmem:[#allocation5 + $0x60] sm:$0xff]
        %v1415 = vld [vmem:[#allocation5 + $0x68] sm:$0xff]
        %v1416 = vld [vmem:[#allocation5 + $0x70] sm:$0xff]
        %v1417 = vld [vmem:[#allocation5 + $0x78] sm:$0xff]
        %v1418 = vld [vmem:[#allocation3 + $0x8] sm:$0xff]
        %v1419 = vld [vmem:[#allocation3 + $0x10] sm:$0xff]
        %v1420 = vld [vmem:[#allocation3 + $0x18] sm:$0xff]
        %v1421 = vld [vmem:[#allocation3 + $0x20] sm:$0xff]
        %s1422 = scalar_lea.vmem [#allocation5], 128
        %v1423 = vld [vmem:[%s1422] sm:$0xff]
        %v1424 = vld [vmem:[%s1422 + $0x8] sm:$0xff]
        %v1425 = vld [vmem:[%s1422 + $0x10] sm:$0xff]
        %v1426 = vld [vmem:[%s1422 + $0x18] sm:$0xff]
        %v1427 = vld [vmem:[%s1422 + $0x20] sm:$0xff]
        %v1428 = vld [vmem:[%s1422 + $0x28] sm:$0xff]
        %v1429 = vld [vmem:[%s1422 + $0x30] sm:$0xff]
        %v1430 = vld [vmem:[%s1422 + $0x38] sm:$0xff]
        %v1431 = vld [vmem:[%s1422 + $0x40] sm:$0xff]
        %v1432 = vld [vmem:[%s1422 + $0x48] sm:$0xff]
        %v1433 = vld [vmem:[%s1422 + $0x50] sm:$0xff]
        %v1434 = vld [vmem:[%s1422 + $0x58] sm:$0xff]
        %v1435 = vld [vmem:[%s1422 + $0x60] sm:$0xff]
        %v1436 = vld [vmem:[%s1422 + $0x68] sm:$0xff]
        %v1437 = vld [vmem:[%s1422 + $0x70] sm:$0xff]
        %v1438 = vld [vmem:[%s1422 + $0x78] sm:$0xff]
        %1439 = vmatprep.subr.mxu0 0.0
        %1440 = vmatpush1.msra.mxu0 %v1423
        %1441 = vmatprep.subr.mxu0 0.0
        %1442 = vmatpush1.msra.mxu0 %v1424
        %1443 = vmatprep.subr.mxu0 0.0
        %1444 = vmatpush1.msra.mxu0 %v1425
        %1445 = vmatprep.subr.mxu0 0.0
        %1446 = vmatpush1.msra.mxu0 %v1426
        %1447 = vmatprep.subr.mxu0 0.0
        %1448 = vmatpush1.msra.mxu0 %v1427
        %1449 = vmatprep.subr.mxu0 0.0
        %1450 = vmatpush1.msra.mxu0 %v1428
        %1451 = vmatprep.subr.mxu0 0.0
        %1452 = vmatpush1.msra.mxu0 %v1429
        %1453 = vmatprep.subr.mxu0 0.0
        %1454 = vmatpush1.msra.mxu0 %v1430
        %1455 = vmatprep.subr.mxu0 0.0
        %1456 = vmatpush1.msra.mxu0 %v1431
        %1457 = vmatprep.subr.mxu0 0.0
        %1458 = vmatpush1.msra.mxu0 %v1432
        %1459 = vmatprep.subr.mxu0 0.0
        %1460 = vmatpush1.msra.mxu0 %v1433
        %1461 = vmatprep.subr.mxu0 0.0
        %1462 = vmatpush1.msra.mxu0 %v1434
        %1463 = vmatprep.subr.mxu0 0.0
        %1464 = vmatpush1.msra.mxu0 %v1435
        %1465 = vmatprep.subr.mxu0 0.0
        %1466 = vmatpush1.msra.mxu0 %v1436
        %1467 = vmatprep.subr.mxu0 0.0
        %1468 = vmatpush1.msra.mxu0 %v1437
        %1469 = vmatprep.subr.mxu0 0.0
        %1470 = vmatpush1.msra.mxu0 %v1438
        %1471 = vmatprep.subr.mxu0 0.0
        %1472 = vmatpush1.msra.mxu0 0.0
        %1473 = vmatprep.subr.mxu0 0.0
        %1474 = vmatpush1.msra.mxu0 0.0
        %1475 = vmatprep.subr.mxu0 0.0
        %1476 = vmatpush1.msra.mxu0 0.0
        %1477 = vmatprep.subr.mxu0 0.0
        %1478 = vmatpush1.msra.mxu0 0.0
        %1479 = vmatprep.subr.mxu0 0.0
        %1480 = vmatpush1.msra.mxu0 0.0
        %1481 = vmatprep.subr.mxu0 0.0
        %1482 = vmatpush1.msra.mxu0 0.0
        %1483 = vmatprep.subr.mxu0 0.0
        %1484 = vmatpush1.msra.mxu0 0.0
        %1485 = vmatprep.subr.mxu0 0.0
        %1486 = vmatpush1.msra.mxu0 0.0
        %1487 = vmatprep.subr.mxu0 0.0
        %1488 = vmatpush1.msra.mxu0 0.0
        %1489 = vmatprep.subr.mxu0 0.0
        %1490 = vmatpush1.msra.mxu0 0.0
        %1491 = vmatprep.subr.mxu0 0.0
        %1492 = vmatpush1.msra.mxu0 0.0
        %1493 = vmatprep.subr.mxu0 0.0
        %1494 = vmatpush1.msra.mxu0 0.0
        %1495 = vmatprep.subr.mxu0 0.0
        %1496 = vmatpush1.msra.mxu0 0.0
        %1497 = vmatprep.subr.mxu0 0.0
        %1498 = vmatpush1.msra.mxu0 0.0
        %1499 = vmatprep.subr.mxu0 0.0
        %1500 = vmatpush1.msra.mxu0 0.0
        %1501 = vmatprep.subr.mxu0 0.0
        %1502 = vmatpush1.msra.mxu0 0.0
        %1503 = vmatprep.mubr.f32.mxu0 0.0
        %1504 = vmatmul.mubr.f32.gmra.mrb[0].mxu0 %v1418
        %v1505 = vpop.f32.mrb[0].mxu0
        %v1506 = vadd.f32 0.0, %v1505
        %v1507 = vpop.f32.mrb[0].mxu0
        %1508 = vmatprep.mubr.f32.mxu0 0.0
        %1509 = vmatmul.mubr.f32.gmra.mrb[0].mxu0 %v1419
        %v1510 = vpop.f32.mrb[0].mxu0
        %v1511 = vadd.f32 0.0, %v1510
        %v1512 = vpop.f32.mrb[0].mxu0
        %1513 = vmatprep.mubr.f32.mxu0 0.0
        %1514 = vmatmul.mubr.f32.gmra.mrb[0].mxu0 %v1420
        %v1515 = vpop.f32.mrb[0].mxu0
        %v1516 = vadd.f32 0.0, %v1515
        %v1517 = vpop.f32.mrb[0].mxu0
        %1518 = vmatprep.mubr.f32.mxu0 0.0
        %1519 = vmatmul.mubr.f32.gmra.mrb[0].mxu0 %v1421
        %v1520 = vpop.f32.mrb[0].mxu0
        %v1521 = vadd.f32 0.0, %v1520
        %v1522 = vpop.f32.mrb[0].mxu0
        %1523 = vdwg.mxu0
        %1524 = vmatprep.subr.mxu0 0.0
        %1525 = vmatpush1.msra.mxu0 %v1402
        %1526 = vmatprep.subr.mxu0 0.0
        %1527 = vmatpush1.msra.mxu0 %v1403
        %1528 = vmatprep.subr.mxu0 0.0
        %1529 = vmatpush1.msra.mxu0 %v1404
        %1530 = vmatprep.subr.mxu0 0.0
        %1531 = vmatpush1.msra.mxu0 %v1405
        %1532 = vmatprep.subr.mxu0 0.0
        %1533 = vmatpush1.msra.mxu0 %v1406
        %1534 = vmatprep.subr.mxu0 0.0
        %1535 = vmatpush1.msra.mxu0 %v1407
        %1536 = vmatprep.subr.mxu0 0.0
        %1537 = vmatpush1.msra.mxu0 %v1408
        %1538 = vmatprep.subr.mxu0 0.0
        %1539 = vmatpush1.msra.mxu0 %v1409
        %1540 = vmatprep.subr.mxu0 0.0
        %1541 = vmatpush1.msra.mxu0 %v1410
        %1542 = vmatprep.subr.mxu0 0.0
        %1543 = vmatpush1.msra.mxu0 %v1411
        %1544 = vmatprep.subr.mxu0 0.0
        %1545 = vmatpush1.msra.mxu0 %v1412
        %1546 = vmatprep.subr.mxu0 0.0
        %1547 = vmatpush1.msra.mxu0 %v1413
        %1548 = vmatprep.subr.mxu0 0.0
        %1549 = vmatpush1.msra.mxu0 %v1414
        %1550 = vmatprep.subr.mxu0 0.0
        %1551 = vmatpush1.msra.mxu0 %v1415
        %1552 = vmatprep.subr.mxu0 0.0
        %1553 = vmatpush1.msra.mxu0 %v1416
        %1554 = vmatprep.subr.mxu0 0.0
        %1555 = vmatpush1.msra.mxu0 %v1417
        %1556 = vmatprep.subr.mxu0 0.0
        %1557 = vmatpush1.msra.mxu0 0.0
        %1558 = vmatprep.subr.mxu0 0.0
        %1559 = vmatpush1.msra.mxu0 0.0
        %1560 = vmatprep.subr.mxu0 0.0
        %1561 = vmatpush1.msra.mxu0 0.0
        %1562 = vmatprep.subr.mxu0 0.0
        %1563 = vmatpush1.msra.mxu0 0.0
        %1564 = vmatprep.subr.mxu0 0.0
        %1565 = vmatpush1.msra.mxu0 0.0
        %1566 = vmatprep.subr.mxu0 0.0
        %1567 = vmatpush1.msra.mxu0 0.0
        %1568 = vmatprep.subr.mxu0 0.0
        %1569 = vmatpush1.msra.mxu0 0.0
        %1570 = vmatprep.subr.mxu0 0.0
        %1571 = vmatpush1.msra.mxu0 0.0
        %1572 = vmatprep.subr.mxu0 0.0
        %1573 = vmatpush1.msra.mxu0 0.0
        %1574 = vmatprep.subr.mxu0 0.0
        %1575 = vmatpush1.msra.mxu0 0.0
        %1576 = vmatprep.subr.mxu0 0.0
        %1577 = vmatpush1.msra.mxu0 0.0
        %1578 = vmatprep.subr.mxu0 0.0
        %1579 = vmatpush1.msra.mxu0 0.0
        %1580 = vmatprep.subr.mxu0 0.0
        %1581 = vmatpush1.msra.mxu0 0.0
        %1582 = vmatprep.subr.mxu0 0.0
        %1583 = vmatpush1.msra.mxu0 0.0
        %1584 = vmatprep.subr.mxu0 0.0
        %1585 = vmatpush1.msra.mxu0 0.0
        %1586 = vmatprep.subr.mxu0 0.0
        %1587 = vmatpush1.msra.mxu0 0.0
        %1588 = vmatprep.mubr.f32.mxu0 0.0
        %1589 = vmatmul.mubr.f32.gmra.mrb[0].mxu0 %v1398
        %v1590 = vpop.f32.mrb[0].mxu0
        %v1591 = vadd.f32 %v1506, %v1590
        %v1592 = vpop.f32.mrb[0].mxu0
        %1593 = vmatprep.mubr.f32.mxu0 0.0
        %1594 = vmatmul.mubr.f32.gmra.mrb[0].mxu0 %v1399
        %v1595 = vpop.f32.mrb[0].mxu0
        %v1596 = vadd.f32 %v1511, %v1595
        %v1597 = vpop.f32.mrb[0].mxu0
        %1598 = vmatprep.mubr.f32.mxu0 0.0
        %1599 = vmatmul.mubr.f32.gmra.mrb[0].mxu0 %v1400
        %v1600 = vpop.f32.mrb[0].mxu0
        %v1601 = vadd.f32 %v1516, %v1600
        %v1602 = vpop.f32.mrb[0].mxu0
        %1603 = vmatprep.mubr.f32.mxu0 0.0
        %1604 = vmatmul.mubr.f32.gmra.mrb[0].mxu0 %v1401
        %v1605 = vpop.f32.mrb[0].mxu0
        %v1606 = vadd.f32 %v1521, %v1605
        %v1607 = vpop.f32.mrb[0].mxu0
        %1608 = vdwg.mxu0
        %v1609 = vld [vmem:[#allocation3 + $0xc] sm:$0xff]
        %v1610 = vld [vmem:[#allocation3 + $0x14] sm:$0xff]
        %v1611 = vld [vmem:[#allocation3 + $0x1c] sm:$0xff]
        %v1612 = vld [vmem:[#allocation3 + $0x24] sm:$0xff]
        %s1613 = scalar_lea.vmem [#allocation5], 256
        %v1614 = vld [vmem:[%s1613] sm:$0xff]
        %v1615 = vld [vmem:[%s1613 + $0x8] sm:$0xff]
        %v1616 = vld [vmem:[%s1613 + $0x10] sm:$0xff]
        %v1617 = vld [vmem:[%s1613 + $0x18] sm:$0xff]
        %v1618 = vld [vmem:[%s1613 + $0x20] sm:$0xff]
        %v1619 = vld [vmem:[%s1613 + $0x28] sm:$0xff]
        %v1620 = vld [vmem:[%s1613 + $0x30] sm:$0xff]
        %v1621 = vld [vmem:[%s1613 + $0x38] sm:$0xff]
        %v1622 = vld [vmem:[%s1613 + $0x40] sm:$0xff]
        %v1623 = vld [vmem:[%s1613 + $0x48] sm:$0xff]
        %v1624 = vld [vmem:[%s1613 + $0x50] sm:$0xff]
        %v1625 = vld [vmem:[%s1613 + $0x58] sm:$0xff]
        %v1626 = vld [vmem:[%s1613 + $0x60] sm:$0xff]
        %v1627 = vld [vmem:[%s1613 + $0x68] sm:$0xff]
        %v1628 = vld [vmem:[%s1613 + $0x70] sm:$0xff]
        %v1629 = vld [vmem:[%s1613 + $0x78] sm:$0xff]
        %1630 = vmatprep.subr.mxu0 0.0
        %1631 = vmatpush1.msra.mxu0 %v1614
        %1632 = vmatprep.subr.mxu0 0.0
        %1633 = vmatpush1.msra.mxu0 %v1615
        %1634 = vmatprep.subr.mxu0 0.0
        %1635 = vmatpush1.msra.mxu0 %v1616
        %1636 = vmatprep.subr.mxu0 0.0
        %1637 = vmatpush1.msra.mxu0 %v1617
        %1638 = vmatprep.subr.mxu0 0.0
        %1639 = vmatpush1.msra.mxu0 %v1618
        %1640 = vmatprep.subr.mxu0 0.0
        %1641 = vmatpush1.msra.mxu0 %v1619
        %1642 = vmatprep.subr.mxu0 0.0
        %1643 = vmatpush1.msra.mxu0 %v1620
        %1644 = vmatprep.subr.mxu0 0.0
        %1645 = vmatpush1.msra.mxu0 %v1621
        %1646 = vmatprep.subr.mxu0 0.0
        %1647 = vmatpush1.msra.mxu0 %v1622
        %1648 = vmatprep.subr.mxu0 0.0
        %1649 = vmatpush1.msra.mxu0 %v1623
        %1650 = vmatprep.subr.mxu0 0.0
        %1651 = vmatpush1.msra.mxu0 %v1624
        %1652 = vmatprep.subr.mxu0 0.0
        %1653 = vmatpush1.msra.mxu0 %v1625
        %1654 = vmatprep.subr.mxu0 0.0
        %1655 = vmatpush1.msra.mxu0 %v1626
        %1656 = vmatprep.subr.mxu0 0.0
        %1657 = vmatpush1.msra.mxu0 %v1627
        %1658 = vmatprep.subr.mxu0 0.0
        %1659 = vmatpush1.msra.mxu0 %v1628
        %1660 = vmatprep.subr.mxu0 0.0
        %1661 = vmatpush1.msra.mxu0 %v1629
        %1662 = vmatprep.subr.mxu0 0.0
        %1663 = vmatpush1.msra.mxu0 0.0
        %1664 = vmatprep.subr.mxu0 0.0
        %1665 = vmatpush1.msra.mxu0 0.0
        %1666 = vmatprep.subr.mxu0 0.0
        %1667 = vmatpush1.msra.mxu0 0.0
        %1668 = vmatprep.subr.mxu0 0.0
        %1669 = vmatpush1.msra.mxu0 0.0
        %1670 = vmatprep.subr.mxu0 0.0
        %1671 = vmatpush1.msra.mxu0 0.0
        %1672 = vmatprep.subr.mxu0 0.0
        %1673 = vmatpush1.msra.mxu0 0.0
        %1674 = vmatprep.subr.mxu0 0.0
        %1675 = vmatpush1.msra.mxu0 0.0
        %1676 = vmatprep.subr.mxu0 0.0
        %1677 = vmatpush1.msra.mxu0 0.0
        %1678 = vmatprep.subr.mxu0 0.0
        %1679 = vmatpush1.msra.mxu0 0.0
        %1680 = vmatprep.subr.mxu0 0.0
        %1681 = vmatpush1.msra.mxu0 0.0
        %1682 = vmatprep.subr.mxu0 0.0
        %1683 = vmatpush1.msra.mxu0 0.0
        %1684 = vmatprep.subr.mxu0 0.0
        %1685 = vmatpush1.msra.mxu0 0.0
        %1686 = vmatprep.subr.mxu0 0.0
        %1687 = vmatpush1.msra.mxu0 0.0
        %1688 = vmatprep.subr.mxu0 0.0
        %1689 = vmatpush1.msra.mxu0 0.0
        %1690 = vmatprep.subr.mxu0 0.0
        %1691 = vmatpush1.msra.mxu0 0.0
        %1692 = vmatprep.subr.mxu0 0.0
        %1693 = vmatpush1.msra.mxu0 0.0
        %1694 = vmatprep.mubr.f32.mxu0 0.0
        %1695 = vmatmul.mubr.f32.gmra.mrb[0].mxu0 %v1609
        %v1696 = vpop.f32.mrb[0].mxu0
        %v1697 = vadd.f32 0.0, %v1696
        %v1698 = vpop.f32.mrb[0].mxu0
        %1699 = vmatprep.mubr.f32.mxu0 0.0
        %1700 = vmatmul.mubr.f32.gmra.mrb[0].mxu0 %v1610
        %v1701 = vpop.f32.mrb[0].mxu0
        %v1702 = vadd.f32 0.0, %v1701
        %v1703 = vpop.f32.mrb[0].mxu0
        %1704 = vmatprep.mubr.f32.mxu0 0.0
        %1705 = vmatmul.mubr.f32.gmra.mrb[0].mxu0 %v1611
        %v1706 = vpop.f32.mrb[0].mxu0
        %v1707 = vadd.f32 0.0, %v1706
        %v1708 = vpop.f32.mrb[0].mxu0
        %1709 = vmatprep.mubr.f32.mxu0 0.0
        %1710 = vmatmul.mubr.f32.gmra.mrb[0].mxu0 %v1612
        %v1711 = vpop.f32.mrb[0].mxu0
        %v1712 = vadd.f32 0.0, %v1711
        %v1713 = vpop.f32.mrb[0].mxu0
        %1714 = vdwg.mxu0
        %v1715 = vadd.f32 %v1591, %v1697
        %v1716 = vadd.f32 %v1596, %v1702
        %v1717 = vadd.f32 %v1601, %v1707
        %v1718 = vadd.f32 %v1606, %v1712
        %v1719 = vld [vmem:[#allocation3 + $0x10] sm:$0xff]
        %v1720 = vld [vmem:[#allocation3 + $0x18] sm:$0xff]
        %v1721 = vld [vmem:[#allocation3 + $0x20] sm:$0xff]
        %v1722 = vld [vmem:[#allocation3 + $0x28] sm:$0xff]
        %s1723 = scalar_lea.vmem [#allocation5], 384
        %v1724 = vld [vmem:[%s1723] sm:$0xff]
        %v1725 = vld [vmem:[%s1723 + $0x8] sm:$0xff]
        %v1726 = vld [vmem:[%s1723 + $0x10] sm:$0xff]
        %v1727 = vld [vmem:[%s1723 + $0x18] sm:$0xff]
        %v1728 = vld [vmem:[%s1723 + $0x20] sm:$0xff]
        %v1729 = vld [vmem:[%s1723 + $0x28] sm:$0xff]
        %v1730 = vld [vmem:[%s1723 + $0x30] sm:$0xff]
        %v1731 = vld [vmem:[%s1723 + $0x38] sm:$0xff]
        %v1732 = vld [vmem:[%s1723 + $0x40] sm:$0xff]
        %v1733 = vld [vmem:[%s1723 + $0x48] sm:$0xff]
        %v1734 = vld [vmem:[%s1723 + $0x50] sm:$0xff]
        %v1735 = vld [vmem:[%s1723 + $0x58] sm:$0xff]
        %v1736 = vld [vmem:[%s1723 + $0x60] sm:$0xff]
        %v1737 = vld [vmem:[%s1723 + $0x68] sm:$0xff]
        %v1738 = vld [vmem:[%s1723 + $0x70] sm:$0xff]
        %v1739 = vld [vmem:[%s1723 + $0x78] sm:$0xff]
        %1740 = vmatprep.subr.mxu0 0.0
        %1741 = vmatpush1.msra.mxu0 %v1724
        %1742 = vmatprep.subr.mxu0 0.0
        %1743 = vmatpush1.msra.mxu0 %v1725
        %1744 = vmatprep.subr.mxu0 0.0
        %1745 = vmatpush1.msra.mxu0 %v1726
        %1746 = vmatprep.subr.mxu0 0.0
        %1747 = vmatpush1.msra.mxu0 %v1727
        %1748 = vmatprep.subr.mxu0 0.0
        %1749 = vmatpush1.msra.mxu0 %v1728
        %1750 = vmatprep.subr.mxu0 0.0
        %1751 = vmatpush1.msra.mxu0 %v1729
        %1752 = vmatprep.subr.mxu0 0.0
        %1753 = vmatpush1.msra.mxu0 %v1730
        %1754 = vmatprep.subr.mxu0 0.0
        %1755 = vmatpush1.msra.mxu0 %v1731
        %1756 = vmatprep.subr.mxu0 0.0
        %1757 = vmatpush1.msra.mxu0 %v1732
        %1758 = vmatprep.subr.mxu0 0.0
        %1759 = vmatpush1.msra.mxu0 %v1733
        %1760 = vmatprep.subr.mxu0 0.0
        %1761 = vmatpush1.msra.mxu0 %v1734
        %1762 = vmatprep.subr.mxu0 0.0
        %1763 = vmatpush1.msra.mxu0 %v1735
        %1764 = vmatprep.subr.mxu0 0.0
        %1765 = vmatpush1.msra.mxu0 %v1736
        %1766 = vmatprep.subr.mxu0 0.0
        %1767 = vmatpush1.msra.mxu0 %v1737
        %1768 = vmatprep.subr.mxu0 0.0
        %1769 = vmatpush1.msra.mxu0 %v1738
        %1770 = vmatprep.subr.mxu0 0.0
        %1771 = vmatpush1.msra.mxu0 %v1739
        %1772 = vmatprep.subr.mxu0 0.0
        %1773 = vmatpush1.msra.mxu0 0.0
        %1774 = vmatprep.subr.mxu0 0.0
        %1775 = vmatpush1.msra.mxu0 0.0
        %1776 = vmatprep.subr.mxu0 0.0
        %1777 = vmatpush1.msra.mxu0 0.0
        %1778 = vmatprep.subr.mxu0 0.0
        %1779 = vmatpush1.msra.mxu0 0.0
        %1780 = vmatprep.subr.mxu0 0.0
        %1781 = vmatpush1.msra.mxu0 0.0
        %1782 = vmatprep.subr.mxu0 0.0
        %1783 = vmatpush1.msra.mxu0 0.0
        %1784 = vmatprep.subr.mxu0 0.0
        %1785 = vmatpush1.msra.mxu0 0.0
        %1786 = vmatprep.subr.mxu0 0.0
        %1787 = vmatpush1.msra.mxu0 0.0
        %1788 = vmatprep.subr.mxu0 0.0
        %1789 = vmatpush1.msra.mxu0 0.0
        %1790 = vmatprep.subr.mxu0 0.0
        %1791 = vmatpush1.msra.mxu0 0.0
        %1792 = vmatprep.subr.mxu0 0.0
        %1793 = vmatpush1.msra.mxu0 0.0
        %1794 = vmatprep.subr.mxu0 0.0
        %1795 = vmatpush1.msra.mxu0 0.0
        %1796 = vmatprep.subr.mxu0 0.0
        %1797 = vmatpush1.msra.mxu0 0.0
        %1798 = vmatprep.subr.mxu0 0.0
        %1799 = vmatpush1.msra.mxu0 0.0
        %1800 = vmatprep.subr.mxu0 0.0
        %1801 = vmatpush1.msra.mxu0 0.0
        %1802 = vmatprep.subr.mxu0 0.0
        %1803 = vmatpush1.msra.mxu0 0.0
        %1804 = vmatprep.mubr.f32.mxu0 0.0
        %1805 = vmatmul.mubr.f32.gmra.mrb[0].mxu0 %v1719
        %v1806 = vpop.f32.mrb[0].mxu0
        %v1807 = vadd.f32 0.0, %v1806
        %v1808 = vpop.f32.mrb[0].mxu0
        %1809 = vmatprep.mubr.f32.mxu0 0.0
        %1810 = vmatmul.mubr.f32.gmra.mrb[0].mxu0 %v1720
        %v1811 = vpop.f32.mrb[0].mxu0
        %v1812 = vadd.f32 0.0, %v1811
        %v1813 = vpop.f32.mrb[0].mxu0
        %1814 = vmatprep.mubr.f32.mxu0 0.0
        %1815 = vmatmul.mubr.f32.gmra.mrb[0].mxu0 %v1721
        %v1816 = vpop.f32.mrb[0].mxu0
        %v1817 = vadd.f32 0.0, %v1816
        %v1818 = vpop.f32.mrb[0].mxu0
        %1819 = vmatprep.mubr.f32.mxu0 0.0
        %1820 = vmatmul.mubr.f32.gmra.mrb[0].mxu0 %v1722
        %v1821 = vpop.f32.mrb[0].mxu0
        %v1822 = vadd.f32 0.0, %v1821
        %v1823 = vpop.f32.mrb[0].mxu0
        %1824 = vdwg.mxu0
        %v1825 = vadd.f32 %v1715, %v1807
        %v1826 = vadd.f32 %v1716, %v1812
        %v1827 = vadd.f32 %v1717, %v1817
        %v1828 = vadd.f32 %v1718, %v1822
        %v1829 = vld [vmem:[#allocation3 + $0x14] sm:$0xff]
        %v1830 = vld [vmem:[#allocation3 + $0x1c] sm:$0xff]
        %v1831 = vld [vmem:[#allocation3 + $0x24] sm:$0xff]
        %v1832 = vld [vmem:[#allocation3 + $0x2c] sm:$0xff]
        %s1833 = scalar_lea.vmem [#allocation5], 512
        %v1834 = vld [vmem:[%s1833] sm:$0xff]
        %v1835 = vld [vmem:[%s1833 + $0x8] sm:$0xff]
        %v1836 = vld [vmem:[%s1833 + $0x10] sm:$0xff]
        %v1837 = vld [vmem:[%s1833 + $0x18] sm:$0xff]
        %v1838 = vld [vmem:[%s1833 + $0x20] sm:$0xff]
        %v1839 = vld [vmem:[%s1833 + $0x28] sm:$0xff]
        %v1840 = vld [vmem:[%s1833 + $0x30] sm:$0xff]
        %v1841 = vld [vmem:[%s1833 + $0x38] sm:$0xff]
        %v1842 = vld [vmem:[%s1833 + $0x40] sm:$0xff]
        %v1843 = vld [vmem:[%s1833 + $0x48] sm:$0xff]
        %v1844 = vld [vmem:[%s1833 + $0x50] sm:$0xff]
        %v1845 = vld [vmem:[%s1833 + $0x58] sm:$0xff]
        %v1846 = vld [vmem:[%s1833 + $0x60] sm:$0xff]
        %v1847 = vld [vmem:[%s1833 + $0x68] sm:$0xff]
        %v1848 = vld [vmem:[%s1833 + $0x70] sm:$0xff]
        %v1849 = vld [vmem:[%s1833 + $0x78] sm:$0xff]
        %1850 = vmatprep.subr.mxu0 0.0
        %1851 = vmatpush1.msra.mxu0 %v1834
        %1852 = vmatprep.subr.mxu0 0.0
        %1853 = vmatpush1.msra.mxu0 %v1835
        %1854 = vmatprep.subr.mxu0 0.0
        %1855 = vmatpush1.msra.mxu0 %v1836
        %1856 = vmatprep.subr.mxu0 0.0
        %1857 = vmatpush1.msra.mxu0 %v1837
        %1858 = vmatprep.subr.mxu0 0.0
        %1859 = vmatpush1.msra.mxu0 %v1838
        %1860 = vmatprep.subr.mxu0 0.0
        %1861 = vmatpush1.msra.mxu0 %v1839
        %1862 = vmatprep.subr.mxu0 0.0
        %1863 = vmatpush1.msra.mxu0 %v1840
        %1864 = vmatprep.subr.mxu0 0.0
        %1865 = vmatpush1.msra.mxu0 %v1841
        %1866 = vmatprep.subr.mxu0 0.0
        %1867 = vmatpush1.msra.mxu0 %v1842
        %1868 = vmatprep.subr.mxu0 0.0
        %1869 = vmatpush1.msra.mxu0 %v1843
        %1870 = vmatprep.subr.mxu0 0.0
        %1871 = vmatpush1.msra.mxu0 %v1844
        %1872 = vmatprep.subr.mxu0 0.0
        %1873 = vmatpush1.msra.mxu0 %v1845
        %1874 = vmatprep.subr.mxu0 0.0
        %1875 = vmatpush1.msra.mxu0 %v1846
        %1876 = vmatprep.subr.mxu0 0.0
        %1877 = vmatpush1.msra.mxu0 %v1847
        %1878 = vmatprep.subr.mxu0 0.0
        %1879 = vmatpush1.msra.mxu0 %v1848
        %1880 = vmatprep.subr.mxu0 0.0
        %1881 = vmatpush1.msra.mxu0 %v1849
        %1882 = vmatprep.subr.mxu0 0.0
        %1883 = vmatpush1.msra.mxu0 0.0
        %1884 = vmatprep.subr.mxu0 0.0
        %1885 = vmatpush1.msra.mxu0 0.0
        %1886 = vmatprep.subr.mxu0 0.0
        %1887 = vmatpush1.msra.mxu0 0.0
        %1888 = vmatprep.subr.mxu0 0.0
        %1889 = vmatpush1.msra.mxu0 0.0
        %1890 = vmatprep.subr.mxu0 0.0
        %1891 = vmatpush1.msra.mxu0 0.0
        %1892 = vmatprep.subr.mxu0 0.0
        %1893 = vmatpush1.msra.mxu0 0.0
        %1894 = vmatprep.subr.mxu0 0.0
        %1895 = vmatpush1.msra.mxu0 0.0
        %1896 = vmatprep.subr.mxu0 0.0
        %1897 = vmatpush1.msra.mxu0 0.0
        %1898 = vmatprep.subr.mxu0 0.0
        %1899 = vmatpush1.msra.mxu0 0.0
        %1900 = vmatprep.subr.mxu0 0.0
        %1901 = vmatpush1.msra.mxu0 0.0
        %1902 = vmatprep.subr.mxu0 0.0
        %1903 = vmatpush1.msra.mxu0 0.0
        %1904 = vmatprep.subr.mxu0 0.0
        %1905 = vmatpush1.msra.mxu0 0.0
        %1906 = vmatprep.subr.mxu0 0.0
        %1907 = vmatpush1.msra.mxu0 0.0
        %1908 = vmatprep.subr.mxu0 0.0
        %1909 = vmatpush1.msra.mxu0 0.0
        %1910 = vmatprep.subr.mxu0 0.0
        %1911 = vmatpush1.msra.mxu0 0.0
        %1912 = vmatprep.subr.mxu0 0.0
        %1913 = vmatpush1.msra.mxu0 0.0
        %1914 = vmatprep.mubr.f32.mxu0 0.0
        %1915 = vmatmul.mubr.f32.gmra.mrb[0].mxu0 %v1829
        %v1916 = vpop.f32.mrb[0].mxu0
        %v1917 = vadd.f32 0.0, %v1916
        %v1918 = vpop.f32.mrb[0].mxu0
        %1919 = vmatprep.mubr.f32.mxu0 0.0
        %1920 = vmatmul.mubr.f32.gmra.mrb[0].mxu0 %v1830
        %v1921 = vpop.f32.mrb[0].mxu0
        %v1922 = vadd.f32 0.0, %v1921
        %v1923 = vpop.f32.mrb[0].mxu0
        %1924 = vmatprep.mubr.f32.mxu0 0.0
        %1925 = vmatmul.mubr.f32.gmra.mrb[0].mxu0 %v1831
        %v1926 = vpop.f32.mrb[0].mxu0
        %v1927 = vadd.f32 0.0, %v1926
        %v1928 = vpop.f32.mrb[0].mxu0
        %1929 = vmatprep.mubr.f32.mxu0 0.0
        %1930 = vmatmul.mubr.f32.gmra.mrb[0].mxu0 %v1832
        %v1931 = vpop.f32.mrb[0].mxu0
        %v1932 = vadd.f32 0.0, %v1931
        %v1933 = vpop.f32.mrb[0].mxu0
        %1934 = vdwg.mxu0
        %v1935 = vadd.f32 %v1825, %v1917
        %v1936 = vadd.f32 %v1826, %v1922
        %v1937 = vadd.f32 %v1827, %v1927
        %v1938 = vadd.f32 %v1828, %v1932
        %v1939 = vld [vmem:[#allocation3 + $0x18] sm:$0xff]
        %v1940 = vld [vmem:[#allocation3 + $0x20] sm:$0xff]
        %v1941 = vld [vmem:[#allocation3 + $0x28] sm:$0xff]
        %v1942 = vld [vmem:[#allocation3 + $0x30] sm:$0xff]
        %s1943 = scalar_lea.vmem [#allocation5], 640
        %v1944 = vld [vmem:[%s1943] sm:$0xff]
        %v1945 = vld [vmem:[%s1943 + $0x8] sm:$0xff]
        %v1946 = vld [vmem:[%s1943 + $0x10] sm:$0xff]
        %v1947 = vld [vmem:[%s1943 + $0x18] sm:$0xff]
        %v1948 = vld [vmem:[%s1943 + $0x20] sm:$0xff]
        %v1949 = vld [vmem:[%s1943 + $0x28] sm:$0xff]
        %v1950 = vld [vmem:[%s1943 + $0x30] sm:$0xff]
        %v1951 = vld [vmem:[%s1943 + $0x38] sm:$0xff]
        %v1952 = vld [vmem:[%s1943 + $0x40] sm:$0xff]
        %v1953 = vld [vmem:[%s1943 + $0x48] sm:$0xff]
        %v1954 = vld [vmem:[%s1943 + $0x50] sm:$0xff]
        %v1955 = vld [vmem:[%s1943 + $0x58] sm:$0xff]
        %v1956 = vld [vmem:[%s1943 + $0x60] sm:$0xff]
        %v1957 = vld [vmem:[%s1943 + $0x68] sm:$0xff]
        %v1958 = vld [vmem:[%s1943 + $0x70] sm:$0xff]
        %v1959 = vld [vmem:[%s1943 + $0x78] sm:$0xff]
        %1960 = vmatprep.subr.mxu0 0.0
        %1961 = vmatpush1.msra.mxu0 %v1944
        %1962 = vmatprep.subr.mxu0 0.0
        %1963 = vmatpush1.msra.mxu0 %v1945
        %1964 = vmatprep.subr.mxu0 0.0
        %1965 = vmatpush1.msra.mxu0 %v1946
        %1966 = vmatprep.subr.mxu0 0.0
        %1967 = vmatpush1.msra.mxu0 %v1947
        %1968 = vmatprep.subr.mxu0 0.0
        %1969 = vmatpush1.msra.mxu0 %v1948
        %1970 = vmatprep.subr.mxu0 0.0
        %1971 = vmatpush1.msra.mxu0 %v1949
        %1972 = vmatprep.subr.mxu0 0.0
        %1973 = vmatpush1.msra.mxu0 %v1950
        %1974 = vmatprep.subr.mxu0 0.0
        %1975 = vmatpush1.msra.mxu0 %v1951
        %1976 = vmatprep.subr.mxu0 0.0
        %1977 = vmatpush1.msra.mxu0 %v1952
        %1978 = vmatprep.subr.mxu0 0.0
        %1979 = vmatpush1.msra.mxu0 %v1953
        %1980 = vmatprep.subr.mxu0 0.0
        %1981 = vmatpush1.msra.mxu0 %v1954
        %1982 = vmatprep.subr.mxu0 0.0
        %1983 = vmatpush1.msra.mxu0 %v1955
        %1984 = vmatprep.subr.mxu0 0.0
        %1985 = vmatpush1.msra.mxu0 %v1956
        %1986 = vmatprep.subr.mxu0 0.0
        %1987 = vmatpush1.msra.mxu0 %v1957
        %1988 = vmatprep.subr.mxu0 0.0
        %1989 = vmatpush1.msra.mxu0 %v1958
        %1990 = vmatprep.subr.mxu0 0.0
        %1991 = vmatpush1.msra.mxu0 %v1959
        %1992 = vmatprep.subr.mxu0 0.0
        %1993 = vmatpush1.msra.mxu0 0.0
        %1994 = vmatprep.subr.mxu0 0.0
        %1995 = vmatpush1.msra.mxu0 0.0
        %1996 = vmatprep.subr.mxu0 0.0
        %1997 = vmatpush1.msra.mxu0 0.0
        %1998 = vmatprep.subr.mxu0 0.0
        %1999 = vmatpush1.msra.mxu0 0.0
        %2000 = vmatprep.subr.mxu0 0.0
        %2001 = vmatpush1.msra.mxu0 0.0
        %2002 = vmatprep.subr.mxu0 0.0
        %2003 = vmatpush1.msra.mxu0 0.0
        %2004 = vmatprep.subr.mxu0 0.0
        %2005 = vmatpush1.msra.mxu0 0.0
        %2006 = vmatprep.subr.mxu0 0.0
        %2007 = vmatpush1.msra.mxu0 0.0
        %2008 = vmatprep.subr.mxu0 0.0
        %2009 = vmatpush1.msra.mxu0 0.0
        %2010 = vmatprep.subr.mxu0 0.0
        %2011 = vmatpush1.msra.mxu0 0.0
        %2012 = vmatprep.subr.mxu0 0.0
        %2013 = vmatpush1.msra.mxu0 0.0
        %2014 = vmatprep.subr.mxu0 0.0
        %2015 = vmatpush1.msra.mxu0 0.0
        %2016 = vmatprep.subr.mxu0 0.0
        %2017 = vmatpush1.msra.mxu0 0.0
        %2018 = vmatprep.subr.mxu0 0.0
        %2019 = vmatpush1.msra.mxu0 0.0
        %2020 = vmatprep.subr.mxu0 0.0
        %2021 = vmatpush1.msra.mxu0 0.0
        %2022 = vmatprep.subr.mxu0 0.0
        %2023 = vmatpush1.msra.mxu0 0.0
        %2024 = vmatprep.mubr.f32.mxu0 0.0
        %2025 = vmatmul.mubr.f32.gmra.mrb[0].mxu0 %v1939
        %v2026 = vpop.f32.mrb[0].mxu0
        %v2027 = vadd.f32 0.0, %v2026
        %v2028 = vpop.f32.mrb[0].mxu0
        %2029 = vmatprep.mubr.f32.mxu0 0.0
        %2030 = vmatmul.mubr.f32.gmra.mrb[0].mxu0 %v1940
        %v2031 = vpop.f32.mrb[0].mxu0
        %v2032 = vadd.f32 0.0, %v2031
        %v2033 = vpop.f32.mrb[0].mxu0
        %2034 = vmatprep.mubr.f32.mxu0 0.0
        %2035 = vmatmul.mubr.f32.gmra.mrb[0].mxu0 %v1941
        %v2036 = vpop.f32.mrb[0].mxu0
        %v2037 = vadd.f32 0.0, %v2036
        %v2038 = vpop.f32.mrb[0].mxu0
        %2039 = vmatprep.mubr.f32.mxu0 0.0
        %2040 = vmatmul.mubr.f32.gmra.mrb[0].mxu0 %v1942
        %v2041 = vpop.f32.mrb[0].mxu0
        %v2042 = vadd.f32 0.0, %v2041
        %v2043 = vpop.f32.mrb[0].mxu0
        %2044 = vdwg.mxu0
        %v2045 = vadd.f32 %v1935, %v2027
        %v2046 = vadd.f32 %v1936, %v2032
        %v2047 = vadd.f32 %v1937, %v2037
        %v2048 = vadd.f32 %v1938, %v2042
        %v2049 = vld [vmem:[#allocation3 + $0x1c] sm:$0xff]
        %v2050 = vld [vmem:[#allocation3 + $0x24] sm:$0xff]
        %v2051 = vld [vmem:[#allocation3 + $0x2c] sm:$0xff]
        %v2052 = vld [vmem:[#allocation3 + $0x34] sm:$0xff]
        %s2053 = scalar_lea.vmem [#allocation5], 768
        %v2054 = vld [vmem:[%s2053] sm:$0xff]
        %v2055 = vld [vmem:[%s2053 + $0x8] sm:$0xff]
        %v2056 = vld [vmem:[%s2053 + $0x10] sm:$0xff]
        %v2057 = vld [vmem:[%s2053 + $0x18] sm:$0xff]
        %v2058 = vld [vmem:[%s2053 + $0x20] sm:$0xff]
        %v2059 = vld [vmem:[%s2053 + $0x28] sm:$0xff]
        %v2060 = vld [vmem:[%s2053 + $0x30] sm:$0xff]
        %v2061 = vld [vmem:[%s2053 + $0x38] sm:$0xff]
        %v2062 = vld [vmem:[%s2053 + $0x40] sm:$0xff]
        %v2063 = vld [vmem:[%s2053 + $0x48] sm:$0xff]
        %v2064 = vld [vmem:[%s2053 + $0x50] sm:$0xff]
        %v2065 = vld [vmem:[%s2053 + $0x58] sm:$0xff]
        %v2066 = vld [vmem:[%s2053 + $0x60] sm:$0xff]
        %v2067 = vld [vmem:[%s2053 + $0x68] sm:$0xff]
        %v2068 = vld [vmem:[%s2053 + $0x70] sm:$0xff]
        %v2069 = vld [vmem:[%s2053 + $0x78] sm:$0xff]
        %2070 = vmatprep.subr.mxu0 0.0
        %2071 = vmatpush1.msra.mxu0 %v2054
        %2072 = vmatprep.subr.mxu0 0.0
        %2073 = vmatpush1.msra.mxu0 %v2055
        %2074 = vmatprep.subr.mxu0 0.0
        %2075 = vmatpush1.msra.mxu0 %v2056
        %2076 = vmatprep.subr.mxu0 0.0
        %2077 = vmatpush1.msra.mxu0 %v2057
        %2078 = vmatprep.subr.mxu0 0.0
        %2079 = vmatpush1.msra.mxu0 %v2058
        %2080 = vmatprep.subr.mxu0 0.0
        %2081 = vmatpush1.msra.mxu0 %v2059
        %2082 = vmatprep.subr.mxu0 0.0
        %2083 = vmatpush1.msra.mxu0 %v2060
        %2084 = vmatprep.subr.mxu0 0.0
        %2085 = vmatpush1.msra.mxu0 %v2061
        %2086 = vmatprep.subr.mxu0 0.0
        %2087 = vmatpush1.msra.mxu0 %v2062
        %2088 = vmatprep.subr.mxu0 0.0
        %2089 = vmatpush1.msra.mxu0 %v2063
        %2090 = vmatprep.subr.mxu0 0.0
        %2091 = vmatpush1.msra.mxu0 %v2064
        %2092 = vmatprep.subr.mxu0 0.0
        %2093 = vmatpush1.msra.mxu0 %v2065
        %2094 = vmatprep.subr.mxu0 0.0
        %2095 = vmatpush1.msra.mxu0 %v2066
        %2096 = vmatprep.subr.mxu0 0.0
        %2097 = vmatpush1.msra.mxu0 %v2067
        %2098 = vmatprep.subr.mxu0 0.0
        %2099 = vmatpush1.msra.mxu0 %v2068
        %2100 = vmatprep.subr.mxu0 0.0
        %2101 = vmatpush1.msra.mxu0 %v2069
        %2102 = vmatprep.subr.mxu0 0.0
        %2103 = vmatpush1.msra.mxu0 0.0
        %2104 = vmatprep.subr.mxu0 0.0
        %2105 = vmatpush1.msra.mxu0 0.0
        %2106 = vmatprep.subr.mxu0 0.0
        %2107 = vmatpush1.msra.mxu0 0.0
        %2108 = vmatprep.subr.mxu0 0.0
        %2109 = vmatpush1.msra.mxu0 0.0
        %2110 = vmatprep.subr.mxu0 0.0
        %2111 = vmatpush1.msra.mxu0 0.0
        %2112 = vmatprep.subr.mxu0 0.0
        %2113 = vmatpush1.msra.mxu0 0.0
        %2114 = vmatprep.subr.mxu0 0.0
        %2115 = vmatpush1.msra.mxu0 0.0
        %2116 = vmatprep.subr.mxu0 0.0
        %2117 = vmatpush1.msra.mxu0 0.0
        %2118 = vmatprep.subr.mxu0 0.0
        %2119 = vmatpush1.msra.mxu0 0.0
        %2120 = vmatprep.subr.mxu0 0.0
        %2121 = vmatpush1.msra.mxu0 0.0
        %2122 = vmatprep.subr.mxu0 0.0
        %2123 = vmatpush1.msra.mxu0 0.0
        %2124 = vmatprep.subr.mxu0 0.0
        %2125 = vmatpush1.msra.mxu0 0.0
        %2126 = vmatprep.subr.mxu0 0.0
        %2127 = vmatpush1.msra.mxu0 0.0
        %2128 = vmatprep.subr.mxu0 0.0
        %2129 = vmatpush1.msra.mxu0 0.0
        %2130 = vmatprep.subr.mxu0 0.0
        %2131 = vmatpush1.msra.mxu0 0.0
        %2132 = vmatprep.subr.mxu0 0.0
        %2133 = vmatpush1.msra.mxu0 0.0
        %2134 = vmatprep.mubr.f32.mxu0 0.0
        %2135 = vmatmul.mubr.f32.gmra.mrb[0].mxu0 %v2049
        %v2136 = vpop.f32.mrb[0].mxu0
        %v2137 = vadd.f32 0.0, %v2136
        %v2138 = vpop.f32.mrb[0].mxu0
        %2139 = vmatprep.mubr.f32.mxu0 0.0
        %2140 = vmatmul.mubr.f32.gmra.mrb[0].mxu0 %v2050
        %v2141 = vpop.f32.mrb[0].mxu0
        %v2142 = vadd.f32 0.0, %v2141
        %v2143 = vpop.f32.mrb[0].mxu0
        %2144 = vmatprep.mubr.f32.mxu0 0.0
        %2145 = vmatmul.mubr.f32.gmra.mrb[0].mxu0 %v2051
        %v2146 = vpop.f32.mrb[0].mxu0
        %v2147 = vadd.f32 0.0, %v2146
        %v2148 = vpop.f32.mrb[0].mxu0
        %2149 = vmatprep.mubr.f32.mxu0 0.0
        %2150 = vmatmul.mubr.f32.gmra.mrb[0].mxu0 %v2052
        %v2151 = vpop.f32.mrb[0].mxu0
        %v2152 = vadd.f32 0.0, %v2151
        %v2153 = vpop.f32.mrb[0].mxu0
        %2154 = vdwg.mxu0
        %v2155 = vadd.f32 %v2045, %v2137
        %v2156 = vadd.f32 %v2046, %v2142
        %v2157 = vadd.f32 %v2047, %v2147
        %v2158 = vadd.f32 %v2048, %v2152
        %v2159 = vld [vmem:[#allocation3 + $0x20] sm:$0xff]
        %v2160 = vld [vmem:[#allocation3 + $0x28] sm:$0xff]
        %v2161 = vld [vmem:[#allocation3 + $0x30] sm:$0xff]
        %v2162 = vld [vmem:[#allocation3 + $0x38] sm:$0xff]
        %s2163 = scalar_lea.vmem [#allocation5], 896
        %v2164 = vld [vmem:[%s2163] sm:$0xff]
        %v2165 = vld [vmem:[%s2163 + $0x8] sm:$0xff]
        %v2166 = vld [vmem:[%s2163 + $0x10] sm:$0xff]
        %v2167 = vld [vmem:[%s2163 + $0x18] sm:$0xff]
        %v2168 = vld [vmem:[%s2163 + $0x20] sm:$0xff]
        %v2169 = vld [vmem:[%s2163 + $0x28] sm:$0xff]
        %v2170 = vld [vmem:[%s2163 + $0x30] sm:$0xff]
        %v2171 = vld [vmem:[%s2163 + $0x38] sm:$0xff]
        %v2172 = vld [vmem:[%s2163 + $0x40] sm:$0xff]
        %v2173 = vld [vmem:[%s2163 + $0x48] sm:$0xff]
        %v2174 = vld [vmem:[%s2163 + $0x50] sm:$0xff]
        %v2175 = vld [vmem:[%s2163 + $0x58] sm:$0xff]
        %v2176 = vld [vmem:[%s2163 + $0x60] sm:$0xff]
        %v2177 = vld [vmem:[%s2163 + $0x68] sm:$0xff]
        %v2178 = vld [vmem:[%s2163 + $0x70] sm:$0xff]
        %v2179 = vld [vmem:[%s2163 + $0x78] sm:$0xff]
        %2180 = vmatprep.subr.mxu0 0.0
        %2181 = vmatpush1.msra.mxu0 %v2164
        %2182 = vmatprep.subr.mxu0 0.0
        %2183 = vmatpush1.msra.mxu0 %v2165
        %2184 = vmatprep.subr.mxu0 0.0
        %2185 = vmatpush1.msra.mxu0 %v2166
        %2186 = vmatprep.subr.mxu0 0.0
        %2187 = vmatpush1.msra.mxu0 %v2167
        %2188 = vmatprep.subr.mxu0 0.0
        %2189 = vmatpush1.msra.mxu0 %v2168
        %2190 = vmatprep.subr.mxu0 0.0
        %2191 = vmatpush1.msra.mxu0 %v2169
        %2192 = vmatprep.subr.mxu0 0.0
        %2193 = vmatpush1.msra.mxu0 %v2170
        %2194 = vmatprep.subr.mxu0 0.0
        %2195 = vmatpush1.msra.mxu0 %v2171
        %2196 = vmatprep.subr.mxu0 0.0
        %2197 = vmatpush1.msra.mxu0 %v2172
        %2198 = vmatprep.subr.mxu0 0.0
        %2199 = vmatpush1.msra.mxu0 %v2173
        %2200 = vmatprep.subr.mxu0 0.0
        %2201 = vmatpush1.msra.mxu0 %v2174
        %2202 = vmatprep.subr.mxu0 0.0
        %2203 = vmatpush1.msra.mxu0 %v2175
        %2204 = vmatprep.subr.mxu0 0.0
        %2205 = vmatpush1.msra.mxu0 %v2176
        %2206 = vmatprep.subr.mxu0 0.0
        %2207 = vmatpush1.msra.mxu0 %v2177
        %2208 = vmatprep.subr.mxu0 0.0
        %2209 = vmatpush1.msra.mxu0 %v2178
        %2210 = vmatprep.subr.mxu0 0.0
        %2211 = vmatpush1.msra.mxu0 %v2179
        %2212 = vmatprep.subr.mxu0 0.0
        %2213 = vmatpush1.msra.mxu0 0.0
        %2214 = vmatprep.subr.mxu0 0.0
        %2215 = vmatpush1.msra.mxu0 0.0
        %2216 = vmatprep.subr.mxu0 0.0
        %2217 = vmatpush1.msra.mxu0 0.0
        %2218 = vmatprep.subr.mxu0 0.0
        %2219 = vmatpush1.msra.mxu0 0.0
        %2220 = vmatprep.subr.mxu0 0.0
        %2221 = vmatpush1.msra.mxu0 0.0
        %2222 = vmatprep.subr.mxu0 0.0
        %2223 = vmatpush1.msra.mxu0 0.0
        %2224 = vmatprep.subr.mxu0 0.0
        %2225 = vmatpush1.msra.mxu0 0.0
        %2226 = vmatprep.subr.mxu0 0.0
        %2227 = vmatpush1.msra.mxu0 0.0
        %2228 = vmatprep.subr.mxu0 0.0
        %2229 = vmatpush1.msra.mxu0 0.0
        %2230 = vmatprep.subr.mxu0 0.0
        %2231 = vmatpush1.msra.mxu0 0.0
        %2232 = vmatprep.subr.mxu0 0.0
        %2233 = vmatpush1.msra.mxu0 0.0
        %2234 = vmatprep.subr.mxu0 0.0
        %2235 = vmatpush1.msra.mxu0 0.0
        %2236 = vmatprep.subr.mxu0 0.0
        %2237 = vmatpush1.msra.mxu0 0.0
        %2238 = vmatprep.subr.mxu0 0.0
        %2239 = vmatpush1.msra.mxu0 0.0
        %2240 = vmatprep.subr.mxu0 0.0
        %2241 = vmatpush1.msra.mxu0 0.0
        %2242 = vmatprep.subr.mxu0 0.0
        %2243 = vmatpush1.msra.mxu0 0.0
        %2244 = vmatprep.mubr.f32.mxu0 0.0
        %2245 = vmatmul.mubr.f32.gmra.mrb[0].mxu0 %v2159
        %v2246 = vpop.f32.mrb[0].mxu0
        %v2247 = vadd.f32 0.0, %v2246
        %v2248 = vpop.f32.mrb[0].mxu0
        %2249 = vmatprep.mubr.f32.mxu0 0.0
        %2250 = vmatmul.mubr.f32.gmra.mrb[0].mxu0 %v2160
        %v2251 = vpop.f32.mrb[0].mxu0
        %v2252 = vadd.f32 0.0, %v2251
        %v2253 = vpop.f32.mrb[0].mxu0
        %2254 = vmatprep.mubr.f32.mxu0 0.0
        %2255 = vmatmul.mubr.f32.gmra.mrb[0].mxu0 %v2161
        %v2256 = vpop.f32.mrb[0].mxu0
        %v2257 = vadd.f32 0.0, %v2256
        %v2258 = vpop.f32.mrb[0].mxu0
        %2259 = vmatprep.mubr.f32.mxu0 0.0
        %2260 = vmatmul.mubr.f32.gmra.mrb[0].mxu0 %v2162
        %v2261 = vpop.f32.mrb[0].mxu0
        %v2262 = vadd.f32 0.0, %v2261
        %v2263 = vpop.f32.mrb[0].mxu0
        %2264 = vdwg.mxu0
        %v2265 = vadd.f32 %v2155, %v2247
        %v2266 = vadd.f32 %v2156, %v2252
        %v2267 = vadd.f32 %v2157, %v2257
        %v2268 = vadd.f32 %v2158, %v2262
        %v2269 = vld [vmem:[#allocation3 + $0x24] sm:$0xff]
        %v2270 = vld [vmem:[#allocation3 + $0x2c] sm:$0xff]
        %v2271 = vld [vmem:[#allocation3 + $0x34] sm:$0xff]
        %v2272 = vld [vmem:[#allocation3 + $0x3c] sm:$0xff]
        %s2273 = scalar_lea.vmem [#allocation5], 1024
        %v2274 = vld [vmem:[%s2273] sm:$0xff]
        %v2275 = vld [vmem:[%s2273 + $0x8] sm:$0xff]
        %v2276 = vld [vmem:[%s2273 + $0x10] sm:$0xff]
        %v2277 = vld [vmem:[%s2273 + $0x18] sm:$0xff]
        %v2278 = vld [vmem:[%s2273 + $0x20] sm:$0xff]
        %v2279 = vld [vmem:[%s2273 + $0x28] sm:$0xff]
        %v2280 = vld [vmem:[%s2273 + $0x30] sm:$0xff]
        %v2281 = vld [vmem:[%s2273 + $0x38] sm:$0xff]
        %v2282 = vld [vmem:[%s2273 + $0x40] sm:$0xff]
        %v2283 = vld [vmem:[%s2273 + $0x48] sm:$0xff]
        %v2284 = vld [vmem:[%s2273 + $0x50] sm:$0xff]
        %v2285 = vld [vmem:[%s2273 + $0x58] sm:$0xff]
        %v2286 = vld [vmem:[%s2273 + $0x60] sm:$0xff]
        %v2287 = vld [vmem:[%s2273 + $0x68] sm:$0xff]
        %v2288 = vld [vmem:[%s2273 + $0x70] sm:$0xff]
        %v2289 = vld [vmem:[%s2273 + $0x78] sm:$0xff]
        %2290 = vmatprep.subr.mxu0 0.0
        %2291 = vmatpush1.msra.mxu0 %v2274
        %2292 = vmatprep.subr.mxu0 0.0
        %2293 = vmatpush1.msra.mxu0 %v2275
        %2294 = vmatprep.subr.mxu0 0.0
        %2295 = vmatpush1.msra.mxu0 %v2276
        %2296 = vmatprep.subr.mxu0 0.0
        %2297 = vmatpush1.msra.mxu0 %v2277
        %2298 = vmatprep.subr.mxu0 0.0
        %2299 = vmatpush1.msra.mxu0 %v2278
        %2300 = vmatprep.subr.mxu0 0.0
        %2301 = vmatpush1.msra.mxu0 %v2279
        %2302 = vmatprep.subr.mxu0 0.0
        %2303 = vmatpush1.msra.mxu0 %v2280
        %2304 = vmatprep.subr.mxu0 0.0
        %2305 = vmatpush1.msra.mxu0 %v2281
        %2306 = vmatprep.subr.mxu0 0.0
        %2307 = vmatpush1.msra.mxu0 %v2282
        %2308 = vmatprep.subr.mxu0 0.0
        %2309 = vmatpush1.msra.mxu0 %v2283
        %2310 = vmatprep.subr.mxu0 0.0
        %2311 = vmatpush1.msra.mxu0 %v2284
        %2312 = vmatprep.subr.mxu0 0.0
        %2313 = vmatpush1.msra.mxu0 %v2285
        %2314 = vmatprep.subr.mxu0 0.0
        %2315 = vmatpush1.msra.mxu0 %v2286
        %2316 = vmatprep.subr.mxu0 0.0
        %2317 = vmatpush1.msra.mxu0 %v2287
        %2318 = vmatprep.subr.mxu0 0.0
        %2319 = vmatpush1.msra.mxu0 %v2288
        %2320 = vmatprep.subr.mxu0 0.0
        %2321 = vmatpush1.msra.mxu0 %v2289
        %2322 = vmatprep.subr.mxu0 0.0
        %2323 = vmatpush1.msra.mxu0 0.0
        %2324 = vmatprep.subr.mxu0 0.0
        %2325 = vmatpush1.msra.mxu0 0.0
        %2326 = vmatprep.subr.mxu0 0.0
        %2327 = vmatpush1.msra.mxu0 0.0
        %2328 = vmatprep.subr.mxu0 0.0
        %2329 = vmatpush1.msra.mxu0 0.0
        %2330 = vmatprep.subr.mxu0 0.0
        %2331 = vmatpush1.msra.mxu0 0.0
        %2332 = vmatprep.subr.mxu0 0.0
        %2333 = vmatpush1.msra.mxu0 0.0
        %2334 = vmatprep.subr.mxu0 0.0
        %2335 = vmatpush1.msra.mxu0 0.0
        %2336 = vmatprep.subr.mxu0 0.0
        %2337 = vmatpush1.msra.mxu0 0.0
        %2338 = vmatprep.subr.mxu0 0.0
        %2339 = vmatpush1.msra.mxu0 0.0
        %2340 = vmatprep.subr.mxu0 0.0
        %2341 = vmatpush1.msra.mxu0 0.0
        %2342 = vmatprep.subr.mxu0 0.0
        %2343 = vmatpush1.msra.mxu0 0.0
        %2344 = vmatprep.subr.mxu0 0.0
        %2345 = vmatpush1.msra.mxu0 0.0
        %2346 = vmatprep.subr.mxu0 0.0
        %2347 = vmatpush1.msra.mxu0 0.0
        %2348 = vmatprep.subr.mxu0 0.0
        %2349 = vmatpush1.msra.mxu0 0.0
        %2350 = vmatprep.subr.mxu0 0.0
        %2351 = vmatpush1.msra.mxu0 0.0
        %2352 = vmatprep.subr.mxu0 0.0
        %2353 = vmatpush1.msra.mxu0 0.0
        %2354 = vmatprep.mubr.f32.mxu0 0.0
        %2355 = vmatmul.mubr.f32.gmra.mrb[0].mxu0 %v2269
        %v2356 = vpop.f32.mrb[0].mxu0
        %v2357 = vadd.f32 0.0, %v2356
        %v2358 = vpop.f32.mrb[0].mxu0
        %2359 = vmatprep.mubr.f32.mxu0 0.0
        %2360 = vmatmul.mubr.f32.gmra.mrb[0].mxu0 %v2270
        %v2361 = vpop.f32.mrb[0].mxu0
        %v2362 = vadd.f32 0.0, %v2361
        %v2363 = vpop.f32.mrb[0].mxu0
        %2364 = vmatprep.mubr.f32.mxu0 0.0
        %2365 = vmatmul.mubr.f32.gmra.mrb[0].mxu0 %v2271
        %v2366 = vpop.f32.mrb[0].mxu0
        %v2367 = vadd.f32 0.0, %v2366
        %v2368 = vpop.f32.mrb[0].mxu0
        %2369 = vmatprep.mubr.f32.mxu0 0.0
        %2370 = vmatmul.mubr.f32.gmra.mrb[0].mxu0 %v2272
        %v2371 = vpop.f32.mrb[0].mxu0
        %v2372 = vadd.f32 0.0, %v2371
        %v2373 = vpop.f32.mrb[0].mxu0
        %2374 = vdwg.mxu0
        %v2375 = vadd.f32 %v2265, %v2357
        %v2376 = vadd.f32 %v2266, %v2362
        %v2377 = vadd.f32 %v2267, %v2367
        %v2378 = vadd.f32 %v2268, %v2372
        %v2379 = vld [vmem:[#allocation3 + $0x28] sm:$0xff]
        %v2380 = vld [vmem:[#allocation3 + $0x30] sm:$0xff]
        %v2381 = vld [vmem:[#allocation3 + $0x38] sm:$0xff]
        %v2382 = vld [vmem:[#allocation3 + $0x40] sm:$0xff]
        %s2383 = scalar_lea.vmem [#allocation5], 1152
        %v2384 = vld [vmem:[%s2383] sm:$0xff]
        %v2385 = vld [vmem:[%s2383 + $0x8] sm:$0xff]
        %v2386 = vld [vmem:[%s2383 + $0x10] sm:$0xff]
        %v2387 = vld [vmem:[%s2383 + $0x18] sm:$0xff]
        %v2388 = vld [vmem:[%s2383 + $0x20] sm:$0xff]
        %v2389 = vld [vmem:[%s2383 + $0x28] sm:$0xff]
        %v2390 = vld [vmem:[%s2383 + $0x30] sm:$0xff]
        %v2391 = vld [vmem:[%s2383 + $0x38] sm:$0xff]
        %v2392 = vld [vmem:[%s2383 + $0x40] sm:$0xff]
        %v2393 = vld [vmem:[%s2383 + $0x48] sm:$0xff]
        %v2394 = vld [vmem:[%s2383 + $0x50] sm:$0xff]
        %v2395 = vld [vmem:[%s2383 + $0x58] sm:$0xff]
        %v2396 = vld [vmem:[%s2383 + $0x60] sm:$0xff]
        %v2397 = vld [vmem:[%s2383 + $0x68] sm:$0xff]
        %v2398 = vld [vmem:[%s2383 + $0x70] sm:$0xff]
        %v2399 = vld [vmem:[%s2383 + $0x78] sm:$0xff]
        %2400 = vmatprep.subr.mxu0 0.0
        %2401 = vmatpush1.msra.mxu0 %v2384
        %2402 = vmatprep.subr.mxu0 0.0
        %2403 = vmatpush1.msra.mxu0 %v2385
        %2404 = vmatprep.subr.mxu0 0.0
        %2405 = vmatpush1.msra.mxu0 %v2386
        %2406 = vmatprep.subr.mxu0 0.0
        %2407 = vmatpush1.msra.mxu0 %v2387
        %2408 = vmatprep.subr.mxu0 0.0
        %2409 = vmatpush1.msra.mxu0 %v2388
        %2410 = vmatprep.subr.mxu0 0.0
        %2411 = vmatpush1.msra.mxu0 %v2389
        %2412 = vmatprep.subr.mxu0 0.0
        %2413 = vmatpush1.msra.mxu0 %v2390
        %2414 = vmatprep.subr.mxu0 0.0
        %2415 = vmatpush1.msra.mxu0 %v2391
        %2416 = vmatprep.subr.mxu0 0.0
        %2417 = vmatpush1.msra.mxu0 %v2392
        %2418 = vmatprep.subr.mxu0 0.0
        %2419 = vmatpush1.msra.mxu0 %v2393
        %2420 = vmatprep.subr.mxu0 0.0
        %2421 = vmatpush1.msra.mxu0 %v2394
        %2422 = vmatprep.subr.mxu0 0.0
        %2423 = vmatpush1.msra.mxu0 %v2395
        %2424 = vmatprep.subr.mxu0 0.0
        %2425 = vmatpush1.msra.mxu0 %v2396
        %2426 = vmatprep.subr.mxu0 0.0
        %2427 = vmatpush1.msra.mxu0 %v2397
        %2428 = vmatprep.subr.mxu0 0.0
        %2429 = vmatpush1.msra.mxu0 %v2398
        %2430 = vmatprep.subr.mxu0 0.0
        %2431 = vmatpush1.msra.mxu0 %v2399
        %2432 = vmatprep.subr.mxu0 0.0
        %2433 = vmatpush1.msra.mxu0 0.0
        %2434 = vmatprep.subr.mxu0 0.0
        %2435 = vmatpush1.msra.mxu0 0.0
        %2436 = vmatprep.subr.mxu0 0.0
        %2437 = vmatpush1.msra.mxu0 0.0
        %2438 = vmatprep.subr.mxu0 0.0
        %2439 = vmatpush1.msra.mxu0 0.0
        %2440 = vmatprep.subr.mxu0 0.0
        %2441 = vmatpush1.msra.mxu0 0.0
        %2442 = vmatprep.subr.mxu0 0.0
        %2443 = vmatpush1.msra.mxu0 0.0
        %2444 = vmatprep.subr.mxu0 0.0
        %2445 = vmatpush1.msra.mxu0 0.0
        %2446 = vmatprep.subr.mxu0 0.0
        %2447 = vmatpush1.msra.mxu0 0.0
        %2448 = vmatprep.subr.mxu0 0.0
        %2449 = vmatpush1.msra.mxu0 0.0
        %2450 = vmatprep.subr.mxu0 0.0
        %2451 = vmatpush1.msra.mxu0 0.0
        %2452 = vmatprep.subr.mxu0 0.0
        %2453 = vmatpush1.msra.mxu0 0.0
        %2454 = vmatprep.subr.mxu0 0.0
        %2455 = vmatpush1.msra.mxu0 0.0
        %2456 = vmatprep.subr.mxu0 0.0
        %2457 = vmatpush1.msra.mxu0 0.0
        %2458 = vmatprep.subr.mxu0 0.0
        %2459 = vmatpush1.msra.mxu0 0.0
        %2460 = vmatprep.subr.mxu0 0.0
        %2461 = vmatpush1.msra.mxu0 0.0
        %2462 = vmatprep.subr.mxu0 0.0
        %2463 = vmatpush1.msra.mxu0 0.0
        %2464 = vmatprep.mubr.f32.mxu0 0.0
        %2465 = vmatmul.mubr.f32.gmra.mrb[0].mxu0 %v2379
        %v2466 = vpop.f32.mrb[0].mxu0
        %v2467 = vadd.f32 0.0, %v2466
        %v2468 = vpop.f32.mrb[0].mxu0
        %2469 = vmatprep.mubr.f32.mxu0 0.0
        %2470 = vmatmul.mubr.f32.gmra.mrb[0].mxu0 %v2380
        %v2471 = vpop.f32.mrb[0].mxu0
        %v2472 = vadd.f32 0.0, %v2471
        %v2473 = vpop.f32.mrb[0].mxu0
        %2474 = vmatprep.mubr.f32.mxu0 0.0
        %2475 = vmatmul.mubr.f32.gmra.mrb[0].mxu0 %v2381
        %v2476 = vpop.f32.mrb[0].mxu0
        %v2477 = vadd.f32 0.0, %v2476
        %v2478 = vpop.f32.mrb[0].mxu0
        %2479 = vmatprep.mubr.f32.mxu0 0.0
        %2480 = vmatmul.mubr.f32.gmra.mrb[0].mxu0 %v2382
        %v2481 = vpop.f32.mrb[0].mxu0
        %v2482 = vadd.f32 0.0, %v2481
        %v2483 = vpop.f32.mrb[0].mxu0
        %2484 = vdwg.mxu0
        %v2485 = vadd.f32 %v2375, %v2467
        %v2486 = vadd.f32 %v2376, %v2472
        %v2487 = vadd.f32 %v2377, %v2477
        %v2488 = vadd.f32 %v2378, %v2482
        %v2489 = vld [vmem:[%s9] sm:$0x1]
        %v2491 = vlaneseq
        %v2492 = vshrl.u32 %v2491, 7
        %v2493 = vsub.s32 0, %v2492
        %v2494 = vrot.slane %v2489, %v2493
        %v2496 = vadd.f32 %v2485, %v2494
        %v2497 = vadd.f32 %v2486, %v2494
        %v2498 = vadd.f32 %v2487, %v2494
        %v2499 = vadd.f32 %v2488, %v2494
        %v2500 = vlaneseq
        %v2501 = vshrl.u32 %v2500, 7
        %v2502 = vadd.s32 %v2501, 8
        %v2503 = vadd.s32 %v2501, 16
        %v2504 = vadd.s32 %v2501, 24
        %vm2505 = vcmp.eq.s32.totalorder %v2501, 0
        %vm2506 = vcmp.eq.s32.totalorder %v2502, 0
        %vm2507 = vcmp.eq.s32.totalorder %v2503, 0
        %vm2508 = vcmp.eq.s32.totalorder %v2504, 0
        %v2509 = vrot.slane %v1090, 7
        %v2510 = vrot.slane %v1091, 7
        %v2511 = vrot.slane %v1092, 7
        %v2512 = vrot.slane %v1093, 7
        %vm2513 = vcmp.lt.s32.totalorder %v2501, 1
        %v2514 = vsel %vm2513, %v2511, %v2512
        %v2515 = vsel %vm2513, %v2510, %v2511
        %v2516 = vsel %vm2513, %v2509, %v2510
        %v2517 = vsel %vm2513, %v2512, %v2509
        %v2518 = vsel %vm2505, %v1090, %v2517
        %v2519 = vsel %vm2506, %v1091, %v2516
        %v2520 = vsel %vm2507, %v1092, %v2515
        %v2521 = vsel %vm2508, %v1093, %v2514
        %vm2522 = vcmp.eq.s32.totalorder %v2501, 31
        %vm2523 = vcmp.eq.s32.totalorder %v2502, 31
        %vm2524 = vcmp.eq.s32.totalorder %v2503, 31
        %vm2525 = vcmp.eq.s32.totalorder %v2504, 31
        %v2526 = vrot.slane %v1090, 1
        %v2527 = vrot.slane %v1091, 1
        %v2528 = vrot.slane %v1092, 1
        %v2529 = vrot.slane %v1093, 1
        %vm2530 = vcmp.lt.s32.totalorder %v2501, 7
        %v2531 = vsel %vm2530, %v2528, %v2529
        %v2532 = vsel %vm2530, %v2527, %v2528
        %v2533 = vsel %vm2530, %v2526, %v2527
        %v2534 = vsel %vm2530, %v2529, %v2526
        %v2535 = vsel %vm2522, %v1090, %v2533
        %v2536 = vsel %vm2523, %v1091, %v2532
        %v2537 = vsel %vm2524, %v1092, %v2531
        %v2538 = vsel %vm2525, %v1093, %v2534
        %v2539 = vmax.f32 %v2518, %v2535
        %v2540 = vmax.f32 %v2519, %v2536
        %v2541 = vmax.f32 %v2520, %v2537
        %v2542 = vmax.f32 %v2521, %v2538
        %v2543 = vmax.f32 %v1090, %v2539
        %v2544 = vmax.f32 %v1091, %v2540
        %v2545 = vmax.f32 %v1092, %v2541
        %v2546 = vmax.f32 %v1093, %v2542
        %v2547 = vld [vmem:[%s11] sm:$0xf]
        %v2548 = vld [vmem:[%s13] sm:$0x1]
        %v2550 = vlaneseq
        %v2551 = vshrl.u32 %v2550, 7
        %v2552 = vsub.s32 0, %v2551
        %v2553 = vrot.slane %v2548, %v2552
        %v2556 = vsel %vm1102, %v2543, 0
        %v2559 = vsel %vm1102, %v2544, 0
        %v2562 = vsel %vm1102, %v2545, 0
        %v2565 = vsel %vm1102, %v2546, 0
        %v2568 = vsel %vm1115, %v2547, 0
        %2570 = vmatprep.subr.mxu0 0.0
        %2571 = vmatpush1.msra.mxu0 %v2568
        %2572 = vmatprep.subr.mxu0 0.0
        %2573 = vmatpush1.msra.mxu0 0.0
        %2574 = vmatprep.subr.mxu0 0.0
        %2575 = vmatpush1.msra.mxu0 0.0
        %2576 = vmatprep.subr.mxu0 0.0
        %2577 = vmatpush1.msra.mxu0 0.0
        %2578 = vmatprep.subr.mxu0 0.0
        %2579 = vmatpush1.msra.mxu0 0.0
        %2580 = vmatprep.subr.mxu0 0.0
        %2581 = vmatpush1.msra.mxu0 0.0
        %2582 = vmatprep.subr.mxu0 0.0
        %2583 = vmatpush1.msra.mxu0 0.0
        %2584 = vmatprep.subr.mxu0 0.0
        %2585 = vmatpush1.msra.mxu0 0.0
        %2586 = vmatprep.subr.mxu0 0.0
        %2587 = vmatpush1.msra.mxu0 0.0
        %2588 = vmatprep.subr.mxu0 0.0
        %2589 = vmatpush1.msra.mxu0 0.0
        %2590 = vmatprep.subr.mxu0 0.0
        %2591 = vmatpush1.msra.mxu0 0.0
        %2592 = vmatprep.subr.mxu0 0.0
        %2593 = vmatpush1.msra.mxu0 0.0
        %2594 = vmatprep.subr.mxu0 0.0
        %2595 = vmatpush1.msra.mxu0 0.0
        %2596 = vmatprep.subr.mxu0 0.0
        %2597 = vmatpush1.msra.mxu0 0.0
        %2598 = vmatprep.subr.mxu0 0.0
        %2599 = vmatpush1.msra.mxu0 0.0
        %2600 = vmatprep.subr.mxu0 0.0
        %2601 = vmatpush1.msra.mxu0 0.0
        %2602 = vmatprep.subr.mxu0 0.0
        %2603 = vmatpush1.msra.mxu0 0.0
        %2604 = vmatprep.subr.mxu0 0.0
        %2605 = vmatpush1.msra.mxu0 0.0
        %2606 = vmatprep.subr.mxu0 0.0
        %2607 = vmatpush1.msra.mxu0 0.0
        %2608 = vmatprep.subr.mxu0 0.0
        %2609 = vmatpush1.msra.mxu0 0.0
        %2610 = vmatprep.subr.mxu0 0.0
        %2611 = vmatpush1.msra.mxu0 0.0
        %2612 = vmatprep.subr.mxu0 0.0
        %2613 = vmatpush1.msra.mxu0 0.0
        %2614 = vmatprep.subr.mxu0 0.0
        %2615 = vmatpush1.msra.mxu0 0.0
        %2616 = vmatprep.subr.mxu0 0.0
        %2617 = vmatpush1.msra.mxu0 0.0
        %2618 = vmatprep.subr.mxu0 0.0
        %2619 = vmatpush1.msra.mxu0 0.0
        %2620 = vmatprep.subr.mxu0 0.0
        %2621 = vmatpush1.msra.mxu0 0.0
        %2622 = vmatprep.subr.mxu0 0.0
        %2623 = vmatpush1.msra.mxu0 0.0
        %2624 = vmatprep.subr.mxu0 0.0
        %2625 = vmatpush1.msra.mxu0 0.0
        %2626 = vmatprep.subr.mxu0 0.0
        %2627 = vmatpush1.msra.mxu0 0.0
        %2628 = vmatprep.subr.mxu0 0.0
        %2629 = vmatpush1.msra.mxu0 0.0
        %2630 = vmatprep.subr.mxu0 0.0
        %2631 = vmatpush1.msra.mxu0 0.0
        %2632 = vmatprep.subr.mxu0 0.0
        %2633 = vmatpush1.msra.mxu0 0.0
        %2634 = vmatprep.mubr.f32.mxu0 0.0
        %2635 = vmatmul.mubr.f32.gmra.mrb[0].mxu0 %v2556
        %v2636 = vpop.f32.mrb[0].mxu0
        %v2637 = vadd.f32 %v2553, %v2636
        %v2638 = vpop.f32.mrb[0].mxu0
        %2639 = vmatprep.mubr.f32.mxu0 0.0
        %2640 = vmatmul.mubr.f32.gmra.mrb[0].mxu0 %v2559
        %v2641 = vpop.f32.mrb[0].mxu0
        %v2642 = vadd.f32 %v2553, %v2641
        %v2643 = vpop.f32.mrb[0].mxu0
        %2644 = vmatprep.mubr.f32.mxu0 0.0
        %2645 = vmatmul.mubr.f32.gmra.mrb[0].mxu0 %v2562
        %v2646 = vpop.f32.mrb[0].mxu0
        %v2647 = vadd.f32 %v2553, %v2646
        %v2648 = vpop.f32.mrb[0].mxu0
        %2649 = vmatprep.mubr.f32.mxu0 0.0
        %2650 = vmatmul.mubr.f32.gmra.mrb[0].mxu0 %v2565
        %v2651 = vpop.f32.mrb[0].mxu0
        %v2652 = vadd.f32 %v2553, %v2651
        %v2653 = vpop.f32.mrb[0].mxu0
        %2654 = vdwg.mxu0
        %v2655 = vld [vmem:[%s15] sm:$0x1]
        %v2656 = vld [vmem:[%s17] sm:$0x1]
        %v2658 = vlaneseq
        %v2659 = vshrl.u32 %v2658, 7
        %v2660 = vsub.s32 0, %v2659
        %v2661 = vrot.slane %v2655, %v2660
        %v2663 = vmul.f32 %v2496, %v2661
        %v2664 = vmul.f32 %v2497, %v2661
        %v2665 = vmul.f32 %v2498, %v2661
        %v2666 = vmul.f32 %v2499, %v2661
        %v2668 = vlaneseq
        %v2669 = vshrl.u32 %v2668, 7
        %v2670 = vsub.s32 0, %v2669
        %v2671 = vrot.slane %v2656, %v2670
        %v2673 = vadd.f32 %v2663, %v2671
        %v2674 = vadd.f32 %v2664, %v2671
        %v2675 = vadd.f32 %v2665, %v2671
        %v2676 = vadd.f32 %v2666, %v2671
        %v2677 = vmax.f32 %v2673, 0.0
        %v2678 = vmax.f32 %v2674, 0.0
        %v2679 = vmax.f32 %v2675, 0.0
        %v2680 = vmax.f32 %v2676, 0.0
        %vm2681 = vcmask 785408
        %2682 = vst.msk [vmem:[#allocation4] sm:$0xff] %vm2681, %v2677
        %2683 = vst.msk [vmem:[#allocation4 + $0x8] sm:$0xff] %vm2681, %v2678
        %2684 = vst.msk [vmem:[#allocation4 + $0x10] sm:$0xff] %vm2681, %v2679
        %2685 = vst.msk [vmem:[#allocation4 + $0x18] sm:$0xff] %vm2681, %v2680
        %2686 = vrot.lane.b32.xlu0 %v2661, 32
        %v2687 = vpop.permute.xlu0 %2686
        %v2689 = vmul.f32 %v2637, %v2687
        %v2690 = vmul.f32 %v2642, %v2687
        %v2691 = vmul.f32 %v2647, %v2687
        %v2692 = vmul.f32 %v2652, %v2687
        %2693 = vrot.lane.b32.xlu0 %v2671, 32
        %v2694 = vpop.permute.xlu0 %2693
        %v2696 = vadd.f32 %v2689, %v2694
        %v2697 = vadd.f32 %v2690, %v2694
        %v2698 = vadd.f32 %v2691, %v2694
        %v2699 = vadd.f32 %v2692, %v2694
        %v2700 = vmax.f32 %v2696, 0.0
        %v2701 = vmax.f32 %v2697, 0.0
        %v2702 = vmax.f32 %v2698, 0.0
        %v2703 = vmax.f32 %v2699, 0.0
        %2708 = vrot.lane.b32.xlu0 %v2700, 96
        %v2709 = vpop.permute.xlu0 %2708
        %2710 = vrot.lane.b32.xlu0 %v2701, 96
        %v2711 = vpop.permute.xlu0 %2710
        %2712 = vrot.lane.b32.xlu0 %v2702, 96
        %v2713 = vpop.permute.xlu0 %2712
        %2714 = vrot.lane.b32.xlu0 %v2703, 96
        %v2715 = vpop.permute.xlu0 %2714
        %2720 = vst.msk [vmem:[#allocation4] sm:$0xff] %vm1388, %v2709
        %2721 = vst.msk [vmem:[#allocation4 + $0x8] sm:$0xff] %vm1388, %v2711
        %2722 = vst.msk [vmem:[#allocation4 + $0x10] sm:$0xff] %vm1388, %v2713
        %2723 = vst.msk [vmem:[#allocation4 + $0x18] sm:$0xff] %vm1388, %v2715
        %v2724 = vld [vmem:[#allocation4] ss:$2 sm:$0xff]
        %s2725 = scalar_lea.vmem [#allocation4], 16
        %v2726 = vld [vmem:[%s2725] ss:$2 sm:$0xff]
        %s2727 = scalar_lea.vmem [#allocation4], 1
        %v2728 = vld [vmem:[%s2727] ss:$2 sm:$0xff]
        %s2729 = scalar_lea.vmem [#allocation4], 17
        %v2730 = vld [vmem:[%s2729] ss:$2 sm:$0xff]
        %v2731 = vmax.f32 %v2724, %v2728
        %v2732 = vmax.f32 %v2726, %v2730
        %v2733 = vld [vmem:[#allocation7] sm:$0xff]
        %v2734 = vld [vmem:[#allocation7 + $0x8] sm:$0xff]
        %v2735 = vld [vmem:[#allocation7 + $0x10] sm:$0xff]
        %v2736 = vld [vmem:[#allocation7 + $0x18] sm:$0xff]
        %v2737 = vld [vmem:[#allocation7 + $0x20] sm:$0xff]
        %v2738 = vld [vmem:[#allocation7 + $0x28] sm:$0xff]
        %v2739 = vld [vmem:[#allocation7 + $0x30] sm:$0xff]
        %v2740 = vld [vmem:[#allocation7 + $0x38] sm:$0xff]
        %v2741 = vld [vmem:[#allocation7 + $0x40] sm:$0xff]
        %v2742 = vld [vmem:[#allocation7 + $0x48] sm:$0xff]
        %v2743 = vld [vmem:[#allocation7 + $0x50] sm:$0xff]
        %v2744 = vld [vmem:[#allocation7 + $0x58] sm:$0xff]
        %v2745 = vld [vmem:[#allocation7 + $0x60] sm:$0xff]
        %v2746 = vld [vmem:[#allocation7 + $0x68] sm:$0xff]
        %v2747 = vld [vmem:[#allocation7 + $0x70] sm:$0xff]
        %v2748 = vld [vmem:[#allocation7 + $0x78] sm:$0xff]
        %v2749 = vld [vmem:[%s21] sm:$0x1]
        %v2751 = vlaneseq
        %v2752 = vshrl.u32 %v2751, 7
        %v2753 = vsub.s32 0, %v2752
        %v2754 = vrot.slane %v2749, %v2753
        %2756 = vmatprep.subr.mxu0 0.0
        %2757 = vmatpush1.msra.mxu0 %v2733
        %2758 = vmatprep.subr.mxu0 0.0
        %2759 = vmatpush1.msra.mxu0 %v2734
        %2760 = vmatprep.subr.mxu0 0.0
        %2761 = vmatpush1.msra.mxu0 %v2735
        %2762 = vmatprep.subr.mxu0 0.0
        %2763 = vmatpush1.msra.mxu0 %v2736
        %2764 = vmatprep.subr.mxu0 0.0
        %2765 = vmatpush1.msra.mxu0 %v2737
        %2766 = vmatprep.subr.mxu0 0.0
        %2767 = vmatpush1.msra.mxu0 %v2738
        %2768 = vmatprep.subr.mxu0 0.0
        %2769 = vmatpush1.msra.mxu0 %v2739
        %2770 = vmatprep.subr.mxu0 0.0
        %2771 = vmatpush1.msra.mxu0 %v2740
        %2772 = vmatprep.subr.mxu0 0.0
        %2773 = vmatpush1.msra.mxu0 %v2741
        %2774 = vmatprep.subr.mxu0 0.0
        %2775 = vmatpush1.msra.mxu0 %v2742
        %2776 = vmatprep.subr.mxu0 0.0
        %2777 = vmatpush1.msra.mxu0 %v2743
        %2778 = vmatprep.subr.mxu0 0.0
        %2779 = vmatpush1.msra.mxu0 %v2744
        %2780 = vmatprep.subr.mxu0 0.0
        %2781 = vmatpush1.msra.mxu0 %v2745
        %2782 = vmatprep.subr.mxu0 0.0
        %2783 = vmatpush1.msra.mxu0 %v2746
        %2784 = vmatprep.subr.mxu0 0.0
        %2785 = vmatpush1.msra.mxu0 %v2747
        %2786 = vmatprep.subr.mxu0 0.0
        %2787 = vmatpush1.msra.mxu0 %v2748
        %2788 = vmatprep.subr.mxu0 0.0
        %2789 = vmatpush1.msra.mxu0 0.0
        %2790 = vmatprep.subr.mxu0 0.0
        %2791 = vmatpush1.msra.mxu0 0.0
        %2792 = vmatprep.subr.mxu0 0.0
        %2793 = vmatpush1.msra.mxu0 0.0
        %2794 = vmatprep.subr.mxu0 0.0
        %2795 = vmatpush1.msra.mxu0 0.0
        %2796 = vmatprep.subr.mxu0 0.0
        %2797 = vmatpush1.msra.mxu0 0.0
        %2798 = vmatprep.subr.mxu0 0.0
        %2799 = vmatpush1.msra.mxu0 0.0
        %2800 = vmatprep.subr.mxu0 0.0
        %2801 = vmatpush1.msra.mxu0 0.0
        %2802 = vmatprep.subr.mxu0 0.0
        %2803 = vmatpush1.msra.mxu0 0.0
        %2804 = vmatprep.subr.mxu0 0.0
        %2805 = vmatpush1.msra.mxu0 0.0
        %2806 = vmatprep.subr.mxu0 0.0
        %2807 = vmatpush1.msra.mxu0 0.0
        %2808 = vmatprep.subr.mxu0 0.0
        %2809 = vmatpush1.msra.mxu0 0.0
        %2810 = vmatprep.subr.mxu0 0.0
        %2811 = vmatpush1.msra.mxu0 0.0
        %2812 = vmatprep.subr.mxu0 0.0
        %2813 = vmatpush1.msra.mxu0 0.0
        %2814 = vmatprep.subr.mxu0 0.0
        %2815 = vmatpush1.msra.mxu0 0.0
        %2816 = vmatprep.subr.mxu0 0.0
        %2817 = vmatpush1.msra.mxu0 0.0
        %2818 = vmatprep.subr.mxu0 0.0
        %2819 = vmatpush1.msra.mxu0 0.0
        %2820 = vmatprep.mubr.f32.mxu0 0.0
        %2821 = vmatmul.mubr.f32.gmra.mrb[0].mxu0 %v2731
        %v2822 = vpop.f32.mrb[0].mxu0
        %v2823 = vadd.f32 %v2754, %v2822
        %v2824 = vpop.f32.mrb[0].mxu0
        %2825 = vmatprep.mubr.f32.mxu0 0.0
        %2826 = vmatmul.mubr.f32.gmra.mrb[0].mxu0 %v2732
        %v2827 = vpop.f32.mrb[0].mxu0
        %v2828 = vadd.f32 %v2754, %v2827
        %v2829 = vpop.f32.mrb[0].mxu0
        %2830 = vdwg.mxu0
        %2831 = vst.msk [vmem:[#allocation2] sm:$0xff] %vm1204, 0.0
        %2832 = vst.msk [vmem:[#allocation2 + $0x8] sm:$0xff] %vm1204, 0.0
        %2833 = vst.msk [vmem:[#allocation2 + $0x10] sm:$0xff] %vm1204, 0.0
        %2834 = vst.msk [vmem:[#allocation2 + $0x18] sm:$0xff] %vm1204, %v2823
        %2835 = vst.msk [vmem:[#allocation2 + $0x20] sm:$0xff] %vm1204, %v2828
        %2836 = vst.msk [vmem:[#allocation2 + $0x28] sm:$0xff] %vm1204, 0.0
        %2837 = vst.msk [vmem:[#allocation2 + $0x30] sm:$0xff] %vm1204, 0.0
        %2838 = vst.msk [vmem:[#allocation2 + $0x38] sm:$0xff] %vm1204, 0.0
        %v2839 = vld [vmem:[#allocation2] sm:$0xff]
        %v2840 = vld [vmem:[#allocation2 + $0x8] sm:$0xff]
        %v2841 = vld [vmem:[#allocation2 + $0x10] sm:$0xff]
        %v2842 = vld [vmem:[#allocation2 + $0x18] sm:$0xff]
        %v2843 = vld [vmem:[#allocation2 + $0x20] sm:$0xff]
        %v2844 = vld [vmem:[#allocation2 + $0x28] sm:$0xff]
        %v2845 = vld [vmem:[#allocation2 + $0x30] sm:$0xff]
        %2846 = vst.msk [vmem:[#allocation3] sm:$0xff] %vm1204, %v2839
        %2847 = vst.msk [vmem:[#allocation3 + $0x8] sm:$0xff] %vm1204, %v2840
        %2848 = vst.msk [vmem:[#allocation3 + $0x10] sm:$0xff] %vm1204, %v2841
        %2849 = vst.msk [vmem:[#allocation3 + $0x18] sm:$0xff] %vm1204, %v2842
        %2850 = vst.msk [vmem:[#allocation3 + $0x20] sm:$0xff] %vm1204, %v2843
        %2851 = vst.msk [vmem:[#allocation3 + $0x28] sm:$0xff] %vm1204, %v2844
        %2852 = vst.msk [vmem:[#allocation3 + $0x30] sm:$0xff] %vm1204, %v2845
        %v2853 = vld [vmem:[#allocation2 + $0x1] sm:$0xff]
        %v2854 = vld [vmem:[#allocation2 + $0x9] sm:$0xff]
        %v2855 = vld [vmem:[#allocation2 + $0x11] sm:$0xff]
        %v2856 = vld [vmem:[#allocation2 + $0x19] sm:$0xff]
        %v2857 = vld [vmem:[#allocation2 + $0x21] sm:$0xff]
        %v2858 = vld [vmem:[#allocation2 + $0x29] sm:$0xff]
        %v2859 = vld [vmem:[#allocation2 + $0x31] sm:$0xff]
        %2867 = vrot.lane.b32.xlu0 %v2853, 32
        %v2868 = vpop.permute.xlu0 %2867
        %2869 = vrot.lane.b32.xlu0 %v2854, 32
        %v2870 = vpop.permute.xlu0 %2869
        %2871 = vrot.lane.b32.xlu0 %v2855, 32
        %v2872 = vpop.permute.xlu0 %2871
        %2873 = vrot.lane.b32.xlu0 %v2856, 32
        %v2874 = vpop.permute.xlu0 %2873
        %2875 = vrot.lane.b32.xlu0 %v2857, 32
        %v2876 = vpop.permute.xlu0 %2875
        %2877 = vrot.lane.b32.xlu0 %v2858, 32
        %v2878 = vpop.permute.xlu0 %2877
        %2879 = vrot.lane.b32.xlu0 %v2859, 32
        %v2880 = vpop.permute.xlu0 %2879
        %2888 = vst.msk [vmem:[#allocation3] sm:$0xff] %vm1278, %v2868
        %2889 = vst.msk [vmem:[#allocation3 + $0x8] sm:$0xff] %vm1278, %v2870
        %2890 = vst.msk [vmem:[#allocation3 + $0x10] sm:$0xff] %vm1278, %v2872
        %2891 = vst.msk [vmem:[#allocation3 + $0x18] sm:$0xff] %vm1278, %v2874
        %2892 = vst.msk [vmem:[#allocation3 + $0x20] sm:$0xff] %vm1278, %v2876
        %2893 = vst.msk [vmem:[#allocation3 + $0x28] sm:$0xff] %vm1278, %v2878
        %2894 = vst.msk [vmem:[#allocation3 + $0x30] sm:$0xff] %vm1278, %v2880
        %v2895 = vld [vmem:[#allocation2 + $0x2] sm:$0xff]
        %v2896 = vld [vmem:[#allocation2 + $0xa] sm:$0xff]
        %v2897 = vld [vmem:[#allocation2 + $0x12] sm:$0xff]
        %v2898 = vld [vmem:[#allocation2 + $0x1a] sm:$0xff]
        %v2899 = vld [vmem:[#allocation2 + $0x22] sm:$0xff]
        %v2900 = vld [vmem:[#allocation2 + $0x2a] sm:$0xff]
        %v2901 = vld [vmem:[#allocation2 + $0x32] sm:$0xff]
        %2909 = vrot.lane.b32.xlu0 %v2895, 64
        %v2910 = vpop.permute.xlu0 %2909
        %2911 = vrot.lane.b32.xlu0 %v2896, 64
        %v2912 = vpop.permute.xlu0 %2911
        %2913 = vrot.lane.b32.xlu0 %v2897, 64
        %v2914 = vpop.permute.xlu0 %2913
        %2915 = vrot.lane.b32.xlu0 %v2898, 64
        %v2916 = vpop.permute.xlu0 %2915
        %2917 = vrot.lane.b32.xlu0 %v2899, 64
        %v2918 = vpop.permute.xlu0 %2917
        %2919 = vrot.lane.b32.xlu0 %v2900, 64
        %v2920 = vpop.permute.xlu0 %2919
        %2921 = vrot.lane.b32.xlu0 %v2901, 64
        %v2922 = vpop.permute.xlu0 %2921
        %2930 = vst.msk [vmem:[#allocation3] sm:$0xff] %vm1333, %v2910
        %2931 = vst.msk [vmem:[#allocation3 + $0x8] sm:$0xff] %vm1333, %v2912
        %2932 = vst.msk [vmem:[#allocation3 + $0x10] sm:$0xff] %vm1333, %v2914
        %2933 = vst.msk [vmem:[#allocation3 + $0x18] sm:$0xff] %vm1333, %v2916
        %2934 = vst.msk [vmem:[#allocation3 + $0x20] sm:$0xff] %vm1333, %v2918
        %2935 = vst.msk [vmem:[#allocation3 + $0x28] sm:$0xff] %vm1333, %v2920
        %2936 = vst.msk [vmem:[#allocation3 + $0x30] sm:$0xff] %vm1333, %v2922
        %v2937 = vld [vmem:[#allocation2 + $0x3] sm:$0xff]
        %v2938 = vld [vmem:[#allocation2 + $0xb] sm:$0xff]
        %v2939 = vld [vmem:[#allocation2 + $0x13] sm:$0xff]
        %v2940 = vld [vmem:[#allocation2 + $0x1b] sm:$0xff]
        %v2941 = vld [vmem:[#allocation2 + $0x23] sm:$0xff]
        %v2942 = vld [vmem:[#allocation2 + $0x2b] sm:$0xff]
        %v2943 = vld [vmem:[#allocation2 + $0x33] sm:$0xff]
        %2951 = vrot.lane.b32.xlu0 %v2937, 96
        %v2952 = vpop.permute.xlu0 %2951
        %2953 = vrot.lane.b32.xlu0 %v2938, 96
        %v2954 = vpop.permute.xlu0 %2953
        %2955 = vrot.lane.b32.xlu0 %v2939, 96
        %v2956 = vpop.permute.xlu0 %2955
        %2957 = vrot.lane.b32.xlu0 %v2940, 96
        %v2958 = vpop.permute.xlu0 %2957
        %2959 = vrot.lane.b32.xlu0 %v2941, 96
        %v2960 = vpop.permute.xlu0 %2959
        %2961 = vrot.lane.b32.xlu0 %v2942, 96
        %v2962 = vpop.permute.xlu0 %2961
        %2963 = vrot.lane.b32.xlu0 %v2943, 96
        %v2964 = vpop.permute.xlu0 %2963
        %2972 = vst.msk [vmem:[#allocation3] sm:$0xff] %vm1388, %v2952
        %2973 = vst.msk [vmem:[#allocation3 + $0x8] sm:$0xff] %vm1388, %v2954
        %2974 = vst.msk [vmem:[#allocation3 + $0x10] sm:$0xff] %vm1388, %v2956
        %2975 = vst.msk [vmem:[#allocation3 + $0x18] sm:$0xff] %vm1388, %v2958
        %2976 = vst.msk [vmem:[#allocation3 + $0x20] sm:$0xff] %vm1388, %v2960
        %2977 = vst.msk [vmem:[#allocation3 + $0x28] sm:$0xff] %vm1388, %v2962
        %2978 = vst.msk [vmem:[#allocation3 + $0x30] sm:$0xff] %vm1388, %v2964
        %v2979 = vld [vmem:[#allocation3 + $0x4] sm:$0xff]
        %v2980 = vld [vmem:[#allocation3 + $0xc] sm:$0xff]
        %v2981 = vld [vmem:[#allocation9] sm:$0xff]
        %v2982 = vld [vmem:[#allocation9 + $0x8] sm:$0xff]
        %v2983 = vld [vmem:[#allocation9 + $0x10] sm:$0xff]
        %v2984 = vld [vmem:[#allocation9 + $0x18] sm:$0xff]
        %v2985 = vld [vmem:[#allocation9 + $0x20] sm:$0xff]
        %v2986 = vld [vmem:[#allocation9 + $0x28] sm:$0xff]
        %v2987 = vld [vmem:[#allocation9 + $0x30] sm:$0xff]
        %v2988 = vld [vmem:[#allocation9 + $0x38] sm:$0xff]
        %v2989 = vld [vmem:[#allocation9 + $0x40] sm:$0xff]
        %v2990 = vld [vmem:[#allocation9 + $0x48] sm:$0xff]
        %v2991 = vld [vmem:[#allocation9 + $0x50] sm:$0xff]
        %v2992 = vld [vmem:[#allocation9 + $0x58] sm:$0xff]
        %v2993 = vld [vmem:[#allocation9 + $0x60] sm:$0xff]
        %v2994 = vld [vmem:[#allocation9 + $0x68] sm:$0xff]
        %v2995 = vld [vmem:[#allocation9 + $0x70] sm:$0xff]
        %v2996 = vld [vmem:[#allocation9 + $0x78] sm:$0xff]
        %v2997 = vld [vmem:[#allocation3 + $0x8] sm:$0xff]
        %v2998 = vld [vmem:[#allocation3 + $0x10] sm:$0xff]
        %s2999 = scalar_lea.vmem [#allocation9], 128
        %v3000 = vld [vmem:[%s2999] sm:$0xff]
        %v3001 = vld [vmem:[%s2999 + $0x8] sm:$0xff]
        %v3002 = vld [vmem:[%s2999 + $0x10] sm:$0xff]
        %v3003 = vld [vmem:[%s2999 + $0x18] sm:$0xff]
        %v3004 = vld [vmem:[%s2999 + $0x20] sm:$0xff]
        %v3005 = vld [vmem:[%s2999 + $0x28] sm:$0xff]
        %v3006 = vld [vmem:[%s2999 + $0x30] sm:$0xff]
        %v3007 = vld [vmem:[%s2999 + $0x38] sm:$0xff]
        %v3008 = vld [vmem:[%s2999 + $0x40] sm:$0xff]
        %v3009 = vld [vmem:[%s2999 + $0x48] sm:$0xff]
        %v3010 = vld [vmem:[%s2999 + $0x50] sm:$0xff]
        %v3011 = vld [vmem:[%s2999 + $0x58] sm:$0xff]
        %v3012 = vld [vmem:[%s2999 + $0x60] sm:$0xff]
        %v3013 = vld [vmem:[%s2999 + $0x68] sm:$0xff]
        %v3014 = vld [vmem:[%s2999 + $0x70] sm:$0xff]
        %v3015 = vld [vmem:[%s2999 + $0x78] sm:$0xff]
        %3016 = vmatprep.subr.mxu0 0.0
        %3017 = vmatpush1.msra.mxu0 %v3000
        %3018 = vmatprep.subr.mxu0 0.0
        %3019 = vmatpush1.msra.mxu0 %v3001
        %3020 = vmatprep.subr.mxu0 0.0
        %3021 = vmatpush1.msra.mxu0 %v3002
        %3022 = vmatprep.subr.mxu0 0.0
        %3023 = vmatpush1.msra.mxu0 %v3003
        %3024 = vmatprep.subr.mxu0 0.0
        %3025 = vmatpush1.msra.mxu0 %v3004
        %3026 = vmatprep.subr.mxu0 0.0
        %3027 = vmatpush1.msra.mxu0 %v3005
        %3028 = vmatprep.subr.mxu0 0.0
        %3029 = vmatpush1.msra.mxu0 %v3006
        %3030 = vmatprep.subr.mxu0 0.0
        %3031 = vmatpush1.msra.mxu0 %v3007
        %3032 = vmatprep.subr.mxu0 0.0
        %3033 = vmatpush1.msra.mxu0 %v3008
        %3034 = vmatprep.subr.mxu0 0.0
        %3035 = vmatpush1.msra.mxu0 %v3009
        %3036 = vmatprep.subr.mxu0 0.0
        %3037 = vmatpush1.msra.mxu0 %v3010
        %3038 = vmatprep.subr.mxu0 0.0
        %3039 = vmatpush1.msra.mxu0 %v3011
        %3040 = vmatprep.subr.mxu0 0.0
        %3041 = vmatpush1.msra.mxu0 %v3012
        %3042 = vmatprep.subr.mxu0 0.0
        %3043 = vmatpush1.msra.mxu0 %v3013
        %3044 = vmatprep.subr.mxu0 0.0
        %3045 = vmatpush1.msra.mxu0 %v3014
        %3046 = vmatprep.subr.mxu0 0.0
        %3047 = vmatpush1.msra.mxu0 %v3015
        %3048 = vmatprep.subr.mxu0 0.0
        %3049 = vmatpush1.msra.mxu0 0.0
        %3050 = vmatprep.subr.mxu0 0.0
        %3051 = vmatpush1.msra.mxu0 0.0
        %3052 = vmatprep.subr.mxu0 0.0
        %3053 = vmatpush1.msra.mxu0 0.0
        %3054 = vmatprep.subr.mxu0 0.0
        %3055 = vmatpush1.msra.mxu0 0.0
        %3056 = vmatprep.subr.mxu0 0.0
        %3057 = vmatpush1.msra.mxu0 0.0
        %3058 = vmatprep.subr.mxu0 0.0
        %3059 = vmatpush1.msra.mxu0 0.0
        %3060 = vmatprep.subr.mxu0 0.0
        %3061 = vmatpush1.msra.mxu0 0.0
        %3062 = vmatprep.subr.mxu0 0.0
        %3063 = vmatpush1.msra.mxu0 0.0
        %3064 = vmatprep.subr.mxu0 0.0
        %3065 = vmatpush1.msra.mxu0 0.0
        %3066 = vmatprep.subr.mxu0 0.0
        %3067 = vmatpush1.msra.mxu0 0.0
        %3068 = vmatprep.subr.mxu0 0.0
        %3069 = vmatpush1.msra.mxu0 0.0
        %3070 = vmatprep.subr.mxu0 0.0
        %3071 = vmatpush1.msra.mxu0 0.0
        %3072 = vmatprep.subr.mxu0 0.0
        %3073 = vmatpush1.msra.mxu0 0.0
        %3074 = vmatprep.subr.mxu0 0.0
        %3075 = vmatpush1.msra.mxu0 0.0
        %3076 = vmatprep.subr.mxu0 0.0
        %3077 = vmatpush1.msra.mxu0 0.0
        %3078 = vmatprep.subr.mxu0 0.0
        %3079 = vmatpush1.msra.mxu0 0.0
        %3080 = vmatprep.mubr.f32.mxu0 0.0
        %3081 = vmatmul.mubr.f32.gmra.mrb[0].mxu0 %v2997
        %v3082 = vpop.f32.mrb[0].mxu0
        %v3083 = vadd.f32 0.0, %v3082
        %v3084 = vpop.f32.mrb[0].mxu0
        %3085 = vmatprep.mubr.f32.mxu0 0.0
        %3086 = vmatmul.mubr.f32.gmra.mrb[0].mxu0 %v2998
        %v3087 = vpop.f32.mrb[0].mxu0
        %v3088 = vadd.f32 0.0, %v3087
        %v3089 = vpop.f32.mrb[0].mxu0
        %3090 = vdwg.mxu0
        %3091 = vmatprep.subr.mxu0 0.0
        %3092 = vmatpush1.msra.mxu0 %v2981
        %3093 = vmatprep.subr.mxu0 0.0
        %3094 = vmatpush1.msra.mxu0 %v2982
        %3095 = vmatprep.subr.mxu0 0.0
        %3096 = vmatpush1.msra.mxu0 %v2983
        %3097 = vmatprep.subr.mxu0 0.0
        %3098 = vmatpush1.msra.mxu0 %v2984
        %3099 = vmatprep.subr.mxu0 0.0
        %3100 = vmatpush1.msra.mxu0 %v2985
        %3101 = vmatprep.subr.mxu0 0.0
        %3102 = vmatpush1.msra.mxu0 %v2986
        %3103 = vmatprep.subr.mxu0 0.0
        %3104 = vmatpush1.msra.mxu0 %v2987
        %3105 = vmatprep.subr.mxu0 0.0
        %3106 = vmatpush1.msra.mxu0 %v2988
        %3107 = vmatprep.subr.mxu0 0.0
        %3108 = vmatpush1.msra.mxu0 %v2989
        %3109 = vmatprep.subr.mxu0 0.0
        %3110 = vmatpush1.msra.mxu0 %v2990
        %3111 = vmatprep.subr.mxu0 0.0
        %3112 = vmatpush1.msra.mxu0 %v2991
        %3113 = vmatprep.subr.mxu0 0.0
        %3114 = vmatpush1.msra.mxu0 %v2992
        %3115 = vmatprep.subr.mxu0 0.0
        %3116 = vmatpush1.msra.mxu0 %v2993
        %3117 = vmatprep.subr.mxu0 0.0
        %3118 = vmatpush1.msra.mxu0 %v2994
        %3119 = vmatprep.subr.mxu0 0.0
        %3120 = vmatpush1.msra.mxu0 %v2995
        %3121 = vmatprep.subr.mxu0 0.0
        %3122 = vmatpush1.msra.mxu0 %v2996
        %3123 = vmatprep.subr.mxu0 0.0
        %3124 = vmatpush1.msra.mxu0 0.0
        %3125 = vmatprep.subr.mxu0 0.0
        %3126 = vmatpush1.msra.mxu0 0.0
        %3127 = vmatprep.subr.mxu0 0.0
        %3128 = vmatpush1.msra.mxu0 0.0
        %3129 = vmatprep.subr.mxu0 0.0
        %3130 = vmatpush1.msra.mxu0 0.0
        %3131 = vmatprep.subr.mxu0 0.0
        %3132 = vmatpush1.msra.mxu0 0.0
        %3133 = vmatprep.subr.mxu0 0.0
        %3134 = vmatpush1.msra.mxu0 0.0
        %3135 = vmatprep.subr.mxu0 0.0
        %3136 = vmatpush1.msra.mxu0 0.0
        %3137 = vmatprep.subr.mxu0 0.0
        %3138 = vmatpush1.msra.mxu0 0.0
        %3139 = vmatprep.subr.mxu0 0.0
        %3140 = vmatpush1.msra.mxu0 0.0
        %3141 = vmatprep.subr.mxu0 0.0
        %3142 = vmatpush1.msra.mxu0 0.0
        %3143 = vmatprep.subr.mxu0 0.0
        %3144 = vmatpush1.msra.mxu0 0.0
        %3145 = vmatprep.subr.mxu0 0.0
        %3146 = vmatpush1.msra.mxu0 0.0
        %3147 = vmatprep.subr.mxu0 0.0
        %3148 = vmatpush1.msra.mxu0 0.0
        %3149 = vmatprep.subr.mxu0 0.0
        %3150 = vmatpush1.msra.mxu0 0.0
        %3151 = vmatprep.subr.mxu0 0.0
        %3152 = vmatpush1.msra.mxu0 0.0
        %3153 = vmatprep.subr.mxu0 0.0
        %3154 = vmatpush1.msra.mxu0 0.0
        %3155 = vmatprep.mubr.f32.mxu0 0.0
        %3156 = vmatmul.mubr.f32.gmra.mrb[0].mxu0 %v2979
        %v3157 = vpop.f32.mrb[0].mxu0
        %v3158 = vadd.f32 %v3083, %v3157
        %v3159 = vpop.f32.mrb[0].mxu0
        %3160 = vmatprep.mubr.f32.mxu0 0.0
        %3161 = vmatmul.mubr.f32.gmra.mrb[0].mxu0 %v2980
        %v3162 = vpop.f32.mrb[0].mxu0
        %v3163 = vadd.f32 %v3088, %v3162
        %v3164 = vpop.f32.mrb[0].mxu0
        %3165 = vdwg.mxu0
        %v3166 = vld [vmem:[#allocation3 + $0xc] sm:$0xff]
        %v3167 = vld [vmem:[#allocation3 + $0x14] sm:$0xff]
        %s3168 = scalar_lea.vmem [#allocation9], 256
        %v3169 = vld [vmem:[%s3168] sm:$0xff]
        %v3170 = vld [vmem:[%s3168 + $0x8] sm:$0xff]
        %v3171 = vld [vmem:[%s3168 + $0x10] sm:$0xff]
        %v3172 = vld [vmem:[%s3168 + $0x18] sm:$0xff]
        %v3173 = vld [vmem:[%s3168 + $0x20] sm:$0xff]
        %v3174 = vld [vmem:[%s3168 + $0x28] sm:$0xff]
        %v3175 = vld [vmem:[%s3168 + $0x30] sm:$0xff]
        %v3176 = vld [vmem:[%s3168 + $0x38] sm:$0xff]
        %v3177 = vld [vmem:[%s3168 + $0x40] sm:$0xff]
        %v3178 = vld [vmem:[%s3168 + $0x48] sm:$0xff]
        %v3179 = vld [vmem:[%s3168 + $0x50] sm:$0xff]
        %v3180 = vld [vmem:[%s3168 + $0x58] sm:$0xff]
        %v3181 = vld [vmem:[%s3168 + $0x60] sm:$0xff]
        %v3182 = vld [vmem:[%s3168 + $0x68] sm:$0xff]
        %v3183 = vld [vmem:[%s3168 + $0x70] sm:$0xff]
        %v3184 = vld [vmem:[%s3168 + $0x78] sm:$0xff]
        %3185 = vmatprep.subr.mxu0 0.0
        %3186 = vmatpush1.msra.mxu0 %v3169
        %3187 = vmatprep.subr.mxu0 0.0
        %3188 = vmatpush1.msra.mxu0 %v3170
        %3189 = vmatprep.subr.mxu0 0.0
        %3190 = vmatpush1.msra.mxu0 %v3171
        %3191 = vmatprep.subr.mxu0 0.0
        %3192 = vmatpush1.msra.mxu0 %v3172
        %3193 = vmatprep.subr.mxu0 0.0
        %3194 = vmatpush1.msra.mxu0 %v3173
        %3195 = vmatprep.subr.mxu0 0.0
        %3196 = vmatpush1.msra.mxu0 %v3174
        %3197 = vmatprep.subr.mxu0 0.0
        %3198 = vmatpush1.msra.mxu0 %v3175
        %3199 = vmatprep.subr.mxu0 0.0
        %3200 = vmatpush1.msra.mxu0 %v3176
        %3201 = vmatprep.subr.mxu0 0.0
        %3202 = vmatpush1.msra.mxu0 %v3177
        %3203 = vmatprep.subr.mxu0 0.0
        %3204 = vmatpush1.msra.mxu0 %v3178
        %3205 = vmatprep.subr.mxu0 0.0
        %3206 = vmatpush1.msra.mxu0 %v3179
        %3207 = vmatprep.subr.mxu0 0.0
        %3208 = vmatpush1.msra.mxu0 %v3180
        %3209 = vmatprep.subr.mxu0 0.0
        %3210 = vmatpush1.msra.mxu0 %v3181
        %3211 = vmatprep.subr.mxu0 0.0
        %3212 = vmatpush1.msra.mxu0 %v3182
        %3213 = vmatprep.subr.mxu0 0.0
        %3214 = vmatpush1.msra.mxu0 %v3183
        %3215 = vmatprep.subr.mxu0 0.0
        %3216 = vmatpush1.msra.mxu0 %v3184
        %3217 = vmatprep.subr.mxu0 0.0
        %3218 = vmatpush1.msra.mxu0 0.0
        %3219 = vmatprep.subr.mxu0 0.0
        %3220 = vmatpush1.msra.mxu0 0.0
        %3221 = vmatprep.subr.mxu0 0.0
        %3222 = vmatpush1.msra.mxu0 0.0
        %3223 = vmatprep.subr.mxu0 0.0
        %3224 = vmatpush1.msra.mxu0 0.0
        %3225 = vmatprep.subr.mxu0 0.0
        %3226 = vmatpush1.msra.mxu0 0.0
        %3227 = vmatprep.subr.mxu0 0.0
        %3228 = vmatpush1.msra.mxu0 0.0
        %3229 = vmatprep.subr.mxu0 0.0
        %3230 = vmatpush1.msra.mxu0 0.0
        %3231 = vmatprep.subr.mxu0 0.0
        %3232 = vmatpush1.msra.mxu0 0.0
        %3233 = vmatprep.subr.mxu0 0.0
        %3234 = vmatpush1.msra.mxu0 0.0
        %3235 = vmatprep.subr.mxu0 0.0
        %3236 = vmatpush1.msra.mxu0 0.0
        %3237 = vmatprep.subr.mxu0 0.0
        %3238 = vmatpush1.msra.mxu0 0.0
        %3239 = vmatprep.subr.mxu0 0.0
        %3240 = vmatpush1.msra.mxu0 0.0
        %3241 = vmatprep.subr.mxu0 0.0
        %3242 = vmatpush1.msra.mxu0 0.0
        %3243 = vmatprep.subr.mxu0 0.0
        %3244 = vmatpush1.msra.mxu0 0.0
        %3245 = vmatprep.subr.mxu0 0.0
        %3246 = vmatpush1.msra.mxu0 0.0
        %3247 = vmatprep.subr.mxu0 0.0
        %3248 = vmatpush1.msra.mxu0 0.0
        %3249 = vmatprep.mubr.f32.mxu0 0.0
        %3250 = vmatmul.mubr.f32.gmra.mrb[0].mxu0 %v3166
        %v3251 = vpop.f32.mrb[0].mxu0
        %v3252 = vadd.f32 0.0, %v3251
        %v3253 = vpop.f32.mrb[0].mxu0
        %3254 = vmatprep.mubr.f32.mxu0 0.0
        %3255 = vmatmul.mubr.f32.gmra.mrb[0].mxu0 %v3167
        %v3256 = vpop.f32.mrb[0].mxu0
        %v3257 = vadd.f32 0.0, %v3256
        %v3258 = vpop.f32.mrb[0].mxu0
        %3259 = vdwg.mxu0
        %v3260 = vadd.f32 %v3158, %v3252
        %v3261 = vadd.f32 %v3163, %v3257
        %v3262 = vld [vmem:[#allocation3 + $0x10] sm:$0xff]
        %v3263 = vld [vmem:[#allocation3 + $0x18] sm:$0xff]
        %s3264 = scalar_lea.vmem [#allocation9], 384
        %v3265 = vld [vmem:[%s3264] sm:$0xff]
        %v3266 = vld [vmem:[%s3264 + $0x8] sm:$0xff]
        %v3267 = vld [vmem:[%s3264 + $0x10] sm:$0xff]
        %v3268 = vld [vmem:[%s3264 + $0x18] sm:$0xff]
        %v3269 = vld [vmem:[%s3264 + $0x20] sm:$0xff]
        %v3270 = vld [vmem:[%s3264 + $0x28] sm:$0xff]
        %v3271 = vld [vmem:[%s3264 + $0x30] sm:$0xff]
        %v3272 = vld [vmem:[%s3264 + $0x38] sm:$0xff]
        %v3273 = vld [vmem:[%s3264 + $0x40] sm:$0xff]
        %v3274 = vld [vmem:[%s3264 + $0x48] sm:$0xff]
        %v3275 = vld [vmem:[%s3264 + $0x50] sm:$0xff]
        %v3276 = vld [vmem:[%s3264 + $0x58] sm:$0xff]
        %v3277 = vld [vmem:[%s3264 + $0x60] sm:$0xff]
        %v3278 = vld [vmem:[%s3264 + $0x68] sm:$0xff]
        %v3279 = vld [vmem:[%s3264 + $0x70] sm:$0xff]
        %v3280 = vld [vmem:[%s3264 + $0x78] sm:$0xff]
        %3281 = vmatprep.subr.mxu0 0.0
        %3282 = vmatpush1.msra.mxu0 %v3265
        %3283 = vmatprep.subr.mxu0 0.0
        %3284 = vmatpush1.msra.mxu0 %v3266
        %3285 = vmatprep.subr.mxu0 0.0
        %3286 = vmatpush1.msra.mxu0 %v3267
        %3287 = vmatprep.subr.mxu0 0.0
        %3288 = vmatpush1.msra.mxu0 %v3268
        %3289 = vmatprep.subr.mxu0 0.0
        %3290 = vmatpush1.msra.mxu0 %v3269
        %3291 = vmatprep.subr.mxu0 0.0
        %3292 = vmatpush1.msra.mxu0 %v3270
        %3293 = vmatprep.subr.mxu0 0.0
        %3294 = vmatpush1.msra.mxu0 %v3271
        %3295 = vmatprep.subr.mxu0 0.0
        %3296 = vmatpush1.msra.mxu0 %v3272
        %3297 = vmatprep.subr.mxu0 0.0
        %3298 = vmatpush1.msra.mxu0 %v3273
        %3299 = vmatprep.subr.mxu0 0.0
        %3300 = vmatpush1.msra.mxu0 %v3274
        %3301 = vmatprep.subr.mxu0 0.0
        %3302 = vmatpush1.msra.mxu0 %v3275
        %3303 = vmatprep.subr.mxu0 0.0
        %3304 = vmatpush1.msra.mxu0 %v3276
        %3305 = vmatprep.subr.mxu0 0.0
        %3306 = vmatpush1.msra.mxu0 %v3277
        %3307 = vmatprep.subr.mxu0 0.0
        %3308 = vmatpush1.msra.mxu0 %v3278
        %3309 = vmatprep.subr.mxu0 0.0
        %3310 = vmatpush1.msra.mxu0 %v3279
        %3311 = vmatprep.subr.mxu0 0.0
        %3312 = vmatpush1.msra.mxu0 %v3280
        %3313 = vmatprep.subr.mxu0 0.0
        %3314 = vmatpush1.msra.mxu0 0.0
        %3315 = vmatprep.subr.mxu0 0.0
        %3316 = vmatpush1.msra.mxu0 0.0
        %3317 = vmatprep.subr.mxu0 0.0
        %3318 = vmatpush1.msra.mxu0 0.0
        %3319 = vmatprep.subr.mxu0 0.0
        %3320 = vmatpush1.msra.mxu0 0.0
        %3321 = vmatprep.subr.mxu0 0.0
        %3322 = vmatpush1.msra.mxu0 0.0
        %3323 = vmatprep.subr.mxu0 0.0
        %3324 = vmatpush1.msra.mxu0 0.0
        %3325 = vmatprep.subr.mxu0 0.0
        %3326 = vmatpush1.msra.mxu0 0.0
        %3327 = vmatprep.subr.mxu0 0.0
        %3328 = vmatpush1.msra.mxu0 0.0
        %3329 = vmatprep.subr.mxu0 0.0
        %3330 = vmatpush1.msra.mxu0 0.0
        %3331 = vmatprep.subr.mxu0 0.0
        %3332 = vmatpush1.msra.mxu0 0.0
        %3333 = vmatprep.subr.mxu0 0.0
        %3334 = vmatpush1.msra.mxu0 0.0
        %3335 = vmatprep.subr.mxu0 0.0
        %3336 = vmatpush1.msra.mxu0 0.0
        %3337 = vmatprep.subr.mxu0 0.0
        %3338 = vmatpush1.msra.mxu0 0.0
        %3339 = vmatprep.subr.mxu0 0.0
        %3340 = vmatpush1.msra.mxu0 0.0
        %3341 = vmatprep.subr.mxu0 0.0
        %3342 = vmatpush1.msra.mxu0 0.0
        %3343 = vmatprep.subr.mxu0 0.0
        %3344 = vmatpush1.msra.mxu0 0.0
        %3345 = vmatprep.mubr.f32.mxu0 0.0
        %3346 = vmatmul.mubr.f32.gmra.mrb[0].mxu0 %v3262
        %v3347 = vpop.f32.mrb[0].mxu0
        %v3348 = vadd.f32 0.0, %v3347
        %v3349 = vpop.f32.mrb[0].mxu0
        %3350 = vmatprep.mubr.f32.mxu0 0.0
        %3351 = vmatmul.mubr.f32.gmra.mrb[0].mxu0 %v3263
        %v3352 = vpop.f32.mrb[0].mxu0
        %v3353 = vadd.f32 0.0, %v3352
        %v3354 = vpop.f32.mrb[0].mxu0
        %3355 = vdwg.mxu0
        %v3356 = vadd.f32 %v3260, %v3348
        %v3357 = vadd.f32 %v3261, %v3353
        %v3358 = vld [vmem:[#allocation3 + $0x14] sm:$0xff]
        %v3359 = vld [vmem:[#allocation3 + $0x1c] sm:$0xff]
        %s3360 = scalar_lea.vmem [#allocation9], 512
        %v3361 = vld [vmem:[%s3360] sm:$0xff]
        %v3362 = vld [vmem:[%s3360 + $0x8] sm:$0xff]
        %v3363 = vld [vmem:[%s3360 + $0x10] sm:$0xff]
        %v3364 = vld [vmem:[%s3360 + $0x18] sm:$0xff]
        %v3365 = vld [vmem:[%s3360 + $0x20] sm:$0xff]
        %v3366 = vld [vmem:[%s3360 + $0x28] sm:$0xff]
        %v3367 = vld [vmem:[%s3360 + $0x30] sm:$0xff]
        %v3368 = vld [vmem:[%s3360 + $0x38] sm:$0xff]
        %v3369 = vld [vmem:[%s3360 + $0x40] sm:$0xff]
        %v3370 = vld [vmem:[%s3360 + $0x48] sm:$0xff]
        %v3371 = vld [vmem:[%s3360 + $0x50] sm:$0xff]
        %v3372 = vld [vmem:[%s3360 + $0x58] sm:$0xff]
        %v3373 = vld [vmem:[%s3360 + $0x60] sm:$0xff]
        %v3374 = vld [vmem:[%s3360 + $0x68] sm:$0xff]
        %v3375 = vld [vmem:[%s3360 + $0x70] sm:$0xff]
        %v3376 = vld [vmem:[%s3360 + $0x78] sm:$0xff]
        %3377 = vmatprep.subr.mxu0 0.0
        %3378 = vmatpush1.msra.mxu0 %v3361
        %3379 = vmatprep.subr.mxu0 0.0
        %3380 = vmatpush1.msra.mxu0 %v3362
        %3381 = vmatprep.subr.mxu0 0.0
        %3382 = vmatpush1.msra.mxu0 %v3363
        %3383 = vmatprep.subr.mxu0 0.0
        %3384 = vmatpush1.msra.mxu0 %v3364
        %3385 = vmatprep.subr.mxu0 0.0
        %3386 = vmatpush1.msra.mxu0 %v3365
        %3387 = vmatprep.subr.mxu0 0.0
        %3388 = vmatpush1.msra.mxu0 %v3366
        %3389 = vmatprep.subr.mxu0 0.0
        %3390 = vmatpush1.msra.mxu0 %v3367
        %3391 = vmatprep.subr.mxu0 0.0
        %3392 = vmatpush1.msra.mxu0 %v3368
        %3393 = vmatprep.subr.mxu0 0.0
        %3394 = vmatpush1.msra.mxu0 %v3369
        %3395 = vmatprep.subr.mxu0 0.0
        %3396 = vmatpush1.msra.mxu0 %v3370
        %3397 = vmatprep.subr.mxu0 0.0
        %3398 = vmatpush1.msra.mxu0 %v3371
        %3399 = vmatprep.subr.mxu0 0.0
        %3400 = vmatpush1.msra.mxu0 %v3372
        %3401 = vmatprep.subr.mxu0 0.0
        %3402 = vmatpush1.msra.mxu0 %v3373
        %3403 = vmatprep.subr.mxu0 0.0
        %3404 = vmatpush1.msra.mxu0 %v3374
        %3405 = vmatprep.subr.mxu0 0.0
        %3406 = vmatpush1.msra.mxu0 %v3375
        %3407 = vmatprep.subr.mxu0 0.0
        %3408 = vmatpush1.msra.mxu0 %v3376
        %3409 = vmatprep.subr.mxu0 0.0
        %3410 = vmatpush1.msra.mxu0 0.0
        %3411 = vmatprep.subr.mxu0 0.0
        %3412 = vmatpush1.msra.mxu0 0.0
        %3413 = vmatprep.subr.mxu0 0.0
        %3414 = vmatpush1.msra.mxu0 0.0
        %3415 = vmatprep.subr.mxu0 0.0
        %3416 = vmatpush1.msra.mxu0 0.0
        %3417 = vmatprep.subr.mxu0 0.0
        %3418 = vmatpush1.msra.mxu0 0.0
        %3419 = vmatprep.subr.mxu0 0.0
        %3420 = vmatpush1.msra.mxu0 0.0
        %3421 = vmatprep.subr.mxu0 0.0
        %3422 = vmatpush1.msra.mxu0 0.0
        %3423 = vmatprep.subr.mxu0 0.0
        %3424 = vmatpush1.msra.mxu0 0.0
        %3425 = vmatprep.subr.mxu0 0.0
        %3426 = vmatpush1.msra.mxu0 0.0
        %3427 = vmatprep.subr.mxu0 0.0
        %3428 = vmatpush1.msra.mxu0 0.0
        %3429 = vmatprep.subr.mxu0 0.0
        %3430 = vmatpush1.msra.mxu0 0.0
        %3431 = vmatprep.subr.mxu0 0.0
        %3432 = vmatpush1.msra.mxu0 0.0
        %3433 = vmatprep.subr.mxu0 0.0
        %3434 = vmatpush1.msra.mxu0 0.0
        %3435 = vmatprep.subr.mxu0 0.0
        %3436 = vmatpush1.msra.mxu0 0.0
        %3437 = vmatprep.subr.mxu0 0.0
        %3438 = vmatpush1.msra.mxu0 0.0
        %3439 = vmatprep.subr.mxu0 0.0
        %3440 = vmatpush1.msra.mxu0 0.0
        %3441 = vmatprep.mubr.f32.mxu0 0.0
        %3442 = vmatmul.mubr.f32.gmra.mrb[0].mxu0 %v3358
        %v3443 = vpop.f32.mrb[0].mxu0
        %v3444 = vadd.f32 0.0, %v3443
        %v3445 = vpop.f32.mrb[0].mxu0
        %3446 = vmatprep.mubr.f32.mxu0 0.0
        %3447 = vmatmul.mubr.f32.gmra.mrb[0].mxu0 %v3359
        %v3448 = vpop.f32.mrb[0].mxu0
        %v3449 = vadd.f32 0.0, %v3448
        %v3450 = vpop.f32.mrb[0].mxu0
        %3451 = vdwg.mxu0
        %v3452 = vadd.f32 %v3356, %v3444
        %v3453 = vadd.f32 %v3357, %v3449
        %v3454 = vld [vmem:[#allocation3 + $0x18] sm:$0xff]
        %v3455 = vld [vmem:[#allocation3 + $0x20] sm:$0xff]
        %s3456 = scalar_lea.vmem [#allocation9], 640
        %v3457 = vld [vmem:[%s3456] sm:$0xff]
        %v3458 = vld [vmem:[%s3456 + $0x8] sm:$0xff]
        %v3459 = vld [vmem:[%s3456 + $0x10] sm:$0xff]
        %v3460 = vld [vmem:[%s3456 + $0x18] sm:$0xff]
        %v3461 = vld [vmem:[%s3456 + $0x20] sm:$0xff]
        %v3462 = vld [vmem:[%s3456 + $0x28] sm:$0xff]
        %v3463 = vld [vmem:[%s3456 + $0x30] sm:$0xff]
        %v3464 = vld [vmem:[%s3456 + $0x38] sm:$0xff]
        %v3465 = vld [vmem:[%s3456 + $0x40] sm:$0xff]
        %v3466 = vld [vmem:[%s3456 + $0x48] sm:$0xff]
        %v3467 = vld [vmem:[%s3456 + $0x50] sm:$0xff]
        %v3468 = vld [vmem:[%s3456 + $0x58] sm:$0xff]
        %v3469 = vld [vmem:[%s3456 + $0x60] sm:$0xff]
        %v3470 = vld [vmem:[%s3456 + $0x68] sm:$0xff]
        %v3471 = vld [vmem:[%s3456 + $0x70] sm:$0xff]
        %v3472 = vld [vmem:[%s3456 + $0x78] sm:$0xff]
        %3473 = vmatprep.subr.mxu0 0.0
        %3474 = vmatpush1.msra.mxu0 %v3457
        %3475 = vmatprep.subr.mxu0 0.0
        %3476 = vmatpush1.msra.mxu0 %v3458
        %3477 = vmatprep.subr.mxu0 0.0
        %3478 = vmatpush1.msra.mxu0 %v3459
        %3479 = vmatprep.subr.mxu0 0.0
        %3480 = vmatpush1.msra.mxu0 %v3460
        %3481 = vmatprep.subr.mxu0 0.0
        %3482 = vmatpush1.msra.mxu0 %v3461
        %3483 = vmatprep.subr.mxu0 0.0
        %3484 = vmatpush1.msra.mxu0 %v3462
        %3485 = vmatprep.subr.mxu0 0.0
        %3486 = vmatpush1.msra.mxu0 %v3463
        %3487 = vmatprep.subr.mxu0 0.0
        %3488 = vmatpush1.msra.mxu0 %v3464
        %3489 = vmatprep.subr.mxu0 0.0
        %3490 = vmatpush1.msra.mxu0 %v3465
        %3491 = vmatprep.subr.mxu0 0.0
        %3492 = vmatpush1.msra.mxu0 %v3466
        %3493 = vmatprep.subr.mxu0 0.0
        %3494 = vmatpush1.msra.mxu0 %v3467
        %3495 = vmatprep.subr.mxu0 0.0
        %3496 = vmatpush1.msra.mxu0 %v3468
        %3497 = vmatprep.subr.mxu0 0.0
        %3498 = vmatpush1.msra.mxu0 %v3469
        %3499 = vmatprep.subr.mxu0 0.0
        %3500 = vmatpush1.msra.mxu0 %v3470
        %3501 = vmatprep.subr.mxu0 0.0
        %3502 = vmatpush1.msra.mxu0 %v3471
        %3503 = vmatprep.subr.mxu0 0.0
        %3504 = vmatpush1.msra.mxu0 %v3472
        %3505 = vmatprep.subr.mxu0 0.0
        %3506 = vmatpush1.msra.mxu0 0.0
        %3507 = vmatprep.subr.mxu0 0.0
        %3508 = vmatpush1.msra.mxu0 0.0
        %3509 = vmatprep.subr.mxu0 0.0
        %3510 = vmatpush1.msra.mxu0 0.0
        %3511 = vmatprep.subr.mxu0 0.0
        %3512 = vmatpush1.msra.mxu0 0.0
        %3513 = vmatprep.subr.mxu0 0.0
        %3514 = vmatpush1.msra.mxu0 0.0
        %3515 = vmatprep.subr.mxu0 0.0
        %3516 = vmatpush1.msra.mxu0 0.0
        %3517 = vmatprep.subr.mxu0 0.0
        %3518 = vmatpush1.msra.mxu0 0.0
        %3519 = vmatprep.subr.mxu0 0.0
        %3520 = vmatpush1.msra.mxu0 0.0
        %3521 = vmatprep.subr.mxu0 0.0
        %3522 = vmatpush1.msra.mxu0 0.0
        %3523 = vmatprep.subr.mxu0 0.0
        %3524 = vmatpush1.msra.mxu0 0.0
        %3525 = vmatprep.subr.mxu0 0.0
        %3526 = vmatpush1.msra.mxu0 0.0
        %3527 = vmatprep.subr.mxu0 0.0
        %3528 = vmatpush1.msra.mxu0 0.0
        %3529 = vmatprep.subr.mxu0 0.0
        %3530 = vmatpush1.msra.mxu0 0.0
        %3531 = vmatprep.subr.mxu0 0.0
        %3532 = vmatpush1.msra.mxu0 0.0
        %3533 = vmatprep.subr.mxu0 0.0
        %3534 = vmatpush1.msra.mxu0 0.0
        %3535 = vmatprep.subr.mxu0 0.0
        %3536 = vmatpush1.msra.mxu0 0.0
        %3537 = vmatprep.mubr.f32.mxu0 0.0
        %3538 = vmatmul.mubr.f32.gmra.mrb[0].mxu0 %v3454
        %v3539 = vpop.f32.mrb[0].mxu0
        %v3540 = vadd.f32 0.0, %v3539
        %v3541 = vpop.f32.mrb[0].mxu0
        %3542 = vmatprep.mubr.f32.mxu0 0.0
        %3543 = vmatmul.mubr.f32.gmra.mrb[0].mxu0 %v3455
        %v3544 = vpop.f32.mrb[0].mxu0
        %v3545 = vadd.f32 0.0, %v3544
        %v3546 = vpop.f32.mrb[0].mxu0
        %3547 = vdwg.mxu0
        %v3548 = vadd.f32 %v3452, %v3540
        %v3549 = vadd.f32 %v3453, %v3545
        %v3550 = vld [vmem:[#allocation3 + $0x1c] sm:$0xff]
        %v3551 = vld [vmem:[#allocation3 + $0x24] sm:$0xff]
        %s3552 = scalar_lea.vmem [#allocation9], 768
        %v3553 = vld [vmem:[%s3552] sm:$0xff]
        %v3554 = vld [vmem:[%s3552 + $0x8] sm:$0xff]
        %v3555 = vld [vmem:[%s3552 + $0x10] sm:$0xff]
        %v3556 = vld [vmem:[%s3552 + $0x18] sm:$0xff]
        %v3557 = vld [vmem:[%s3552 + $0x20] sm:$0xff]
        %v3558 = vld [vmem:[%s3552 + $0x28] sm:$0xff]
        %v3559 = vld [vmem:[%s3552 + $0x30] sm:$0xff]
        %v3560 = vld [vmem:[%s3552 + $0x38] sm:$0xff]
        %v3561 = vld [vmem:[%s3552 + $0x40] sm:$0xff]
        %v3562 = vld [vmem:[%s3552 + $0x48] sm:$0xff]
        %v3563 = vld [vmem:[%s3552 + $0x50] sm:$0xff]
        %v3564 = vld [vmem:[%s3552 + $0x58] sm:$0xff]
        %v3565 = vld [vmem:[%s3552 + $0x60] sm:$0xff]
        %v3566 = vld [vmem:[%s3552 + $0x68] sm:$0xff]
        %v3567 = vld [vmem:[%s3552 + $0x70] sm:$0xff]
        %v3568 = vld [vmem:[%s3552 + $0x78] sm:$0xff]
        %3569 = vmatprep.subr.mxu0 0.0
        %3570 = vmatpush1.msra.mxu0 %v3553
        %3571 = vmatprep.subr.mxu0 0.0
        %3572 = vmatpush1.msra.mxu0 %v3554
        %3573 = vmatprep.subr.mxu0 0.0
        %3574 = vmatpush1.msra.mxu0 %v3555
        %3575 = vmatprep.subr.mxu0 0.0
        %3576 = vmatpush1.msra.mxu0 %v3556
        %3577 = vmatprep.subr.mxu0 0.0
        %3578 = vmatpush1.msra.mxu0 %v3557
        %3579 = vmatprep.subr.mxu0 0.0
        %3580 = vmatpush1.msra.mxu0 %v3558
        %3581 = vmatprep.subr.mxu0 0.0
        %3582 = vmatpush1.msra.mxu0 %v3559
        %3583 = vmatprep.subr.mxu0 0.0
        %3584 = vmatpush1.msra.mxu0 %v3560
        %3585 = vmatprep.subr.mxu0 0.0
        %3586 = vmatpush1.msra.mxu0 %v3561
        %3587 = vmatprep.subr.mxu0 0.0
        %3588 = vmatpush1.msra.mxu0 %v3562
        %3589 = vmatprep.subr.mxu0 0.0
        %3590 = vmatpush1.msra.mxu0 %v3563
        %3591 = vmatprep.subr.mxu0 0.0
        %3592 = vmatpush1.msra.mxu0 %v3564
        %3593 = vmatprep.subr.mxu0 0.0
        %3594 = vmatpush1.msra.mxu0 %v3565
        %3595 = vmatprep.subr.mxu0 0.0
        %3596 = vmatpush1.msra.mxu0 %v3566
        %3597 = vmatprep.subr.mxu0 0.0
        %3598 = vmatpush1.msra.mxu0 %v3567
        %3599 = vmatprep.subr.mxu0 0.0
        %3600 = vmatpush1.msra.mxu0 %v3568
        %3601 = vmatprep.subr.mxu0 0.0
        %3602 = vmatpush1.msra.mxu0 0.0
        %3603 = vmatprep.subr.mxu0 0.0
        %3604 = vmatpush1.msra.mxu0 0.0
        %3605 = vmatprep.subr.mxu0 0.0
        %3606 = vmatpush1.msra.mxu0 0.0
        %3607 = vmatprep.subr.mxu0 0.0
        %3608 = vmatpush1.msra.mxu0 0.0
        %3609 = vmatprep.subr.mxu0 0.0
        %3610 = vmatpush1.msra.mxu0 0.0
        %3611 = vmatprep.subr.mxu0 0.0
        %3612 = vmatpush1.msra.mxu0 0.0
        %3613 = vmatprep.subr.mxu0 0.0
        %3614 = vmatpush1.msra.mxu0 0.0
        %3615 = vmatprep.subr.mxu0 0.0
        %3616 = vmatpush1.msra.mxu0 0.0
        %3617 = vmatprep.subr.mxu0 0.0
        %3618 = vmatpush1.msra.mxu0 0.0
        %3619 = vmatprep.subr.mxu0 0.0
        %3620 = vmatpush1.msra.mxu0 0.0
        %3621 = vmatprep.subr.mxu0 0.0
        %3622 = vmatpush1.msra.mxu0 0.0
        %3623 = vmatprep.subr.mxu0 0.0
        %3624 = vmatpush1.msra.mxu0 0.0
        %3625 = vmatprep.subr.mxu0 0.0
        %3626 = vmatpush1.msra.mxu0 0.0
        %3627 = vmatprep.subr.mxu0 0.0
        %3628 = vmatpush1.msra.mxu0 0.0
        %3629 = vmatprep.subr.mxu0 0.0
        %3630 = vmatpush1.msra.mxu0 0.0
        %3631 = vmatprep.subr.mxu0 0.0
        %3632 = vmatpush1.msra.mxu0 0.0
        %3633 = vmatprep.mubr.f32.mxu0 0.0
        %3634 = vmatmul.mubr.f32.gmra.mrb[0].mxu0 %v3550
        %v3635 = vpop.f32.mrb[0].mxu0
        %v3636 = vadd.f32 0.0, %v3635
        %v3637 = vpop.f32.mrb[0].mxu0
        %3638 = vmatprep.mubr.f32.mxu0 0.0
        %3639 = vmatmul.mubr.f32.gmra.mrb[0].mxu0 %v3551
        %v3640 = vpop.f32.mrb[0].mxu0
        %v3641 = vadd.f32 0.0, %v3640
        %v3642 = vpop.f32.mrb[0].mxu0
        %3643 = vdwg.mxu0
        %v3644 = vadd.f32 %v3548, %v3636
        %v3645 = vadd.f32 %v3549, %v3641
        %v3646 = vld [vmem:[#allocation3 + $0x20] sm:$0xff]
        %v3647 = vld [vmem:[#allocation3 + $0x28] sm:$0xff]
        %s3648 = scalar_lea.vmem [#allocation9], 896
        %v3649 = vld [vmem:[%s3648] sm:$0xff]
        %v3650 = vld [vmem:[%s3648 + $0x8] sm:$0xff]
        %v3651 = vld [vmem:[%s3648 + $0x10] sm:$0xff]
        %v3652 = vld [vmem:[%s3648 + $0x18] sm:$0xff]
        %v3653 = vld [vmem:[%s3648 + $0x20] sm:$0xff]
        %v3654 = vld [vmem:[%s3648 + $0x28] sm:$0xff]
        %v3655 = vld [vmem:[%s3648 + $0x30] sm:$0xff]
        %v3656 = vld [vmem:[%s3648 + $0x38] sm:$0xff]
        %v3657 = vld [vmem:[%s3648 + $0x40] sm:$0xff]
        %v3658 = vld [vmem:[%s3648 + $0x48] sm:$0xff]
        %v3659 = vld [vmem:[%s3648 + $0x50] sm:$0xff]
        %v3660 = vld [vmem:[%s3648 + $0x58] sm:$0xff]
        %v3661 = vld [vmem:[%s3648 + $0x60] sm:$0xff]
        %v3662 = vld [vmem:[%s3648 + $0x68] sm:$0xff]
        %v3663 = vld [vmem:[%s3648 + $0x70] sm:$0xff]
        %v3664 = vld [vmem:[%s3648 + $0x78] sm:$0xff]
        %3665 = vmatprep.subr.mxu0 0.0
        %3666 = vmatpush1.msra.mxu0 %v3649
        %3667 = vmatprep.subr.mxu0 0.0
        %3668 = vmatpush1.msra.mxu0 %v3650
        %3669 = vmatprep.subr.mxu0 0.0
        %3670 = vmatpush1.msra.mxu0 %v3651
        %3671 = vmatprep.subr.mxu0 0.0
        %3672 = vmatpush1.msra.mxu0 %v3652
        %3673 = vmatprep.subr.mxu0 0.0
        %3674 = vmatpush1.msra.mxu0 %v3653
        %3675 = vmatprep.subr.mxu0 0.0
        %3676 = vmatpush1.msra.mxu0 %v3654
        %3677 = vmatprep.subr.mxu0 0.0
        %3678 = vmatpush1.msra.mxu0 %v3655
        %3679 = vmatprep.subr.mxu0 0.0
        %3680 = vmatpush1.msra.mxu0 %v3656
        %3681 = vmatprep.subr.mxu0 0.0
        %3682 = vmatpush1.msra.mxu0 %v3657
        %3683 = vmatprep.subr.mxu0 0.0
        %3684 = vmatpush1.msra.mxu0 %v3658
        %3685 = vmatprep.subr.mxu0 0.0
        %3686 = vmatpush1.msra.mxu0 %v3659
        %3687 = vmatprep.subr.mxu0 0.0
        %3688 = vmatpush1.msra.mxu0 %v3660
        %3689 = vmatprep.subr.mxu0 0.0
        %3690 = vmatpush1.msra.mxu0 %v3661
        %3691 = vmatprep.subr.mxu0 0.0
        %3692 = vmatpush1.msra.mxu0 %v3662
        %3693 = vmatprep.subr.mxu0 0.0
        %3694 = vmatpush1.msra.mxu0 %v3663
        %3695 = vmatprep.subr.mxu0 0.0
        %3696 = vmatpush1.msra.mxu0 %v3664
        %3697 = vmatprep.subr.mxu0 0.0
        %3698 = vmatpush1.msra.mxu0 0.0
        %3699 = vmatprep.subr.mxu0 0.0
        %3700 = vmatpush1.msra.mxu0 0.0
        %3701 = vmatprep.subr.mxu0 0.0
        %3702 = vmatpush1.msra.mxu0 0.0
        %3703 = vmatprep.subr.mxu0 0.0
        %3704 = vmatpush1.msra.mxu0 0.0
        %3705 = vmatprep.subr.mxu0 0.0
        %3706 = vmatpush1.msra.mxu0 0.0
        %3707 = vmatprep.subr.mxu0 0.0
        %3708 = vmatpush1.msra.mxu0 0.0
        %3709 = vmatprep.subr.mxu0 0.0
        %3710 = vmatpush1.msra.mxu0 0.0
        %3711 = vmatprep.subr.mxu0 0.0
        %3712 = vmatpush1.msra.mxu0 0.0
        %3713 = vmatprep.subr.mxu0 0.0
        %3714 = vmatpush1.msra.mxu0 0.0
        %3715 = vmatprep.subr.mxu0 0.0
        %3716 = vmatpush1.msra.mxu0 0.0
        %3717 = vmatprep.subr.mxu0 0.0
        %3718 = vmatpush1.msra.mxu0 0.0
        %3719 = vmatprep.subr.mxu0 0.0
        %3720 = vmatpush1.msra.mxu0 0.0
        %3721 = vmatprep.subr.mxu0 0.0
        %3722 = vmatpush1.msra.mxu0 0.0
        %3723 = vmatprep.subr.mxu0 0.0
        %3724 = vmatpush1.msra.mxu0 0.0
        %3725 = vmatprep.subr.mxu0 0.0
        %3726 = vmatpush1.msra.mxu0 0.0
        %3727 = vmatprep.subr.mxu0 0.0
        %3728 = vmatpush1.msra.mxu0 0.0
        %3729 = vmatprep.mubr.f32.mxu0 0.0
        %3730 = vmatmul.mubr.f32.gmra.mrb[0].mxu0 %v3646
        %v3731 = vpop.f32.mrb[0].mxu0
        %v3732 = vadd.f32 0.0, %v3731
        %v3733 = vpop.f32.mrb[0].mxu0
        %3734 = vmatprep.mubr.f32.mxu0 0.0
        %3735 = vmatmul.mubr.f32.gmra.mrb[0].mxu0 %v3647
        %v3736 = vpop.f32.mrb[0].mxu0
        %v3737 = vadd.f32 0.0, %v3736
        %v3738 = vpop.f32.mrb[0].mxu0
        %3739 = vdwg.mxu0
        %v3740 = vadd.f32 %v3644, %v3732
        %v3741 = vadd.f32 %v3645, %v3737
        %v3742 = vld [vmem:[#allocation3 + $0x24] sm:$0xff]
        %v3743 = vld [vmem:[#allocation3 + $0x2c] sm:$0xff]
        %s3744 = scalar_lea.vmem [#allocation9], 1024
        %v3745 = vld [vmem:[%s3744] sm:$0xff]
        %v3746 = vld [vmem:[%s3744 + $0x8] sm:$0xff]
        %v3747 = vld [vmem:[%s3744 + $0x10] sm:$0xff]
        %v3748 = vld [vmem:[%s3744 + $0x18] sm:$0xff]
        %v3749 = vld [vmem:[%s3744 + $0x20] sm:$0xff]
        %v3750 = vld [vmem:[%s3744 + $0x28] sm:$0xff]
        %v3751 = vld [vmem:[%s3744 + $0x30] sm:$0xff]
        %v3752 = vld [vmem:[%s3744 + $0x38] sm:$0xff]
        %v3753 = vld [vmem:[%s3744 + $0x40] sm:$0xff]
        %v3754 = vld [vmem:[%s3744 + $0x48] sm:$0xff]
        %v3755 = vld [vmem:[%s3744 + $0x50] sm:$0xff]
        %v3756 = vld [vmem:[%s3744 + $0x58] sm:$0xff]
        %v3757 = vld [vmem:[%s3744 + $0x60] sm:$0xff]
        %v3758 = vld [vmem:[%s3744 + $0x68] sm:$0xff]
        %v3759 = vld [vmem:[%s3744 + $0x70] sm:$0xff]
        %v3760 = vld [vmem:[%s3744 + $0x78] sm:$0xff]
        %3761 = vmatprep.subr.mxu0 0.0
        %3762 = vmatpush1.msra.mxu0 %v3745
        %3763 = vmatprep.subr.mxu0 0.0
        %3764 = vmatpush1.msra.mxu0 %v3746
        %3765 = vmatprep.subr.mxu0 0.0
        %3766 = vmatpush1.msra.mxu0 %v3747
        %3767 = vmatprep.subr.mxu0 0.0
        %3768 = vmatpush1.msra.mxu0 %v3748
        %3769 = vmatprep.subr.mxu0 0.0
        %3770 = vmatpush1.msra.mxu0 %v3749
        %3771 = vmatprep.subr.mxu0 0.0
        %3772 = vmatpush1.msra.mxu0 %v3750
        %3773 = vmatprep.subr.mxu0 0.0
        %3774 = vmatpush1.msra.mxu0 %v3751
        %3775 = vmatprep.subr.mxu0 0.0
        %3776 = vmatpush1.msra.mxu0 %v3752
        %3777 = vmatprep.subr.mxu0 0.0
        %3778 = vmatpush1.msra.mxu0 %v3753
        %3779 = vmatprep.subr.mxu0 0.0
        %3780 = vmatpush1.msra.mxu0 %v3754
        %3781 = vmatprep.subr.mxu0 0.0
        %3782 = vmatpush1.msra.mxu0 %v3755
        %3783 = vmatprep.subr.mxu0 0.0
        %3784 = vmatpush1.msra.mxu0 %v3756
        %3785 = vmatprep.subr.mxu0 0.0
        %3786 = vmatpush1.msra.mxu0 %v3757
        %3787 = vmatprep.subr.mxu0 0.0
        %3788 = vmatpush1.msra.mxu0 %v3758
        %3789 = vmatprep.subr.mxu0 0.0
        %3790 = vmatpush1.msra.mxu0 %v3759
        %3791 = vmatprep.subr.mxu0 0.0
        %3792 = vmatpush1.msra.mxu0 %v3760
        %3793 = vmatprep.subr.mxu0 0.0
        %3794 = vmatpush1.msra.mxu0 0.0
        %3795 = vmatprep.subr.mxu0 0.0
        %3796 = vmatpush1.msra.mxu0 0.0
        %3797 = vmatprep.subr.mxu0 0.0
        %3798 = vmatpush1.msra.mxu0 0.0
        %3799 = vmatprep.subr.mxu0 0.0
        %3800 = vmatpush1.msra.mxu0 0.0
        %3801 = vmatprep.subr.mxu0 0.0
        %3802 = vmatpush1.msra.mxu0 0.0
        %3803 = vmatprep.subr.mxu0 0.0
        %3804 = vmatpush1.msra.mxu0 0.0
        %3805 = vmatprep.subr.mxu0 0.0
        %3806 = vmatpush1.msra.mxu0 0.0
        %3807 = vmatprep.subr.mxu0 0.0
        %3808 = vmatpush1.msra.mxu0 0.0
        %3809 = vmatprep.subr.mxu0 0.0
        %3810 = vmatpush1.msra.mxu0 0.0
        %3811 = vmatprep.subr.mxu0 0.0
        %3812 = vmatpush1.msra.mxu0 0.0
        %3813 = vmatprep.subr.mxu0 0.0
        %3814 = vmatpush1.msra.mxu0 0.0
        %3815 = vmatprep.subr.mxu0 0.0
        %3816 = vmatpush1.msra.mxu0 0.0
        %3817 = vmatprep.subr.mxu0 0.0
        %3818 = vmatpush1.msra.mxu0 0.0
        %3819 = vmatprep.subr.mxu0 0.0
        %3820 = vmatpush1.msra.mxu0 0.0
        %3821 = vmatprep.subr.mxu0 0.0
        %3822 = vmatpush1.msra.mxu0 0.0
        %3823 = vmatprep.subr.mxu0 0.0
        %3824 = vmatpush1.msra.mxu0 0.0
        %3825 = vmatprep.mubr.f32.mxu0 0.0
        %3826 = vmatmul.mubr.f32.gmra.mrb[0].mxu0 %v3742
        %v3827 = vpop.f32.mrb[0].mxu0
        %v3828 = vadd.f32 0.0, %v3827
        %v3829 = vpop.f32.mrb[0].mxu0
        %3830 = vmatprep.mubr.f32.mxu0 0.0
        %3831 = vmatmul.mubr.f32.gmra.mrb[0].mxu0 %v3743
        %v3832 = vpop.f32.mrb[0].mxu0
        %v3833 = vadd.f32 0.0, %v3832
        %v3834 = vpop.f32.mrb[0].mxu0
        %3835 = vdwg.mxu0
        %v3836 = vadd.f32 %v3740, %v3828
        %v3837 = vadd.f32 %v3741, %v3833
        %v3838 = vld [vmem:[#allocation3 + $0x28] sm:$0xff]
        %v3839 = vld [vmem:[#allocation3 + $0x30] sm:$0xff]
        %s3840 = scalar_lea.vmem [#allocation9], 1152
        %v3841 = vld [vmem:[%s3840] sm:$0xff]
        %v3842 = vld [vmem:[%s3840 + $0x8] sm:$0xff]
        %v3843 = vld [vmem:[%s3840 + $0x10] sm:$0xff]
        %v3844 = vld [vmem:[%s3840 + $0x18] sm:$0xff]
        %v3845 = vld [vmem:[%s3840 + $0x20] sm:$0xff]
        %v3846 = vld [vmem:[%s3840 + $0x28] sm:$0xff]
        %v3847 = vld [vmem:[%s3840 + $0x30] sm:$0xff]
        %v3848 = vld [vmem:[%s3840 + $0x38] sm:$0xff]
        %v3849 = vld [vmem:[%s3840 + $0x40] sm:$0xff]
        %v3850 = vld [vmem:[%s3840 + $0x48] sm:$0xff]
        %v3851 = vld [vmem:[%s3840 + $0x50] sm:$0xff]
        %v3852 = vld [vmem:[%s3840 + $0x58] sm:$0xff]
        %v3853 = vld [vmem:[%s3840 + $0x60] sm:$0xff]
        %v3854 = vld [vmem:[%s3840 + $0x68] sm:$0xff]
        %v3855 = vld [vmem:[%s3840 + $0x70] sm:$0xff]
        %v3856 = vld [vmem:[%s3840 + $0x78] sm:$0xff]
        %3857 = vmatprep.subr.mxu0 0.0
        %3858 = vmatpush1.msra.mxu0 %v3841
        %3859 = vmatprep.subr.mxu0 0.0
        %3860 = vmatpush1.msra.mxu0 %v3842
        %3861 = vmatprep.subr.mxu0 0.0
        %3862 = vmatpush1.msra.mxu0 %v3843
        %3863 = vmatprep.subr.mxu0 0.0
        %3864 = vmatpush1.msra.mxu0 %v3844
        %3865 = vmatprep.subr.mxu0 0.0
        %3866 = vmatpush1.msra.mxu0 %v3845
        %3867 = vmatprep.subr.mxu0 0.0
        %3868 = vmatpush1.msra.mxu0 %v3846
        %3869 = vmatprep.subr.mxu0 0.0
        %3870 = vmatpush1.msra.mxu0 %v3847
        %3871 = vmatprep.subr.mxu0 0.0
        %3872 = vmatpush1.msra.mxu0 %v3848
        %3873 = vmatprep.subr.mxu0 0.0
        %3874 = vmatpush1.msra.mxu0 %v3849
        %3875 = vmatprep.subr.mxu0 0.0
        %3876 = vmatpush1.msra.mxu0 %v3850
        %3877 = vmatprep.subr.mxu0 0.0
        %3878 = vmatpush1.msra.mxu0 %v3851
        %3879 = vmatprep.subr.mxu0 0.0
        %3880 = vmatpush1.msra.mxu0 %v3852
        %3881 = vmatprep.subr.mxu0 0.0
        %3882 = vmatpush1.msra.mxu0 %v3853
        %3883 = vmatprep.subr.mxu0 0.0
        %3884 = vmatpush1.msra.mxu0 %v3854
        %3885 = vmatprep.subr.mxu0 0.0
        %3886 = vmatpush1.msra.mxu0 %v3855
        %3887 = vmatprep.subr.mxu0 0.0
        %3888 = vmatpush1.msra.mxu0 %v3856
        %3889 = vmatprep.subr.mxu0 0.0
        %3890 = vmatpush1.msra.mxu0 0.0
        %3891 = vmatprep.subr.mxu0 0.0
        %3892 = vmatpush1.msra.mxu0 0.0
        %3893 = vmatprep.subr.mxu0 0.0
        %3894 = vmatpush1.msra.mxu0 0.0
        %3895 = vmatprep.subr.mxu0 0.0
        %3896 = vmatpush1.msra.mxu0 0.0
        %3897 = vmatprep.subr.mxu0 0.0
        %3898 = vmatpush1.msra.mxu0 0.0
        %3899 = vmatprep.subr.mxu0 0.0
        %3900 = vmatpush1.msra.mxu0 0.0
        %3901 = vmatprep.subr.mxu0 0.0
        %3902 = vmatpush1.msra.mxu0 0.0
        %3903 = vmatprep.subr.mxu0 0.0
        %3904 = vmatpush1.msra.mxu0 0.0
        %3905 = vmatprep.subr.mxu0 0.0
        %3906 = vmatpush1.msra.mxu0 0.0
        %3907 = vmatprep.subr.mxu0 0.0
        %3908 = vmatpush1.msra.mxu0 0.0
        %3909 = vmatprep.subr.mxu0 0.0
        %3910 = vmatpush1.msra.mxu0 0.0
        %3911 = vmatprep.subr.mxu0 0.0
        %3912 = vmatpush1.msra.mxu0 0.0
        %3913 = vmatprep.subr.mxu0 0.0
        %3914 = vmatpush1.msra.mxu0 0.0
        %3915 = vmatprep.subr.mxu0 0.0
        %3916 = vmatpush1.msra.mxu0 0.0
        %3917 = vmatprep.subr.mxu0 0.0
        %3918 = vmatpush1.msra.mxu0 0.0
        %3919 = vmatprep.subr.mxu0 0.0
        %3920 = vmatpush1.msra.mxu0 0.0
        %3921 = vmatprep.mubr.f32.mxu0 0.0
        %3922 = vmatmul.mubr.f32.gmra.mrb[0].mxu0 %v3838
        %v3923 = vpop.f32.mrb[0].mxu0
        %v3924 = vadd.f32 0.0, %v3923
        %v3925 = vpop.f32.mrb[0].mxu0
        %3926 = vmatprep.mubr.f32.mxu0 0.0
        %3927 = vmatmul.mubr.f32.gmra.mrb[0].mxu0 %v3839
        %v3928 = vpop.f32.mrb[0].mxu0
        %v3929 = vadd.f32 0.0, %v3928
        %v3930 = vpop.f32.mrb[0].mxu0
        %3931 = vdwg.mxu0
        %v3932 = vadd.f32 %v3836, %v3924
        %v3933 = vadd.f32 %v3837, %v3929
        %v3934 = vld [vmem:[%s25] sm:$0x1]
        %v3936 = vlaneseq
        %v3937 = vshrl.u32 %v3936, 7
        %v3938 = vsub.s32 0, %v3937
        %v3939 = vrot.slane %v3934, %v3938
        %v3941 = vadd.f32 %v3932, %v3939
        %v3942 = vadd.f32 %v3933, %v3939
        %v3943 = vrot.slane %v2731, 7
        %v3944 = vrot.slane %v2732, 7
        %v3945 = vsel %vm2513, %v3943, %v3944
        %v3946 = vsel %vm2513, %v3944, %v3943
        %v3947 = vsel %vm2505, %v2731, %v3946
        %v3948 = vsel %vm2506, %v2732, %v3945
        %vm3949 = vcmp.eq.s32.totalorder %v2501, 15
        %vm3950 = vcmp.eq.s32.totalorder %v2502, 15
        %v3951 = vrot.slane %v2731, 1
        %v3952 = vrot.slane %v2732, 1
        %v3953 = vsel %vm2530, %v3951, %v3952
        %v3954 = vsel %vm2530, %v3952, %v3951
        %v3955 = vsel %vm3949, %v2731, %v3953
        %v3956 = vsel %vm3950, %v2732, %v3954
        %v3957 = vmax.f32 %v3947, %v3955
        %v3958 = vmax.f32 %v3948, %v3956
        %v3959 = vmax.f32 %v2731, %v3957
        %v3960 = vmax.f32 %v2732, %v3958
        %v3961 = vld [vmem:[#allocation10] sm:$0xff]
        %v3962 = vld [vmem:[#allocation10 + $0x8] sm:$0xff]
        %v3963 = vld [vmem:[#allocation10 + $0x10] sm:$0xff]
        %v3964 = vld [vmem:[#allocation10 + $0x18] sm:$0xff]
        %v3965 = vld [vmem:[#allocation10 + $0x20] sm:$0xff]
        %v3966 = vld [vmem:[#allocation10 + $0x28] sm:$0xff]
        %v3967 = vld [vmem:[#allocation10 + $0x30] sm:$0xff]
        %v3968 = vld [vmem:[#allocation10 + $0x38] sm:$0xff]
        %v3969 = vld [vmem:[#allocation10 + $0x40] sm:$0xff]
        %v3970 = vld [vmem:[#allocation10 + $0x48] sm:$0xff]
        %v3971 = vld [vmem:[#allocation10 + $0x50] sm:$0xff]
        %v3972 = vld [vmem:[#allocation10 + $0x58] sm:$0xff]
        %v3973 = vld [vmem:[#allocation10 + $0x60] sm:$0xff]
        %v3974 = vld [vmem:[#allocation10 + $0x68] sm:$0xff]
        %v3975 = vld [vmem:[#allocation10 + $0x70] sm:$0xff]
        %v3976 = vld [vmem:[#allocation10 + $0x78] sm:$0xff]
        %v3977 = vld [vmem:[%s29] sm:$0x1]
        %v3979 = vlaneseq
        %v3980 = vshrl.u32 %v3979, 7
        %v3981 = vsub.s32 0, %v3980
        %v3982 = vrot.slane %v3977, %v3981
        %3984 = vmatprep.subr.mxu0 0.0
        %3985 = vmatpush1.msra.mxu0 %v3961
        %3986 = vmatprep.subr.mxu0 0.0
        %3987 = vmatpush1.msra.mxu0 %v3962
        %3988 = vmatprep.subr.mxu0 0.0
        %3989 = vmatpush1.msra.mxu0 %v3963
        %3990 = vmatprep.subr.mxu0 0.0
        %3991 = vmatpush1.msra.mxu0 %v3964
        %3992 = vmatprep.subr.mxu0 0.0
        %3993 = vmatpush1.msra.mxu0 %v3965
        %3994 = vmatprep.subr.mxu0 0.0
        %3995 = vmatpush1.msra.mxu0 %v3966
        %3996 = vmatprep.subr.mxu0 0.0
        %3997 = vmatpush1.msra.mxu0 %v3967
        %3998 = vmatprep.subr.mxu0 0.0
        %3999 = vmatpush1.msra.mxu0 %v3968
        %4000 = vmatprep.subr.mxu0 0.0
        %4001 = vmatpush1.msra.mxu0 %v3969
        %4002 = vmatprep.subr.mxu0 0.0
        %4003 = vmatpush1.msra.mxu0 %v3970
        %4004 = vmatprep.subr.mxu0 0.0
        %4005 = vmatpush1.msra.mxu0 %v3971
        %4006 = vmatprep.subr.mxu0 0.0
        %4007 = vmatpush1.msra.mxu0 %v3972
        %4008 = vmatprep.subr.mxu0 0.0
        %4009 = vmatpush1.msra.mxu0 %v3973
        %4010 = vmatprep.subr.mxu0 0.0
        %4011 = vmatpush1.msra.mxu0 %v3974
        %4012 = vmatprep.subr.mxu0 0.0
        %4013 = vmatpush1.msra.mxu0 %v3975
        %4014 = vmatprep.subr.mxu0 0.0
        %4015 = vmatpush1.msra.mxu0 %v3976
        %4016 = vmatprep.subr.mxu0 0.0
        %4017 = vmatpush1.msra.mxu0 0.0
        %4018 = vmatprep.subr.mxu0 0.0
        %4019 = vmatpush1.msra.mxu0 0.0
        %4020 = vmatprep.subr.mxu0 0.0
        %4021 = vmatpush1.msra.mxu0 0.0
        %4022 = vmatprep.subr.mxu0 0.0
        %4023 = vmatpush1.msra.mxu0 0.0
        %4024 = vmatprep.subr.mxu0 0.0
        %4025 = vmatpush1.msra.mxu0 0.0
        %4026 = vmatprep.subr.mxu0 0.0
        %4027 = vmatpush1.msra.mxu0 0.0
        %4028 = vmatprep.subr.mxu0 0.0
        %4029 = vmatpush1.msra.mxu0 0.0
        %4030 = vmatprep.subr.mxu0 0.0
        %4031 = vmatpush1.msra.mxu0 0.0
        %4032 = vmatprep.subr.mxu0 0.0
        %4033 = vmatpush1.msra.mxu0 0.0
        %4034 = vmatprep.subr.mxu0 0.0
        %4035 = vmatpush1.msra.mxu0 0.0
        %4036 = vmatprep.subr.mxu0 0.0
        %4037 = vmatpush1.msra.mxu0 0.0
        %4038 = vmatprep.subr.mxu0 0.0
        %4039 = vmatpush1.msra.mxu0 0.0
        %4040 = vmatprep.subr.mxu0 0.0
        %4041 = vmatpush1.msra.mxu0 0.0
        %4042 = vmatprep.subr.mxu0 0.0
        %4043 = vmatpush1.msra.mxu0 0.0
        %4044 = vmatprep.subr.mxu0 0.0
        %4045 = vmatpush1.msra.mxu0 0.0
        %4046 = vmatprep.subr.mxu0 0.0
        %4047 = vmatpush1.msra.mxu0 0.0
        %4048 = vmatprep.mubr.f32.mxu0 0.0
        %4049 = vmatmul.mubr.f32.gmra.mrb[0].mxu0 %v3959
        %v4050 = vpop.f32.mrb[0].mxu0
        %v4051 = vadd.f32 %v3982, %v4050
        %v4052 = vpop.f32.mrb[0].mxu0
        %4053 = vmatprep.mubr.f32.mxu0 0.0
        %4054 = vmatmul.mubr.f32.gmra.mrb[0].mxu0 %v3960
        %v4055 = vpop.f32.mrb[0].mxu0
        %v4056 = vadd.f32 %v3982, %v4055
        %v4057 = vpop.f32.mrb[0].mxu0
        %4058 = vdwg.mxu0
        %v4059 = vld [vmem:[%s31] sm:$0x1]
        %v4060 = vld [vmem:[%s33] sm:$0x1]
        %v4062 = vlaneseq
        %v4063 = vshrl.u32 %v4062, 7
        %v4064 = vsub.s32 0, %v4063
        %v4065 = vrot.slane %v4059, %v4064
        %v4067 = vmul.f32 %v3941, %v4065
        %v4068 = vmul.f32 %v3942, %v4065
        %v4070 = vlaneseq
        %v4071 = vshrl.u32 %v4070, 7
        %v4072 = vsub.s32 0, %v4071
        %v4073 = vrot.slane %v4060, %v4072
        %v4075 = vadd.f32 %v4067, %v4073
        %v4076 = vadd.f32 %v4068, %v4073
        %v4077 = vmax.f32 %v4075, 0.0
        %v4078 = vmax.f32 %v4076, 0.0
        %4079 = vst.msk [vmem:[#allocation4] sm:$0xff] %vm2681, %v4077
        %4080 = vst.msk [vmem:[#allocation4 + $0x8] sm:$0xff] %vm2681, %v4078
        %4081 = vrot.lane.b32.xlu0 %v4065, 32
        %v4082 = vpop.permute.xlu0 %4081
        %v4084 = vmul.f32 %v4051, %v4082
        %v4085 = vmul.f32 %v4056, %v4082
        %4086 = vrot.lane.b32.xlu0 %v4073, 32
        %v4087 = vpop.permute.xlu0 %4086
        %v4089 = vadd.f32 %v4084, %v4087
        %v4090 = vadd.f32 %v4085, %v4087
        %v4091 = vmax.f32 %v4089, 0.0
        %v4092 = vmax.f32 %v4090, 0.0
        %4095 = vrot.lane.b32.xlu0 %v4091, 96
        %v4096 = vpop.permute.xlu0 %4095
        %4097 = vrot.lane.b32.xlu0 %v4092, 96
        %v4098 = vpop.permute.xlu0 %4097
        %4101 = vst.msk [vmem:[#allocation4] sm:$0xff] %vm1388, %v4096
        %4102 = vst.msk [vmem:[#allocation4 + $0x8] sm:$0xff] %vm1388, %v4098
        %v4103 = vld [vmem:[#allocation4] ss:$2 sm:$0xff]
        %v4104 = vld [vmem:[%s2727] ss:$2 sm:$0xff]
        %v4105 = vmax.f32 %v4103, %v4104
        %v4106 = vld [vmem:[#allocation12] sm:$0xff]
        %v4107 = vld [vmem:[#allocation12 + $0x8] sm:$0xff]
        %v4108 = vld [vmem:[#allocation12 + $0x10] sm:$0xff]
        %v4109 = vld [vmem:[#allocation12 + $0x18] sm:$0xff]
        %v4110 = vld [vmem:[#allocation12 + $0x20] sm:$0xff]
        %v4111 = vld [vmem:[#allocation12 + $0x28] sm:$0xff]
        %v4112 = vld [vmem:[#allocation12 + $0x30] sm:$0xff]
        %v4113 = vld [vmem:[#allocation12 + $0x38] sm:$0xff]
        %v4114 = vld [vmem:[#allocation12 + $0x40] sm:$0xff]
        %v4115 = vld [vmem:[#allocation12 + $0x48] sm:$0xff]
        %v4116 = vld [vmem:[#allocation12 + $0x50] sm:$0xff]
        %v4117 = vld [vmem:[#allocation12 + $0x58] sm:$0xff]
        %v4118 = vld [vmem:[#allocation12 + $0x60] sm:$0xff]
        %v4119 = vld [vmem:[#allocation12 + $0x68] sm:$0xff]
        %v4120 = vld [vmem:[#allocation12 + $0x70] sm:$0xff]
        %v4121 = vld [vmem:[#allocation12 + $0x78] sm:$0xff]
        %v4122 = vld [vmem:[%s37] sm:$0x1]
        %v4124 = vlaneseq
        %v4125 = vshrl.u32 %v4124, 7
        %v4126 = vsub.s32 0, %v4125
        %v4127 = vrot.slane %v4122, %v4126
        %4129 = vmatprep.subr.mxu0 0.0
        %4130 = vmatpush1.msra.mxu0 %v4106
        %4131 = vmatprep.subr.mxu0 0.0
        %4132 = vmatpush1.msra.mxu0 %v4107
        %4133 = vmatprep.subr.mxu0 0.0
        %4134 = vmatpush1.msra.mxu0 %v4108
        %4135 = vmatprep.subr.mxu0 0.0
        %4136 = vmatpush1.msra.mxu0 %v4109
        %4137 = vmatprep.subr.mxu0 0.0
        %4138 = vmatpush1.msra.mxu0 %v4110
        %4139 = vmatprep.subr.mxu0 0.0
        %4140 = vmatpush1.msra.mxu0 %v4111
        %4141 = vmatprep.subr.mxu0 0.0
        %4142 = vmatpush1.msra.mxu0 %v4112
        %4143 = vmatprep.subr.mxu0 0.0
        %4144 = vmatpush1.msra.mxu0 %v4113
        %4145 = vmatprep.subr.mxu0 0.0
        %4146 = vmatpush1.msra.mxu0 %v4114
        %4147 = vmatprep.subr.mxu0 0.0
        %4148 = vmatpush1.msra.mxu0 %v4115
        %4149 = vmatprep.subr.mxu0 0.0
        %4150 = vmatpush1.msra.mxu0 %v4116
        %4151 = vmatprep.subr.mxu0 0.0
        %4152 = vmatpush1.msra.mxu0 %v4117
        %4153 = vmatprep.subr.mxu0 0.0
        %4154 = vmatpush1.msra.mxu0 %v4118
        %4155 = vmatprep.subr.mxu0 0.0
        %4156 = vmatpush1.msra.mxu0 %v4119
        %4157 = vmatprep.subr.mxu0 0.0
        %4158 = vmatpush1.msra.mxu0 %v4120
        %4159 = vmatprep.subr.mxu0 0.0
        %4160 = vmatpush1.msra.mxu0 %v4121
        %4161 = vmatprep.subr.mxu0 0.0
        %4162 = vmatpush1.msra.mxu0 0.0
        %4163 = vmatprep.subr.mxu0 0.0
        %4164 = vmatpush1.msra.mxu0 0.0
        %4165 = vmatprep.subr.mxu0 0.0
        %4166 = vmatpush1.msra.mxu0 0.0
        %4167 = vmatprep.subr.mxu0 0.0
        %4168 = vmatpush1.msra.mxu0 0.0
        %4169 = vmatprep.subr.mxu0 0.0
        %4170 = vmatpush1.msra.mxu0 0.0
        %4171 = vmatprep.subr.mxu0 0.0
        %4172 = vmatpush1.msra.mxu0 0.0
        %4173 = vmatprep.subr.mxu0 0.0
        %4174 = vmatpush1.msra.mxu0 0.0
        %4175 = vmatprep.subr.mxu0 0.0
        %4176 = vmatpush1.msra.mxu0 0.0
        %4177 = vmatprep.subr.mxu0 0.0
        %4178 = vmatpush1.msra.mxu0 0.0
        %4179 = vmatprep.subr.mxu0 0.0
        %4180 = vmatpush1.msra.mxu0 0.0
        %4181 = vmatprep.subr.mxu0 0.0
        %4182 = vmatpush1.msra.mxu0 0.0
        %4183 = vmatprep.subr.mxu0 0.0
        %4184 = vmatpush1.msra.mxu0 0.0
        %4185 = vmatprep.subr.mxu0 0.0
        %4186 = vmatpush1.msra.mxu0 0.0
        %4187 = vmatprep.subr.mxu0 0.0
        %4188 = vmatpush1.msra.mxu0 0.0
        %4189 = vmatprep.subr.mxu0 0.0
        %4190 = vmatpush1.msra.mxu0 0.0
        %4191 = vmatprep.subr.mxu0 0.0
        %4192 = vmatpush1.msra.mxu0 0.0
        %4193 = vmatprep.mubr.f32.mxu0 0.0
        %4194 = vmatmul.mubr.f32.gmra.mrb[0].mxu0 %v4105
        %v4195 = vpop.f32.mrb[0].mxu0
        %v4196 = vadd.f32 %v4127, %v4195
        %v4197 = vpop.f32.mrb[0].mxu0
        %4198 = vdwg.mxu0
        %4199 = vst.msk [vmem:[#allocation2] sm:$0xff] %vm1204, 0.0
        %4200 = vst.msk [vmem:[#allocation2 + $0x8] sm:$0xff] %vm1204, 0.0
        %4201 = vst.msk [vmem:[#allocation2 + $0x10] sm:$0xff] %vm1204, 0.0
        %4202 = vst.msk [vmem:[#allocation2 + $0x18] sm:$0xff] %vm1204, %v4196
        %4203 = vst.msk [vmem:[#allocation2 + $0x20] sm:$0xff] %vm1204, 0.0
        %4204 = vst.msk [vmem:[#allocation2 + $0x28] sm:$0xff] %vm1204, 0.0
        %4205 = vst.msk [vmem:[#allocation2 + $0x30] sm:$0xff] %vm1204, 0.0
        %v4206 = vld [vmem:[#allocation2] sm:$0xff]
        %v4207 = vld [vmem:[#allocation2 + $0x8] sm:$0xff]
        %v4208 = vld [vmem:[#allocation2 + $0x10] sm:$0xff]
        %v4209 = vld [vmem:[#allocation2 + $0x18] sm:$0xff]
        %v4210 = vld [vmem:[#allocation2 + $0x20] sm:$0xff]
        %v4211 = vld [vmem:[#allocation2 + $0x28] sm:$0xff]
        %4212 = vst.msk [vmem:[#allocation3] sm:$0xff] %vm1204, %v4206
        %4213 = vst.msk [vmem:[#allocation3 + $0x8] sm:$0xff] %vm1204, %v4207
        %4214 = vst.msk [vmem:[#allocation3 + $0x10] sm:$0xff] %vm1204, %v4208
        %4215 = vst.msk [vmem:[#allocation3 + $0x18] sm:$0xff] %vm1204, %v4209
        %4216 = vst.msk [vmem:[#allocation3 + $0x20] sm:$0xff] %vm1204, %v4210
        %4217 = vst.msk [vmem:[#allocation3 + $0x28] sm:$0xff] %vm1204, %v4211
        %v4218 = vld [vmem:[#allocation2 + $0x1] sm:$0xff]
        %v4219 = vld [vmem:[#allocation2 + $0x9] sm:$0xff]
        %v4220 = vld [vmem:[#allocation2 + $0x11] sm:$0xff]
        %v4221 = vld [vmem:[#allocation2 + $0x19] sm:$0xff]
        %v4222 = vld [vmem:[#allocation2 + $0x21] sm:$0xff]
        %v4223 = vld [vmem:[#allocation2 + $0x29] sm:$0xff]
        %4230 = vrot.lane.b32.xlu0 %v4218, 32
        %v4231 = vpop.permute.xlu0 %4230
        %4232 = vrot.lane.b32.xlu0 %v4219, 32
        %v4233 = vpop.permute.xlu0 %4232
        %4234 = vrot.lane.b32.xlu0 %v4220, 32
        %v4235 = vpop.permute.xlu0 %4234
        %4236 = vrot.lane.b32.xlu0 %v4221, 32
        %v4237 = vpop.permute.xlu0 %4236
        %4238 = vrot.lane.b32.xlu0 %v4222, 32
        %v4239 = vpop.permute.xlu0 %4238
        %4240 = vrot.lane.b32.xlu0 %v4223, 32
        %v4241 = vpop.permute.xlu0 %4240
        %4248 = vst.msk [vmem:[#allocation3] sm:$0xff] %vm1278, %v4231
        %4249 = vst.msk [vmem:[#allocation3 + $0x8] sm:$0xff] %vm1278, %v4233
        %4250 = vst.msk [vmem:[#allocation3 + $0x10] sm:$0xff] %vm1278, %v4235
        %4251 = vst.msk [vmem:[#allocation3 + $0x18] sm:$0xff] %vm1278, %v4237
        %4252 = vst.msk [vmem:[#allocation3 + $0x20] sm:$0xff] %vm1278, %v4239
        %4253 = vst.msk [vmem:[#allocation3 + $0x28] sm:$0xff] %vm1278, %v4241
        %v4254 = vld [vmem:[#allocation2 + $0x2] sm:$0xff]
        %v4255 = vld [vmem:[#allocation2 + $0xa] sm:$0xff]
        %v4256 = vld [vmem:[#allocation2 + $0x12] sm:$0xff]
        %v4257 = vld [vmem:[#allocation2 + $0x1a] sm:$0xff]
        %v4258 = vld [vmem:[#allocation2 + $0x22] sm:$0xff]
        %v4259 = vld [vmem:[#allocation2 + $0x2a] sm:$0xff]
        %4266 = vrot.lane.b32.xlu0 %v4254, 64
        %v4267 = vpop.permute.xlu0 %4266
        %4268 = vrot.lane.b32.xlu0 %v4255, 64
        %v4269 = vpop.permute.xlu0 %4268
        %4270 = vrot.lane.b32.xlu0 %v4256, 64
        %v4271 = vpop.permute.xlu0 %4270
        %4272 = vrot.lane.b32.xlu0 %v4257, 64
        %v4273 = vpop.permute.xlu0 %4272
        %4274 = vrot.lane.b32.xlu0 %v4258, 64
        %v4275 = vpop.permute.xlu0 %4274
        %4276 = vrot.lane.b32.xlu0 %v4259, 64
        %v4277 = vpop.permute.xlu0 %4276
        %4284 = vst.msk [vmem:[#allocation3] sm:$0xff] %vm1333, %v4267
        %4285 = vst.msk [vmem:[#allocation3 + $0x8] sm:$0xff] %vm1333, %v4269
        %4286 = vst.msk [vmem:[#allocation3 + $0x10] sm:$0xff] %vm1333, %v4271
        %4287 = vst.msk [vmem:[#allocation3 + $0x18] sm:$0xff] %vm1333, %v4273
        %4288 = vst.msk [vmem:[#allocation3 + $0x20] sm:$0xff] %vm1333, %v4275
        %4289 = vst.msk [vmem:[#allocation3 + $0x28] sm:$0xff] %vm1333, %v4277
        %v4290 = vld [vmem:[#allocation2 + $0x3] sm:$0xff]
        %v4291 = vld [vmem:[#allocation2 + $0xb] sm:$0xff]
        %v4292 = vld [vmem:[#allocation2 + $0x13] sm:$0xff]
        %v4293 = vld [vmem:[#allocation2 + $0x1b] sm:$0xff]
        %v4294 = vld [vmem:[#allocation2 + $0x23] sm:$0xff]
        %v4295 = vld [vmem:[#allocation2 + $0x2b] sm:$0xff]
        %4302 = vrot.lane.b32.xlu0 %v4290, 96
        %v4303 = vpop.permute.xlu0 %4302
        %4304 = vrot.lane.b32.xlu0 %v4291, 96
        %v4305 = vpop.permute.xlu0 %4304
        %4306 = vrot.lane.b32.xlu0 %v4292, 96
        %v4307 = vpop.permute.xlu0 %4306
        %4308 = vrot.lane.b32.xlu0 %v4293, 96
        %v4309 = vpop.permute.xlu0 %4308
        %4310 = vrot.lane.b32.xlu0 %v4294, 96
        %v4311 = vpop.permute.xlu0 %4310
        %4312 = vrot.lane.b32.xlu0 %v4295, 96
        %v4313 = vpop.permute.xlu0 %4312
        %4320 = vst.msk [vmem:[#allocation3] sm:$0xff] %vm1388, %v4303
        %4321 = vst.msk [vmem:[#allocation3 + $0x8] sm:$0xff] %vm1388, %v4305
        %4322 = vst.msk [vmem:[#allocation3 + $0x10] sm:$0xff] %vm1388, %v4307
        %4323 = vst.msk [vmem:[#allocation3 + $0x18] sm:$0xff] %vm1388, %v4309
        %4324 = vst.msk [vmem:[#allocation3 + $0x20] sm:$0xff] %vm1388, %v4311
        %4325 = vst.msk [vmem:[#allocation3 + $0x28] sm:$0xff] %vm1388, %v4313
        %v4326 = vld [vmem:[#allocation3 + $0x4] sm:$0xff]
        %v4327 = vld [vmem:[#allocation13] sm:$0xff]
        %v4328 = vld [vmem:[#allocation13 + $0x8] sm:$0xff]
        %v4329 = vld [vmem:[#allocation13 + $0x10] sm:$0xff]
        %v4330 = vld [vmem:[#allocation13 + $0x18] sm:$0xff]
        %v4331 = vld [vmem:[#allocation13 + $0x20] sm:$0xff]
        %v4332 = vld [vmem:[#allocation13 + $0x28] sm:$0xff]
        %v4333 = vld [vmem:[#allocation13 + $0x30] sm:$0xff]
        %v4334 = vld [vmem:[#allocation13 + $0x38] sm:$0xff]
        %v4335 = vld [vmem:[#allocation13 + $0x40] sm:$0xff]
        %v4336 = vld [vmem:[#allocation13 + $0x48] sm:$0xff]
        %v4337 = vld [vmem:[#allocation13 + $0x50] sm:$0xff]
        %v4338 = vld [vmem:[#allocation13 + $0x58] sm:$0xff]
        %v4339 = vld [vmem:[#allocation13 + $0x60] sm:$0xff]
        %v4340 = vld [vmem:[#allocation13 + $0x68] sm:$0xff]
        %v4341 = vld [vmem:[#allocation13 + $0x70] sm:$0xff]
        %v4342 = vld [vmem:[#allocation13 + $0x78] sm:$0xff]
        %v4343 = vld [vmem:[#allocation3 + $0x8] sm:$0xff]
        %s4344 = scalar_lea.vmem [#allocation13], 128
        %v4345 = vld [vmem:[%s4344] sm:$0xff]
        %v4346 = vld [vmem:[%s4344 + $0x8] sm:$0xff]
        %v4347 = vld [vmem:[%s4344 + $0x10] sm:$0xff]
        %v4348 = vld [vmem:[%s4344 + $0x18] sm:$0xff]
        %v4349 = vld [vmem:[%s4344 + $0x20] sm:$0xff]
        %v4350 = vld [vmem:[%s4344 + $0x28] sm:$0xff]
        %v4351 = vld [vmem:[%s4344 + $0x30] sm:$0xff]
        %v4352 = vld [vmem:[%s4344 + $0x38] sm:$0xff]
        %v4353 = vld [vmem:[%s4344 + $0x40] sm:$0xff]
        %v4354 = vld [vmem:[%s4344 + $0x48] sm:$0xff]
        %v4355 = vld [vmem:[%s4344 + $0x50] sm:$0xff]
        %v4356 = vld [vmem:[%s4344 + $0x58] sm:$0xff]
        %v4357 = vld [vmem:[%s4344 + $0x60] sm:$0xff]
        %v4358 = vld [vmem:[%s4344 + $0x68] sm:$0xff]
        %v4359 = vld [vmem:[%s4344 + $0x70] sm:$0xff]
        %v4360 = vld [vmem:[%s4344 + $0x78] sm:$0xff]
        %4361 = vmatprep.subr.mxu0 0.0
        %4362 = vmatpush1.msra.mxu0 %v4345
        %4363 = vmatprep.subr.mxu0 0.0
        %4364 = vmatpush1.msra.mxu0 %v4346
        %4365 = vmatprep.subr.mxu0 0.0
        %4366 = vmatpush1.msra.mxu0 %v4347
        %4367 = vmatprep.subr.mxu0 0.0
        %4368 = vmatpush1.msra.mxu0 %v4348
        %4369 = vmatprep.subr.mxu0 0.0
        %4370 = vmatpush1.msra.mxu0 %v4349
        %4371 = vmatprep.subr.mxu0 0.0
        %4372 = vmatpush1.msra.mxu0 %v4350
        %4373 = vmatprep.subr.mxu0 0.0
        %4374 = vmatpush1.msra.mxu0 %v4351
        %4375 = vmatprep.subr.mxu0 0.0
        %4376 = vmatpush1.msra.mxu0 %v4352
        %4377 = vmatprep.subr.mxu0 0.0
        %4378 = vmatpush1.msra.mxu0 %v4353
        %4379 = vmatprep.subr.mxu0 0.0
        %4380 = vmatpush1.msra.mxu0 %v4354
        %4381 = vmatprep.subr.mxu0 0.0
        %4382 = vmatpush1.msra.mxu0 %v4355
        %4383 = vmatprep.subr.mxu0 0.0
        %4384 = vmatpush1.msra.mxu0 %v4356
        %4385 = vmatprep.subr.mxu0 0.0
        %4386 = vmatpush1.msra.mxu0 %v4357
        %4387 = vmatprep.subr.mxu0 0.0
        %4388 = vmatpush1.msra.mxu0 %v4358
        %4389 = vmatprep.subr.mxu0 0.0
        %4390 = vmatpush1.msra.mxu0 %v4359
        %4391 = vmatprep.subr.mxu0 0.0
        %4392 = vmatpush1.msra.mxu0 %v4360
        %4393 = vmatprep.subr.mxu0 0.0
        %4394 = vmatpush1.msra.mxu0 0.0
        %4395 = vmatprep.subr.mxu0 0.0
        %4396 = vmatpush1.msra.mxu0 0.0
        %4397 = vmatprep.subr.mxu0 0.0
        %4398 = vmatpush1.msra.mxu0 0.0
        %4399 = vmatprep.subr.mxu0 0.0
        %4400 = vmatpush1.msra.mxu0 0.0
        %4401 = vmatprep.subr.mxu0 0.0
        %4402 = vmatpush1.msra.mxu0 0.0
        %4403 = vmatprep.subr.mxu0 0.0
        %4404 = vmatpush1.msra.mxu0 0.0
        %4405 = vmatprep.subr.mxu0 0.0
        %4406 = vmatpush1.msra.mxu0 0.0
        %4407 = vmatprep.subr.mxu0 0.0
        %4408 = vmatpush1.msra.mxu0 0.0
        %4409 = vmatprep.subr.mxu0 0.0
        %4410 = vmatpush1.msra.mxu0 0.0
        %4411 = vmatprep.subr.mxu0 0.0
        %4412 = vmatpush1.msra.mxu0 0.0
        %4413 = vmatprep.subr.mxu0 0.0
        %4414 = vmatpush1.msra.mxu0 0.0
        %4415 = vmatprep.subr.mxu0 0.0
        %4416 = vmatpush1.msra.mxu0 0.0
        %4417 = vmatprep.subr.mxu0 0.0
        %4418 = vmatpush1.msra.mxu0 0.0
        %4419 = vmatprep.subr.mxu0 0.0
        %4420 = vmatpush1.msra.mxu0 0.0
        %4421 = vmatprep.subr.mxu0 0.0
        %4422 = vmatpush1.msra.mxu0 0.0
        %4423 = vmatprep.subr.mxu0 0.0
        %4424 = vmatpush1.msra.mxu0 0.0
        %4425 = vmatprep.mubr.f32.mxu0 0.0
        %4426 = vmatmul.mubr.f32.gmra.mrb[0].mxu0 %v4343
        %v4427 = vpop.f32.mrb[0].mxu0
        %v4428 = vadd.f32 0.0, %v4427
        %v4429 = vpop.f32.mrb[0].mxu0
        %4430 = vdwg.mxu0
        %4431 = vmatprep.subr.mxu0 0.0
        %4432 = vmatpush1.msra.mxu0 %v4327
        %4433 = vmatprep.subr.mxu0 0.0
        %4434 = vmatpush1.msra.mxu0 %v4328
        %4435 = vmatprep.subr.mxu0 0.0
        %4436 = vmatpush1.msra.mxu0 %v4329
        %4437 = vmatprep.subr.mxu0 0.0
        %4438 = vmatpush1.msra.mxu0 %v4330
        %4439 = vmatprep.subr.mxu0 0.0
        %4440 = vmatpush1.msra.mxu0 %v4331
        %4441 = vmatprep.subr.mxu0 0.0
        %4442 = vmatpush1.msra.mxu0 %v4332
        %4443 = vmatprep.subr.mxu0 0.0
        %4444 = vmatpush1.msra.mxu0 %v4333
        %4445 = vmatprep.subr.mxu0 0.0
        %4446 = vmatpush1.msra.mxu0 %v4334
        %4447 = vmatprep.subr.mxu0 0.0
        %4448 = vmatpush1.msra.mxu0 %v4335
        %4449 = vmatprep.subr.mxu0 0.0
        %4450 = vmatpush1.msra.mxu0 %v4336
        %4451 = vmatprep.subr.mxu0 0.0
        %4452 = vmatpush1.msra.mxu0 %v4337
        %4453 = vmatprep.subr.mxu0 0.0
        %4454 = vmatpush1.msra.mxu0 %v4338
        %4455 = vmatprep.subr.mxu0 0.0
        %4456 = vmatpush1.msra.mxu0 %v4339
        %4457 = vmatprep.subr.mxu0 0.0
        %4458 = vmatpush1.msra.mxu0 %v4340
        %4459 = vmatprep.subr.mxu0 0.0
        %4460 = vmatpush1.msra.mxu0 %v4341
        %4461 = vmatprep.subr.mxu0 0.0
        %4462 = vmatpush1.msra.mxu0 %v4342
        %4463 = vmatprep.subr.mxu0 0.0
        %4464 = vmatpush1.msra.mxu0 0.0
        %4465 = vmatprep.subr.mxu0 0.0
        %4466 = vmatpush1.msra.mxu0 0.0
        %4467 = vmatprep.subr.mxu0 0.0
        %4468 = vmatpush1.msra.mxu0 0.0
        %4469 = vmatprep.subr.mxu0 0.0
        %4470 = vmatpush1.msra.mxu0 0.0
        %4471 = vmatprep.subr.mxu0 0.0
        %4472 = vmatpush1.msra.mxu0 0.0
        %4473 = vmatprep.subr.mxu0 0.0
        %4474 = vmatpush1.msra.mxu0 0.0
        %4475 = vmatprep.subr.mxu0 0.0
        %4476 = vmatpush1.msra.mxu0 0.0
        %4477 = vmatprep.subr.mxu0 0.0
        %4478 = vmatpush1.msra.mxu0 0.0
        %4479 = vmatprep.subr.mxu0 0.0
        %4480 = vmatpush1.msra.mxu0 0.0
        %4481 = vmatprep.subr.mxu0 0.0
        %4482 = vmatpush1.msra.mxu0 0.0
        %4483 = vmatprep.subr.mxu0 0.0
        %4484 = vmatpush1.msra.mxu0 0.0
        %4485 = vmatprep.subr.mxu0 0.0
        %4486 = vmatpush1.msra.mxu0 0.0
        %4487 = vmatprep.subr.mxu0 0.0
        %4488 = vmatpush1.msra.mxu0 0.0
        %4489 = vmatprep.subr.mxu0 0.0
        %4490 = vmatpush1.msra.mxu0 0.0
        %4491 = vmatprep.subr.mxu0 0.0
        %4492 = vmatpush1.msra.mxu0 0.0
        %4493 = vmatprep.subr.mxu0 0.0
        %4494 = vmatpush1.msra.mxu0 0.0
        %4495 = vmatprep.mubr.f32.mxu0 0.0
        %4496 = vmatmul.mubr.f32.gmra.mrb[0].mxu0 %v4326
        %v4497 = vpop.f32.mrb[0].mxu0
        %v4498 = vadd.f32 %v4428, %v4497
        %v4499 = vpop.f32.mrb[0].mxu0
        %4500 = vdwg.mxu0
        %v4501 = vld [vmem:[#allocation3 + $0xc] sm:$0xff]
        %s4502 = scalar_lea.vmem [#allocation13], 256
        %v4503 = vld [vmem:[%s4502] sm:$0xff]
        %v4504 = vld [vmem:[%s4502 + $0x8] sm:$0xff]
        %v4505 = vld [vmem:[%s4502 + $0x10] sm:$0xff]
        %v4506 = vld [vmem:[%s4502 + $0x18] sm:$0xff]
        %v4507 = vld [vmem:[%s4502 + $0x20] sm:$0xff]
        %v4508 = vld [vmem:[%s4502 + $0x28] sm:$0xff]
        %v4509 = vld [vmem:[%s4502 + $0x30] sm:$0xff]
        %v4510 = vld [vmem:[%s4502 + $0x38] sm:$0xff]
        %v4511 = vld [vmem:[%s4502 + $0x40] sm:$0xff]
        %v4512 = vld [vmem:[%s4502 + $0x48] sm:$0xff]
        %v4513 = vld [vmem:[%s4502 + $0x50] sm:$0xff]
        %v4514 = vld [vmem:[%s4502 + $0x58] sm:$0xff]
        %v4515 = vld [vmem:[%s4502 + $0x60] sm:$0xff]
        %v4516 = vld [vmem:[%s4502 + $0x68] sm:$0xff]
        %v4517 = vld [vmem:[%s4502 + $0x70] sm:$0xff]
        %v4518 = vld [vmem:[%s4502 + $0x78] sm:$0xff]
        %4519 = vmatprep.subr.mxu0 0.0
        %4520 = vmatpush1.msra.mxu0 %v4503
        %4521 = vmatprep.subr.mxu0 0.0
        %4522 = vmatpush1.msra.mxu0 %v4504
        %4523 = vmatprep.subr.mxu0 0.0
        %4524 = vmatpush1.msra.mxu0 %v4505
        %4525 = vmatprep.subr.mxu0 0.0
        %4526 = vmatpush1.msra.mxu0 %v4506
        %4527 = vmatprep.subr.mxu0 0.0
        %4528 = vmatpush1.msra.mxu0 %v4507
        %4529 = vmatprep.subr.mxu0 0.0
        %4530 = vmatpush1.msra.mxu0 %v4508
        %4531 = vmatprep.subr.mxu0 0.0
        %4532 = vmatpush1.msra.mxu0 %v4509
        %4533 = vmatprep.subr.mxu0 0.0
        %4534 = vmatpush1.msra.mxu0 %v4510
        %4535 = vmatprep.subr.mxu0 0.0
        %4536 = vmatpush1.msra.mxu0 %v4511
        %4537 = vmatprep.subr.mxu0 0.0
        %4538 = vmatpush1.msra.mxu0 %v4512
        %4539 = vmatprep.subr.mxu0 0.0
        %4540 = vmatpush1.msra.mxu0 %v4513
        %4541 = vmatprep.subr.mxu0 0.0
        %4542 = vmatpush1.msra.mxu0 %v4514
        %4543 = vmatprep.subr.mxu0 0.0
        %4544 = vmatpush1.msra.mxu0 %v4515
        %4545 = vmatprep.subr.mxu0 0.0
        %4546 = vmatpush1.msra.mxu0 %v4516
        %4547 = vmatprep.subr.mxu0 0.0
        %4548 = vmatpush1.msra.mxu0 %v4517
        %4549 = vmatprep.subr.mxu0 0.0
        %4550 = vmatpush1.msra.mxu0 %v4518
        %4551 = vmatprep.subr.mxu0 0.0
        %4552 = vmatpush1.msra.mxu0 0.0
        %4553 = vmatprep.subr.mxu0 0.0
        %4554 = vmatpush1.msra.mxu0 0.0
        %4555 = vmatprep.subr.mxu0 0.0
        %4556 = vmatpush1.msra.mxu0 0.0
        %4557 = vmatprep.subr.mxu0 0.0
        %4558 = vmatpush1.msra.mxu0 0.0
        %4559 = vmatprep.subr.mxu0 0.0
        %4560 = vmatpush1.msra.mxu0 0.0
        %4561 = vmatprep.subr.mxu0 0.0
        %4562 = vmatpush1.msra.mxu0 0.0
        %4563 = vmatprep.subr.mxu0 0.0
        %4564 = vmatpush1.msra.mxu0 0.0
        %4565 = vmatprep.subr.mxu0 0.0
        %4566 = vmatpush1.msra.mxu0 0.0
        %4567 = vmatprep.subr.mxu0 0.0
        %4568 = vmatpush1.msra.mxu0 0.0
        %4569 = vmatprep.subr.mxu0 0.0
        %4570 = vmatpush1.msra.mxu0 0.0
        %4571 = vmatprep.subr.mxu0 0.0
        %4572 = vmatpush1.msra.mxu0 0.0
        %4573 = vmatprep.subr.mxu0 0.0
        %4574 = vmatpush1.msra.mxu0 0.0
        %4575 = vmatprep.subr.mxu0 0.0
        %4576 = vmatpush1.msra.mxu0 0.0
        %4577 = vmatprep.subr.mxu0 0.0
        %4578 = vmatpush1.msra.mxu0 0.0
        %4579 = vmatprep.subr.mxu0 0.0
        %4580 = vmatpush1.msra.mxu0 0.0
        %4581 = vmatprep.subr.mxu0 0.0
        %4582 = vmatpush1.msra.mxu0 0.0
        %4583 = vmatprep.mubr.f32.mxu0 0.0
        %4584 = vmatmul.mubr.f32.gmra.mrb[0].mxu0 %v4501
        %v4585 = vpop.f32.mrb[0].mxu0
        %v4586 = vadd.f32 0.0, %v4585
        %v4587 = vpop.f32.mrb[0].mxu0
        %4588 = vdwg.mxu0
        %v4589 = vadd.f32 %v4498, %v4586
        %v4590 = vld [vmem:[#allocation3 + $0x10] sm:$0xff]
        %s4591 = scalar_lea.vmem [#allocation13], 384
        %v4592 = vld [vmem:[%s4591] sm:$0xff]
        %v4593 = vld [vmem:[%s4591 + $0x8] sm:$0xff]
        %v4594 = vld [vmem:[%s4591 + $0x10] sm:$0xff]
        %v4595 = vld [vmem:[%s4591 + $0x18] sm:$0xff]
        %v4596 = vld [vmem:[%s4591 + $0x20] sm:$0xff]
        %v4597 = vld [vmem:[%s4591 + $0x28] sm:$0xff]
        %v4598 = vld [vmem:[%s4591 + $0x30] sm:$0xff]
        %v4599 = vld [vmem:[%s4591 + $0x38] sm:$0xff]
        %v4600 = vld [vmem:[%s4591 + $0x40] sm:$0xff]
        %v4601 = vld [vmem:[%s4591 + $0x48] sm:$0xff]
        %v4602 = vld [vmem:[%s4591 + $0x50] sm:$0xff]
        %v4603 = vld [vmem:[%s4591 + $0x58] sm:$0xff]
        %v4604 = vld [vmem:[%s4591 + $0x60] sm:$0xff]
        %v4605 = vld [vmem:[%s4591 + $0x68] sm:$0xff]
        %v4606 = vld [vmem:[%s4591 + $0x70] sm:$0xff]
        %v4607 = vld [vmem:[%s4591 + $0x78] sm:$0xff]
        %4608 = vmatprep.subr.mxu0 0.0
        %4609 = vmatpush1.msra.mxu0 %v4592
        %4610 = vmatprep.subr.mxu0 0.0
        %4611 = vmatpush1.msra.mxu0 %v4593
        %4612 = vmatprep.subr.mxu0 0.0
        %4613 = vmatpush1.msra.mxu0 %v4594
        %4614 = vmatprep.subr.mxu0 0.0
        %4615 = vmatpush1.msra.mxu0 %v4595
        %4616 = vmatprep.subr.mxu0 0.0
        %4617 = vmatpush1.msra.mxu0 %v4596
        %4618 = vmatprep.subr.mxu0 0.0
        %4619 = vmatpush1.msra.mxu0 %v4597
        %4620 = vmatprep.subr.mxu0 0.0
        %4621 = vmatpush1.msra.mxu0 %v4598
        %4622 = vmatprep.subr.mxu0 0.0
        %4623 = vmatpush1.msra.mxu0 %v4599
        %4624 = vmatprep.subr.mxu0 0.0
        %4625 = vmatpush1.msra.mxu0 %v4600
        %4626 = vmatprep.subr.mxu0 0.0
        %4627 = vmatpush1.msra.mxu0 %v4601
        %4628 = vmatprep.subr.mxu0 0.0
        %4629 = vmatpush1.msra.mxu0 %v4602
        %4630 = vmatprep.subr.mxu0 0.0
        %4631 = vmatpush1.msra.mxu0 %v4603
        %4632 = vmatprep.subr.mxu0 0.0
        %4633 = vmatpush1.msra.mxu0 %v4604
        %4634 = vmatprep.subr.mxu0 0.0
        %4635 = vmatpush1.msra.mxu0 %v4605
        %4636 = vmatprep.subr.mxu0 0.0
        %4637 = vmatpush1.msra.mxu0 %v4606
        %4638 = vmatprep.subr.mxu0 0.0
        %4639 = vmatpush1.msra.mxu0 %v4607
        %4640 = vmatprep.subr.mxu0 0.0
        %4641 = vmatpush1.msra.mxu0 0.0
        %4642 = vmatprep.subr.mxu0 0.0
        %4643 = vmatpush1.msra.mxu0 0.0
        %4644 = vmatprep.subr.mxu0 0.0
        %4645 = vmatpush1.msra.mxu0 0.0
        %4646 = vmatprep.subr.mxu0 0.0
        %4647 = vmatpush1.msra.mxu0 0.0
        %4648 = vmatprep.subr.mxu0 0.0
        %4649 = vmatpush1.msra.mxu0 0.0
        %4650 = vmatprep.subr.mxu0 0.0
        %4651 = vmatpush1.msra.mxu0 0.0
        %4652 = vmatprep.subr.mxu0 0.0
        %4653 = vmatpush1.msra.mxu0 0.0
        %4654 = vmatprep.subr.mxu0 0.0
        %4655 = vmatpush1.msra.mxu0 0.0
        %4656 = vmatprep.subr.mxu0 0.0
        %4657 = vmatpush1.msra.mxu0 0.0
        %4658 = vmatprep.subr.mxu0 0.0
        %4659 = vmatpush1.msra.mxu0 0.0
        %4660 = vmatprep.subr.mxu0 0.0
        %4661 = vmatpush1.msra.mxu0 0.0
        %4662 = vmatprep.subr.mxu0 0.0
        %4663 = vmatpush1.msra.mxu0 0.0
        %4664 = vmatprep.subr.mxu0 0.0
        %4665 = vmatpush1.msra.mxu0 0.0
        %4666 = vmatprep.subr.mxu0 0.0
        %4667 = vmatpush1.msra.mxu0 0.0
        %4668 = vmatprep.subr.mxu0 0.0
        %4669 = vmatpush1.msra.mxu0 0.0
        %4670 = vmatprep.subr.mxu0 0.0
        %4671 = vmatpush1.msra.mxu0 0.0
        %4672 = vmatprep.mubr.f32.mxu0 0.0
        %4673 = vmatmul.mubr.f32.gmra.mrb[0].mxu0 %v4590
        %v4674 = vpop.f32.mrb[0].mxu0
        %v4675 = vadd.f32 0.0, %v4674
        %v4676 = vpop.f32.mrb[0].mxu0
        %4677 = vdwg.mxu0
        %v4678 = vadd.f32 %v4589, %v4675
        %v4679 = vld [vmem:[#allocation3 + $0x14] sm:$0xff]
        %s4680 = scalar_lea.vmem [#allocation13], 512
        %v4681 = vld [vmem:[%s4680] sm:$0xff]
        %v4682 = vld [vmem:[%s4680 + $0x8] sm:$0xff]
        %v4683 = vld [vmem:[%s4680 + $0x10] sm:$0xff]
        %v4684 = vld [vmem:[%s4680 + $0x18] sm:$0xff]
        %v4685 = vld [vmem:[%s4680 + $0x20] sm:$0xff]
        %v4686 = vld [vmem:[%s4680 + $0x28] sm:$0xff]
        %v4687 = vld [vmem:[%s4680 + $0x30] sm:$0xff]
        %v4688 = vld [vmem:[%s4680 + $0x38] sm:$0xff]
        %v4689 = vld [vmem:[%s4680 + $0x40] sm:$0xff]
        %v4690 = vld [vmem:[%s4680 + $0x48] sm:$0xff]
        %v4691 = vld [vmem:[%s4680 + $0x50] sm:$0xff]
        %v4692 = vld [vmem:[%s4680 + $0x58] sm:$0xff]
        %v4693 = vld [vmem:[%s4680 + $0x60] sm:$0xff]
        %v4694 = vld [vmem:[%s4680 + $0x68] sm:$0xff]
        %v4695 = vld [vmem:[%s4680 + $0x70] sm:$0xff]
        %v4696 = vld [vmem:[%s4680 + $0x78] sm:$0xff]
        %4697 = vmatprep.subr.mxu0 0.0
        %4698 = vmatpush1.msra.mxu0 %v4681
        %4699 = vmatprep.subr.mxu0 0.0
        %4700 = vmatpush1.msra.mxu0 %v4682
        %4701 = vmatprep.subr.mxu0 0.0
        %4702 = vmatpush1.msra.mxu0 %v4683
        %4703 = vmatprep.subr.mxu0 0.0
        %4704 = vmatpush1.msra.mxu0 %v4684
        %4705 = vmatprep.subr.mxu0 0.0
        %4706 = vmatpush1.msra.mxu0 %v4685
        %4707 = vmatprep.subr.mxu0 0.0
        %4708 = vmatpush1.msra.mxu0 %v4686
        %4709 = vmatprep.subr.mxu0 0.0
        %4710 = vmatpush1.msra.mxu0 %v4687
        %4711 = vmatprep.subr.mxu0 0.0
        %4712 = vmatpush1.msra.mxu0 %v4688
        %4713 = vmatprep.subr.mxu0 0.0
        %4714 = vmatpush1.msra.mxu0 %v4689
        %4715 = vmatprep.subr.mxu0 0.0
        %4716 = vmatpush1.msra.mxu0 %v4690
        %4717 = vmatprep.subr.mxu0 0.0
        %4718 = vmatpush1.msra.mxu0 %v4691
        %4719 = vmatprep.subr.mxu0 0.0
        %4720 = vmatpush1.msra.mxu0 %v4692
        %4721 = vmatprep.subr.mxu0 0.0
        %4722 = vmatpush1.msra.mxu0 %v4693
        %4723 = vmatprep.subr.mxu0 0.0
        %4724 = vmatpush1.msra.mxu0 %v4694
        %4725 = vmatprep.subr.mxu0 0.0
        %4726 = vmatpush1.msra.mxu0 %v4695
        %4727 = vmatprep.subr.mxu0 0.0
        %4728 = vmatpush1.msra.mxu0 %v4696
        %4729 = vmatprep.subr.mxu0 0.0
        %4730 = vmatpush1.msra.mxu0 0.0
        %4731 = vmatprep.subr.mxu0 0.0
        %4732 = vmatpush1.msra.mxu0 0.0
        %4733 = vmatprep.subr.mxu0 0.0
        %4734 = vmatpush1.msra.mxu0 0.0
        %4735 = vmatprep.subr.mxu0 0.0
        %4736 = vmatpush1.msra.mxu0 0.0
        %4737 = vmatprep.subr.mxu0 0.0
        %4738 = vmatpush1.msra.mxu0 0.0
        %4739 = vmatprep.subr.mxu0 0.0
        %4740 = vmatpush1.msra.mxu0 0.0
        %4741 = vmatprep.subr.mxu0 0.0
        %4742 = vmatpush1.msra.mxu0 0.0
        %4743 = vmatprep.subr.mxu0 0.0
        %4744 = vmatpush1.msra.mxu0 0.0
        %4745 = vmatprep.subr.mxu0 0.0
        %4746 = vmatpush1.msra.mxu0 0.0
        %4747 = vmatprep.subr.mxu0 0.0
        %4748 = vmatpush1.msra.mxu0 0.0
        %4749 = vmatprep.subr.mxu0 0.0
        %4750 = vmatpush1.msra.mxu0 0.0
        %4751 = vmatprep.subr.mxu0 0.0
        %4752 = vmatpush1.msra.mxu0 0.0
        %4753 = vmatprep.subr.mxu0 0.0
        %4754 = vmatpush1.msra.mxu0 0.0
        %4755 = vmatprep.subr.mxu0 0.0
        %4756 = vmatpush1.msra.mxu0 0.0
        %4757 = vmatprep.subr.mxu0 0.0
        %4758 = vmatpush1.msra.mxu0 0.0
        %4759 = vmatprep.subr.mxu0 0.0
        %4760 = vmatpush1.msra.mxu0 0.0
        %4761 = vmatprep.mubr.f32.mxu0 0.0
        %4762 = vmatmul.mubr.f32.gmra.mrb[0].mxu0 %v4679
        %v4763 = vpop.f32.mrb[0].mxu0
        %v4764 = vadd.f32 0.0, %v4763
        %v4765 = vpop.f32.mrb[0].mxu0
        %4766 = vdwg.mxu0
        %v4767 = vadd.f32 %v4678, %v4764
        %v4768 = vld [vmem:[#allocation3 + $0x18] sm:$0xff]
        %s4769 = scalar_lea.vmem [#allocation13], 640
        %v4770 = vld [vmem:[%s4769] sm:$0xff]
        %v4771 = vld [vmem:[%s4769 + $0x8] sm:$0xff]
        %v4772 = vld [vmem:[%s4769 + $0x10] sm:$0xff]
        %v4773 = vld [vmem:[%s4769 + $0x18] sm:$0xff]
        %v4774 = vld [vmem:[%s4769 + $0x20] sm:$0xff]
        %v4775 = vld [vmem:[%s4769 + $0x28] sm:$0xff]
        %v4776 = vld [vmem:[%s4769 + $0x30] sm:$0xff]
        %v4777 = vld [vmem:[%s4769 + $0x38] sm:$0xff]
        %v4778 = vld [vmem:[%s4769 + $0x40] sm:$0xff]
        %v4779 = vld [vmem:[%s4769 + $0x48] sm:$0xff]
        %v4780 = vld [vmem:[%s4769 + $0x50] sm:$0xff]
        %v4781 = vld [vmem:[%s4769 + $0x58] sm:$0xff]
        %v4782 = vld [vmem:[%s4769 + $0x60] sm:$0xff]
        %v4783 = vld [vmem:[%s4769 + $0x68] sm:$0xff]
        %v4784 = vld [vmem:[%s4769 + $0x70] sm:$0xff]
        %v4785 = vld [vmem:[%s4769 + $0x78] sm:$0xff]
        %4786 = vmatprep.subr.mxu0 0.0
        %4787 = vmatpush1.msra.mxu0 %v4770
        %4788 = vmatprep.subr.mxu0 0.0
        %4789 = vmatpush1.msra.mxu0 %v4771
        %4790 = vmatprep.subr.mxu0 0.0
        %4791 = vmatpush1.msra.mxu0 %v4772
        %4792 = vmatprep.subr.mxu0 0.0
        %4793 = vmatpush1.msra.mxu0 %v4773
        %4794 = vmatprep.subr.mxu0 0.0
        %4795 = vmatpush1.msra.mxu0 %v4774
        %4796 = vmatprep.subr.mxu0 0.0
        %4797 = vmatpush1.msra.mxu0 %v4775
        %4798 = vmatprep.subr.mxu0 0.0
        %4799 = vmatpush1.msra.mxu0 %v4776
        %4800 = vmatprep.subr.mxu0 0.0
        %4801 = vmatpush1.msra.mxu0 %v4777
        %4802 = vmatprep.subr.mxu0 0.0
        %4803 = vmatpush1.msra.mxu0 %v4778
        %4804 = vmatprep.subr.mxu0 0.0
        %4805 = vmatpush1.msra.mxu0 %v4779
        %4806 = vmatprep.subr.mxu0 0.0
        %4807 = vmatpush1.msra.mxu0 %v4780
        %4808 = vmatprep.subr.mxu0 0.0
        %4809 = vmatpush1.msra.mxu0 %v4781
        %4810 = vmatprep.subr.mxu0 0.0
        %4811 = vmatpush1.msra.mxu0 %v4782
        %4812 = vmatprep.subr.mxu0 0.0
        %4813 = vmatpush1.msra.mxu0 %v4783
        %4814 = vmatprep.subr.mxu0 0.0
        %4815 = vmatpush1.msra.mxu0 %v4784
        %4816 = vmatprep.subr.mxu0 0.0
        %4817 = vmatpush1.msra.mxu0 %v4785
        %4818 = vmatprep.subr.mxu0 0.0
        %4819 = vmatpush1.msra.mxu0 0.0
        %4820 = vmatprep.subr.mxu0 0.0
        %4821 = vmatpush1.msra.mxu0 0.0
        %4822 = vmatprep.subr.mxu0 0.0
        %4823 = vmatpush1.msra.mxu0 0.0
        %4824 = vmatprep.subr.mxu0 0.0
        %4825 = vmatpush1.msra.mxu0 0.0
        %4826 = vmatprep.subr.mxu0 0.0
        %4827 = vmatpush1.msra.mxu0 0.0
        %4828 = vmatprep.subr.mxu0 0.0
        %4829 = vmatpush1.msra.mxu0 0.0
        %4830 = vmatprep.subr.mxu0 0.0
        %4831 = vmatpush1.msra.mxu0 0.0
        %4832 = vmatprep.subr.mxu0 0.0
        %4833 = vmatpush1.msra.mxu0 0.0
        %4834 = vmatprep.subr.mxu0 0.0
        %4835 = vmatpush1.msra.mxu0 0.0
        %4836 = vmatprep.subr.mxu0 0.0
        %4837 = vmatpush1.msra.mxu0 0.0
        %4838 = vmatprep.subr.mxu0 0.0
        %4839 = vmatpush1.msra.mxu0 0.0
        %4840 = vmatprep.subr.mxu0 0.0
        %4841 = vmatpush1.msra.mxu0 0.0
        %4842 = vmatprep.subr.mxu0 0.0
        %4843 = vmatpush1.msra.mxu0 0.0
        %4844 = vmatprep.subr.mxu0 0.0
        %4845 = vmatpush1.msra.mxu0 0.0
        %4846 = vmatprep.subr.mxu0 0.0
        %4847 = vmatpush1.msra.mxu0 0.0
        %4848 = vmatprep.subr.mxu0 0.0
        %4849 = vmatpush1.msra.mxu0 0.0
        %4850 = vmatprep.mubr.f32.mxu0 0.0
        %4851 = vmatmul.mubr.f32.gmra.mrb[0].mxu0 %v4768
        %v4852 = vpop.f32.mrb[0].mxu0
        %v4853 = vadd.f32 0.0, %v4852
        %v4854 = vpop.f32.mrb[0].mxu0
        %4855 = vdwg.mxu0
        %v4856 = vadd.f32 %v4767, %v4853
        %v4857 = vld [vmem:[#allocation3 + $0x1c] sm:$0xff]
        %s4858 = scalar_lea.vmem [#allocation13], 768
        %v4859 = vld [vmem:[%s4858] sm:$0xff]
        %v4860 = vld [vmem:[%s4858 + $0x8] sm:$0xff]
        %v4861 = vld [vmem:[%s4858 + $0x10] sm:$0xff]
        %v4862 = vld [vmem:[%s4858 + $0x18] sm:$0xff]
        %v4863 = vld [vmem:[%s4858 + $0x20] sm:$0xff]
        %v4864 = vld [vmem:[%s4858 + $0x28] sm:$0xff]
        %v4865 = vld [vmem:[%s4858 + $0x30] sm:$0xff]
        %v4866 = vld [vmem:[%s4858 + $0x38] sm:$0xff]
        %v4867 = vld [vmem:[%s4858 + $0x40] sm:$0xff]
        %v4868 = vld [vmem:[%s4858 + $0x48] sm:$0xff]
        %v4869 = vld [vmem:[%s4858 + $0x50] sm:$0xff]
        %v4870 = vld [vmem:[%s4858 + $0x58] sm:$0xff]
        %v4871 = vld [vmem:[%s4858 + $0x60] sm:$0xff]
        %v4872 = vld [vmem:[%s4858 + $0x68] sm:$0xff]
        %v4873 = vld [vmem:[%s4858 + $0x70] sm:$0xff]
        %v4874 = vld [vmem:[%s4858 + $0x78] sm:$0xff]
        %4875 = vmatprep.subr.mxu0 0.0
        %4876 = vmatpush1.msra.mxu0 %v4859
        %4877 = vmatprep.subr.mxu0 0.0
        %4878 = vmatpush1.msra.mxu0 %v4860
        %4879 = vmatprep.subr.mxu0 0.0
        %4880 = vmatpush1.msra.mxu0 %v4861
        %4881 = vmatprep.subr.mxu0 0.0
        %4882 = vmatpush1.msra.mxu0 %v4862
        %4883 = vmatprep.subr.mxu0 0.0
        %4884 = vmatpush1.msra.mxu0 %v4863
        %4885 = vmatprep.subr.mxu0 0.0
        %4886 = vmatpush1.msra.mxu0 %v4864
        %4887 = vmatprep.subr.mxu0 0.0
        %4888 = vmatpush1.msra.mxu0 %v4865
        %4889 = vmatprep.subr.mxu0 0.0
        %4890 = vmatpush1.msra.mxu0 %v4866
        %4891 = vmatprep.subr.mxu0 0.0
        %4892 = vmatpush1.msra.mxu0 %v4867
        %4893 = vmatprep.subr.mxu0 0.0
        %4894 = vmatpush1.msra.mxu0 %v4868
        %4895 = vmatprep.subr.mxu0 0.0
        %4896 = vmatpush1.msra.mxu0 %v4869
        %4897 = vmatprep.subr.mxu0 0.0
        %4898 = vmatpush1.msra.mxu0 %v4870
        %4899 = vmatprep.subr.mxu0 0.0
        %4900 = vmatpush1.msra.mxu0 %v4871
        %4901 = vmatprep.subr.mxu0 0.0
        %4902 = vmatpush1.msra.mxu0 %v4872
        %4903 = vmatprep.subr.mxu0 0.0
        %4904 = vmatpush1.msra.mxu0 %v4873
        %4905 = vmatprep.subr.mxu0 0.0
        %4906 = vmatpush1.msra.mxu0 %v4874
        %4907 = vmatprep.subr.mxu0 0.0
        %4908 = vmatpush1.msra.mxu0 0.0
        %4909 = vmatprep.subr.mxu0 0.0
        %4910 = vmatpush1.msra.mxu0 0.0
        %4911 = vmatprep.subr.mxu0 0.0
        %4912 = vmatpush1.msra.mxu0 0.0
        %4913 = vmatprep.subr.mxu0 0.0
        %4914 = vmatpush1.msra.mxu0 0.0
        %4915 = vmatprep.subr.mxu0 0.0
        %4916 = vmatpush1.msra.mxu0 0.0
        %4917 = vmatprep.subr.mxu0 0.0
        %4918 = vmatpush1.msra.mxu0 0.0
        %4919 = vmatprep.subr.mxu0 0.0
        %4920 = vmatpush1.msra.mxu0 0.0
        %4921 = vmatprep.subr.mxu0 0.0
        %4922 = vmatpush1.msra.mxu0 0.0
        %4923 = vmatprep.subr.mxu0 0.0
        %4924 = vmatpush1.msra.mxu0 0.0
        %4925 = vmatprep.subr.mxu0 0.0
        %4926 = vmatpush1.msra.mxu0 0.0
        %4927 = vmatprep.subr.mxu0 0.0
        %4928 = vmatpush1.msra.mxu0 0.0
        %4929 = vmatprep.subr.mxu0 0.0
        %4930 = vmatpush1.msra.mxu0 0.0
        %4931 = vmatprep.subr.mxu0 0.0
        %4932 = vmatpush1.msra.mxu0 0.0
        %4933 = vmatprep.subr.mxu0 0.0
        %4934 = vmatpush1.msra.mxu0 0.0
        %4935 = vmatprep.subr.mxu0 0.0
        %4936 = vmatpush1.msra.mxu0 0.0
        %4937 = vmatprep.subr.mxu0 0.0
        %4938 = vmatpush1.msra.mxu0 0.0
        %4939 = vmatprep.mubr.f32.mxu0 0.0
        %4940 = vmatmul.mubr.f32.gmra.mrb[0].mxu0 %v4857
        %v4941 = vpop.f32.mrb[0].mxu0
        %v4942 = vadd.f32 0.0, %v4941
        %v4943 = vpop.f32.mrb[0].mxu0
        %4944 = vdwg.mxu0
        %v4945 = vadd.f32 %v4856, %v4942
        %v4946 = vld [vmem:[#allocation3 + $0x20] sm:$0xff]
        %s4947 = scalar_lea.vmem [#allocation13], 896
        %v4948 = vld [vmem:[%s4947] sm:$0xff]
        %v4949 = vld [vmem:[%s4947 + $0x8] sm:$0xff]
        %v4950 = vld [vmem:[%s4947 + $0x10] sm:$0xff]
        %v4951 = vld [vmem:[%s4947 + $0x18] sm:$0xff]
        %v4952 = vld [vmem:[%s4947 + $0x20] sm:$0xff]
        %v4953 = vld [vmem:[%s4947 + $0x28] sm:$0xff]
        %v4954 = vld [vmem:[%s4947 + $0x30] sm:$0xff]
        %v4955 = vld [vmem:[%s4947 + $0x38] sm:$0xff]
        %v4956 = vld [vmem:[%s4947 + $0x40] sm:$0xff]
        %v4957 = vld [vmem:[%s4947 + $0x48] sm:$0xff]
        %v4958 = vld [vmem:[%s4947 + $0x50] sm:$0xff]
        %v4959 = vld [vmem:[%s4947 + $0x58] sm:$0xff]
        %v4960 = vld [vmem:[%s4947 + $0x60] sm:$0xff]
        %v4961 = vld [vmem:[%s4947 + $0x68] sm:$0xff]
        %v4962 = vld [vmem:[%s4947 + $0x70] sm:$0xff]
        %v4963 = vld [vmem:[%s4947 + $0x78] sm:$0xff]
        %4964 = vmatprep.subr.mxu0 0.0
        %4965 = vmatpush1.msra.mxu0 %v4948
        %4966 = vmatprep.subr.mxu0 0.0
        %4967 = vmatpush1.msra.mxu0 %v4949
        %4968 = vmatprep.subr.mxu0 0.0
        %4969 = vmatpush1.msra.mxu0 %v4950
        %4970 = vmatprep.subr.mxu0 0.0
        %4971 = vmatpush1.msra.mxu0 %v4951
        %4972 = vmatprep.subr.mxu0 0.0
        %4973 = vmatpush1.msra.mxu0 %v4952
        %4974 = vmatprep.subr.mxu0 0.0
        %4975 = vmatpush1.msra.mxu0 %v4953
        %4976 = vmatprep.subr.mxu0 0.0
        %4977 = vmatpush1.msra.mxu0 %v4954
        %4978 = vmatprep.subr.mxu0 0.0
        %4979 = vmatpush1.msra.mxu0 %v4955
        %4980 = vmatprep.subr.mxu0 0.0
        %4981 = vmatpush1.msra.mxu0 %v4956
        %4982 = vmatprep.subr.mxu0 0.0
        %4983 = vmatpush1.msra.mxu0 %v4957
        %4984 = vmatprep.subr.mxu0 0.0
        %4985 = vmatpush1.msra.mxu0 %v4958
        %4986 = vmatprep.subr.mxu0 0.0
        %4987 = vmatpush1.msra.mxu0 %v4959
        %4988 = vmatprep.subr.mxu0 0.0
        %4989 = vmatpush1.msra.mxu0 %v4960
        %4990 = vmatprep.subr.mxu0 0.0
        %4991 = vmatpush1.msra.mxu0 %v4961
        %4992 = vmatprep.subr.mxu0 0.0
        %4993 = vmatpush1.msra.mxu0 %v4962
        %4994 = vmatprep.subr.mxu0 0.0
        %4995 = vmatpush1.msra.mxu0 %v4963
        %4996 = vmatprep.subr.mxu0 0.0
        %4997 = vmatpush1.msra.mxu0 0.0
        %4998 = vmatprep.subr.mxu0 0.0
        %4999 = vmatpush1.msra.mxu0 0.0
        %5000 = vmatprep.subr.mxu0 0.0
        %5001 = vmatpush1.msra.mxu0 0.0
        %5002 = vmatprep.subr.mxu0 0.0
        %5003 = vmatpush1.msra.mxu0 0.0
        %5004 = vmatprep.subr.mxu0 0.0
        %5005 = vmatpush1.msra.mxu0 0.0
        %5006 = vmatprep.subr.mxu0 0.0
        %5007 = vmatpush1.msra.mxu0 0.0
        %5008 = vmatprep.subr.mxu0 0.0
        %5009 = vmatpush1.msra.mxu0 0.0
        %5010 = vmatprep.subr.mxu0 0.0
        %5011 = vmatpush1.msra.mxu0 0.0
        %5012 = vmatprep.subr.mxu0 0.0
        %5013 = vmatpush1.msra.mxu0 0.0
        %5014 = vmatprep.subr.mxu0 0.0
        %5015 = vmatpush1.msra.mxu0 0.0
        %5016 = vmatprep.subr.mxu0 0.0
        %5017 = vmatpush1.msra.mxu0 0.0
        %5018 = vmatprep.subr.mxu0 0.0
        %5019 = vmatpush1.msra.mxu0 0.0
        %5020 = vmatprep.subr.mxu0 0.0
        %5021 = vmatpush1.msra.mxu0 0.0
        %5022 = vmatprep.subr.mxu0 0.0
        %5023 = vmatpush1.msra.mxu0 0.0
        %5024 = vmatprep.subr.mxu0 0.0
        %5025 = vmatpush1.msra.mxu0 0.0
        %5026 = vmatprep.subr.mxu0 0.0
        %5027 = vmatpush1.msra.mxu0 0.0
        %5028 = vmatprep.mubr.f32.mxu0 0.0
        %5029 = vmatmul.mubr.f32.gmra.mrb[0].mxu0 %v4946
        %v5030 = vpop.f32.mrb[0].mxu0
        %v5031 = vadd.f32 0.0, %v5030
        %v5032 = vpop.f32.mrb[0].mxu0
        %5033 = vdwg.mxu0
        %v5034 = vadd.f32 %v4945, %v5031
        %v5035 = vld [vmem:[#allocation3 + $0x24] sm:$0xff]
        %s5036 = scalar_lea.vmem [#allocation13], 1024
        %v5037 = vld [vmem:[%s5036] sm:$0xff]
        %v5038 = vld [vmem:[%s5036 + $0x8] sm:$0xff]
        %v5039 = vld [vmem:[%s5036 + $0x10] sm:$0xff]
        %v5040 = vld [vmem:[%s5036 + $0x18] sm:$0xff]
        %v5041 = vld [vmem:[%s5036 + $0x20] sm:$0xff]
        %v5042 = vld [vmem:[%s5036 + $0x28] sm:$0xff]
        %v5043 = vld [vmem:[%s5036 + $0x30] sm:$0xff]
        %v5044 = vld [vmem:[%s5036 + $0x38] sm:$0xff]
        %v5045 = vld [vmem:[%s5036 + $0x40] sm:$0xff]
        %v5046 = vld [vmem:[%s5036 + $0x48] sm:$0xff]
        %v5047 = vld [vmem:[%s5036 + $0x50] sm:$0xff]
        %v5048 = vld [vmem:[%s5036 + $0x58] sm:$0xff]
        %v5049 = vld [vmem:[%s5036 + $0x60] sm:$0xff]
        %v5050 = vld [vmem:[%s5036 + $0x68] sm:$0xff]
        %v5051 = vld [vmem:[%s5036 + $0x70] sm:$0xff]
        %v5052 = vld [vmem:[%s5036 + $0x78] sm:$0xff]
        %5053 = vmatprep.subr.mxu0 0.0
        %5054 = vmatpush1.msra.mxu0 %v5037
        %5055 = vmatprep.subr.mxu0 0.0
        %5056 = vmatpush1.msra.mxu0 %v5038
        %5057 = vmatprep.subr.mxu0 0.0
        %5058 = vmatpush1.msra.mxu0 %v5039
        %5059 = vmatprep.subr.mxu0 0.0
        %5060 = vmatpush1.msra.mxu0 %v5040
        %5061 = vmatprep.subr.mxu0 0.0
        %5062 = vmatpush1.msra.mxu0 %v5041
        %5063 = vmatprep.subr.mxu0 0.0
        %5064 = vmatpush1.msra.mxu0 %v5042
        %5065 = vmatprep.subr.mxu0 0.0
        %5066 = vmatpush1.msra.mxu0 %v5043
        %5067 = vmatprep.subr.mxu0 0.0
        %5068 = vmatpush1.msra.mxu0 %v5044
        %5069 = vmatprep.subr.mxu0 0.0
        %5070 = vmatpush1.msra.mxu0 %v5045
        %5071 = vmatprep.subr.mxu0 0.0
        %5072 = vmatpush1.msra.mxu0 %v5046
        %5073 = vmatprep.subr.mxu0 0.0
        %5074 = vmatpush1.msra.mxu0 %v5047
        %5075 = vmatprep.subr.mxu0 0.0
        %5076 = vmatpush1.msra.mxu0 %v5048
        %5077 = vmatprep.subr.mxu0 0.0
        %5078 = vmatpush1.msra.mxu0 %v5049
        %5079 = vmatprep.subr.mxu0 0.0
        %5080 = vmatpush1.msra.mxu0 %v5050
        %5081 = vmatprep.subr.mxu0 0.0
        %5082 = vmatpush1.msra.mxu0 %v5051
        %5083 = vmatprep.subr.mxu0 0.0
        %5084 = vmatpush1.msra.mxu0 %v5052
        %5085 = vmatprep.subr.mxu0 0.0
        %5086 = vmatpush1.msra.mxu0 0.0
        %5087 = vmatprep.subr.mxu0 0.0
        %5088 = vmatpush1.msra.mxu0 0.0
        %5089 = vmatprep.subr.mxu0 0.0
        %5090 = vmatpush1.msra.mxu0 0.0
        %5091 = vmatprep.subr.mxu0 0.0
        %5092 = vmatpush1.msra.mxu0 0.0
        %5093 = vmatprep.subr.mxu0 0.0
        %5094 = vmatpush1.msra.mxu0 0.0
        %5095 = vmatprep.subr.mxu0 0.0
        %5096 = vmatpush1.msra.mxu0 0.0
        %5097 = vmatprep.subr.mxu0 0.0
        %5098 = vmatpush1.msra.mxu0 0.0
        %5099 = vmatprep.subr.mxu0 0.0
        %5100 = vmatpush1.msra.mxu0 0.0
        %5101 = vmatprep.subr.mxu0 0.0
        %5102 = vmatpush1.msra.mxu0 0.0
        %5103 = vmatprep.subr.mxu0 0.0
        %5104 = vmatpush1.msra.mxu0 0.0
        %5105 = vmatprep.subr.mxu0 0.0
        %5106 = vmatpush1.msra.mxu0 0.0
        %5107 = vmatprep.subr.mxu0 0.0
        %5108 = vmatpush1.msra.mxu0 0.0
        %5109 = vmatprep.subr.mxu0 0.0
        %5110 = vmatpush1.msra.mxu0 0.0
        %5111 = vmatprep.subr.mxu0 0.0
        %5112 = vmatpush1.msra.mxu0 0.0
        %5113 = vmatprep.subr.mxu0 0.0
        %5114 = vmatpush1.msra.mxu0 0.0
        %5115 = vmatprep.subr.mxu0 0.0
        %5116 = vmatpush1.msra.mxu0 0.0
        %5117 = vmatprep.mubr.f32.mxu0 0.0
        %5118 = vmatmul.mubr.f32.gmra.mrb[0].mxu0 %v5035
        %v5119 = vpop.f32.mrb[0].mxu0
        %v5120 = vadd.f32 0.0, %v5119
        %v5121 = vpop.f32.mrb[0].mxu0
        %5122 = vdwg.mxu0
        %v5123 = vadd.f32 %v5034, %v5120
        %v5124 = vld [vmem:[#allocation3 + $0x28] sm:$0xff]
        %s5125 = scalar_lea.vmem [#allocation13], 1152
        %v5126 = vld [vmem:[%s5125] sm:$0xff]
        %v5127 = vld [vmem:[%s5125 + $0x8] sm:$0xff]
        %v5128 = vld [vmem:[%s5125 + $0x10] sm:$0xff]
        %v5129 = vld [vmem:[%s5125 + $0x18] sm:$0xff]
        %v5130 = vld [vmem:[%s5125 + $0x20] sm:$0xff]
        %v5131 = vld [vmem:[%s5125 + $0x28] sm:$0xff]
        %v5132 = vld [vmem:[%s5125 + $0x30] sm:$0xff]
        %v5133 = vld [vmem:[%s5125 + $0x38] sm:$0xff]
        %v5134 = vld [vmem:[%s5125 + $0x40] sm:$0xff]
        %v5135 = vld [vmem:[%s5125 + $0x48] sm:$0xff]
        %v5136 = vld [vmem:[%s5125 + $0x50] sm:$0xff]
        %v5137 = vld [vmem:[%s5125 + $0x58] sm:$0xff]
        %v5138 = vld [vmem:[%s5125 + $0x60] sm:$0xff]
        %v5139 = vld [vmem:[%s5125 + $0x68] sm:$0xff]
        %v5140 = vld [vmem:[%s5125 + $0x70] sm:$0xff]
        %v5141 = vld [vmem:[%s5125 + $0x78] sm:$0xff]
        %5142 = vmatprep.subr.mxu0 0.0
        %5143 = vmatpush1.msra.mxu0 %v5126
        %5144 = vmatprep.subr.mxu0 0.0
        %5145 = vmatpush1.msra.mxu0 %v5127
        %5146 = vmatprep.subr.mxu0 0.0
        %5147 = vmatpush1.msra.mxu0 %v5128
        %5148 = vmatprep.subr.mxu0 0.0
        %5149 = vmatpush1.msra.mxu0 %v5129
        %5150 = vmatprep.subr.mxu0 0.0
        %5151 = vmatpush1.msra.mxu0 %v5130
        %5152 = vmatprep.subr.mxu0 0.0
        %5153 = vmatpush1.msra.mxu0 %v5131
        %5154 = vmatprep.subr.mxu0 0.0
        %5155 = vmatpush1.msra.mxu0 %v5132
        %5156 = vmatprep.subr.mxu0 0.0
        %5157 = vmatpush1.msra.mxu0 %v5133
        %5158 = vmatprep.subr.mxu0 0.0
        %5159 = vmatpush1.msra.mxu0 %v5134
        %5160 = vmatprep.subr.mxu0 0.0
        %5161 = vmatpush1.msra.mxu0 %v5135
        %5162 = vmatprep.subr.mxu0 0.0
        %5163 = vmatpush1.msra.mxu0 %v5136
        %5164 = vmatprep.subr.mxu0 0.0
        %5165 = vmatpush1.msra.mxu0 %v5137
        %5166 = vmatprep.subr.mxu0 0.0
        %5167 = vmatpush1.msra.mxu0 %v5138
        %5168 = vmatprep.subr.mxu0 0.0
        %5169 = vmatpush1.msra.mxu0 %v5139
        %5170 = vmatprep.subr.mxu0 0.0
        %5171 = vmatpush1.msra.mxu0 %v5140
        %5172 = vmatprep.subr.mxu0 0.0
        %5173 = vmatpush1.msra.mxu0 %v5141
        %5174 = vmatprep.subr.mxu0 0.0
        %5175 = vmatpush1.msra.mxu0 0.0
        %5176 = vmatprep.subr.mxu0 0.0
        %5177 = vmatpush1.msra.mxu0 0.0
        %5178 = vmatprep.subr.mxu0 0.0
        %5179 = vmatpush1.msra.mxu0 0.0
        %5180 = vmatprep.subr.mxu0 0.0
        %5181 = vmatpush1.msra.mxu0 0.0
        %5182 = vmatprep.subr.mxu0 0.0
        %5183 = vmatpush1.msra.mxu0 0.0
        %5184 = vmatprep.subr.mxu0 0.0
        %5185 = vmatpush1.msra.mxu0 0.0
        %5186 = vmatprep.subr.mxu0 0.0
        %5187 = vmatpush1.msra.mxu0 0.0
        %5188 = vmatprep.subr.mxu0 0.0
        %5189 = vmatpush1.msra.mxu0 0.0
        %5190 = vmatprep.subr.mxu0 0.0
        %5191 = vmatpush1.msra.mxu0 0.0
        %5192 = vmatprep.subr.mxu0 0.0
        %5193 = vmatpush1.msra.mxu0 0.0
        %5194 = vmatprep.subr.mxu0 0.0
        %5195 = vmatpush1.msra.mxu0 0.0
        %5196 = vmatprep.subr.mxu0 0.0
        %5197 = vmatpush1.msra.mxu0 0.0
        %5198 = vmatprep.subr.mxu0 0.0
        %5199 = vmatpush1.msra.mxu0 0.0
        %5200 = vmatprep.subr.mxu0 0.0
        %5201 = vmatpush1.msra.mxu0 0.0
        %5202 = vmatprep.subr.mxu0 0.0
        %5203 = vmatpush1.msra.mxu0 0.0
        %5204 = vmatprep.subr.mxu0 0.0
        %5205 = vmatpush1.msra.mxu0 0.0
        %5206 = vmatprep.mubr.f32.mxu0 0.0
        %5207 = vmatmul.mubr.f32.gmra.mrb[0].mxu0 %v5124
        %v5208 = vpop.f32.mrb[0].mxu0
        %v5209 = vadd.f32 0.0, %v5208
        %v5210 = vpop.f32.mrb[0].mxu0
        %5211 = vdwg.mxu0
        %v5212 = vadd.f32 %v5123, %v5209
        %v5213 = vld [vmem:[%s41] sm:$0x1]
        %v5215 = vlaneseq
        %v5216 = vshrl.u32 %v5215, 7
        %v5217 = vsub.s32 0, %v5216
        %v5218 = vrot.slane %v5213, %v5217
        %v5220 = vadd.f32 %v5212, %v5218
        %v5221 = vrot.slane %v4105, 7
        %v5222 = vsel %vm2505, %v4105, %v5221
        %vm5223 = vcmp.eq.s32.totalorder %v2501, 7
        %v5224 = vrot.slane %v4105, 1
        %v5225 = vsel %vm5223, %v4105, %v5224
        %v5226 = vmax.f32 %v5222, %v5225
        %v5227 = vmax.f32 %v4105, %v5226
        %v5228 = vld [vmem:[#allocation15] sm:$0xff]
        %v5229 = vld [vmem:[#allocation15 + $0x8] sm:$0xff]
        %v5230 = vld [vmem:[#allocation15 + $0x10] sm:$0xff]
        %v5231 = vld [vmem:[#allocation15 + $0x18] sm:$0xff]
        %v5232 = vld [vmem:[#allocation15 + $0x20] sm:$0xff]
        %v5233 = vld [vmem:[#allocation15 + $0x28] sm:$0xff]
        %v5234 = vld [vmem:[#allocation15 + $0x30] sm:$0xff]
        %v5235 = vld [vmem:[#allocation15 + $0x38] sm:$0xff]
        %v5236 = vld [vmem:[#allocation15 + $0x40] sm:$0xff]
        %v5237 = vld [vmem:[#allocation15 + $0x48] sm:$0xff]
        %v5238 = vld [vmem:[#allocation15 + $0x50] sm:$0xff]
        %v5239 = vld [vmem:[#allocation15 + $0x58] sm:$0xff]
        %v5240 = vld [vmem:[#allocation15 + $0x60] sm:$0xff]
        %v5241 = vld [vmem:[#allocation15 + $0x68] sm:$0xff]
        %v5242 = vld [vmem:[#allocation15 + $0x70] sm:$0xff]
        %v5243 = vld [vmem:[#allocation15 + $0x78] sm:$0xff]
        %v5244 = vld [vmem:[%s45] sm:$0x1]
        %v5246 = vlaneseq
        %v5247 = vshrl.u32 %v5246, 7
        %v5248 = vsub.s32 0, %v5247
        %v5249 = vrot.slane %v5244, %v5248
        %5251 = vmatprep.subr.mxu0 0.0
        %5252 = vmatpush1.msra.mxu0 %v5228
        %5253 = vmatprep.subr.mxu0 0.0
        %5254 = vmatpush1.msra.mxu0 %v5229
        %5255 = vmatprep.subr.mxu0 0.0
        %5256 = vmatpush1.msra.mxu0 %v5230
        %5257 = vmatprep.subr.mxu0 0.0
        %5258 = vmatpush1.msra.mxu0 %v5231
        %5259 = vmatprep.subr.mxu0 0.0
        %5260 = vmatpush1.msra.mxu0 %v5232
        %5261 = vmatprep.subr.mxu0 0.0
        %5262 = vmatpush1.msra.mxu0 %v5233
        %5263 = vmatprep.subr.mxu0 0.0
        %5264 = vmatpush1.msra.mxu0 %v5234
        %5265 = vmatprep.subr.mxu0 0.0
        %5266 = vmatpush1.msra.mxu0 %v5235
        %5267 = vmatprep.subr.mxu0 0.0
        %5268 = vmatpush1.msra.mxu0 %v5236
        %5269 = vmatprep.subr.mxu0 0.0
        %5270 = vmatpush1.msra.mxu0 %v5237
        %5271 = vmatprep.subr.mxu0 0.0
        %5272 = vmatpush1.msra.mxu0 %v5238
        %5273 = vmatprep.subr.mxu0 0.0
        %5274 = vmatpush1.msra.mxu0 %v5239
        %5275 = vmatprep.subr.mxu0 0.0
        %5276 = vmatpush1.msra.mxu0 %v5240
        %5277 = vmatprep.subr.mxu0 0.0
        %5278 = vmatpush1.msra.mxu0 %v5241
        %5279 = vmatprep.subr.mxu0 0.0
        %5280 = vmatpush1.msra.mxu0 %v5242
        %5281 = vmatprep.subr.mxu0 0.0
        %5282 = vmatpush1.msra.mxu0 %v5243
        %5283 = vmatprep.subr.mxu0 0.0
        %5284 = vmatpush1.msra.mxu0 0.0
        %5285 = vmatprep.subr.mxu0 0.0
        %5286 = vmatpush1.msra.mxu0 0.0
        %5287 = vmatprep.subr.mxu0 0.0
        %5288 = vmatpush1.msra.mxu0 0.0
        %5289 = vmatprep.subr.mxu0 0.0
        %5290 = vmatpush1.msra.mxu0 0.0
        %5291 = vmatprep.subr.mxu0 0.0
        %5292 = vmatpush1.msra.mxu0 0.0
        %5293 = vmatprep.subr.mxu0 0.0
        %5294 = vmatpush1.msra.mxu0 0.0
        %5295 = vmatprep.subr.mxu0 0.0
        %5296 = vmatpush1.msra.mxu0 0.0
        %5297 = vmatprep.subr.mxu0 0.0
        %5298 = vmatpush1.msra.mxu0 0.0
        %5299 = vmatprep.subr.mxu0 0.0
        %5300 = vmatpush1.msra.mxu0 0.0
        %5301 = vmatprep.subr.mxu0 0.0
        %5302 = vmatpush1.msra.mxu0 0.0
        %5303 = vmatprep.subr.mxu0 0.0
        %5304 = vmatpush1.msra.mxu0 0.0
        %5305 = vmatprep.subr.mxu0 0.0
        %5306 = vmatpush1.msra.mxu0 0.0
        %5307 = vmatprep.subr.mxu0 0.0
        %5308 = vmatpush1.msra.mxu0 0.0
        %5309 = vmatprep.subr.mxu0 0.0
        %5310 = vmatpush1.msra.mxu0 0.0
        %5311 = vmatprep.subr.mxu0 0.0
        %5312 = vmatpush1.msra.mxu0 0.0
        %5313 = vmatprep.subr.mxu0 0.0
        %5314 = vmatpush1.msra.mxu0 0.0
        %5315 = vmatprep.mubr.f32.mxu0 0.0
        %5316 = vmatmul.mubr.f32.gmra.mrb[0].mxu0 %v5227
        %v5317 = vpop.f32.mrb[0].mxu0
        %v5318 = vadd.f32 %v5249, %v5317
        %v5319 = vpop.f32.mrb[0].mxu0
        %5320 = vdwg.mxu0
        %v5321 = vld [vmem:[%s47] sm:$0x1]
        %v5322 = vld [vmem:[%s49] sm:$0x1]
        %v5324 = vlaneseq
        %v5325 = vshrl.u32 %v5324, 7
        %v5326 = vsub.s32 0, %v5325
        %v5327 = vrot.slane %v5321, %v5326
        %v5329 = vmul.f32 %v5220, %v5327
        %v5331 = vlaneseq
        %v5332 = vshrl.u32 %v5331, 7
        %v5333 = vsub.s32 0, %v5332
        %v5334 = vrot.slane %v5322, %v5333
        %v5336 = vadd.f32 %v5329, %v5334
        %v5337 = vmax.f32 %v5336, 0.0
        %5338 = vst.msk [vmem:[#allocation4] sm:$0xff] %vm2681, %v5337
        %5339 = vrot.lane.b32.xlu0 %v5327, 32
        %v5340 = vpop.permute.xlu0 %5339
        %v5342 = vmul.f32 %v5318, %v5340
        %5343 = vrot.lane.b32.xlu0 %v5334, 32
        %v5344 = vpop.permute.xlu0 %5343
        %v5346 = vadd.f32 %v5342, %v5344
        %v5347 = vmax.f32 %v5346, 0.0
        %5349 = vrot.lane.b32.xlu0 %v5347, 96
        %v5350 = vpop.permute.xlu0 %5349
        %5352 = vst.msk [vmem:[#allocation4] sm:$0xff] %vm1388, %v5350
        %v5353 = vld [vmem:[#allocation4] ss:$2 sm:$0xf]
        %v5354 = vld [vmem:[%s2727] ss:$2 sm:$0xf]
        %v5355 = vmax.f32 %v5353, %v5354
        %v5356 = vld [vmem:[#allocation16] sm:$0xff]
        %v5357 = vld [vmem:[#allocation16 + $0x8] sm:$0xff]
        %v5358 = vld [vmem:[#allocation16 + $0x10] sm:$0xff]
        %v5359 = vld [vmem:[#allocation16 + $0x18] sm:$0xff]
        %v5360 = vld [vmem:[#allocation16 + $0x20] sm:$0xff]
        %v5361 = vld [vmem:[#allocation16 + $0x28] sm:$0xff]
        %v5362 = vld [vmem:[#allocation16 + $0x30] sm:$0xff]
        %v5363 = vld [vmem:[#allocation16 + $0x38] sm:$0xff]
        %v5364 = vld [vmem:[#allocation16 + $0x40] sm:$0xff]
        %v5365 = vld [vmem:[#allocation16 + $0x48] sm:$0xff]
        %v5366 = vld [vmem:[#allocation16 + $0x50] sm:$0xff]
        %v5367 = vld [vmem:[#allocation16 + $0x58] sm:$0xff]
        %v5368 = vld [vmem:[#allocation16 + $0x60] sm:$0xff]
        %v5369 = vld [vmem:[#allocation16 + $0x68] sm:$0xff]
        %v5370 = vld [vmem:[#allocation16 + $0x70] sm:$0xff]
        %v5371 = vld [vmem:[#allocation16 + $0x78] sm:$0xff]
        %v5372 = vld [vmem:[#allocation16 + $0x80] sm:$0xff]
        %v5373 = vld [vmem:[#allocation16 + $0x88] sm:$0xff]
        %v5374 = vld [vmem:[#allocation16 + $0x90] sm:$0xff]
        %v5375 = vld [vmem:[#allocation16 + $0x98] sm:$0xff]
        %v5376 = vld [vmem:[#allocation16 + $0xa0] sm:$0xff]
        %v5377 = vld [vmem:[#allocation16 + $0xa8] sm:$0xff]
        %v5378 = vld [vmem:[#allocation16 + $0xb0] sm:$0xff]
        %v5379 = vld [vmem:[#allocation16 + $0xb8] sm:$0xff]
        %v5380 = vld [vmem:[#allocation16 + $0xc0] sm:$0xff]
        %v5381 = vld [vmem:[#allocation16 + $0xc8] sm:$0xff]
        %v5382 = vld [vmem:[#allocation16 + $0xd0] sm:$0xff]
        %v5383 = vld [vmem:[#allocation16 + $0xd8] sm:$0xff]
        %v5384 = vld [vmem:[#allocation16 + $0xe0] sm:$0xff]
        %v5385 = vld [vmem:[#allocation16 + $0xe8] sm:$0xff]
        %v5386 = vld [vmem:[#allocation16 + $0xf0] sm:$0xff]
        %v5387 = vld [vmem:[#allocation16 + $0xf8] sm:$0xff]
        %5388 = vmatprep.subr.mxu0 %v5357
        %5389 = vmatpush1.msra.mxu0 %v5356
        %5390 = vmatprep.subr.mxu0 %v5359
        %5391 = vmatpush1.msra.mxu0 %v5358
        %5392 = vmatprep.subr.mxu0 %v5361
        %5393 = vmatpush1.msra.mxu0 %v5360
        %5394 = vmatprep.subr.mxu0 %v5363
        %5395 = vmatpush1.msra.mxu0 %v5362
        %5396 = vmatprep.subr.mxu0 %v5365
        %5397 = vmatpush1.msra.mxu0 %v5364
        %5398 = vmatprep.subr.mxu0 %v5367
        %5399 = vmatpush1.msra.mxu0 %v5366
        %5400 = vmatprep.subr.mxu0 %v5369
        %5401 = vmatpush1.msra.mxu0 %v5368
        %5402 = vmatprep.subr.mxu0 %v5371
        %5403 = vmatpush1.msra.mxu0 %v5370
        %5404 = vmatprep.subr.mxu0 %v5373
        %5405 = vmatpush1.msra.mxu0 %v5372
        %5406 = vmatprep.subr.mxu0 %v5375
        %5407 = vmatpush1.msra.mxu0 %v5374
        %5408 = vmatprep.subr.mxu0 %v5377
        %5409 = vmatpush1.msra.mxu0 %v5376
        %5410 = vmatprep.subr.mxu0 %v5379
        %5411 = vmatpush1.msra.mxu0 %v5378
        %5412 = vmatprep.subr.mxu0 %v5381
        %5413 = vmatpush1.msra.mxu0 %v5380
        %5414 = vmatprep.subr.mxu0 %v5383
        %5415 = vmatpush1.msra.mxu0 %v5382
        %5416 = vmatprep.subr.mxu0 %v5385
        %5417 = vmatpush1.msra.mxu0 %v5384
        %5418 = vmatprep.subr.mxu0 %v5387
        %5419 = vmatpush1.msra.mxu0 %v5386
        %5420 = vmatprep.subr.mxu0 0.0
        %5421 = vmatpush1.msra.mxu0 0.0
        %5422 = vmatprep.subr.mxu0 0.0
        %5423 = vmatpush1.msra.mxu0 0.0
        %5424 = vmatprep.subr.mxu0 0.0
        %5425 = vmatpush1.msra.mxu0 0.0
        %5426 = vmatprep.subr.mxu0 0.0
        %5427 = vmatpush1.msra.mxu0 0.0
        %5428 = vmatprep.subr.mxu0 0.0
        %5429 = vmatpush1.msra.mxu0 0.0
        %5430 = vmatprep.subr.mxu0 0.0
        %5431 = vmatpush1.msra.mxu0 0.0
        %5432 = vmatprep.subr.mxu0 0.0
        %5433 = vmatpush1.msra.mxu0 0.0
        %5434 = vmatprep.subr.mxu0 0.0
        %5435 = vmatpush1.msra.mxu0 0.0
        %5436 = vmatprep.subr.mxu0 0.0
        %5437 = vmatpush1.msra.mxu0 0.0
        %5438 = vmatprep.subr.mxu0 0.0
        %5439 = vmatpush1.msra.mxu0 0.0
        %5440 = vmatprep.subr.mxu0 0.0
        %5441 = vmatpush1.msra.mxu0 0.0
        %5442 = vmatprep.subr.mxu0 0.0
        %5443 = vmatpush1.msra.mxu0 0.0
        %5444 = vmatprep.subr.mxu0 0.0
        %5445 = vmatpush1.msra.mxu0 0.0
        %5446 = vmatprep.subr.mxu0 0.0
        %5447 = vmatpush1.msra.mxu0 0.0
        %5448 = vmatprep.subr.mxu0 0.0
        %5449 = vmatpush1.msra.mxu0 0.0
        %5450 = vmatprep.subr.mxu0 0.0
        %5451 = vmatpush1.msra.mxu0 0.0
        %5452 = vmatprep.mubr.f32.mxu0 0.0
        %5453 = vmatmul.mubr.f32.gmra.mrb[0].mxu0 %v5355
        %v5454 = vpop.f32.mrb[0].mxu0
        %v5455 = vadd.f32 0.0, %v5454
        %v5456 = vpop.f32.mrb[0].mxu0
        %v5457 = vadd.f32 0.0, %v5456
        %5458 = vdwg.mxu0
        %v5459 = vld [vmem:[%s53] sm:$0x1]
        %v5461 = vlaneseq
        %v5462 = vshrl.u32 %v5461, 7
        %v5463 = vsub.s32 0, %v5462
        %v5464 = vrot.slane %v5459, %v5463
        %v5466 = vadd.f32 %v5455, %v5464
        %v5467 = vmax.f32 %v5466, 0.0
        %5468 = vst [vmem:[#allocation4] sm:$0xf] %v5467
        %v5469 = vadd.f32 %v5457, %v5464
        %v5470 = vmax.f32 %v5469, 0.0
        %5471 = vst [vmem:[#allocation4 + $0x4] sm:$0xf] %v5470
        %v5472 = vld [vmem:[#allocation4] sm:$0xff]
        %v5473 = vld [vmem:[#allocation18] sm:$0xff]
        %v5474 = vld [vmem:[#allocation18 + $0x8] sm:$0xff]
        %v5475 = vld [vmem:[#allocation18 + $0x10] sm:$0xff]
        %v5476 = vld [vmem:[#allocation18 + $0x18] sm:$0xff]
        %v5477 = vld [vmem:[#allocation18 + $0x20] sm:$0xff]
        %v5478 = vld [vmem:[#allocation18 + $0x28] sm:$0xff]
        %v5479 = vld [vmem:[#allocation18 + $0x30] sm:$0xff]
        %v5480 = vld [vmem:[#allocation18 + $0x38] sm:$0xff]
        %v5481 = vld [vmem:[#allocation18 + $0x40] sm:$0xff]
        %v5482 = vld [vmem:[#allocation18 + $0x48] sm:$0xff]
        %v5483 = vld [vmem:[#allocation18 + $0x50] sm:$0xff]
        %v5484 = vld [vmem:[#allocation18 + $0x58] sm:$0xff]
        %v5485 = vld [vmem:[#allocation18 + $0x60] sm:$0xff]
        %v5486 = vld [vmem:[#allocation18 + $0x68] sm:$0xff]
        %v5487 = vld [vmem:[#allocation18 + $0x70] sm:$0xff]
        %v5488 = vld [vmem:[#allocation18 + $0x78] sm:$0xff]
        %v5489 = vld [vmem:[#allocation18 + $0x80] sm:$0xff]
        %v5490 = vld [vmem:[#allocation18 + $0x88] sm:$0xff]
        %v5491 = vld [vmem:[#allocation18 + $0x90] sm:$0xff]
        %v5492 = vld [vmem:[#allocation18 + $0x98] sm:$0xff]
        %v5493 = vld [vmem:[#allocation18 + $0xa0] sm:$0xff]
        %v5494 = vld [vmem:[#allocation18 + $0xa8] sm:$0xff]
        %v5495 = vld [vmem:[#allocation18 + $0xb0] sm:$0xff]
        %v5496 = vld [vmem:[#allocation18 + $0xb8] sm:$0xff]
        %v5497 = vld [vmem:[#allocation18 + $0xc0] sm:$0xff]
        %v5498 = vld [vmem:[#allocation18 + $0xc8] sm:$0xff]
        %v5499 = vld [vmem:[#allocation18 + $0xd0] sm:$0xff]
        %v5500 = vld [vmem:[#allocation18 + $0xd8] sm:$0xff]
        %v5501 = vld [vmem:[#allocation18 + $0xe0] sm:$0xff]
        %v5502 = vld [vmem:[#allocation18 + $0xe8] sm:$0xff]
        %v5503 = vld [vmem:[#allocation18 + $0xf0] sm:$0xff]
        %v5504 = vld [vmem:[#allocation18 + $0xf8] sm:$0xff]
        %5505 = vmatprep.subr.mxu0 %v5474
        %5506 = vmatpush1.msra.mxu0 %v5473
        %5507 = vmatprep.subr.mxu0 %v5476
        %5508 = vmatpush1.msra.mxu0 %v5475
        %5509 = vmatprep.subr.mxu0 %v5478
        %5510 = vmatpush1.msra.mxu0 %v5477
        %5511 = vmatprep.subr.mxu0 %v5480
        %5512 = vmatpush1.msra.mxu0 %v5479
        %5513 = vmatprep.subr.mxu0 %v5482
        %5514 = vmatpush1.msra.mxu0 %v5481
        %5515 = vmatprep.subr.mxu0 %v5484
        %5516 = vmatpush1.msra.mxu0 %v5483
        %5517 = vmatprep.subr.mxu0 %v5486
        %5518 = vmatpush1.msra.mxu0 %v5485
        %5519 = vmatprep.subr.mxu0 %v5488
        %5520 = vmatpush1.msra.mxu0 %v5487
        %5521 = vmatprep.subr.mxu0 %v5490
        %5522 = vmatpush1.msra.mxu0 %v5489
        %5523 = vmatprep.subr.mxu0 %v5492
        %5524 = vmatpush1.msra.mxu0 %v5491
        %5525 = vmatprep.subr.mxu0 %v5494
        %5526 = vmatpush1.msra.mxu0 %v5493
        %5527 = vmatprep.subr.mxu0 %v5496
        %5528 = vmatpush1.msra.mxu0 %v5495
        %5529 = vmatprep.subr.mxu0 %v5498
        %5530 = vmatpush1.msra.mxu0 %v5497
        %5531 = vmatprep.subr.mxu0 %v5500
        %5532 = vmatpush1.msra.mxu0 %v5499
        %5533 = vmatprep.subr.mxu0 %v5502
        %5534 = vmatpush1.msra.mxu0 %v5501
        %5535 = vmatprep.subr.mxu0 %v5504
        %5536 = vmatpush1.msra.mxu0 %v5503
        %5537 = vmatprep.subr.mxu0 0.0
        %5538 = vmatpush1.msra.mxu0 0.0
        %5539 = vmatprep.subr.mxu0 0.0
        %5540 = vmatpush1.msra.mxu0 0.0
        %5541 = vmatprep.subr.mxu0 0.0
        %5542 = vmatpush1.msra.mxu0 0.0
        %5543 = vmatprep.subr.mxu0 0.0
        %5544 = vmatpush1.msra.mxu0 0.0
        %5545 = vmatprep.subr.mxu0 0.0
        %5546 = vmatpush1.msra.mxu0 0.0
        %5547 = vmatprep.subr.mxu0 0.0
        %5548 = vmatpush1.msra.mxu0 0.0
        %5549 = vmatprep.subr.mxu0 0.0
        %5550 = vmatpush1.msra.mxu0 0.0
        %5551 = vmatprep.subr.mxu0 0.0
        %5552 = vmatpush1.msra.mxu0 0.0
        %5553 = vmatprep.subr.mxu0 0.0
        %5554 = vmatpush1.msra.mxu0 0.0
        %5555 = vmatprep.subr.mxu0 0.0
        %5556 = vmatpush1.msra.mxu0 0.0
        %5557 = vmatprep.subr.mxu0 0.0
        %5558 = vmatpush1.msra.mxu0 0.0
        %5559 = vmatprep.subr.mxu0 0.0
        %5560 = vmatpush1.msra.mxu0 0.0
        %5561 = vmatprep.subr.mxu0 0.0
        %5562 = vmatpush1.msra.mxu0 0.0
        %5563 = vmatprep.subr.mxu0 0.0
        %5564 = vmatpush1.msra.mxu0 0.0
        %5565 = vmatprep.subr.mxu0 0.0
        %5566 = vmatpush1.msra.mxu0 0.0
        %5567 = vmatprep.subr.mxu0 0.0
        %5568 = vmatpush1.msra.mxu0 0.0
        %5569 = vmatprep.mubr.f32.mxu0 0.0
        %5570 = vmatmul.mubr.f32.gmra.mrb[0].mxu0 %v5472
        %v5571 = vpop.f32.mrb[0].mxu0
        %v5572 = vadd.f32 0.0, %v5571
        %v5573 = vpop.f32.mrb[0].mxu0
        %v5574 = vadd.f32 0.0, %v5573
        %5575 = vdwg.mxu0
        %v5576 = vld [vmem:[%s57] sm:$0x1]
        %v5578 = vlaneseq
        %v5579 = vshrl.u32 %v5578, 7
        %v5580 = vsub.s32 0, %v5579
        %v5581 = vrot.slane %v5576, %v5580
        %v5583 = vadd.f32 %v5572, %v5581
        %v5584 = vmax.f32 %v5583, 0.0
        %5585 = vst [vmem:[#allocation4] sm:$0xff] %v5584
        %v5586 = vadd.f32 %v5574, %v5581
        %v5587 = vmax.f32 %v5586, 0.0
        %5588 = vst [vmem:[#allocation4 + $0x8] sm:$0xff] %v5587
        %v5589 = vld [vmem:[#allocation4] sm:$0xff]
        %v5590 = vld [vmem:[#allocation4 + $0x8] sm:$0xff]
        %v5591 = vld [vmem:[%s59] sm:$0xff]
        %v5592 = vld [vmem:[%s59 + $0x8] sm:$0xff]
        %v5593 = vld [vmem:[%s59 + $0x10] sm:$0xff]
        %v5594 = vld [vmem:[%s59 + $0x18] sm:$0xff]
        %v5595 = vld [vmem:[%s59 + $0x20] sm:$0xff]
        %v5596 = vld [vmem:[%s59 + $0x28] sm:$0xff]
        %v5597 = vld [vmem:[%s59 + $0x30] sm:$0xff]
        %v5598 = vld [vmem:[%s59 + $0x38] sm:$0xff]
        %v5599 = vld [vmem:[%s59 + $0x40] sm:$0xff]
        %v5600 = vld [vmem:[%s59 + $0x48] sm:$0xff]
        %v5601 = vld [vmem:[%s59 + $0x50] sm:$0xff]
        %v5602 = vld [vmem:[%s59 + $0x58] sm:$0xff]
        %v5603 = vld [vmem:[%s59 + $0x60] sm:$0xff]
        %v5604 = vld [vmem:[%s59 + $0x68] sm:$0xff]
        %v5605 = vld [vmem:[%s59 + $0x70] sm:$0xff]
        %v5606 = vld [vmem:[%s59 + $0x78] sm:$0xff]
        %5607 = vmatprep.subr.mxu0 0.0
        %5608 = vmatpush1.msra.mxu0 %v5591
        %5609 = vmatprep.subr.mxu0 0.0
        %5610 = vmatpush1.msra.mxu0 %v5592
        %5611 = vmatprep.subr.mxu0 0.0
        %5612 = vmatpush1.msra.mxu0 %v5593
        %5613 = vmatprep.subr.mxu0 0.0
        %5614 = vmatpush1.msra.mxu0 %v5594
        %5615 = vmatprep.subr.mxu0 0.0
        %5616 = vmatpush1.msra.mxu0 %v5595
        %5617 = vmatprep.subr.mxu0 0.0
        %5618 = vmatpush1.msra.mxu0 %v5596
        %5619 = vmatprep.subr.mxu0 0.0
        %5620 = vmatpush1.msra.mxu0 %v5597
        %5621 = vmatprep.subr.mxu0 0.0
        %5622 = vmatpush1.msra.mxu0 %v5598
        %5623 = vmatprep.subr.mxu0 0.0
        %5624 = vmatpush1.msra.mxu0 %v5599
        %5625 = vmatprep.subr.mxu0 0.0
        %5626 = vmatpush1.msra.mxu0 %v5600
        %5627 = vmatprep.subr.mxu0 0.0
        %5628 = vmatpush1.msra.mxu0 %v5601
        %5629 = vmatprep.subr.mxu0 0.0
        %5630 = vmatpush1.msra.mxu0 %v5602
        %5631 = vmatprep.subr.mxu0 0.0
        %5632 = vmatpush1.msra.mxu0 %v5603
        %5633 = vmatprep.subr.mxu0 0.0
        %5634 = vmatpush1.msra.mxu0 %v5604
        %5635 = vmatprep.subr.mxu0 0.0
        %5636 = vmatpush1.msra.mxu0 %v5605
        %5637 = vmatprep.subr.mxu0 0.0
        %5638 = vmatpush1.msra.mxu0 %v5606
        %5639 = vmatprep.subr.mxu0 0.0
        %5640 = vmatpush1.msra.mxu0 0.0
        %5641 = vmatprep.subr.mxu0 0.0
        %5642 = vmatpush1.msra.mxu0 0.0
        %5643 = vmatprep.subr.mxu0 0.0
        %5644 = vmatpush1.msra.mxu0 0.0
        %5645 = vmatprep.subr.mxu0 0.0
        %5646 = vmatpush1.msra.mxu0 0.0
        %5647 = vmatprep.subr.mxu0 0.0
        %5648 = vmatpush1.msra.mxu0 0.0
        %5649 = vmatprep.subr.mxu0 0.0
        %5650 = vmatpush1.msra.mxu0 0.0
        %5651 = vmatprep.subr.mxu0 0.0
        %5652 = vmatpush1.msra.mxu0 0.0
        %5653 = vmatprep.subr.mxu0 0.0
        %5654 = vmatpush1.msra.mxu0 0.0
        %5655 = vmatprep.subr.mxu0 0.0
        %5656 = vmatpush1.msra.mxu0 0.0
        %5657 = vmatprep.subr.mxu0 0.0
        %5658 = vmatpush1.msra.mxu0 0.0
        %5659 = vmatprep.subr.mxu0 0.0
        %5660 = vmatpush1.msra.mxu0 0.0
        %5661 = vmatprep.subr.mxu0 0.0
        %5662 = vmatpush1.msra.mxu0 0.0
        %5663 = vmatprep.subr.mxu0 0.0
        %5664 = vmatpush1.msra.mxu0 0.0
        %5665 = vmatprep.subr.mxu0 0.0
        %5666 = vmatpush1.msra.mxu0 0.0
        %5667 = vmatprep.subr.mxu0 0.0
        %5668 = vmatpush1.msra.mxu0 0.0
        %5669 = vmatprep.subr.mxu0 0.0
        %5670 = vmatpush1.msra.mxu0 0.0
        %5671 = vmatprep.mubr.f32.mxu0 0.0
        %5672 = vmatmul.mubr.f32.gmra.mrb[0].mxu0 %v5589
        %v5673 = vpop.f32.mrb[0].mxu0
        %v5674 = vadd.f32 0.0, %v5673
        %v5675 = vpop.f32.mrb[0].mxu0
        %5676 = vmatprep.mubr.f32.mxu0 0.0
        %5677 = vmatmul.mubr.f32.gmra.mrb[0].mxu0 %v5590
        %v5678 = vpop.f32.mrb[0].mxu0
        %v5679 = vadd.f32 0.0, %v5678
        %v5680 = vpop.f32.mrb[0].mxu0
        %5681 = vdwg.mxu0
        %v5682 = vld [vmem:[%s61] sm:$0x1]
        %v5684 = vlaneseq
        %v5685 = vshrl.u32 %v5684, 7
        %v5686 = vsub.s32 0, %v5685
        %v5687 = vrot.slane %v5682, %v5686
        %v5689 = vadd.f32 %v5674, %v5687
        %v5690 = vadd.f32 %v5679, %v5687
        %v5691 = vmax.f32 %v5689, 0.0
        %v5692 = vmax.f32 %v5690, 0.0
        %5693 = vst.msk [vmem:[#allocation4] sm:$0xff] %vm1102, %v5691
        %5694 = vst.msk [vmem:[#allocation4 + $0x8] sm:$0xff] %vm1102, %v5692
        %5695 = vrot.lane.b32.xlu0 %v5687, 4
        %v5696 = vpop.permute.xlu0 %5695
        %v5698 = vadd.f32 %v5674, %v5696
        %v5699 = vadd.f32 %v5679, %v5696
        %v5700 = vmax.f32 %v5698, 0.0
        %v5701 = vmax.f32 %v5699, 0.0
        %5704 = vrot.lane.b32.xlu0 %v5700, 124
        %v5705 = vpop.permute.xlu0 %5704
        %5706 = vrot.lane.b32.xlu0 %v5701, 124
        %v5707 = vpop.permute.xlu0 %5706
        %5710 = vst.msk [vmem:[#allocation4 + $0x10] sm:$0xff] %vm1102, %v5705
        %5711 = vst.msk [vmem:[#allocation4 + $0x18] sm:$0xff] %vm1102, %v5707
        %v5712 = vld [vmem:[#allocation4] sm:$0xff]
        %v5713 = vld [vmem:[#allocation4 + $0x8] sm:$0xff]
        %v5714 = vld [vmem:[#allocation4 + $0x10] sm:$0xff]
        %v5715 = vld [vmem:[#allocation4 + $0x18] sm:$0xff]
        %vm5716 = vcmask 24576
        %5717 = vst.msk [vmem:[%s1089] sm:$0x1] %vm5716, %v5712
        %5718 = vst.msk [vmem:[%s1089 + $0x1] sm:$0x1] %vm5716, %v5714
        %5719 = vst.msk [vmem:[%s1089 + $0x2] sm:$0x1] %vm5716, %v5713
        %5720 = vst.msk [vmem:[%s1089 + $0x3] sm:$0x1] %vm5716, %v5715
        %vm5721 = vcmask 28676
        %5722 = vst.msk [vmem:[%s1089] sm:$0x10] %vm5721, %v5712
        %5723 = vst.msk [vmem:[%s1089 + $0x1] sm:$0x10] %vm5721, %v5714
        %5724 = vst.msk [vmem:[%s1089 + $0x2] sm:$0x10] %vm5721, %v5713
        %5725 = vst.msk [vmem:[%s1089 + $0x3] sm:$0x10] %vm5721, %v5715
        %vm5726 = vcmask 25601
        %5727 = vst.msk [vmem:[%s1089 + $0x7] sm:$0x2] %vm5726, %v5712
        %5728 = vst.msk [vmem:[%s1089 + $0x8] sm:$0x2] %vm5726, %v5714
        %5729 = vst.msk [vmem:[%s1089 + $0x9] sm:$0x2] %vm5726, %v5713
        %5730 = vst.msk [vmem:[%s1089 + $0xa] sm:$0x2] %vm5726, %v5715
        %vm5731 = vcmask 29701
        %5732 = vst.msk [vmem:[%s1089 + $0x7] sm:$0x20] %vm5731, %v5712
        %5733 = vst.msk [vmem:[%s1089 + $0x8] sm:$0x20] %vm5731, %v5714
        %5734 = vst.msk [vmem:[%s1089 + $0x9] sm:$0x20] %vm5731, %v5713
        %5735 = vst.msk [vmem:[%s1089 + $0xa] sm:$0x20] %vm5731, %v5715
        %vm5736 = vcmask 26626
        %5737 = vst.msk [vmem:[%s1089 + $0xe] sm:$0x4] %vm5736, %v5712
        %5738 = vst.msk [vmem:[%s1089 + $0xf] sm:$0x4] %vm5736, %v5714
        %5739 = vst.msk [vmem:[%s1089 + $0x10] sm:$0x4] %vm5736, %v5713
        %5740 = vst.msk [vmem:[%s1089 + $0x11] sm:$0x4] %vm5736, %v5715
        %vm5741 = vcmask 30726
        %5742 = vst.msk [vmem:[%s1089 + $0xe] sm:$0x40] %vm5741, %v5712
        %5743 = vst.msk [vmem:[%s1089 + $0xf] sm:$0x40] %vm5741, %v5714
        %5744 = vst.msk [vmem:[%s1089 + $0x10] sm:$0x40] %vm5741, %v5713
        %5745 = vst.msk [vmem:[%s1089 + $0x11] sm:$0x40] %vm5741, %v5715
        %vm5746 = vcmask 27651
        %5747 = vst.msk [vmem:[%s1089 + $0x15] sm:$0x8] %vm5746, %v5712
        %5748 = vst.msk [vmem:[%s1089 + $0x16] sm:$0x8] %vm5746, %v5714
        %5749 = vst.msk [vmem:[%s1089 + $0x17] sm:$0x8] %vm5746, %v5713
        %5750 = vst.msk [vmem:[%s1089 + $0x18] sm:$0x8] %vm5746, %v5715
        %vm5751 = vcmask 31751
        %5752 = vst.msk [vmem:[%s1089 + $0x15] sm:$0x80] %vm5751, %v5712
        %5753 = vst.msk [vmem:[%s1089 + $0x16] sm:$0x80] %vm5751, %v5714
        %5754 = vst.msk [vmem:[%s1089 + $0x17] sm:$0x80] %vm5751, %v5713
        %5755 = vst.msk [vmem:[%s1089 + $0x18] sm:$0x80] %vm5751, %v5715
        %p5756 = scmp.lt.s32.totalorder %s79, 1
        %s5757 = scalar_select %p5756, %s79, 1
        %s5758 = smul.addr %s5757, 4
        %s5759 = smul.addr %s5758, 8
        %s5760 = scalar_lea.vmem %s63, %s5759
        // Predicated region
        $region181: #{inception_autoencoder_forward.1} parent=143 // pred_check
          %p5761 = pneg %p753
        $region182: #{inception_autoencoder_forward.1} parent=143 // pred_check_branch
          %5763 = sbr.rel (%p5761) target = $region184
        $region183: #{inception_autoencoder_forward.1} parent=143 // pred_region
          _
        $region184: #{inception_autoencoder_forward.1} parent=143 // pred_fallthru
          _
      $region144: #{inception_autoencoder_forward.1} parent=5 // pred_fallthru
        _
      %p5764 = scmp.le.s32.totalorder 2, %s74
      // Predicated region
      $region185: #{inception_autoencoder_forward.1} parent=5 // pred_check
        %p5765 = pneg %p5764
      $region186: #{inception_autoencoder_forward.1} parent=5 // pred_check_branch
        %5767 = sbr.rel (%p5765) target = $region188
      $region187: #{inception_autoencoder_forward.1} parent=5 // pred_region
        %s5768 = ssub.s32 %s74, 2
        // Predicated region
        $region189: #{inception_autoencoder_forward.1} parent=187 // pred_check
          %p5769 = pneg %p759
        $region190: #{inception_autoencoder_forward.1} parent=187 // pred_check_branch
          %5771 = sbr.rel (%p5769) target = $region192
        $region191: #{inception_autoencoder_forward.1} parent=187 // pred_region
          %p5772 = scmp.lt.s32.totalorder %s80, 1
          %s5773 = scalar_select %p5772, %s80, 1
          %s5774 = smul.addr %s5773, 4
          %s5775 = smul.addr %s5774, 8
          %s5776 = scalar_lea.vmem %s63, %s5775
        $region192: #{inception_autoencoder_forward.1} parent=187 // pred_fallthru
          _
      $region188: #{inception_autoencoder_forward.1} parent=5 // pred_fallthru
        _
    $region6: #{inception_autoencoder_forward.1} parent=1 // loop_footer
      %s78 = sadd.s32 1, %s74
    $region7: #{inception_autoencoder_forward.1} parent=1 // loop_footer_branch
      %73 = sbr.rel target = $region3
    $region8: #{inception_autoencoder_forward.1} parent=1 // loop_exit
      _
    %5777 = vsyncpa [#allocation6], 1
    %s5778 = scalar_lea.sflag [#allocation6], 1
    %5779 = vsyncpa %s5778, 1
    %5780 = vsyncpa [#allocation8], 1
    %5781 = vsyncpa [#allocation11], 1
    %5782 = vsyncpa [#allocation14], 1
    %5783 = vsyncpa [#allocation17], 1

</llo_original>
